<compile_context>
chip_gen: v6e
topology: v6e:2x2x1
jax: 0.10.0
libtpu: 0.0.40
codegen_flags: <defaults>
</compile_context>

<pallas_src>
import functools

import jax
import jax.numpy as jnp
from jax.experimental import pallas as pl
from jax.experimental.pallas import tpu as pltpu

BN_EPS = 1e-5


def _round_up(x, m):
    return ((x + m - 1) // m) * m


# --------------------------------------------------------------------------
# Pallas kernels
# --------------------------------------------------------------------------
def _mm_fused_kernel(a_ref, b_ref, eps_ref, o_ref, *, relu):
    """Single-K-step matmul with fused bias -> ReLU -> BN scale/shift.

    a_ref:   (tm, Kp) f32   (cast to bf16 in-kernel)
    b_ref:   (Kp, tn) bf16  (pre-packed/padded in build_params)
    eps_ref: (3, tn)  f32   rows = [bias, bn_scale, bn_shift]
    One dot, one epilogue, ONE store.
    """
    a = a_ref[...].astype(jnp.bfloat16)
    y = jnp.dot(a, b_ref[...], preferred_element_type=jnp.float32)
    eps = eps_ref[...]
    y = y + eps[0:1, :]
    if relu:
        y = jnp.maximum(y, 0.0)
    o_ref[...] = y * eps[1:2, :] + eps[2:3, :]


def _fc_head_kernel(x_ref, w1_ref, b1_ref, w2_ref, b2_ref, o_ref):
    """Fused fc1 -> ReLU -> fc2.  fc1 activation stays in VMEM/vregs."""
    x = x_ref[...].astype(jnp.bfloat16)
    h = jnp.dot(x, w1_ref[...], preferred_element_type=jnp.float32)
    h = jnp.maximum(h + b1_ref[...], 0.0)
    o_ref[...] = (jnp.dot(h.astype(jnp.bfloat16), w2_ref[...],
                          preferred_element_type=jnp.float32) + b2_ref[...])


# --------------------------------------------------------------------------
# Fused matmul wrapper (single K step; K <= 896 for every layer here)
# --------------------------------------------------------------------------
def matmul_fused(a, w_packed, eps_packed, n_out, relu):
    """out[:M, :n_out] of relu_opt(a @ w + bias) * scale + shift."""
    M, K = a.shape
    Kp, Np = w_packed.shape

    # M tiling: single full block when it fits comfortably; otherwise an EVEN
    # number of blocks (v7x has 2 TensorCores sharing the parallel grid).
    Mp8 = _round_up(max(M, 8), 8)
    if Mp8 <= 896:
        n_mblk = 1
        tm = Mp8
    else:
        n_mblk = 2
        while _round_up((Mp8 + n_mblk - 1) // n_mblk, 8) > 896:
            n_mblk += 2
        tm = _round_up((Mp8 + n_mblk - 1) // n_mblk, 8)
    Mp = tm * n_mblk
    tn = min(Np, 512)

    a_p = jnp.pad(a.astype(jnp.float32), ((0, Mp - M), (0, Kp - K)))

    cost = pl.CostEstimate(
        flops=2 * Mp * Np * Kp,
        transcendentals=0,
        bytes_accessed=a_p.size * 4 + w_packed.size * 2
        + Mp * Np * 4 + eps_packed.size * 4,
    )

    out = pl.pallas_call(
        functools.partial(_mm_fused_kernel, relu=relu),
        out_shape=jax.ShapeDtypeStruct((Mp, Np), jnp.float32),
        grid_spec=pltpu.PrefetchScalarGridSpec(
            num_scalar_prefetch=0,
            grid=(Mp // tm, Np // tn),
            in_specs=[
                pl.BlockSpec((tm, Kp), lambda i, j: (i, 0)),
                pl.BlockSpec((Kp, tn), lambda i, j: (0, j)),
                pl.BlockSpec((3, tn), lambda i, j: (0, j)),
            ],
            out_specs=pl.BlockSpec((tm, tn), lambda i, j: (i, j)),
        ),
        compiler_params=pltpu.CompilerParams(
            dimension_semantics=("parallel", "parallel")),
        cost_estimate=cost,
    )(a_p, w_packed, eps_packed)
    return out[:M, :n_out]


# --------------------------------------------------------------------------
# Layer wrappers (glue)
# --------------------------------------------------------------------------
def conv_relu_bn(x, w_packed, eps_packed, ksize, cout):
    """x: (N,H,W,Cin) NHWC.  batchnorm(relu(conv(x)+bias)), stride 1, pad 0."""
    N, H, W, Cin = x.shape
    Ho, Wo = H - ksize + 1, W - ksize + 1
    # Static-stride im2col; flatten order (dy, dx, cin) matches the weight
    # matrix packed as (kH, kW, Cin, Cout) -> (kH*kW*Cin, Cout).
    cols = [x[:, dy:dy + Ho, dx:dx + Wo, :]
            for dy in range(ksize) for dx in range(ksize)]
    patches = jnp.concatenate(cols, axis=-1).reshape(
        N * Ho * Wo, ksize * ksize * Cin)
    out = matmul_fused(patches, w_packed, eps_packed, cout, relu=True)
    return out.reshape(N, Ho, Wo, cout)


def maxpool2x2(x):
    """2x2 stride-2 max pool as pure XLA glue (fuses with adjacent slices)."""
    a = x[:, 0::2, 0::2, :]
    b = x[:, 0::2, 1::2, :]
    c = x[:, 1::2, 0::2, :]
    d = x[:, 1::2, 1::2, :]
    return jnp.maximum(jnp.maximum(a, b), jnp.maximum(c, d))


def fc_head(x_flat, w1, b1, w2, b2, n_out):
    """Fused fc1+ReLU+fc2 in one gridless pallas_call."""
    M, K = x_flat.shape
    Kp = w1.shape[0]
    Mp = _round_up(max(M, 8), 8)
    x_p = jnp.pad(x_flat.astype(jnp.float32), ((0, Mp - M), (0, Kp - K)))
    out = pl.pallas_call(
        _fc_head_kernel,
        out_shape=jax.ShapeDtypeStruct((Mp, w2.shape[1]), jnp.float32),
    )(x_p, w1, b1, w2, b2)
    return out[:M, :n_out]


# --------------------------------------------------------------------------
# Parameters: deterministic synthetic init, pre-packed/padded bf16 weights
# and packed (3, Np) epilogue arrays, built ONCE outside the jitted forward.
# --------------------------------------------------------------------------
def _fold_bn(c):
    # PyTorch BatchNorm2d defaults: gamma=1, beta=0, running_mean=0, var=1.
    gamma = jnp.ones((c,), jnp.float32)
    beta = jnp.zeros((c,), jnp.float32)
    mean = jnp.zeros((c,), jnp.float32)
    var = jnp.ones((c,), jnp.float32)
    scale = gamma / jnp.sqrt(var + BN_EPS)
    shift = beta - mean * scale
    return scale, shift


def _pack_conv(key, cout, cin, ksz):
    kw_, kb_ = jax.random.split(key)
    fan_in = cin * ksz * ksz
    w = jax.random.normal(kw_, (cout, cin, ksz, ksz), jnp.float32)
    w = w * jnp.sqrt(2.0 / fan_in)
    w_mat = jnp.transpose(w, (2, 3, 1, 0)).reshape(ksz * ksz * cin, cout)
    Kp = _round_up(ksz * ksz * cin, 128)
    Np = _round_up(cout, 128)
    w_p = jnp.pad(w_mat, ((0, Kp - w_mat.shape[0]),
                          (0, Np - cout))).astype(jnp.bfloat16)
    bias = 0.1 * jax.random.normal(kb_, (cout,), jnp.float32)
    scale, shift = _fold_bn(cout)
    eps = jnp.stack([jnp.pad(bias, (0, Np - cout)),
                     jnp.pad(scale, (0, Np - cout)),
                     jnp.pad(shift, (0, Np - cout))], axis=0)
    return w_p, eps


def _pack_fc(key, cout, cin):
    kw_, kb_ = jax.random.split(key)
    w = jax.random.normal(kw_, (cout, cin), jnp.float32) * jnp.sqrt(1.0 / cin)
    Kp = _round_up(cin, 128)
    Np = _round_up(cout, 128)
    w_p = jnp.pad(w.T, ((0, Kp - cin), (0, Np - cout))).astype(jnp.bfloat16)
    bias = 0.1 * jax.random.normal(kb_, (cout,), jnp.float32)
    b_p = jnp.pad(bias, (0, Np - cout)).reshape(1, Np)
    return w_p, b_p


def build_params(key):
    keys = jax.random.split(key, 6)
    return {
        "conv1": _pack_conv(keys[0], 32, 1, 5),
        "conv2": _pack_conv(keys[1], 32, 32, 5),
        "conv3": _pack_conv(keys[2], 64, 32, 3),
        "conv4": _pack_conv(keys[3], 64, 64, 3),
        "fc1": _pack_fc(keys[4], 256, 576),
        "fc2": _pack_fc(keys[5], 10, 256),
    }


# --------------------------------------------------------------------------
# Forward pass (matches FashionCNN4.forward, eval mode)
# --------------------------------------------------------------------------
def fashioncnn4_forward(params, x_nchw):
    # PyTorch NCHW input -> NHWC internally.
    x = jnp.transpose(x_nchw, (0, 2, 3, 1)).astype(jnp.float32)

    x = conv_relu_bn(x, *params["conv1"], 5, 32)   # 28 -> 24
    x = conv_relu_bn(x, *params["conv2"], 5, 32)   # 24 -> 20
    x = maxpool2x2(x)                              # 20 -> 10
    # conv1_drop (Dropout 0.25): identity in eval mode.
    x = conv_relu_bn(x, *params["conv3"], 3, 64)   # 10 -> 8
    x = conv_relu_bn(x, *params["conv4"], 3, 64)   # 8 -> 6
    x = maxpool2x2(x)                              # 6 -> 3
    # conv2_drop (Dropout 0.25): identity in eval mode.

    # PyTorch flattens in NCHW order (C, H, W) -> (N, 576).
    x = jnp.transpose(x, (0, 3, 1, 2)).reshape(x.shape[0], -1)

    w1, b1 = params["fc1"]
    w2, b2 = params["fc2"]
    # fc1 -> ReLU -> (dp1 identity) -> fc2, all fused in one pallas_call.
    return fc_head(x, w1, b1, w2, b2, 10)


# --------------------------------------------------------------------------
if __name__ == "__main__":
    key = jax.random.PRNGKey(0)
    kp, kx = jax.random.split(key)

    params = build_params(kp)
    # Fashion-MNIST-shaped input: (N=2, C=1, H=28, W=28) so the flatten
    # produces the 576 features fc1 expects.
    x = jax.random.normal(kx, (2, 1, 28, 28), jnp.float32)

    fwd = jax.jit(fashioncnn4_forward)
    logits = fwd(params, x)
    jax.block_until_ready(logits)

    assert logits.shape == (2, 10)
    assert bool(jnp.all(jnp.isfinite(logits)))
    print("KERNEL_OK")
</pallas_src>

<mosaic_0001>
module attributes {stable_mosaic.version = 11 : i64} {
  func.func @_mm_fused_kernel(%arg0: i32, %arg1: i32, %arg2: memref<576x128xf32, #tpu.memory_space<vmem>>, %arg3: memref<128x128xbf16, #tpu.memory_space<vmem>>, %arg4: memref<3x128xf32, #tpu.memory_space<vmem>>, %arg5: memref<576x128xf32, #tpu.memory_space<vmem>>) attributes {dimension_semantics = [#tpu.dimension_semantics<parallel>, #tpu.dimension_semantics<parallel>], iteration_bounds = array<i64: 2, 1>, scalar_prefetch = 0 : i64, scratch_operands = 0 : i64, tpu.core_type = #tpu.core_type<tc>, window_params = [{transform_indices = @transform_0, window_bounds = array<i64: 576, 128>}, {transform_indices = @transform_1, window_bounds = array<i64: 128, 128>}, {transform_indices = @transform_2, window_bounds = array<i64: 3, 128>}, {transform_indices = @transform_3, window_bounds = array<i64: 576, 128>}]} {
    %c0 = arith.constant 0 : index
    %c0_0 = arith.constant 0 : index
    %0 = vector.load %arg2[%c0, %c0_0] : memref<576x128xf32, #tpu.memory_space<vmem>>, vector<576x128xf32>
    %1 = arith.truncf %0 : vector<576x128xf32> to vector<576x128xbf16>
    %c0_1 = arith.constant 0 : index
    %c0_2 = arith.constant 0 : index
    %2 = vector.load %arg3[%c0_1, %c0_2] : memref<128x128xbf16, #tpu.memory_space<vmem>>, vector<128x128xbf16>
    %cst = arith.constant dense<0.000000e+00> : vector<576x128xf32>
    %3 = tpu.matmul %1, %2, %cst {dimension_numbers = #tpu.dot_dimension_numbers<[1], [0], [0], [1], [0, 0, 1, 1], [], []>} : vector<576x128xbf16>, vector<128x128xbf16>, vector<576x128xf32> -> vector<576x128xf32>
    %c0_3 = arith.constant 0 : index
    %c0_4 = arith.constant 0 : index
    %4 = vector.load %arg4[%c0_3, %c0_4] : memref<3x128xf32, #tpu.memory_space<vmem>>, vector<3x128xf32>
    %5 = vector.extract_strided_slice %4 {offsets = [0, 0], sizes = [1, 128], strides = [1, 1]} : vector<3x128xf32> to vector<1x128xf32>
    %6 = vector.broadcast %5 : vector<1x128xf32> to vector<576x128xf32>
    %7 = arith.addf %3, %6 : vector<576x128xf32>
    %cst_5 = arith.constant 0.000000e+00 : f32
    %8 = vector.broadcast %cst_5 : f32 to vector<576x128xf32>
    %9 = arith.maximumf %7, %8 : vector<576x128xf32>
    %10 = vector.extract_strided_slice %4 {offsets = [1, 0], sizes = [1, 128], strides = [1, 1]} : vector<3x128xf32> to vector<1x128xf32>
    %11 = vector.broadcast %10 : vector<1x128xf32> to vector<576x128xf32>
    %12 = arith.mulf %9, %11 : vector<576x128xf32>
    %13 = vector.extract_strided_slice %4 {offsets = [2, 0], sizes = [1, 128], strides = [1, 1]} : vector<3x128xf32> to vector<1x128xf32>
    %14 = vector.broadcast %13 : vector<1x128xf32> to vector<576x128xf32>
    %15 = arith.addf %12, %14 : vector<576x128xf32>
    %c0_6 = arith.constant 0 : index
    %c0_7 = arith.constant 0 : index
    %16 = vector.load %arg5[%c0_6, %c0_7] : memref<576x128xf32, #tpu.memory_space<vmem>>, vector<576x128xf32>
    tpu.vector_store %arg5[%c0_6, %c0_7], %15 {strides = array<i32>} : memref<576x128xf32, #tpu.memory_space<vmem>>, vector<576x128xf32>,
    return
  }
  func.func @transform_0(%arg0: i32, %arg1: i32) -> (i32, i32) {
    %c0_i32 = arith.constant 0 : i32
    %c0_i32_0 = arith.constant 0 : i32
    return %arg0, %c0_i32 : i32, i32
  }
  func.func @transform_1(%arg0: i32, %arg1: i32) -> (i32, i32) {
    %c0_i32 = arith.constant 0 : i32
    %c0_i32_0 = arith.constant 0 : i32
    return %c0_i32, %arg1 : i32, i32
  }
  func.func @transform_2(%arg0: i32, %arg1: i32) -> (i32, i32) {
    %c0_i32 = arith.constant 0 : i32
    %c0_i32_0 = arith.constant 0 : i32
    return %c0_i32, %arg1 : i32, i32
  }
  func.func @transform_3(%arg0: i32, %arg1: i32) -> (i32, i32) {
    %c0_i32 = arith.constant 0 : i32
    return %arg0, %arg1 : i32, i32
  }
}

module attributes {stable_mosaic.version = 11 : i64} {
  func.func @_mm_fused_kernel(%arg0: i32, %arg1: i32, %arg2: memref<800x896xf32, #tpu.memory_space<vmem>>, %arg3: memref<896x128xbf16, #tpu.memory_space<vmem>>, %arg4: memref<3x128xf32, #tpu.memory_space<vmem>>, %arg5: memref<800x128xf32, #tpu.memory_space<vmem>>) attributes {dimension_semantics = [#tpu.dimension_semantics<parallel>, #tpu.dimension_semantics<parallel>], iteration_bounds = array<i64: 1, 1>, scalar_prefetch = 0 : i64, scratch_operands = 0 : i64, tpu.core_type = #tpu.core_type<tc>, window_params = [{transform_indices = @transform_0, window_bounds = array<i64: 800, 896>}, {transform_indices = @transform_1, window_bounds = array<i64: 896, 128>}, {transform_indices = @transform_2, window_bounds = array<i64: 3, 128>}, {transform_indices = @transform_3, window_bounds = array<i64: 800, 128>}]} {
    %c0 = arith.constant 0 : index
    %c0_0 = arith.constant 0 : index
    %0 = vector.load %arg2[%c0, %c0_0] : memref<800x896xf32, #tpu.memory_space<vmem>>, vector<800x896xf32>
    %1 = arith.truncf %0 : vector<800x896xf32> to vector<800x896xbf16>
    %c0_1 = arith.constant 0 : index
    %c0_2 = arith.constant 0 : index
    %2 = vector.load %arg3[%c0_1, %c0_2] : memref<896x128xbf16, #tpu.memory_space<vmem>>, vector<896x128xbf16>
    %cst = arith.constant dense<0.000000e+00> : vector<800x128xf32>
    %3 = tpu.matmul %1, %2, %cst {dimension_numbers = #tpu.dot_dimension_numbers<[1], [0], [0], [1], [0, 0, 1, 1], [], []>} : vector<800x896xbf16>, vector<896x128xbf16>, vector<800x128xf32> -> vector<800x128xf32>
    %c0_3 = arith.constant 0 : index
    %c0_4 = arith.constant 0 : index
    %4 = vector.load %arg4[%c0_3, %c0_4] : memref<3x128xf32, #tpu.memory_space<vmem>>, vector<3x128xf32>
    %5 = vector.extract_strided_slice %4 {offsets = [0, 0], sizes = [1, 128], strides = [1, 1]} : vector<3x128xf32> to vector<1x128xf32>
    %6 = vector.broadcast %5 : vector<1x128xf32> to vector<800x128xf32>
    %7 = arith.addf %3, %6 : vector<800x128xf32>
    %cst_5 = arith.constant 0.000000e+00 : f32
    %8 = vector.broadcast %cst_5 : f32 to vector<800x128xf32>
    %9 = arith.maximumf %7, %8 : vector<800x128xf32>
    %10 = vector.extract_strided_slice %4 {offsets = [1, 0], sizes = [1, 128], strides = [1, 1]} : vector<3x128xf32> to vector<1x128xf32>
    %11 = vector.broadcast %10 : vector<1x128xf32> to vector<800x128xf32>
    %12 = arith.mulf %9, %11 : vector<800x128xf32>
    %13 = vector.extract_strided_slice %4 {offsets = [2, 0], sizes = [1, 128], strides = [1, 1]} : vector<3x128xf32> to vector<1x128xf32>
    %14 = vector.broadcast %13 : vector<1x128xf32> to vector<800x128xf32>
    %15 = arith.addf %12, %14 : vector<800x128xf32>
    %c0_6 = arith.constant 0 : index
    %c0_7 = arith.constant 0 : index
    %16 = vector.load %arg5[%c0_6, %c0_7] : memref<800x128xf32, #tpu.memory_space<vmem>>, vector<800x128xf32>
    tpu.vector_store %arg5[%c0_6, %c0_7], %15 {strides = array<i32>} : memref<800x128xf32, #tpu.memory_space<vmem>>, vector<800x128xf32>,
    return
  }
  func.func @transform_0(%arg0: i32, %arg1: i32) -> (i32, i32) {
    %c0_i32 = arith.constant 0 : i32
    %c0_i32_0 = arith.constant 0 : i32
    return %arg0, %c0_i32 : i32, i32
  }
  func.func @transform_1(%arg0: i32, %arg1: i32) -> (i32, i32) {
    %c0_i32 = arith.constant 0 : i32
    %c0_i32_0 = arith.constant 0 : i32
    return %c0_i32, %arg1 : i32, i32
  }
  func.func @transform_2(%arg0: i32, %arg1: i32) -> (i32, i32) {
    %c0_i32 = arith.constant 0 : i32
    %c0_i32_0 = arith.constant 0 : i32
    return %c0_i32, %arg1 : i32, i32
  }
  func.func @transform_3(%arg0: i32, %arg1: i32) -> (i32, i32) {
    %c0_i32 = arith.constant 0 : i32
    return %arg0, %arg1 : i32, i32
  }
}

module attributes {stable_mosaic.version = 11 : i64} {
  func.func @_mm_fused_kernel(%arg0: i32, %arg1: i32, %arg2: memref<128x384xf32, #tpu.memory_space<vmem>>, %arg3: memref<384x128xbf16, #tpu.memory_space<vmem>>, %arg4: memref<3x128xf32, #tpu.memory_space<vmem>>, %arg5: memref<128x128xf32, #tpu.memory_space<vmem>>) attributes {dimension_semantics = [#tpu.dimension_semantics<parallel>, #tpu.dimension_semantics<parallel>], iteration_bounds = array<i64: 1, 1>, scalar_prefetch = 0 : i64, scratch_operands = 0 : i64, tpu.core_type = #tpu.core_type<tc>, window_params = [{transform_indices = @transform_0, window_bounds = array<i64: 128, 384>}, {transform_indices = @transform_1, window_bounds = array<i64: 384, 128>}, {transform_indices = @transform_2, window_bounds = array<i64: 3, 128>}, {transform_indices = @transform_3, window_bounds = array<i64: 128, 128>}]} {
    %c0 = arith.constant 0 : index
    %c0_0 = arith.constant 0 : index
    %0 = vector.load %arg2[%c0, %c0_0] : memref<128x384xf32, #tpu.memory_space<vmem>>, vector<128x384xf32>
    %1 = arith.truncf %0 : vector<128x384xf32> to vector<128x384xbf16>
    %c0_1 = arith.constant 0 : index
    %c0_2 = arith.constant 0 : index
    %2 = vector.load %arg3[%c0_1, %c0_2] : memref<384x128xbf16, #tpu.memory_space<vmem>>, vector<384x128xbf16>
    %cst = arith.constant dense<0.000000e+00> : vector<128x128xf32>
    %3 = tpu.matmul %1, %2, %cst {dimension_numbers = #tpu.dot_dimension_numbers<[1], [0], [0], [1], [0, 0, 1, 1], [], []>} : vector<128x384xbf16>, vector<384x128xbf16>, vector<128x128xf32> -> vector<128x128xf32>
    %c0_3 = arith.constant 0 : index
    %c0_4 = arith.constant 0 : index
    %4 = vector.load %arg4[%c0_3, %c0_4] : memref<3x128xf32, #tpu.memory_space<vmem>>, vector<3x128xf32>
    %5 = vector.extract_strided_slice %4 {offsets = [0, 0], sizes = [1, 128], strides = [1, 1]} : vector<3x128xf32> to vector<1x128xf32>
    %6 = vector.broadcast %5 : vector<1x128xf32> to vector<128x128xf32>
    %7 = arith.addf %3, %6 : vector<128x128xf32>
    %cst_5 = arith.constant 0.000000e+00 : f32
    %8 = vector.broadcast %cst_5 : f32 to vector<128x128xf32>
    %9 = arith.maximumf %7, %8 : vector<128x128xf32>
    %10 = vector.extract_strided_slice %4 {offsets = [1, 0], sizes = [1, 128], strides = [1, 1]} : vector<3x128xf32> to vector<1x128xf32>
    %11 = vector.broadcast %10 : vector<1x128xf32> to vector<128x128xf32>
    %12 = arith.mulf %9, %11 : vector<128x128xf32>
    %13 = vector.extract_strided_slice %4 {offsets = [2, 0], sizes = [1, 128], strides = [1, 1]} : vector<3x128xf32> to vector<1x128xf32>
    %14 = vector.broadcast %13 : vector<1x128xf32> to vector<128x128xf32>
    %15 = arith.addf %12, %14 : vector<128x128xf32>
    %c0_6 = arith.constant 0 : index
    %c0_7 = arith.constant 0 : index
    %16 = vector.load %arg5[%c0_6, %c0_7] : memref<128x128xf32, #tpu.memory_space<vmem>>, vector<128x128xf32>
    tpu.vector_store %arg5[%c0_6, %c0_7], %15 {strides = array<i32>} : memref<128x128xf32, #tpu.memory_space<vmem>>, vector<128x128xf32>,
    return
  }
  func.func @transform_0(%arg0: i32, %arg1: i32) -> (i32, i32) {
    %c0_i32 = arith.constant 0 : i32
    %c0_i32_0 = arith.constant 0 : i32
    return %arg0, %c0_i32 : i32, i32
  }
  func.func @transform_1(%arg0: i32, %arg1: i32) -> (i32, i32) {
    %c0_i32 = arith.constant 0 : i32
    %c0_i32_0 = arith.constant 0 : i32
    return %c0_i32, %arg1 : i32, i32
  }
  func.func @transform_2(%arg0: i32, %arg1: i32) -> (i32, i32) {
    %c0_i32 = arith.constant 0 : i32
    %c0_i32_0 = arith.constant 0 : i32
    return %c0_i32, %arg1 : i32, i32
  }
  func.func @transform_3(%arg0: i32, %arg1: i32) -> (i32, i32) {
    %c0_i32 = arith.constant 0 : i32
    return %arg0, %arg1 : i32, i32
  }
}

module attributes {stable_mosaic.version = 11 : i64} {
  func.func @_mm_fused_kernel(%arg0: i32, %arg1: i32, %arg2: memref<72x640xf32, #tpu.memory_space<vmem>>, %arg3: memref<640x128xbf16, #tpu.memory_space<vmem>>, %arg4: memref<3x128xf32, #tpu.memory_space<vmem>>, %arg5: memref<72x128xf32, #tpu.memory_space<vmem>>) attributes {dimension_semantics = [#tpu.dimension_semantics<parallel>, #tpu.dimension_semantics<parallel>], iteration_bounds = array<i64: 1, 1>, scalar_prefetch = 0 : i64, scratch_operands = 0 : i64, tpu.core_type = #tpu.core_type<tc>, window_params = [{transform_indices = @transform_0, window_bounds = array<i64: 72, 640>}, {transform_indices = @transform_1, window_bounds = array<i64: 640, 128>}, {transform_indices = @transform_2, window_bounds = array<i64: 3, 128>}, {transform_indices = @transform_3, window_bounds = array<i64: 72, 128>}]} {
    %c0 = arith.constant 0 : index
    %c0_0 = arith.constant 0 : index
    %0 = vector.load %arg2[%c0, %c0_0] : memref<72x640xf32, #tpu.memory_space<vmem>>, vector<72x640xf32>
    %1 = arith.truncf %0 : vector<72x640xf32> to vector<72x640xbf16>
    %c0_1 = arith.constant 0 : index
    %c0_2 = arith.constant 0 : index
    %2 = vector.load %arg3[%c0_1, %c0_2] : memref<640x128xbf16, #tpu.memory_space<vmem>>, vector<640x128xbf16>
    %cst = arith.constant dense<0.000000e+00> : vector<72x128xf32>
    %3 = tpu.matmul %1, %2, %cst {dimension_numbers = #tpu.dot_dimension_numbers<[1], [0], [0], [1], [0, 0, 1, 1], [], []>} : vector<72x640xbf16>, vector<640x128xbf16>, vector<72x128xf32> -> vector<72x128xf32>
    %c0_3 = arith.constant 0 : index
    %c0_4 = arith.constant 0 : index
    %4 = vector.load %arg4[%c0_3, %c0_4] : memref<3x128xf32, #tpu.memory_space<vmem>>, vector<3x128xf32>
    %5 = vector.extract_strided_slice %4 {offsets = [0, 0], sizes = [1, 128], strides = [1, 1]} : vector<3x128xf32> to vector<1x128xf32>
    %6 = vector.broadcast %5 : vector<1x128xf32> to vector<72x128xf32>
    %7 = arith.addf %3, %6 : vector<72x128xf32>
    %cst_5 = arith.constant 0.000000e+00 : f32
    %8 = vector.broadcast %cst_5 : f32 to vector<72x128xf32>
    %9 = arith.maximumf %7, %8 : vector<72x128xf32>
    %10 = vector.extract_strided_slice %4 {offsets = [1, 0], sizes = [1, 128], strides = [1, 1]} : vector<3x128xf32> to vector<1x128xf32>
    %11 = vector.broadcast %10 : vector<1x128xf32> to vector<72x128xf32>
    %12 = arith.mulf %9, %11 : vector<72x128xf32>
    %13 = vector.extract_strided_slice %4 {offsets = [2, 0], sizes = [1, 128], strides = [1, 1]} : vector<3x128xf32> to vector<1x128xf32>
    %14 = vector.broadcast %13 : vector<1x128xf32> to vector<72x128xf32>
    %15 = arith.addf %12, %14 : vector<72x128xf32>
    %c0_6 = arith.constant 0 : index
    %c0_7 = arith.constant 0 : index
    %16 = vector.load %arg5[%c0_6, %c0_7] : memref<72x128xf32, #tpu.memory_space<vmem>>, vector<72x128xf32>
    tpu.vector_store %arg5[%c0_6, %c0_7], %15 {strides = array<i32>} : memref<72x128xf32, #tpu.memory_space<vmem>>, vector<72x128xf32>,
    return
  }
  func.func @transform_0(%arg0: i32, %arg1: i32) -> (i32, i32) {
    %c0_i32 = arith.constant 0 : i32
    %c0_i32_0 = arith.constant 0 : i32
    return %arg0, %c0_i32 : i32, i32
  }
  func.func @transform_1(%arg0: i32, %arg1: i32) -> (i32, i32) {
    %c0_i32 = arith.constant 0 : i32
    %c0_i32_0 = arith.constant 0 : i32
    return %c0_i32, %arg1 : i32, i32
  }
  func.func @transform_2(%arg0: i32, %arg1: i32) -> (i32, i32) {
    %c0_i32 = arith.constant 0 : i32
    %c0_i32_0 = arith.constant 0 : i32
    return %c0_i32, %arg1 : i32, i32
  }
  func.func @transform_3(%arg0: i32, %arg1: i32) -> (i32, i32) {
    %c0_i32 = arith.constant 0 : i32
    return %arg0, %arg1 : i32, i32
  }
}

module attributes {stable_mosaic.version = 11 : i64} {
  func.func @_fc_head_kernel(%arg0: memref<8x640xf32, #tpu.memory_space<vmem>>, %arg1: memref<640x256xbf16, #tpu.memory_space<vmem>>, %arg2: memref<1x256xf32, #tpu.memory_space<vmem>>, %arg3: memref<256x128xbf16, #tpu.memory_space<vmem>>, %arg4: memref<1x128xf32, #tpu.memory_space<vmem>>, %arg5: memref<8x128xf32, #tpu.memory_space<vmem>>) attributes {dimension_semantics = [], scalar_prefetch = 0 : i64, scratch_operands = 0 : i64, tpu.core_type = #tpu.core_type<tc>} {
    %c0 = arith.constant 0 : index
    %c0_0 = arith.constant 0 : index
    %0 = vector.load %arg0[%c0, %c0_0] : memref<8x640xf32, #tpu.memory_space<vmem>>, vector<8x640xf32>
    %1 = arith.truncf %0 : vector<8x640xf32> to vector<8x640xbf16>
    %c0_1 = arith.constant 0 : index
    %c0_2 = arith.constant 0 : index
    %2 = vector.load %arg1[%c0_1, %c0_2] : memref<640x256xbf16, #tpu.memory_space<vmem>>, vector<640x256xbf16>
    %cst = arith.constant dense<0.000000e+00> : vector<8x256xf32>
    %3 = tpu.matmul %1, %2, %cst {dimension_numbers = #tpu.dot_dimension_numbers<[1], [0], [0], [1], [0, 0, 1, 1], [], []>} : vector<8x640xbf16>, vector<640x256xbf16>, vector<8x256xf32> -> vector<8x256xf32>
    %c0_3 = arith.constant 0 : index
    %c0_4 = arith.constant 0 : index
    %4 = vector.load %arg2[%c0_3, %c0_4] : memref<1x256xf32, #tpu.memory_space<vmem>>, vector<1x256xf32>
    %5 = vector.broadcast %4 : vector<1x256xf32> to vector<8x256xf32>
    %6 = arith.addf %3, %5 : vector<8x256xf32>
    %cst_5 = arith.constant 0.000000e+00 : f32
    %7 = vector.broadcast %cst_5 : f32 to vector<8x256xf32>
    %8 = arith.maximumf %6, %7 : vector<8x256xf32>
    %9 = arith.truncf %8 : vector<8x256xf32> to vector<8x256xbf16>
    %c0_6 = arith.constant 0 : index
    %c0_7 = arith.constant 0 : index
    %10 = vector.load %arg3[%c0_6, %c0_7] : memref<256x128xbf16, #tpu.memory_space<vmem>>, vector<256x128xbf16>
    %cst_8 = arith.constant dense<0.000000e+00> : vector<8x128xf32>
    %11 = tpu.matmul %9, %10, %cst_8 {dimension_numbers = #tpu.dot_dimension_numbers<[1], [0], [0], [1], [0, 0, 1, 1], [], []>} : vector<8x256xbf16>, vector<256x128xbf16>, vector<8x128xf32> -> vector<8x128xf32>
    %c0_9 = arith.constant 0 : index
    %c0_10 = arith.constant 0 : index
    %12 = vector.load %arg4[%c0_9, %c0_10] : memref<1x128xf32, #tpu.memory_space<vmem>>, vector<1x128xf32>
    %13 = vector.broadcast %12 : vector<1x128xf32> to vector<8x128xf32>
    %14 = arith.addf %11, %13 : vector<8x128xf32>
    %c0_11 = arith.constant 0 : index
    %c0_12 = arith.constant 0 : index
    %15 = vector.load %arg5[%c0_11, %c0_12] : memref<8x128xf32, #tpu.memory_space<vmem>>, vector<8x128xf32>
    tpu.vector_store %arg5[%c0_11, %c0_12], %14 {strides = array<i32>} : memref<8x128xf32, #tpu.memory_space<vmem>>, vector<8x128xf32>,
    return
  }
}

</mosaic_0001>

<llo_original>
// kernel: fashioncnn4_forward.5
$region0: #{fashioncnn4_forward.5}
  #allocation0 [shape = 'u32[]', space=smem, size = 0x4, offset = 0x4, fixed_abs, tag = 'smem constant byte address 0x4 - core index']
  #allocation1 [shape = 'u32[144,128]{1,0:T(1,128)}', space=vmem, size = 0x12000, scoped, tag = 'internal scratch']
  %s0 = inlined_call_operand.vmem [shape: f32[1152,128], index: 0, kind: input, shape index: {}]
  %s1 = inlined_call_operand.vmem [shape: bf16[128,128], index: 1, kind: input, shape index: {}]
  %s2 = inlined_call_operand.vmem [shape: f32[3,128], index: 2, kind: input, shape index: {}]
  %s3 = inlined_call_operand.vmem [shape: f32[1152,128], index: 3, kind: output, shape index: {}]
  %s4 = sld [smem:[#allocation0]]
  $region45: #{fashioncnn4_forward.5} parent=0
    _
  %s6 = ssub.s32 1, %s4
  %s7 = scalar_select 0, %s6, %s4
  loop: start=0, step=1, limit=4
  $region2: #{fashioncnn4_forward.5} parent=0 // loop_pre_header
    _
  $region3: #{fashioncnn4_forward.5} parent=0 // loop_header
    %s9 = sphi 0, %s13
    %p10 = scmp.ge.s32.totalorder %s9, 4
    %s16 = sphi 0, %s28
    %s17 = sphi 0, %s24
    %s18 = sphi 0, %s16
    %s19 = sphi 0, %s17
    %s20 = sphi 0, %s18
    %s21 = sphi 0, %s19
    %s31 = sphi 0, %s33
    %s34 = sphi 0, %s31
    %s35 = sphi 0, %s34
    %s51 = sphi 0, %s35
    %s57 = sphi 0, %s59
    %s60 = sphi 0, %s57
    %s61 = sphi 0, %s60
    %s77 = sphi 0, %s61
    %s83 = sphi 0, %s85
    %s86 = sphi 0, %s83
    %s87 = sphi 0, %s86
    %s103 = sphi 0, %s87
    %s111 = sphi 0, %s113
    %s114 = sphi 0, %s111
    %s115 = sphi 0, %s114
    %s131 = sphi 0, %s115
  $region4: #{fashioncnn4_forward.5} parent=0 // loop_header_branch
    %12 = sbr.rel (%p10) target = $region8
  $region5: #{fashioncnn4_forward.5} parent=0 // loop_body
    %s14 = ssub.s32 %s9, 1
    %s15 = ssub.s32 %s9, 2
    %s22 = sadd.s32 1, %s17
    %p23 = scmp.ge.s32.totalorder %s22, 1
    %s24 = scalar_select %p23, 0, %s22
    %s25 = sadd.s32 1, %s16
    %s26 = scalar_select %p23, %s25, %s16
    %p27 = scmp.ge.s32.totalorder %s26, 2
    %s28 = scalar_select %p27, 0, %s26
    %s29 = ssub.s32 %s16, %s28
    %p30 = scmp.eq.s32.totalorder %s29, 0
    %s32 = sadd.s32 %s31, 1
    %s33 = scalar_select %p30, %s31, %s32
    %p36 = pneg %p30
    %p37 = scmp.eq.s32.totalorder %s9, 1
    %p38 = por %p36, %p37
    %p39 = scmp.ne.s32.totalorder %s31, %s34
    %p40 = scmp.eq.s32.totalorder %s9, 0
    %p41 = por %p39, %p40
    %p42 = scmp.ne.s32.totalorder %s31, %s34
    %p43 = scmp.eq.s32.totalorder %s14, 1
    %p44 = por %p42, %p43
    %p45 = scmp.ne.s32.totalorder %s34, %s35
    %p46 = scmp.eq.s32.totalorder %s14, 0
    %p47 = por %p45, %p46
    %p48 = scmp.ne.s32.totalorder %s34, %s35
    %p49 = scmp.eq.s32.totalorder %s15, 1
    %p50 = por %p48, %p49
    %p52 = scmp.ne.s32.totalorder %s35, %s51
    %p53 = scmp.eq.s32.totalorder %s15, 0
    %p54 = por %p52, %p53
    %s55 = ssub.s32 %s17, %s24
    %p56 = scmp.eq.s32.totalorder %s55, 0
    %s58 = sadd.s32 %s57, 1
    %s59 = scalar_select %p56, %s57, %s58
    %p62 = pneg %p56
    %p63 = scmp.eq.s32.totalorder %s9, 1
    %p64 = por %p62, %p63
    %p65 = scmp.ne.s32.totalorder %s57, %s60
    %p66 = scmp.eq.s32.totalorder %s9, 0
    %p67 = por %p65, %p66
    %p68 = scmp.ne.s32.totalorder %s57, %s60
    %p69 = scmp.eq.s32.totalorder %s14, 1
    %p70 = por %p68, %p69
    %p71 = scmp.ne.s32.totalorder %s60, %s61
    %p72 = scmp.eq.s32.totalorder %s14, 0
    %p73 = por %p71, %p72
    %p74 = scmp.ne.s32.totalorder %s60, %s61
    %p75 = scmp.eq.s32.totalorder %s15, 1
    %p76 = por %p74, %p75
    %p78 = scmp.ne.s32.totalorder %s61, %s77
    %p79 = scmp.eq.s32.totalorder %s15, 0
    %p80 = por %p78, %p79
    %s81 = ssub.s32 %s17, %s24
    %p82 = scmp.eq.s32.totalorder %s81, 0
    %s84 = sadd.s32 %s83, 1
    %s85 = scalar_select %p82, %s83, %s84
    %p88 = pneg %p82
    %p89 = scmp.eq.s32.totalorder %s9, 1
    %p90 = por %p88, %p89
    %p91 = scmp.ne.s32.totalorder %s83, %s86
    %p92 = scmp.eq.s32.totalorder %s9, 0
    %p93 = por %p91, %p92
    %p94 = scmp.ne.s32.totalorder %s83, %s86
    %p95 = scmp.eq.s32.totalorder %s14, 1
    %p96 = por %p94, %p95
    %p97 = scmp.ne.s32.totalorder %s86, %s87
    %p98 = scmp.eq.s32.totalorder %s14, 0
    %p99 = por %p97, %p98
    %p100 = scmp.ne.s32.totalorder %s86, %s87
    %p101 = scmp.eq.s32.totalorder %s15, 1
    %p102 = por %p100, %p101
    %p104 = scmp.ne.s32.totalorder %s87, %s103
    %p105 = scmp.eq.s32.totalorder %s15, 0
    %p106 = por %p104, %p105
    %s107 = ssub.s32 %s16, %s28
    %s108 = ssub.s32 %s17, %s24
    %s109 = sor.u32 %s107, %s108
    %p110 = scmp.eq.s32.totalorder %s109, 0
    %s112 = sadd.s32 %s111, 1
    %s113 = scalar_select %p110, %s111, %s112
    %p116 = pneg %p110
    %p117 = scmp.eq.s32.totalorder %s9, 1
    %p118 = por %p116, %p117
    %p119 = scmp.ne.s32.totalorder %s111, %s114
    %p120 = scmp.eq.s32.totalorder %s9, 0
    %p121 = por %p119, %p120
    %p122 = scmp.ne.s32.totalorder %s111, %s114
    %p123 = scmp.eq.s32.totalorder %s14, 1
    %p124 = por %p122, %p123
    %p125 = scmp.ne.s32.totalorder %s114, %s115
    %p126 = scmp.eq.s32.totalorder %s14, 0
    %p127 = por %p125, %p126
    %p128 = scmp.ne.s32.totalorder %s114, %s115
    %p129 = scmp.eq.s32.totalorder %s15, 1
    %p130 = por %p128, %p129
    %p132 = scmp.ne.s32.totalorder %s115, %s131
    %p133 = scmp.eq.s32.totalorder %s15, 0
    %p134 = por %p132, %p133
    %p135 = scmp.le.s32.totalorder 1, %s9
    %p136 = scmp.lt.s32.totalorder %s9, 3
    %p137 = pnand %p135, %p136
    %p138 = pneg %p137
    // Predicated region
    $region9: #{fashioncnn4_forward.5} parent=5 // pred_check
      _
    $region10: #{fashioncnn4_forward.5} parent=5 // pred_check_branch
      %140 = sbr.rel (%p137) target = $region12
    $region11: #{fashioncnn4_forward.5} parent=5 // pred_region
      %s141 = ssub.s32 %s9, 1
      // Predicated region
      $region13: #{fashioncnn4_forward.5} parent=11 // pred_check
        %p142 = pneg %p73
      $region14: #{fashioncnn4_forward.5} parent=11 // pred_check_branch
        %144 = sbr.rel (%p142) target = $region16
      $region15: #{fashioncnn4_forward.5} parent=11 // pred_region
        %p145 = scmp.lt.s32.totalorder %s19, 0
        %s146 = scalar_select %p145, %s19, 0
        %s147 = smul.addr %s146, 4
        %s148 = scalar_lea.vmem %s1, %s147
      $region16: #{fashioncnn4_forward.5} parent=11 // pred_fallthru
        _
      // Predicated region
      $region17: #{fashioncnn4_forward.5} parent=11 // pred_check
        %p149 = pneg %p99
      $region18: #{fashioncnn4_forward.5} parent=11 // pred_check_branch
        %151 = sbr.rel (%p149) target = $region20
      $region19: #{fashioncnn4_forward.5} parent=11 // pred_region
        %p152 = scmp.lt.s32.totalorder %s19, 0
        %s153 = scalar_select %p152, %s19, 0
        %s154 = smul.addr %s153, 4
        %s155 = scalar_lea.vmem %s2, %s154
      $region20: #{fashioncnn4_forward.5} parent=11 // pred_fallthru
        _
    $region12: #{fashioncnn4_forward.5} parent=5 // pred_fallthru
      _
    %p156 = scmp.lt.s32.totalorder %s9, 2
    // Predicated region
    $region21: #{fashioncnn4_forward.5} parent=5 // pred_check
      %p157 = pneg %p156
    $region22: #{fashioncnn4_forward.5} parent=5 // pred_check_branch
      %159 = sbr.rel (%p157) target = $region24
    $region23: #{fashioncnn4_forward.5} parent=5 // pred_region
      // Predicated region
      $region25: #{fashioncnn4_forward.5} parent=23 // pred_check
        %p160 = pneg %p41
      $region26: #{fashioncnn4_forward.5} parent=23 // pred_check_branch
        %162 = sbr.rel (%p160) target = $region28
      $region27: #{fashioncnn4_forward.5} parent=23 // pred_region
        %s163 = smul.u32 72, %s16
        %p164 = scmp.lt.s32.totalorder %s163, 143
        %s165 = scalar_select %p164, %s163, 143
        %s166 = smul.addr %s165, 8
        %s167 = scalar_lea.vmem %s0, %s166
        %s168 = smul.u32 72, %s16
      $region28: #{fashioncnn4_forward.5} parent=23 // pred_fallthru
        _
    $region24: #{fashioncnn4_forward.5} parent=5 // pred_fallthru
      _
    %p169 = scmp.le.s32.totalorder 1, %s9
    %p170 = scmp.lt.s32.totalorder %s9, 3
    %p171 = pnand %p169, %p170
    %p172 = pneg %p171
    // Predicated region
    $region29: #{fashioncnn4_forward.5} parent=5 // pred_check
      _
    $region30: #{fashioncnn4_forward.5} parent=5 // pred_check_branch
      %174 = sbr.rel (%p171) target = $region32
    $region31: #{fashioncnn4_forward.5} parent=5 // pred_region
      %s175 = ssub.s32 %s9, 1
      %s176 = smul.u32 72, %s18
      %p177 = scmp.lt.s32.totalorder %s176, 143
      %s178 = scalar_select %p177, %s176, 143
      %s179 = smul.addr %s178, 8
      %s180 = scalar_lea.vmem %s0, %s179
      %p181 = pneg %p47
      %p182 = pneg %p44
      %p183 = scmp.lt.s32.totalorder %s19, 0
      %s184 = scalar_select %p183, %s19, 0
      %s185 = smul.addr %s184, 4
      %s186 = scalar_lea.vmem %s1, %s185
      %p187 = pneg %p73
      %p188 = pneg %p70
      %p189 = scmp.lt.s32.totalorder %s19, 0
      %s190 = scalar_select %p189, %s19, 0
      %s191 = smul.addr %s190, 4
      %s192 = scalar_lea.vmem %s2, %s191
      %p193 = pneg %p99
      %p194 = pneg %p96
      %p195 = pneg %p127
      %p196 = pneg %p124
      %s197 = smul.u32 72, %s18
      %p198 = scmp.lt.s32.totalorder %s197, 143
      %s199 = scalar_select %p198, %s197, 143
      %p200 = scmp.lt.s32.totalorder %s19, 0
      %s201 = scalar_select %p200, %s19, 0
      %s202 = sadd.s32 %s201, %s199
      %s203 = smul.addr %s202, 8
      %s204 = scalar_lea.vmem %s3, %s203
      %s205 = smul.u32 72, %s18
      %p206 = scmp.lt.s32.totalorder %s205, 143
      %s207 = scalar_select %p206, %s205, 143
      %s208 = smul.addr %s207, 8
      %s209 = scalar_lea.vmem %s0, %s208
      %s210 = smul.u32 72, %s18
      %p211 = scmp.lt.s32.totalorder %s19, 0
      %s212 = scalar_select %p211, %s19, 0
      %s213 = smul.addr %s212, 4
      %s214 = scalar_lea.vmem %s1, %s213
      %p215 = scmp.lt.s32.totalorder %s19, 0
      %s216 = scalar_select %p215, %s19, 0
      %s217 = smul.addr %s216, 4
      %s218 = scalar_lea.vmem %s2, %s217
      %s219 = smul.u32 72, %s18
      %p220 = scmp.lt.s32.totalorder %s219, 143
      %s221 = scalar_select %p220, %s219, 143
      %p222 = scmp.lt.s32.totalorder %s19, 0
      %s223 = scalar_select %p222, %s19, 0
      %s224 = sadd.s32 %s223, %s221
      %s225 = smul.addr %s224, 8
      %s226 = scalar_lea.vmem %s3, %s225
      %s227 = smul.u32 72, %s18
      %v229 = vld [vmem:[%s209] sm:$0xff]
      %v230 = vld [vmem:[%s209 + $0x8] sm:$0xff]
      %v231 = vld [vmem:[%s209 + $0x10] sm:$0xff]
      %v232 = vld [vmem:[%s209 + $0x18] sm:$0xff]
      %v233 = vld [vmem:[%s209 + $0x20] sm:$0xff]
      %v234 = vld [vmem:[%s209 + $0x28] sm:$0xff]
      %v235 = vld [vmem:[%s209 + $0x30] sm:$0xff]
      %v236 = vld [vmem:[%s209 + $0x38] sm:$0xff]
      %v237 = vld [vmem:[%s209 + $0x40] sm:$0xff]
      %v238 = vld [vmem:[%s209 + $0x48] sm:$0xff]
      %v239 = vld [vmem:[%s209 + $0x50] sm:$0xff]
      %v240 = vld [vmem:[%s209 + $0x58] sm:$0xff]
      %v241 = vld [vmem:[%s209 + $0x60] sm:$0xff]
      %v242 = vld [vmem:[%s209 + $0x68] sm:$0xff]
      %v243 = vld [vmem:[%s209 + $0x70] sm:$0xff]
      %v244 = vld [vmem:[%s209 + $0x78] sm:$0xff]
      %v245 = vld [vmem:[%s209 + $0x80] sm:$0xff]
      %v246 = vld [vmem:[%s209 + $0x88] sm:$0xff]
      %v247 = vld [vmem:[%s209 + $0x90] sm:$0xff]
      %v248 = vld [vmem:[%s209 + $0x98] sm:$0xff]
      %v249 = vld [vmem:[%s209 + $0xa0] sm:$0xff]
      %v250 = vld [vmem:[%s209 + $0xa8] sm:$0xff]
      %v251 = vld [vmem:[%s209 + $0xb0] sm:$0xff]
      %v252 = vld [vmem:[%s209 + $0xb8] sm:$0xff]
      %v253 = vld [vmem:[%s209 + $0xc0] sm:$0xff]
      %v254 = vld [vmem:[%s209 + $0xc8] sm:$0xff]
      %v255 = vld [vmem:[%s209 + $0xd0] sm:$0xff]
      %v256 = vld [vmem:[%s209 + $0xd8] sm:$0xff]
      %v257 = vld [vmem:[%s209 + $0xe0] sm:$0xff]
      %v258 = vld [vmem:[%s209 + $0xe8] sm:$0xff]
      %v259 = vld [vmem:[%s209 + $0xf0] sm:$0xff]
      %v260 = vld [vmem:[%s209 + $0xf8] sm:$0xff]
      %v261 = vld [vmem:[%s209 + $0x100] sm:$0xff]
      %v262 = vld [vmem:[%s209 + $0x108] sm:$0xff]
      %v263 = vld [vmem:[%s209 + $0x110] sm:$0xff]
      %v264 = vld [vmem:[%s209 + $0x118] sm:$0xff]
      %v265 = vld [vmem:[%s209 + $0x120] sm:$0xff]
      %v266 = vld [vmem:[%s209 + $0x128] sm:$0xff]
      %v267 = vld [vmem:[%s209 + $0x130] sm:$0xff]
      %v268 = vld [vmem:[%s209 + $0x138] sm:$0xff]
      %v269 = vld [vmem:[%s209 + $0x140] sm:$0xff]
      %v270 = vld [vmem:[%s209 + $0x148] sm:$0xff]
      %v271 = vld [vmem:[%s209 + $0x150] sm:$0xff]
      %v272 = vld [vmem:[%s209 + $0x158] sm:$0xff]
      %v273 = vld [vmem:[%s209 + $0x160] sm:$0xff]
      %v274 = vld [vmem:[%s209 + $0x168] sm:$0xff]
      %v275 = vld [vmem:[%s209 + $0x170] sm:$0xff]
      %v276 = vld [vmem:[%s209 + $0x178] sm:$0xff]
      %v277 = vld [vmem:[%s209 + $0x180] sm:$0xff]
      %v278 = vld [vmem:[%s209 + $0x188] sm:$0xff]
      %v279 = vld [vmem:[%s209 + $0x190] sm:$0xff]
      %v280 = vld [vmem:[%s209 + $0x198] sm:$0xff]
      %v281 = vld [vmem:[%s209 + $0x1a0] sm:$0xff]
      %v282 = vld [vmem:[%s209 + $0x1a8] sm:$0xff]
      %v283 = vld [vmem:[%s209 + $0x1b0] sm:$0xff]
      %v284 = vld [vmem:[%s209 + $0x1b8] sm:$0xff]
      %v285 = vld [vmem:[%s209 + $0x1c0] sm:$0xff]
      %v286 = vld [vmem:[%s209 + $0x1c8] sm:$0xff]
      %v287 = vld [vmem:[%s209 + $0x1d0] sm:$0xff]
      %v288 = vld [vmem:[%s209 + $0x1d8] sm:$0xff]
      %v289 = vld [vmem:[%s209 + $0x1e0] sm:$0xff]
      %v290 = vld [vmem:[%s209 + $0x1e8] sm:$0xff]
      %v291 = vld [vmem:[%s209 + $0x1f0] sm:$0xff]
      %v292 = vld [vmem:[%s209 + $0x1f8] sm:$0xff]
      %v293 = vld [vmem:[%s209 + $0x200] sm:$0xff]
      %v294 = vld [vmem:[%s209 + $0x208] sm:$0xff]
      %v295 = vld [vmem:[%s209 + $0x210] sm:$0xff]
      %v296 = vld [vmem:[%s209 + $0x218] sm:$0xff]
      %v297 = vld [vmem:[%s209 + $0x220] sm:$0xff]
      %v298 = vld [vmem:[%s209 + $0x228] sm:$0xff]
      %v299 = vld [vmem:[%s209 + $0x230] sm:$0xff]
      %v300 = vld [vmem:[%s209 + $0x238] sm:$0xff]
      %v301 = vpack.c.bf16 %v230, %v229
      %v302 = vpack.c.bf16 %v232, %v231
      %v303 = vpack.c.bf16 %v234, %v233
      %v304 = vpack.c.bf16 %v236, %v235
      %v305 = vpack.c.bf16 %v238, %v237
      %v306 = vpack.c.bf16 %v240, %v239
      %v307 = vpack.c.bf16 %v242, %v241
      %v308 = vpack.c.bf16 %v244, %v243
      %v309 = vpack.c.bf16 %v246, %v245
      %v310 = vpack.c.bf16 %v248, %v247
      %v311 = vpack.c.bf16 %v250, %v249
      %v312 = vpack.c.bf16 %v252, %v251
      %v313 = vpack.c.bf16 %v254, %v253
      %v314 = vpack.c.bf16 %v256, %v255
      %v315 = vpack.c.bf16 %v258, %v257
      %v316 = vpack.c.bf16 %v260, %v259
      %v317 = vpack.c.bf16 %v262, %v261
      %v318 = vpack.c.bf16 %v264, %v263
      %v319 = vpack.c.bf16 %v266, %v265
      %v320 = vpack.c.bf16 %v268, %v267
      %v321 = vpack.c.bf16 %v270, %v269
      %v322 = vpack.c.bf16 %v272, %v271
      %v323 = vpack.c.bf16 %v274, %v273
      %v324 = vpack.c.bf16 %v276, %v275
      %v325 = vpack.c.bf16 %v278, %v277
      %v326 = vpack.c.bf16 %v280, %v279
      %v327 = vpack.c.bf16 %v282, %v281
      %v328 = vpack.c.bf16 %v284, %v283
      %v329 = vpack.c.bf16 %v286, %v285
      %v330 = vpack.c.bf16 %v288, %v287
      %v331 = vpack.c.bf16 %v290, %v289
      %v332 = vpack.c.bf16 %v292, %v291
      %v333 = vpack.c.bf16 %v294, %v293
      %v334 = vpack.c.bf16 %v296, %v295
      %v335 = vpack.c.bf16 %v298, %v297
      %v336 = vpack.c.bf16 %v300, %v299
      %v337 = vld [vmem:[%s214] sm:$0xf]
      %v338 = vld [vmem:[%s214 + $0x4] sm:$0xf]
      %v339 = vld [vmem:[%s214 + $0x8] sm:$0xf]
      %v340 = vld [vmem:[%s214 + $0xc] sm:$0xf]
      %v341 = vld [vmem:[%s214 + $0x10] sm:$0xf]
      %v342 = vld [vmem:[%s214 + $0x14] sm:$0xf]
      %v343 = vld [vmem:[%s214 + $0x18] sm:$0xf]
      %v344 = vld [vmem:[%s214 + $0x1c] sm:$0xf]
      %v345 = vld [vmem:[%s214 + $0x20] sm:$0xf]
      %v346 = vld [vmem:[%s214 + $0x24] sm:$0xf]
      %v347 = vld [vmem:[%s214 + $0x28] sm:$0xf]
      %v348 = vld [vmem:[%s214 + $0x2c] sm:$0xf]
      %v349 = vld [vmem:[%s214 + $0x30] sm:$0xf]
      %v350 = vld [vmem:[%s214 + $0x34] sm:$0xf]
      %v351 = vld [vmem:[%s214 + $0x38] sm:$0xf]
      %v352 = vld [vmem:[%s214 + $0x3c] sm:$0xf]
      %v353 = vld [vmem:[%s218] sm:$0x7]
      %v354 = vlaneseq
      %v355 = vshrl.u32 %v354, 7
      %v356 = vsub.s32 0, %v355
      %v357 = vrot.slane %v353, %v356
      %v374 = vunpack.c.l.b16 %v337
      %v375 = vunpack.c.l.b16 %v338
      %v376 = vunpack.c.l.b16 %v339
      %v377 = vunpack.c.l.b16 %v340
      %v378 = vunpack.c.l.b16 %v341
      %v379 = vunpack.c.l.b16 %v342
      %v380 = vunpack.c.l.b16 %v343
      %v381 = vunpack.c.l.b16 %v344
      %v382 = vunpack.c.l.b16 %v345
      %v383 = vunpack.c.l.b16 %v346
      %v384 = vunpack.c.l.b16 %v347
      %v385 = vunpack.c.l.b16 %v348
      %v386 = vunpack.c.l.b16 %v349
      %v387 = vunpack.c.l.b16 %v350
      %v388 = vunpack.c.l.b16 %v351
      %v389 = vunpack.c.l.b16 %v352
      %v390 = vpack.c.b16 %v375, %v374
      %v391 = vpack.c.b16 %v377, %v376
      %v392 = vpack.c.b16 %v379, %v378
      %v393 = vpack.c.b16 %v381, %v380
      %v394 = vpack.c.b16 %v383, %v382
      %v395 = vpack.c.b16 %v385, %v384
      %v396 = vpack.c.b16 %v387, %v386
      %v397 = vpack.c.b16 %v389, %v388
      %406 = vmatprep.subr.bf16.mxu0 0
      %407 = vmatpush1.bf16.msra.mxu0 %v397
      %408 = vmatprep.subr.bf16.mxu0 0
      %409 = vmatpush1.bf16.msra.mxu0 %v396
      %410 = vmatprep.subr.bf16.mxu0 0
      %411 = vmatpush1.bf16.msra.mxu0 %v395
      %412 = vmatprep.subr.bf16.mxu0 0
      %413 = vmatpush1.bf16.msra.mxu0 %v394
      %414 = vmatprep.subr.bf16.mxu0 0
      %415 = vmatpush1.bf16.msra.mxu0 %v393
      %416 = vmatprep.subr.bf16.mxu0 0
      %417 = vmatpush1.bf16.msra.mxu0 %v392
      %418 = vmatprep.subr.bf16.mxu0 0
      %419 = vmatpush1.bf16.msra.mxu0 %v391
      %420 = vmatprep.subr.bf16.mxu0 0
      %421 = vmatpush1.bf16.msra.mxu0 %v390
      %422 = vmatprep.subr.bf16.mxu0 0
      %423 = vmatpush2.bf16.msra.mxu0 0
      %424 = vmatprep.subr.bf16.mxu0 0
      %425 = vmatpush2.bf16.msra.mxu0 0
      %426 = vmatprep.subr.bf16.mxu0 0
      %427 = vmatpush2.bf16.msra.mxu0 0
      %428 = vmatprep.subr.bf16.mxu0 0
      %429 = vmatpush2.bf16.msra.mxu0 0
      %430 = vmatprep.subr.bf16.mxu0 0
      %431 = vmatpush2.bf16.msra.mxu0 0
      %432 = vmatprep.subr.bf16.mxu0 0
      %433 = vmatpush2.bf16.msra.mxu0 0
      %434 = vmatprep.subr.bf16.mxu0 0
      %435 = vmatpush2.bf16.msra.mxu0 0
      %436 = vmatprep.subr.bf16.mxu0 0
      %437 = vmatpush2.bf16.msra.mxu0 0
      %438 = vmatprep.mubr.bf16.mxu0 0
      %439 = vmatmul.mubr.bf16.gmra.mxu0 %v301
      %v440 = vpop.f32.mrf.mxu0
      %v441 = vadd.f32 %v357, %v440
      %v442 = vpop.f32.mrf.mxu0
      %v443 = vpop.f32.mrf.mxu0
      %v444 = vadd.f32 %v357, %v443
      %v445 = vpop.f32.mrf.mxu0
      %446 = vmatprep.mubr.bf16.mxu0 0
      %447 = vmatmul.mubr.bf16.gmra.mxu0 %v302
      %v448 = vpop.f32.mrf.mxu0
      %v449 = vadd.f32 %v357, %v448
      %v450 = vpop.f32.mrf.mxu0
      %v451 = vpop.f32.mrf.mxu0
      %v452 = vadd.f32 %v357, %v451
      %v453 = vpop.f32.mrf.mxu0
      %454 = vmatprep.mubr.bf16.mxu0 0
      %455 = vmatmul.mubr.bf16.gmra.mxu0 %v303
      %v456 = vpop.f32.mrf.mxu0
      %v457 = vadd.f32 %v357, %v456
      %v458 = vpop.f32.mrf.mxu0
      %v459 = vpop.f32.mrf.mxu0
      %v460 = vadd.f32 %v357, %v459
      %v461 = vpop.f32.mrf.mxu0
      %462 = vmatprep.mubr.bf16.mxu0 0
      %463 = vmatmul.mubr.bf16.gmra.mxu0 %v304
      %v464 = vpop.f32.mrf.mxu0
      %v465 = vadd.f32 %v357, %v464
      %v466 = vpop.f32.mrf.mxu0
      %v467 = vpop.f32.mrf.mxu0
      %v468 = vadd.f32 %v357, %v467
      %v469 = vpop.f32.mrf.mxu0
      %470 = vmatprep.mubr.bf16.mxu0 0
      %471 = vmatmul.mubr.bf16.gmra.mxu0 %v305
      %v472 = vpop.f32.mrf.mxu0
      %v473 = vadd.f32 %v357, %v472
      %v474 = vpop.f32.mrf.mxu0
      %v475 = vpop.f32.mrf.mxu0
      %v476 = vadd.f32 %v357, %v475
      %v477 = vpop.f32.mrf.mxu0
      %478 = vmatprep.mubr.bf16.mxu0 0
      %479 = vmatmul.mubr.bf16.gmra.mxu0 %v306
      %v480 = vpop.f32.mrf.mxu0
      %v481 = vadd.f32 %v357, %v480
      %v482 = vpop.f32.mrf.mxu0
      %v483 = vpop.f32.mrf.mxu0
      %v484 = vadd.f32 %v357, %v483
      %v485 = vpop.f32.mrf.mxu0
      %486 = vmatprep.mubr.bf16.mxu0 0
      %487 = vmatmul.mubr.bf16.gmra.mxu0 %v307
      %v488 = vpop.f32.mrf.mxu0
      %v489 = vadd.f32 %v357, %v488
      %v490 = vpop.f32.mrf.mxu0
      %v491 = vpop.f32.mrf.mxu0
      %v492 = vadd.f32 %v357, %v491
      %v493 = vpop.f32.mrf.mxu0
      %494 = vmatprep.mubr.bf16.mxu0 0
      %495 = vmatmul.mubr.bf16.gmra.mxu0 %v308
      %v496 = vpop.f32.mrf.mxu0
      %v497 = vadd.f32 %v357, %v496
      %v498 = vpop.f32.mrf.mxu0
      %v499 = vpop.f32.mrf.mxu0
      %v500 = vadd.f32 %v357, %v499
      %v501 = vpop.f32.mrf.mxu0
      %502 = vmatprep.mubr.bf16.mxu0 0
      %503 = vmatmul.mubr.bf16.gmra.mxu0 %v309
      %v504 = vpop.f32.mrf.mxu0
      %v505 = vadd.f32 %v357, %v504
      %v506 = vpop.f32.mrf.mxu0
      %v507 = vpop.f32.mrf.mxu0
      %v508 = vadd.f32 %v357, %v507
      %v509 = vpop.f32.mrf.mxu0
      %510 = vmatprep.mubr.bf16.mxu0 0
      %511 = vmatmul.mubr.bf16.gmra.mxu0 %v310
      %v512 = vpop.f32.mrf.mxu0
      %v513 = vadd.f32 %v357, %v512
      %v514 = vpop.f32.mrf.mxu0
      %v515 = vpop.f32.mrf.mxu0
      %v516 = vadd.f32 %v357, %v515
      %v517 = vpop.f32.mrf.mxu0
      %518 = vmatprep.mubr.bf16.mxu0 0
      %519 = vmatmul.mubr.bf16.gmra.mxu0 %v311
      %v520 = vpop.f32.mrf.mxu0
      %v521 = vadd.f32 %v357, %v520
      %v522 = vpop.f32.mrf.mxu0
      %v523 = vpop.f32.mrf.mxu0
      %v524 = vadd.f32 %v357, %v523
      %v525 = vpop.f32.mrf.mxu0
      %526 = vmatprep.mubr.bf16.mxu0 0
      %527 = vmatmul.mubr.bf16.gmra.mxu0 %v312
      %v528 = vpop.f32.mrf.mxu0
      %v529 = vadd.f32 %v357, %v528
      %v530 = vpop.f32.mrf.mxu0
      %v531 = vpop.f32.mrf.mxu0
      %v532 = vadd.f32 %v357, %v531
      %v533 = vpop.f32.mrf.mxu0
      %534 = vmatprep.mubr.bf16.mxu0 0
      %535 = vmatmul.mubr.bf16.gmra.mxu0 %v313
      %v536 = vpop.f32.mrf.mxu0
      %v537 = vadd.f32 %v357, %v536
      %v538 = vpop.f32.mrf.mxu0
      %v539 = vpop.f32.mrf.mxu0
      %v540 = vadd.f32 %v357, %v539
      %v541 = vpop.f32.mrf.mxu0
      %542 = vmatprep.mubr.bf16.mxu0 0
      %543 = vmatmul.mubr.bf16.gmra.mxu0 %v314
      %v544 = vpop.f32.mrf.mxu0
      %v545 = vadd.f32 %v357, %v544
      %v546 = vpop.f32.mrf.mxu0
      %v547 = vpop.f32.mrf.mxu0
      %v548 = vadd.f32 %v357, %v547
      %v549 = vpop.f32.mrf.mxu0
      %550 = vmatprep.mubr.bf16.mxu0 0
      %551 = vmatmul.mubr.bf16.gmra.mxu0 %v315
      %v552 = vpop.f32.mrf.mxu0
      %v553 = vadd.f32 %v357, %v552
      %v554 = vpop.f32.mrf.mxu0
      %v555 = vpop.f32.mrf.mxu0
      %v556 = vadd.f32 %v357, %v555
      %v557 = vpop.f32.mrf.mxu0
      %558 = vmatprep.mubr.bf16.mxu0 0
      %559 = vmatmul.mubr.bf16.gmra.mxu0 %v316
      %v560 = vpop.f32.mrf.mxu0
      %v561 = vadd.f32 %v357, %v560
      %v562 = vpop.f32.mrf.mxu0
      %v563 = vpop.f32.mrf.mxu0
      %v564 = vadd.f32 %v357, %v563
      %v565 = vpop.f32.mrf.mxu0
      %566 = vmatprep.mubr.bf16.mxu0 0
      %567 = vmatmul.mubr.bf16.gmra.mxu0 %v317
      %v568 = vpop.f32.mrf.mxu0
      %v569 = vadd.f32 %v357, %v568
      %v570 = vpop.f32.mrf.mxu0
      %v571 = vpop.f32.mrf.mxu0
      %v572 = vadd.f32 %v357, %v571
      %v573 = vpop.f32.mrf.mxu0
      %574 = vmatprep.mubr.bf16.mxu0 0
      %575 = vmatmul.mubr.bf16.gmra.mxu0 %v318
      %v576 = vpop.f32.mrf.mxu0
      %v577 = vadd.f32 %v357, %v576
      %v578 = vpop.f32.mrf.mxu0
      %v579 = vpop.f32.mrf.mxu0
      %v580 = vadd.f32 %v357, %v579
      %v581 = vpop.f32.mrf.mxu0
      %582 = vmatprep.mubr.bf16.mxu0 0
      %583 = vmatmul.mubr.bf16.gmra.mxu0 %v319
      %v584 = vpop.f32.mrf.mxu0
      %v585 = vadd.f32 %v357, %v584
      %v586 = vpop.f32.mrf.mxu0
      %v587 = vpop.f32.mrf.mxu0
      %v588 = vadd.f32 %v357, %v587
      %v589 = vpop.f32.mrf.mxu0
      %590 = vmatprep.mubr.bf16.mxu0 0
      %591 = vmatmul.mubr.bf16.gmra.mxu0 %v320
      %v592 = vpop.f32.mrf.mxu0
      %v593 = vadd.f32 %v357, %v592
      %v594 = vpop.f32.mrf.mxu0
      %v595 = vpop.f32.mrf.mxu0
      %v596 = vadd.f32 %v357, %v595
      %v597 = vpop.f32.mrf.mxu0
      %598 = vmatprep.mubr.bf16.mxu0 0
      %599 = vmatmul.mubr.bf16.gmra.mxu0 %v321
      %v600 = vpop.f32.mrf.mxu0
      %v601 = vadd.f32 %v357, %v600
      %v602 = vpop.f32.mrf.mxu0
      %v603 = vpop.f32.mrf.mxu0
      %v604 = vadd.f32 %v357, %v603
      %v605 = vpop.f32.mrf.mxu0
      %606 = vmatprep.mubr.bf16.mxu0 0
      %607 = vmatmul.mubr.bf16.gmra.mxu0 %v322
      %v608 = vpop.f32.mrf.mxu0
      %v609 = vadd.f32 %v357, %v608
      %v610 = vpop.f32.mrf.mxu0
      %v611 = vpop.f32.mrf.mxu0
      %v612 = vadd.f32 %v357, %v611
      %v613 = vpop.f32.mrf.mxu0
      %614 = vmatprep.mubr.bf16.mxu0 0
      %615 = vmatmul.mubr.bf16.gmra.mxu0 %v323
      %v616 = vpop.f32.mrf.mxu0
      %v617 = vadd.f32 %v357, %v616
      %v618 = vpop.f32.mrf.mxu0
      %v619 = vpop.f32.mrf.mxu0
      %v620 = vadd.f32 %v357, %v619
      %v621 = vpop.f32.mrf.mxu0
      %622 = vmatprep.mubr.bf16.mxu0 0
      %623 = vmatmul.mubr.bf16.gmra.mxu0 %v324
      %v624 = vpop.f32.mrf.mxu0
      %v625 = vadd.f32 %v357, %v624
      %v626 = vpop.f32.mrf.mxu0
      %v627 = vpop.f32.mrf.mxu0
      %v628 = vadd.f32 %v357, %v627
      %v629 = vpop.f32.mrf.mxu0
      %630 = vmatprep.mubr.bf16.mxu0 0
      %631 = vmatmul.mubr.bf16.gmra.mxu0 %v325
      %v632 = vpop.f32.mrf.mxu0
      %v633 = vadd.f32 %v357, %v632
      %v634 = vpop.f32.mrf.mxu0
      %v635 = vpop.f32.mrf.mxu0
      %v636 = vadd.f32 %v357, %v635
      %v637 = vpop.f32.mrf.mxu0
      %638 = vmatprep.mubr.bf16.mxu0 0
      %639 = vmatmul.mubr.bf16.gmra.mxu0 %v326
      %v640 = vpop.f32.mrf.mxu0
      %v641 = vadd.f32 %v357, %v640
      %v642 = vpop.f32.mrf.mxu0
      %v643 = vpop.f32.mrf.mxu0
      %v644 = vadd.f32 %v357, %v643
      %v645 = vpop.f32.mrf.mxu0
      %646 = vmatprep.mubr.bf16.mxu0 0
      %647 = vmatmul.mubr.bf16.gmra.mxu0 %v327
      %v648 = vpop.f32.mrf.mxu0
      %v649 = vadd.f32 %v357, %v648
      %v650 = vpop.f32.mrf.mxu0
      %v651 = vpop.f32.mrf.mxu0
      %v652 = vadd.f32 %v357, %v651
      %v653 = vpop.f32.mrf.mxu0
      %654 = vmatprep.mubr.bf16.mxu0 0
      %655 = vmatmul.mubr.bf16.gmra.mxu0 %v328
      %v656 = vpop.f32.mrf.mxu0
      %v657 = vadd.f32 %v357, %v656
      %v658 = vpop.f32.mrf.mxu0
      %v659 = vpop.f32.mrf.mxu0
      %v660 = vadd.f32 %v357, %v659
      %v661 = vpop.f32.mrf.mxu0
      %662 = vmatprep.mubr.bf16.mxu0 0
      %663 = vmatmul.mubr.bf16.gmra.mxu0 %v329
      %v664 = vpop.f32.mrf.mxu0
      %v665 = vadd.f32 %v357, %v664
      %v666 = vpop.f32.mrf.mxu0
      %v667 = vpop.f32.mrf.mxu0
      %v668 = vadd.f32 %v357, %v667
      %v669 = vpop.f32.mrf.mxu0
      %670 = vmatprep.mubr.bf16.mxu0 0
      %671 = vmatmul.mubr.bf16.gmra.mxu0 %v330
      %v672 = vpop.f32.mrf.mxu0
      %v673 = vadd.f32 %v357, %v672
      %v674 = vpop.f32.mrf.mxu0
      %v675 = vpop.f32.mrf.mxu0
      %v676 = vadd.f32 %v357, %v675
      %v677 = vpop.f32.mrf.mxu0
      %678 = vmatprep.mubr.bf16.mxu0 0
      %679 = vmatmul.mubr.bf16.gmra.mxu0 %v331
      %v680 = vpop.f32.mrf.mxu0
      %v681 = vadd.f32 %v357, %v680
      %v682 = vpop.f32.mrf.mxu0
      %v683 = vpop.f32.mrf.mxu0
      %v684 = vadd.f32 %v357, %v683
      %v685 = vpop.f32.mrf.mxu0
      %686 = vmatprep.mubr.bf16.mxu0 0
      %687 = vmatmul.mubr.bf16.gmra.mxu0 %v332
      %v688 = vpop.f32.mrf.mxu0
      %v689 = vadd.f32 %v357, %v688
      %v690 = vpop.f32.mrf.mxu0
      %v691 = vpop.f32.mrf.mxu0
      %v692 = vadd.f32 %v357, %v691
      %v693 = vpop.f32.mrf.mxu0
      %694 = vmatprep.mubr.bf16.mxu0 0
      %695 = vmatmul.mubr.bf16.gmra.mxu0 %v333
      %v696 = vpop.f32.mrf.mxu0
      %v697 = vadd.f32 %v357, %v696
      %v698 = vpop.f32.mrf.mxu0
      %v699 = vpop.f32.mrf.mxu0
      %v700 = vadd.f32 %v357, %v699
      %v701 = vpop.f32.mrf.mxu0
      %702 = vmatprep.mubr.bf16.mxu0 0
      %703 = vmatmul.mubr.bf16.gmra.mxu0 %v334
      %v704 = vpop.f32.mrf.mxu0
      %v705 = vadd.f32 %v357, %v704
      %v706 = vpop.f32.mrf.mxu0
      %v707 = vpop.f32.mrf.mxu0
      %v708 = vadd.f32 %v357, %v707
      %v709 = vpop.f32.mrf.mxu0
      %710 = vmatprep.mubr.bf16.mxu0 0
      %711 = vmatmul.mubr.bf16.gmra.mxu0 %v335
      %v712 = vpop.f32.mrf.mxu0
      %v713 = vadd.f32 %v357, %v712
      %v714 = vpop.f32.mrf.mxu0
      %v715 = vpop.f32.mrf.mxu0
      %v716 = vadd.f32 %v357, %v715
      %v717 = vpop.f32.mrf.mxu0
      %718 = vmatprep.mubr.bf16.mxu0 0
      %719 = vmatmul.mubr.bf16.gmra.mxu0 %v336
      %v720 = vpop.f32.mrf.mxu0
      %v721 = vadd.f32 %v357, %v720
      %v722 = vpop.f32.mrf.mxu0
      %v723 = vpop.f32.mrf.mxu0
      %v724 = vadd.f32 %v357, %v723
      %v725 = vpop.f32.mrf.mxu0
      %726 = vdwg.mxu0
      %v727 = vmax.f32 %v441, 0.0
      %v728 = vmax.f32 %v444, 0.0
      %v729 = vmax.f32 %v449, 0.0
      %v730 = vmax.f32 %v452, 0.0
      %v731 = vmax.f32 %v457, 0.0
      %v732 = vmax.f32 %v460, 0.0
      %v733 = vmax.f32 %v465, 0.0
      %v734 = vmax.f32 %v468, 0.0
      %v735 = vmax.f32 %v473, 0.0
      %v736 = vmax.f32 %v476, 0.0
      %v737 = vmax.f32 %v481, 0.0
      %v738 = vmax.f32 %v484, 0.0
      %v739 = vmax.f32 %v489, 0.0
      %v740 = vmax.f32 %v492, 0.0
      %v741 = vmax.f32 %v497, 0.0
      %v742 = vmax.f32 %v500, 0.0
      %v743 = vmax.f32 %v505, 0.0
      %v744 = vmax.f32 %v508, 0.0
      %v745 = vmax.f32 %v513, 0.0
      %v746 = vmax.f32 %v516, 0.0
      %v747 = vmax.f32 %v521, 0.0
      %v748 = vmax.f32 %v524, 0.0
      %v749 = vmax.f32 %v529, 0.0
      %v750 = vmax.f32 %v532, 0.0
      %v751 = vmax.f32 %v537, 0.0
      %v752 = vmax.f32 %v540, 0.0
      %v753 = vmax.f32 %v545, 0.0
      %v754 = vmax.f32 %v548, 0.0
      %v755 = vmax.f32 %v553, 0.0
      %v756 = vmax.f32 %v556, 0.0
      %v757 = vmax.f32 %v561, 0.0
      %v758 = vmax.f32 %v564, 0.0
      %v759 = vmax.f32 %v569, 0.0
      %v760 = vmax.f32 %v572, 0.0
      %v761 = vmax.f32 %v577, 0.0
      %v762 = vmax.f32 %v580, 0.0
      %v763 = vmax.f32 %v585, 0.0
      %v764 = vmax.f32 %v588, 0.0
      %v765 = vmax.f32 %v593, 0.0
      %v766 = vmax.f32 %v596, 0.0
      %v767 = vmax.f32 %v601, 0.0
      %v768 = vmax.f32 %v604, 0.0
      %v769 = vmax.f32 %v609, 0.0
      %v770 = vmax.f32 %v612, 0.0
      %v771 = vmax.f32 %v617, 0.0
      %v772 = vmax.f32 %v620, 0.0
      %v773 = vmax.f32 %v625, 0.0
      %v774 = vmax.f32 %v628, 0.0
      %v775 = vmax.f32 %v633, 0.0
      %v776 = vmax.f32 %v636, 0.0
      %v777 = vmax.f32 %v641, 0.0
      %v778 = vmax.f32 %v644, 0.0
      %v779 = vmax.f32 %v649, 0.0
      %v780 = vmax.f32 %v652, 0.0
      %v781 = vmax.f32 %v657, 0.0
      %v782 = vmax.f32 %v660, 0.0
      %v783 = vmax.f32 %v665, 0.0
      %v784 = vmax.f32 %v668, 0.0
      %v785 = vmax.f32 %v673, 0.0
      %v786 = vmax.f32 %v676, 0.0
      %v787 = vmax.f32 %v681, 0.0
      %v788 = vmax.f32 %v684, 0.0
      %v789 = vmax.f32 %v689, 0.0
      %v790 = vmax.f32 %v692, 0.0
      %v791 = vmax.f32 %v697, 0.0
      %v792 = vmax.f32 %v700, 0.0
      %v793 = vmax.f32 %v705, 0.0
      %v794 = vmax.f32 %v708, 0.0
      %v795 = vmax.f32 %v713, 0.0
      %v796 = vmax.f32 %v716, 0.0
      %v797 = vmax.f32 %v721, 0.0
      %v798 = vmax.f32 %v724, 0.0
      %v799 = vlaneseq
      %v800 = vshrl.u32 %v799, 7
      %v801 = vsub.s32 1, %v800
      %v802 = vrot.slane %v353, %v801
      %v803 = vmul.f32 %v727, %v802
      %v804 = vmul.f32 %v728, %v802
      %v805 = vmul.f32 %v729, %v802
      %v806 = vmul.f32 %v730, %v802
      %v807 = vmul.f32 %v731, %v802
      %v808 = vmul.f32 %v732, %v802
      %v809 = vmul.f32 %v733, %v802
      %v810 = vmul.f32 %v734, %v802
      %v811 = vmul.f32 %v735, %v802
      %v812 = vmul.f32 %v736, %v802
      %v813 = vmul.f32 %v737, %v802
      %v814 = vmul.f32 %v738, %v802
      %v815 = vmul.f32 %v739, %v802
      %v816 = vmul.f32 %v740, %v802
      %v817 = vmul.f32 %v741, %v802
      %v818 = vmul.f32 %v742, %v802
      %v819 = vmul.f32 %v743, %v802
      %v820 = vmul.f32 %v744, %v802
      %v821 = vmul.f32 %v745, %v802
      %v822 = vmul.f32 %v746, %v802
      %v823 = vmul.f32 %v747, %v802
      %v824 = vmul.f32 %v748, %v802
      %v825 = vmul.f32 %v749, %v802
      %v826 = vmul.f32 %v750, %v802
      %v827 = vmul.f32 %v751, %v802
      %v828 = vmul.f32 %v752, %v802
      %v829 = vmul.f32 %v753, %v802
      %v830 = vmul.f32 %v754, %v802
      %v831 = vmul.f32 %v755, %v802
      %v832 = vmul.f32 %v756, %v802
      %v833 = vmul.f32 %v757, %v802
      %v834 = vmul.f32 %v758, %v802
      %v835 = vmul.f32 %v759, %v802
      %v836 = vmul.f32 %v760, %v802
      %v837 = vmul.f32 %v761, %v802
      %v838 = vmul.f32 %v762, %v802
      %v839 = vmul.f32 %v763, %v802
      %v840 = vmul.f32 %v764, %v802
      %v841 = vmul.f32 %v765, %v802
      %v842 = vmul.f32 %v766, %v802
      %v843 = vmul.f32 %v767, %v802
      %v844 = vmul.f32 %v768, %v802
      %v845 = vmul.f32 %v769, %v802
      %v846 = vmul.f32 %v770, %v802
      %v847 = vmul.f32 %v771, %v802
      %v848 = vmul.f32 %v772, %v802
      %v849 = vmul.f32 %v773, %v802
      %v850 = vmul.f32 %v774, %v802
      %v851 = vmul.f32 %v775, %v802
      %v852 = vmul.f32 %v776, %v802
      %v853 = vmul.f32 %v777, %v802
      %v854 = vmul.f32 %v778, %v802
      %v855 = vmul.f32 %v779, %v802
      %v856 = vmul.f32 %v780, %v802
      %v857 = vmul.f32 %v781, %v802
      %v858 = vmul.f32 %v782, %v802
      %v859 = vmul.f32 %v783, %v802
      %v860 = vmul.f32 %v784, %v802
      %v861 = vmul.f32 %v785, %v802
      %v862 = vmul.f32 %v786, %v802
      %v863 = vmul.f32 %v787, %v802
      %v864 = vmul.f32 %v788, %v802
      %v865 = vmul.f32 %v789, %v802
      %v866 = vmul.f32 %v790, %v802
      %v867 = vmul.f32 %v791, %v802
      %v868 = vmul.f32 %v792, %v802
      %v869 = vmul.f32 %v793, %v802
      %v870 = vmul.f32 %v794, %v802
      %v871 = vmul.f32 %v795, %v802
      %v872 = vmul.f32 %v796, %v802
      %v873 = vmul.f32 %v797, %v802
      %v874 = vmul.f32 %v798, %v802
      %v875 = vlaneseq
      %v876 = vshrl.u32 %v875, 7
      %v877 = vsub.s32 2, %v876
      %v878 = vrot.slane %v353, %v877
      %v879 = vadd.f32 %v803, %v878
      %v880 = vadd.f32 %v804, %v878
      %v881 = vadd.f32 %v805, %v878
      %v882 = vadd.f32 %v806, %v878
      %v883 = vadd.f32 %v807, %v878
      %v884 = vadd.f32 %v808, %v878
      %v885 = vadd.f32 %v809, %v878
      %v886 = vadd.f32 %v810, %v878
      %v887 = vadd.f32 %v811, %v878
      %v888 = vadd.f32 %v812, %v878
      %v889 = vadd.f32 %v813, %v878
      %v890 = vadd.f32 %v814, %v878
      %v891 = vadd.f32 %v815, %v878
      %v892 = vadd.f32 %v816, %v878
      %v893 = vadd.f32 %v817, %v878
      %v894 = vadd.f32 %v818, %v878
      %v895 = vadd.f32 %v819, %v878
      %v896 = vadd.f32 %v820, %v878
      %v897 = vadd.f32 %v821, %v878
      %v898 = vadd.f32 %v822, %v878
      %v899 = vadd.f32 %v823, %v878
      %v900 = vadd.f32 %v824, %v878
      %v901 = vadd.f32 %v825, %v878
      %v902 = vadd.f32 %v826, %v878
      %v903 = vadd.f32 %v827, %v878
      %v904 = vadd.f32 %v828, %v878
      %v905 = vadd.f32 %v829, %v878
      %v906 = vadd.f32 %v830, %v878
      %v907 = vadd.f32 %v831, %v878
      %v908 = vadd.f32 %v832, %v878
      %v909 = vadd.f32 %v833, %v878
      %v910 = vadd.f32 %v834, %v878
      %v911 = vadd.f32 %v835, %v878
      %v912 = vadd.f32 %v836, %v878
      %v913 = vadd.f32 %v837, %v878
      %v914 = vadd.f32 %v838, %v878
      %v915 = vadd.f32 %v839, %v878
      %v916 = vadd.f32 %v840, %v878
      %v917 = vadd.f32 %v841, %v878
      %v918 = vadd.f32 %v842, %v878
      %v919 = vadd.f32 %v843, %v878
      %v920 = vadd.f32 %v844, %v878
      %v921 = vadd.f32 %v845, %v878
      %v922 = vadd.f32 %v846, %v878
      %v923 = vadd.f32 %v847, %v878
      %v924 = vadd.f32 %v848, %v878
      %v925 = vadd.f32 %v849, %v878
      %v926 = vadd.f32 %v850, %v878
      %v927 = vadd.f32 %v851, %v878
      %v928 = vadd.f32 %v852, %v878
      %v929 = vadd.f32 %v853, %v878
      %v930 = vadd.f32 %v854, %v878
      %v931 = vadd.f32 %v855, %v878
      %v932 = vadd.f32 %v856, %v878
      %v933 = vadd.f32 %v857, %v878
      %v934 = vadd.f32 %v858, %v878
      %v935 = vadd.f32 %v859, %v878
      %v936 = vadd.f32 %v860, %v878
      %v937 = vadd.f32 %v861, %v878
      %v938 = vadd.f32 %v862, %v878
      %v939 = vadd.f32 %v863, %v878
      %v940 = vadd.f32 %v864, %v878
      %v941 = vadd.f32 %v865, %v878
      %v942 = vadd.f32 %v866, %v878
      %v943 = vadd.f32 %v867, %v878
      %v944 = vadd.f32 %v868, %v878
      %v945 = vadd.f32 %v869, %v878
      %v946 = vadd.f32 %v870, %v878
      %v947 = vadd.f32 %v871, %v878
      %v948 = vadd.f32 %v872, %v878
      %v949 = vadd.f32 %v873, %v878
      %v950 = vadd.f32 %v874, %v878
      %951 = vst [vmem:[%s226] sm:$0xff] %v879
      %952 = vst [vmem:[%s226 + $0x8] sm:$0xff] %v880
      %953 = vst [vmem:[%s226 + $0x10] sm:$0xff] %v881
      %954 = vst [vmem:[%s226 + $0x18] sm:$0xff] %v882
      %955 = vst [vmem:[%s226 + $0x20] sm:$0xff] %v883
      %956 = vst [vmem:[%s226 + $0x28] sm:$0xff] %v884
      %957 = vst [vmem:[%s226 + $0x30] sm:$0xff] %v885
      %958 = vst [vmem:[%s226 + $0x38] sm:$0xff] %v886
      %959 = vst [vmem:[%s226 + $0x40] sm:$0xff] %v887
      %960 = vst [vmem:[%s226 + $0x48] sm:$0xff] %v888
      %961 = vst [vmem:[%s226 + $0x50] sm:$0xff] %v889
      %962 = vst [vmem:[%s226 + $0x58] sm:$0xff] %v890
      %963 = vst [vmem:[%s226 + $0x60] sm:$0xff] %v891
      %964 = vst [vmem:[%s226 + $0x68] sm:$0xff] %v892
      %965 = vst [vmem:[%s226 + $0x70] sm:$0xff] %v893
      %966 = vst [vmem:[%s226 + $0x78] sm:$0xff] %v894
      %967 = vst [vmem:[%s226 + $0x80] sm:$0xff] %v895
      %968 = vst [vmem:[%s226 + $0x88] sm:$0xff] %v896
      %969 = vst [vmem:[%s226 + $0x90] sm:$0xff] %v897
      %970 = vst [vmem:[%s226 + $0x98] sm:$0xff] %v898
      %971 = vst [vmem:[%s226 + $0xa0] sm:$0xff] %v899
      %972 = vst [vmem:[%s226 + $0xa8] sm:$0xff] %v900
      %973 = vst [vmem:[%s226 + $0xb0] sm:$0xff] %v901
      %974 = vst [vmem:[%s226 + $0xb8] sm:$0xff] %v902
      %975 = vst [vmem:[%s226 + $0xc0] sm:$0xff] %v903
      %976 = vst [vmem:[%s226 + $0xc8] sm:$0xff] %v904
      %977 = vst [vmem:[%s226 + $0xd0] sm:$0xff] %v905
      %978 = vst [vmem:[%s226 + $0xd8] sm:$0xff] %v906
      %979 = vst [vmem:[%s226 + $0xe0] sm:$0xff] %v907
      %980 = vst [vmem:[%s226 + $0xe8] sm:$0xff] %v908
      %981 = vst [vmem:[%s226 + $0xf0] sm:$0xff] %v909
      %982 = vst [vmem:[%s226 + $0xf8] sm:$0xff] %v910
      %983 = vst [vmem:[%s226 + $0x100] sm:$0xff] %v911
      %984 = vst [vmem:[%s226 + $0x108] sm:$0xff] %v912
      %985 = vst [vmem:[%s226 + $0x110] sm:$0xff] %v913
      %986 = vst [vmem:[%s226 + $0x118] sm:$0xff] %v914
      %987 = vst [vmem:[%s226 + $0x120] sm:$0xff] %v915
      %988 = vst [vmem:[%s226 + $0x128] sm:$0xff] %v916
      %989 = vst [vmem:[%s226 + $0x130] sm:$0xff] %v917
      %990 = vst [vmem:[%s226 + $0x138] sm:$0xff] %v918
      %991 = vst [vmem:[%s226 + $0x140] sm:$0xff] %v919
      %992 = vst [vmem:[%s226 + $0x148] sm:$0xff] %v920
      %993 = vst [vmem:[%s226 + $0x150] sm:$0xff] %v921
      %994 = vst [vmem:[%s226 + $0x158] sm:$0xff] %v922
      %995 = vst [vmem:[%s226 + $0x160] sm:$0xff] %v923
      %996 = vst [vmem:[%s226 + $0x168] sm:$0xff] %v924
      %997 = vst [vmem:[%s226 + $0x170] sm:$0xff] %v925
      %998 = vst [vmem:[%s226 + $0x178] sm:$0xff] %v926
      %999 = vst [vmem:[%s226 + $0x180] sm:$0xff] %v927
      %1000 = vst [vmem:[%s226 + $0x188] sm:$0xff] %v928
      %1001 = vst [vmem:[%s226 + $0x190] sm:$0xff] %v929
      %1002 = vst [vmem:[%s226 + $0x198] sm:$0xff] %v930
      %1003 = vst [vmem:[%s226 + $0x1a0] sm:$0xff] %v931
      %1004 = vst [vmem:[%s226 + $0x1a8] sm:$0xff] %v932
      %1005 = vst [vmem:[%s226 + $0x1b0] sm:$0xff] %v933
      %1006 = vst [vmem:[%s226 + $0x1b8] sm:$0xff] %v934
      %1007 = vst [vmem:[%s226 + $0x1c0] sm:$0xff] %v935
      %1008 = vst [vmem:[%s226 + $0x1c8] sm:$0xff] %v936
      %1009 = vst [vmem:[%s226 + $0x1d0] sm:$0xff] %v937
      %1010 = vst [vmem:[%s226 + $0x1d8] sm:$0xff] %v938
      %1011 = vst [vmem:[%s226 + $0x1e0] sm:$0xff] %v939
      %1012 = vst [vmem:[%s226 + $0x1e8] sm:$0xff] %v940
      %1013 = vst [vmem:[%s226 + $0x1f0] sm:$0xff] %v941
      %1014 = vst [vmem:[%s226 + $0x1f8] sm:$0xff] %v942
      %1015 = vst [vmem:[%s226 + $0x200] sm:$0xff] %v943
      %1016 = vst [vmem:[%s226 + $0x208] sm:$0xff] %v944
      %1017 = vst [vmem:[%s226 + $0x210] sm:$0xff] %v945
      %1018 = vst [vmem:[%s226 + $0x218] sm:$0xff] %v946
      %1019 = vst [vmem:[%s226 + $0x220] sm:$0xff] %v947
      %1020 = vst [vmem:[%s226 + $0x228] sm:$0xff] %v948
      %1021 = vst [vmem:[%s226 + $0x230] sm:$0xff] %v949
      %1022 = vst [vmem:[%s226 + $0x238] sm:$0xff] %v950
      %s1023 = smul.u32 72, %s18
      %p1024 = scmp.lt.s32.totalorder %s1023, 143
      %s1025 = scalar_select %p1024, %s1023, 143
      %p1026 = scmp.lt.s32.totalorder %s19, 0
      %s1027 = scalar_select %p1026, %s19, 0
      %s1028 = sadd.s32 %s1027, %s1025
      %s1029 = smul.addr %s1028, 8
      %s1030 = scalar_lea.vmem %s3, %s1029
      // Predicated region
      $region33: #{fashioncnn4_forward.5} parent=31 // pred_check
        %p1031 = pneg %p124
      $region34: #{fashioncnn4_forward.5} parent=31 // pred_check_branch
        %1033 = sbr.rel (%p1031) target = $region36
      $region35: #{fashioncnn4_forward.5} parent=31 // pred_region
        %s1034 = smul.u32 72, %s18
      $region36: #{fashioncnn4_forward.5} parent=31 // pred_fallthru
        _
    $region32: #{fashioncnn4_forward.5} parent=5 // pred_fallthru
      _
    %p1035 = scmp.le.s32.totalorder 2, %s9
    // Predicated region
    $region37: #{fashioncnn4_forward.5} parent=5 // pred_check
      %p1036 = pneg %p1035
    $region38: #{fashioncnn4_forward.5} parent=5 // pred_check_branch
      %1038 = sbr.rel (%p1036) target = $region40
    $region39: #{fashioncnn4_forward.5} parent=5 // pred_region
      %s1039 = ssub.s32 %s9, 2
      // Predicated region
      $region41: #{fashioncnn4_forward.5} parent=39 // pred_check
        %p1040 = pneg %p130
      $region42: #{fashioncnn4_forward.5} parent=39 // pred_check_branch
        %1042 = sbr.rel (%p1040) target = $region44
      $region43: #{fashioncnn4_forward.5} parent=39 // pred_region
        %s1043 = smul.u32 72, %s20
        %p1044 = scmp.lt.s32.totalorder %s1043, 143
        %s1045 = scalar_select %p1044, %s1043, 143
        %p1046 = scmp.lt.s32.totalorder %s21, 0
        %s1047 = scalar_select %p1046, %s21, 0
        %s1048 = sadd.s32 %s1047, %s1045
        %s1049 = smul.addr %s1048, 8
        %s1050 = scalar_lea.vmem %s3, %s1049
      $region44: #{fashioncnn4_forward.5} parent=39 // pred_fallthru
        _
    $region40: #{fashioncnn4_forward.5} parent=5 // pred_fallthru
      _
  $region6: #{fashioncnn4_forward.5} parent=0 // loop_footer
    %s13 = sadd.s32 1, %s9
  $region7: #{fashioncnn4_forward.5} parent=0 // loop_footer_branch
    %8 = sbr.rel target = $region3
  $region8: #{fashioncnn4_forward.5} parent=0 // loop_exit
    _

// kernel: fashioncnn4_forward.7
$region0: #{fashioncnn4_forward.7}
  #allocation0 [shape = 'u32[]', space=smem, size = 0x4, offset = 0x4, fixed_abs, tag = 'smem constant byte address 0x4 - core index']
  #allocation1 [shape = 'u32[144,128]{1,0:T(1,128)}', space=vmem, size = 0x12000, scoped, tag = 'internal scratch']
  %s0 = inlined_call_operand.vmem [shape: f32[128,384], index: 0, kind: input, shape index: {}]
  %s1 = inlined_call_operand.vmem [shape: bf16[384,128], index: 1, kind: input, shape index: {}]
  %s2 = inlined_call_operand.vmem [shape: f32[3,128], index: 2, kind: input, shape index: {}]
  %s3 = inlined_call_operand.vmem [shape: f32[128,128], index: 3, kind: output, shape index: {}]
  %s4 = sld [smem:[#allocation0]]
  $region22: #{fashioncnn4_forward.7} parent=0
    _
  %s6 = ssub.s32 1, %s4
  %s7 = scalar_select 0, %s6, %s4
  // Predicated region
  $region2: #{fashioncnn4_forward.7} parent=0 // pred_check
    _
  $region3: #{fashioncnn4_forward.7} parent=0 // pred_check_branch
    %9 = sbr.rel (0) target = $region5
  $region4: #{fashioncnn4_forward.7} parent=0 // pred_region
    _
  $region5: #{fashioncnn4_forward.7} parent=0 // pred_fallthru
    _
  // Predicated region
  $region6: #{fashioncnn4_forward.7} parent=0 // pred_check
    _
  $region7: #{fashioncnn4_forward.7} parent=0 // pred_check_branch
    %11 = sbr.rel (0) target = $region9
  $region8: #{fashioncnn4_forward.7} parent=0 // pred_region
    _
  $region9: #{fashioncnn4_forward.7} parent=0 // pred_fallthru
    _
  // Predicated region
  $region10: #{fashioncnn4_forward.7} parent=0 // pred_check
    _
  $region11: #{fashioncnn4_forward.7} parent=0 // pred_check_branch
    %13 = sbr.rel (0) target = $region13
  $region12: #{fashioncnn4_forward.7} parent=0 // pred_region
    _
  $region13: #{fashioncnn4_forward.7} parent=0 // pred_fallthru
    _
  %v15 = vld [vmem:[%s0] sm:$0xff]
  %v16 = vld [vmem:[%s0 + $0x8] sm:$0xff]
  %v17 = vld [vmem:[%s0 + $0x10] sm:$0xff]
  %v18 = vld [vmem:[%s0 + $0x18] sm:$0xff]
  %v19 = vld [vmem:[%s0 + $0x20] sm:$0xff]
  %v20 = vld [vmem:[%s0 + $0x28] sm:$0xff]
  %v21 = vld [vmem:[%s0 + $0x30] sm:$0xff]
  %v22 = vld [vmem:[%s0 + $0x38] sm:$0xff]
  %v23 = vld [vmem:[%s0 + $0x40] sm:$0xff]
  %v24 = vld [vmem:[%s0 + $0x48] sm:$0xff]
  %v25 = vld [vmem:[%s0 + $0x50] sm:$0xff]
  %v26 = vld [vmem:[%s0 + $0x58] sm:$0xff]
  %v27 = vld [vmem:[%s0 + $0x60] sm:$0xff]
  %v28 = vld [vmem:[%s0 + $0x68] sm:$0xff]
  %v29 = vld [vmem:[%s0 + $0x70] sm:$0xff]
  %v30 = vld [vmem:[%s0 + $0x78] sm:$0xff]
  %v31 = vld [vmem:[%s0 + $0x80] sm:$0xff]
  %v32 = vld [vmem:[%s0 + $0x88] sm:$0xff]
  %v33 = vld [vmem:[%s0 + $0x90] sm:$0xff]
  %v34 = vld [vmem:[%s0 + $0x98] sm:$0xff]
  %v35 = vld [vmem:[%s0 + $0xa0] sm:$0xff]
  %v36 = vld [vmem:[%s0 + $0xa8] sm:$0xff]
  %v37 = vld [vmem:[%s0 + $0xb0] sm:$0xff]
  %v38 = vld [vmem:[%s0 + $0xb8] sm:$0xff]
  %v39 = vld [vmem:[%s0 + $0xc0] sm:$0xff]
  %v40 = vld [vmem:[%s0 + $0xc8] sm:$0xff]
  %v41 = vld [vmem:[%s0 + $0xd0] sm:$0xff]
  %v42 = vld [vmem:[%s0 + $0xd8] sm:$0xff]
  %v43 = vld [vmem:[%s0 + $0xe0] sm:$0xff]
  %v44 = vld [vmem:[%s0 + $0xe8] sm:$0xff]
  %v45 = vld [vmem:[%s0 + $0xf0] sm:$0xff]
  %v46 = vld [vmem:[%s0 + $0xf8] sm:$0xff]
  %v47 = vld [vmem:[%s0 + $0x100] sm:$0xff]
  %v48 = vld [vmem:[%s0 + $0x108] sm:$0xff]
  %v49 = vld [vmem:[%s0 + $0x110] sm:$0xff]
  %v50 = vld [vmem:[%s0 + $0x118] sm:$0xff]
  %v51 = vld [vmem:[%s0 + $0x120] sm:$0xff]
  %v52 = vld [vmem:[%s0 + $0x128] sm:$0xff]
  %v53 = vld [vmem:[%s0 + $0x130] sm:$0xff]
  %v54 = vld [vmem:[%s0 + $0x138] sm:$0xff]
  %v55 = vld [vmem:[%s0 + $0x140] sm:$0xff]
  %v56 = vld [vmem:[%s0 + $0x148] sm:$0xff]
  %v57 = vld [vmem:[%s0 + $0x150] sm:$0xff]
  %v58 = vld [vmem:[%s0 + $0x158] sm:$0xff]
  %v59 = vld [vmem:[%s0 + $0x160] sm:$0xff]
  %v60 = vld [vmem:[%s0 + $0x168] sm:$0xff]
  %v61 = vld [vmem:[%s0 + $0x170] sm:$0xff]
  %v62 = vld [vmem:[%s0 + $0x178] sm:$0xff]
  %v63 = vpack.c.bf16 %v18, %v15
  %v64 = vpack.c.bf16 %v19, %v16
  %v65 = vpack.c.bf16 %v20, %v17
  %v66 = vpack.c.bf16 %v24, %v21
  %v67 = vpack.c.bf16 %v25, %v22
  %v68 = vpack.c.bf16 %v26, %v23
  %v69 = vpack.c.bf16 %v30, %v27
  %v70 = vpack.c.bf16 %v31, %v28
  %v71 = vpack.c.bf16 %v32, %v29
  %v72 = vpack.c.bf16 %v36, %v33
  %v73 = vpack.c.bf16 %v37, %v34
  %v74 = vpack.c.bf16 %v38, %v35
  %v75 = vpack.c.bf16 %v42, %v39
  %v76 = vpack.c.bf16 %v43, %v40
  %v77 = vpack.c.bf16 %v44, %v41
  %v78 = vpack.c.bf16 %v48, %v45
  %v79 = vpack.c.bf16 %v49, %v46
  %v80 = vpack.c.bf16 %v50, %v47
  %v81 = vpack.c.bf16 %v54, %v51
  %v82 = vpack.c.bf16 %v55, %v52
  %v83 = vpack.c.bf16 %v56, %v53
  %v84 = vpack.c.bf16 %v60, %v57
  %v85 = vpack.c.bf16 %v61, %v58
  %v86 = vpack.c.bf16 %v62, %v59
  %v87 = vld [vmem:[%s1] sm:$0xf]
  %v88 = vld [vmem:[%s1 + $0x4] sm:$0xf]
  %v89 = vld [vmem:[%s1 + $0x8] sm:$0xf]
  %v90 = vld [vmem:[%s1 + $0xc] sm:$0xf]
  %v91 = vld [vmem:[%s1 + $0x10] sm:$0xf]
  %v92 = vld [vmem:[%s1 + $0x14] sm:$0xf]
  %v93 = vld [vmem:[%s1 + $0x18] sm:$0xf]
  %v94 = vld [vmem:[%s1 + $0x1c] sm:$0xf]
  %v95 = vld [vmem:[%s1 + $0x20] sm:$0xf]
  %v96 = vld [vmem:[%s1 + $0x24] sm:$0xf]
  %v97 = vld [vmem:[%s1 + $0x28] sm:$0xf]
  %v98 = vld [vmem:[%s1 + $0x2c] sm:$0xf]
  %v99 = vld [vmem:[%s1 + $0x30] sm:$0xf]
  %v100 = vld [vmem:[%s1 + $0x34] sm:$0xf]
  %v101 = vld [vmem:[%s1 + $0x38] sm:$0xf]
  %v102 = vld [vmem:[%s1 + $0x3c] sm:$0xf]
  %v103 = vld [vmem:[%s1 + $0x40] sm:$0xf]
  %v104 = vld [vmem:[%s1 + $0x44] sm:$0xf]
  %v105 = vld [vmem:[%s1 + $0x48] sm:$0xf]
  %v106 = vld [vmem:[%s1 + $0x4c] sm:$0xf]
  %v107 = vld [vmem:[%s1 + $0x50] sm:$0xf]
  %v108 = vld [vmem:[%s1 + $0x54] sm:$0xf]
  %v109 = vld [vmem:[%s1 + $0x58] sm:$0xf]
  %v110 = vld [vmem:[%s1 + $0x5c] sm:$0xf]
  %v111 = vld [vmem:[%s1 + $0x60] sm:$0xf]
  %v112 = vld [vmem:[%s1 + $0x64] sm:$0xf]
  %v113 = vld [vmem:[%s1 + $0x68] sm:$0xf]
  %v114 = vld [vmem:[%s1 + $0x6c] sm:$0xf]
  %v115 = vld [vmem:[%s1 + $0x70] sm:$0xf]
  %v116 = vld [vmem:[%s1 + $0x74] sm:$0xf]
  %v117 = vld [vmem:[%s1 + $0x78] sm:$0xf]
  %v118 = vld [vmem:[%s1 + $0x7c] sm:$0xf]
  %v119 = vld [vmem:[%s1 + $0x80] sm:$0xf]
  %v120 = vld [vmem:[%s1 + $0x84] sm:$0xf]
  %v121 = vld [vmem:[%s1 + $0x88] sm:$0xf]
  %v122 = vld [vmem:[%s1 + $0x8c] sm:$0xf]
  %v123 = vld [vmem:[%s1 + $0x90] sm:$0xf]
  %v124 = vld [vmem:[%s1 + $0x94] sm:$0xf]
  %v125 = vld [vmem:[%s1 + $0x98] sm:$0xf]
  %v126 = vld [vmem:[%s1 + $0x9c] sm:$0xf]
  %v127 = vld [vmem:[%s1 + $0xa0] sm:$0xf]
  %v128 = vld [vmem:[%s1 + $0xa4] sm:$0xf]
  %v129 = vld [vmem:[%s1 + $0xa8] sm:$0xf]
  %v130 = vld [vmem:[%s1 + $0xac] sm:$0xf]
  %v131 = vld [vmem:[%s1 + $0xb0] sm:$0xf]
  %v132 = vld [vmem:[%s1 + $0xb4] sm:$0xf]
  %v133 = vld [vmem:[%s1 + $0xb8] sm:$0xf]
  %v134 = vld [vmem:[%s1 + $0xbc] sm:$0xf]
  %v135 = vld [vmem:[%s2] sm:$0x7]
  %v136 = vlaneseq
  %v137 = vshrl.u32 %v136, 7
  %v138 = vsub.s32 0, %v137
  %v139 = vrot.slane %v135, %v138
  %v188 = vunpack.c.l.b16 %v87
  %v189 = vunpack.c.l.b16 %v88
  %v190 = vunpack.c.l.b16 %v89
  %v191 = vunpack.c.l.b16 %v90
  %v192 = vunpack.c.l.b16 %v91
  %v193 = vunpack.c.l.b16 %v92
  %v194 = vunpack.c.l.b16 %v93
  %v195 = vunpack.c.l.b16 %v94
  %v196 = vunpack.c.l.b16 %v95
  %v197 = vunpack.c.l.b16 %v96
  %v198 = vunpack.c.l.b16 %v97
  %v199 = vunpack.c.l.b16 %v98
  %v200 = vunpack.c.l.b16 %v99
  %v201 = vunpack.c.l.b16 %v100
  %v202 = vunpack.c.l.b16 %v101
  %v203 = vunpack.c.l.b16 %v102
  %v204 = vunpack.c.l.b16 %v103
  %v205 = vunpack.c.l.b16 %v104
  %v206 = vunpack.c.l.b16 %v105
  %v207 = vunpack.c.l.b16 %v106
  %v208 = vunpack.c.l.b16 %v107
  %v209 = vunpack.c.l.b16 %v108
  %v210 = vunpack.c.l.b16 %v109
  %v211 = vunpack.c.l.b16 %v110
  %v212 = vunpack.c.l.b16 %v111
  %v213 = vunpack.c.l.b16 %v112
  %v214 = vunpack.c.l.b16 %v113
  %v215 = vunpack.c.l.b16 %v114
  %v216 = vunpack.c.l.b16 %v115
  %v217 = vunpack.c.l.b16 %v116
  %v218 = vunpack.c.l.b16 %v117
  %v219 = vunpack.c.l.b16 %v118
  %v220 = vunpack.c.l.b16 %v119
  %v221 = vunpack.c.l.b16 %v120
  %v222 = vunpack.c.l.b16 %v121
  %v223 = vunpack.c.l.b16 %v122
  %v224 = vunpack.c.l.b16 %v123
  %v225 = vunpack.c.l.b16 %v124
  %v226 = vunpack.c.l.b16 %v125
  %v227 = vunpack.c.l.b16 %v126
  %v228 = vunpack.c.l.b16 %v127
  %v229 = vunpack.c.l.b16 %v128
  %v230 = vunpack.c.l.b16 %v129
  %v231 = vunpack.c.l.b16 %v130
  %v232 = vunpack.c.l.b16 %v131
  %v233 = vunpack.c.l.b16 %v132
  %v234 = vunpack.c.l.b16 %v133
  %v235 = vunpack.c.l.b16 %v134
  %v236 = vpack.c.b16 %v189, %v188
  %v237 = vpack.c.b16 %v191, %v190
  %v238 = vpack.c.b16 %v193, %v192
  %v239 = vpack.c.b16 %v195, %v194
  %v240 = vpack.c.b16 %v197, %v196
  %v241 = vpack.c.b16 %v199, %v198
  %v242 = vpack.c.b16 %v201, %v200
  %v243 = vpack.c.b16 %v203, %v202
  %v244 = vpack.c.b16 %v205, %v204
  %v245 = vpack.c.b16 %v207, %v206
  %v246 = vpack.c.b16 %v209, %v208
  %v247 = vpack.c.b16 %v211, %v210
  %v248 = vpack.c.b16 %v213, %v212
  %v249 = vpack.c.b16 %v215, %v214
  %v250 = vpack.c.b16 %v217, %v216
  %v251 = vpack.c.b16 %v219, %v218
  %v252 = vpack.c.b16 %v221, %v220
  %v253 = vpack.c.b16 %v223, %v222
  %v254 = vpack.c.b16 %v225, %v224
  %v255 = vpack.c.b16 %v227, %v226
  %v256 = vpack.c.b16 %v229, %v228
  %v257 = vpack.c.b16 %v231, %v230
  %v258 = vpack.c.b16 %v233, %v232
  %v259 = vpack.c.b16 %v235, %v234
  %284 = vmatprep.subr.bf16.mxu0 0
  %285 = vmatpush1.bf16.msra.mxu0 %v243
  %286 = vmatprep.subr.bf16.mxu0 0
  %287 = vmatpush1.bf16.msra.mxu0 %v242
  %288 = vmatprep.subr.bf16.mxu0 0
  %289 = vmatpush1.bf16.msra.mxu0 %v241
  %290 = vmatprep.subr.bf16.mxu0 0
  %291 = vmatpush1.bf16.msra.mxu0 %v240
  %292 = vmatprep.subr.bf16.mxu0 0
  %293 = vmatpush1.bf16.msra.mxu0 %v239
  %294 = vmatprep.subr.bf16.mxu0 0
  %295 = vmatpush1.bf16.msra.mxu0 %v238
  %296 = vmatprep.subr.bf16.mxu0 0
  %297 = vmatpush1.bf16.msra.mxu0 %v237
  %298 = vmatprep.subr.bf16.mxu0 0
  %299 = vmatpush1.bf16.msra.mxu0 %v236
  %300 = vmatprep.subr.bf16.mxu0 0
  %301 = vmatpush2.bf16.msra.mxu0 %v251
  %302 = vmatprep.subr.bf16.mxu0 0
  %303 = vmatpush2.bf16.msra.mxu0 %v250
  %304 = vmatprep.subr.bf16.mxu0 0
  %305 = vmatpush2.bf16.msra.mxu0 %v249
  %306 = vmatprep.subr.bf16.mxu0 0
  %307 = vmatpush2.bf16.msra.mxu0 %v248
  %308 = vmatprep.subr.bf16.mxu0 0
  %309 = vmatpush2.bf16.msra.mxu0 %v247
  %310 = vmatprep.subr.bf16.mxu0 0
  %311 = vmatpush2.bf16.msra.mxu0 %v246
  %312 = vmatprep.subr.bf16.mxu0 0
  %313 = vmatpush2.bf16.msra.mxu0 %v245
  %314 = vmatprep.subr.bf16.mxu0 0
  %315 = vmatpush2.bf16.msra.mxu0 %v244
  %316 = vmatprep.mubr.bf16.mxu0 %v64
  %317 = vmatmul.mubr.bf16.gmra.mxu0 %v63
  %v318 = vpop.f32.mrf.mxu0
  %v319 = vadd.f32 %v139, %v318
  %v320 = vpop.f32.mrf.mxu0
  %v321 = vpop.f32.mrf.mxu0
  %v322 = vadd.f32 %v139, %v321
  %v323 = vpop.f32.mrf.mxu0
  %324 = vmatprep.mubr.bf16.mxu0 %v67
  %325 = vmatmul.mubr.bf16.gmra.mxu0 %v66
  %v326 = vpop.f32.mrf.mxu0
  %v327 = vadd.f32 %v139, %v326
  %v328 = vpop.f32.mrf.mxu0
  %v329 = vpop.f32.mrf.mxu0
  %v330 = vadd.f32 %v139, %v329
  %v331 = vpop.f32.mrf.mxu0
  %332 = vmatprep.mubr.bf16.mxu0 %v70
  %333 = vmatmul.mubr.bf16.gmra.mxu0 %v69
  %v334 = vpop.f32.mrf.mxu0
  %v335 = vadd.f32 %v139, %v334
  %v336 = vpop.f32.mrf.mxu0
  %v337 = vpop.f32.mrf.mxu0
  %v338 = vadd.f32 %v139, %v337
  %v339 = vpop.f32.mrf.mxu0
  %340 = vmatprep.mubr.bf16.mxu0 %v73
  %341 = vmatmul.mubr.bf16.gmra.mxu0 %v72
  %v342 = vpop.f32.mrf.mxu0
  %v343 = vadd.f32 %v139, %v342
  %v344 = vpop.f32.mrf.mxu0
  %v345 = vpop.f32.mrf.mxu0
  %v346 = vadd.f32 %v139, %v345
  %v347 = vpop.f32.mrf.mxu0
  %348 = vmatprep.mubr.bf16.mxu0 %v76
  %349 = vmatmul.mubr.bf16.gmra.mxu0 %v75
  %v350 = vpop.f32.mrf.mxu0
  %v351 = vadd.f32 %v139, %v350
  %v352 = vpop.f32.mrf.mxu0
  %v353 = vpop.f32.mrf.mxu0
  %v354 = vadd.f32 %v139, %v353
  %v355 = vpop.f32.mrf.mxu0
  %356 = vmatprep.mubr.bf16.mxu0 %v79
  %357 = vmatmul.mubr.bf16.gmra.mxu0 %v78
  %v358 = vpop.f32.mrf.mxu0
  %v359 = vadd.f32 %v139, %v358
  %v360 = vpop.f32.mrf.mxu0
  %v361 = vpop.f32.mrf.mxu0
  %v362 = vadd.f32 %v139, %v361
  %v363 = vpop.f32.mrf.mxu0
  %364 = vmatprep.mubr.bf16.mxu0 %v82
  %365 = vmatmul.mubr.bf16.gmra.mxu0 %v81
  %v366 = vpop.f32.mrf.mxu0
  %v367 = vadd.f32 %v139, %v366
  %v368 = vpop.f32.mrf.mxu0
  %v369 = vpop.f32.mrf.mxu0
  %v370 = vadd.f32 %v139, %v369
  %v371 = vpop.f32.mrf.mxu0
  %372 = vmatprep.mubr.bf16.mxu0 %v85
  %373 = vmatmul.mubr.bf16.gmra.mxu0 %v84
  %v374 = vpop.f32.mrf.mxu0
  %v375 = vadd.f32 %v139, %v374
  %v376 = vpop.f32.mrf.mxu0
  %v377 = vpop.f32.mrf.mxu0
  %v378 = vadd.f32 %v139, %v377
  %v379 = vpop.f32.mrf.mxu0
  %380 = vdwg.mxu0
  %381 = vmatprep.subr.bf16.mxu0 0
  %382 = vmatpush1.bf16.msra.mxu0 %v259
  %383 = vmatprep.subr.bf16.mxu0 0
  %384 = vmatpush1.bf16.msra.mxu0 %v258
  %385 = vmatprep.subr.bf16.mxu0 0
  %386 = vmatpush1.bf16.msra.mxu0 %v257
  %387 = vmatprep.subr.bf16.mxu0 0
  %388 = vmatpush1.bf16.msra.mxu0 %v256
  %389 = vmatprep.subr.bf16.mxu0 0
  %390 = vmatpush1.bf16.msra.mxu0 %v255
  %391 = vmatprep.subr.bf16.mxu0 0
  %392 = vmatpush1.bf16.msra.mxu0 %v254
  %393 = vmatprep.subr.bf16.mxu0 0
  %394 = vmatpush1.bf16.msra.mxu0 %v253
  %395 = vmatprep.subr.bf16.mxu0 0
  %396 = vmatpush1.bf16.msra.mxu0 %v252
  %397 = vmatprep.subr.bf16.mxu0 0
  %398 = vmatpush2.bf16.msra.mxu0 0
  %399 = vmatprep.subr.bf16.mxu0 0
  %400 = vmatpush2.bf16.msra.mxu0 0
  %401 = vmatprep.subr.bf16.mxu0 0
  %402 = vmatpush2.bf16.msra.mxu0 0
  %403 = vmatprep.subr.bf16.mxu0 0
  %404 = vmatpush2.bf16.msra.mxu0 0
  %405 = vmatprep.subr.bf16.mxu0 0
  %406 = vmatpush2.bf16.msra.mxu0 0
  %407 = vmatprep.subr.bf16.mxu0 0
  %408 = vmatpush2.bf16.msra.mxu0 0
  %409 = vmatprep.subr.bf16.mxu0 0
  %410 = vmatpush2.bf16.msra.mxu0 0
  %411 = vmatprep.subr.bf16.mxu0 0
  %412 = vmatpush2.bf16.msra.mxu0 0
  %413 = vmatprep.mubr.bf16.mxu0 0
  %414 = vmatmul.mubr.bf16.gmra.mxu0 %v65
  %v415 = vpop.f32.mrf.mxu0
  %v416 = vadd.f32 %v319, %v415
  %v417 = vpop.f32.mrf.mxu0
  %v418 = vpop.f32.mrf.mxu0
  %v419 = vadd.f32 %v322, %v418
  %v420 = vpop.f32.mrf.mxu0
  %421 = vmatprep.mubr.bf16.mxu0 0
  %422 = vmatmul.mubr.bf16.gmra.mxu0 %v68
  %v423 = vpop.f32.mrf.mxu0
  %v424 = vadd.f32 %v327, %v423
  %v425 = vpop.f32.mrf.mxu0
  %v426 = vpop.f32.mrf.mxu0
  %v427 = vadd.f32 %v330, %v426
  %v428 = vpop.f32.mrf.mxu0
  %429 = vmatprep.mubr.bf16.mxu0 0
  %430 = vmatmul.mubr.bf16.gmra.mxu0 %v71
  %v431 = vpop.f32.mrf.mxu0
  %v432 = vadd.f32 %v335, %v431
  %v433 = vpop.f32.mrf.mxu0
  %v434 = vpop.f32.mrf.mxu0
  %v435 = vadd.f32 %v338, %v434
  %v436 = vpop.f32.mrf.mxu0
  %437 = vmatprep.mubr.bf16.mxu0 0
  %438 = vmatmul.mubr.bf16.gmra.mxu0 %v74
  %v439 = vpop.f32.mrf.mxu0
  %v440 = vadd.f32 %v343, %v439
  %v441 = vpop.f32.mrf.mxu0
  %v442 = vpop.f32.mrf.mxu0
  %v443 = vadd.f32 %v346, %v442
  %v444 = vpop.f32.mrf.mxu0
  %445 = vmatprep.mubr.bf16.mxu0 0
  %446 = vmatmul.mubr.bf16.gmra.mxu0 %v77
  %v447 = vpop.f32.mrf.mxu0
  %v448 = vadd.f32 %v351, %v447
  %v449 = vpop.f32.mrf.mxu0
  %v450 = vpop.f32.mrf.mxu0
  %v451 = vadd.f32 %v354, %v450
  %v452 = vpop.f32.mrf.mxu0
  %453 = vmatprep.mubr.bf16.mxu0 0
  %454 = vmatmul.mubr.bf16.gmra.mxu0 %v80
  %v455 = vpop.f32.mrf.mxu0
  %v456 = vadd.f32 %v359, %v455
  %v457 = vpop.f32.mrf.mxu0
  %v458 = vpop.f32.mrf.mxu0
  %v459 = vadd.f32 %v362, %v458
  %v460 = vpop.f32.mrf.mxu0
  %461 = vmatprep.mubr.bf16.mxu0 0
  %462 = vmatmul.mubr.bf16.gmra.mxu0 %v83
  %v463 = vpop.f32.mrf.mxu0
  %v464 = vadd.f32 %v367, %v463
  %v465 = vpop.f32.mrf.mxu0
  %v466 = vpop.f32.mrf.mxu0
  %v467 = vadd.f32 %v370, %v466
  %v468 = vpop.f32.mrf.mxu0
  %469 = vmatprep.mubr.bf16.mxu0 0
  %470 = vmatmul.mubr.bf16.gmra.mxu0 %v86
  %v471 = vpop.f32.mrf.mxu0
  %v472 = vadd.f32 %v375, %v471
  %v473 = vpop.f32.mrf.mxu0
  %v474 = vpop.f32.mrf.mxu0
  %v475 = vadd.f32 %v378, %v474
  %v476 = vpop.f32.mrf.mxu0
  %477 = vdwg.mxu0
  %v478 = vmax.f32 %v416, 0.0
  %v479 = vmax.f32 %v419, 0.0
  %v480 = vmax.f32 %v424, 0.0
  %v481 = vmax.f32 %v427, 0.0
  %v482 = vmax.f32 %v432, 0.0
  %v483 = vmax.f32 %v435, 0.0
  %v484 = vmax.f32 %v440, 0.0
  %v485 = vmax.f32 %v443, 0.0
  %v486 = vmax.f32 %v448, 0.0
  %v487 = vmax.f32 %v451, 0.0
  %v488 = vmax.f32 %v456, 0.0
  %v489 = vmax.f32 %v459, 0.0
  %v490 = vmax.f32 %v464, 0.0
  %v491 = vmax.f32 %v467, 0.0
  %v492 = vmax.f32 %v472, 0.0
  %v493 = vmax.f32 %v475, 0.0
  %v494 = vlaneseq
  %v495 = vshrl.u32 %v494, 7
  %v496 = vsub.s32 1, %v495
  %v497 = vrot.slane %v135, %v496
  %v498 = vmul.f32 %v478, %v497
  %v499 = vmul.f32 %v479, %v497
  %v500 = vmul.f32 %v480, %v497
  %v501 = vmul.f32 %v481, %v497
  %v502 = vmul.f32 %v482, %v497
  %v503 = vmul.f32 %v483, %v497
  %v504 = vmul.f32 %v484, %v497
  %v505 = vmul.f32 %v485, %v497
  %v506 = vmul.f32 %v486, %v497
  %v507 = vmul.f32 %v487, %v497
  %v508 = vmul.f32 %v488, %v497
  %v509 = vmul.f32 %v489, %v497
  %v510 = vmul.f32 %v490, %v497
  %v511 = vmul.f32 %v491, %v497
  %v512 = vmul.f32 %v492, %v497
  %v513 = vmul.f32 %v493, %v497
  %v514 = vlaneseq
  %v515 = vshrl.u32 %v514, 7
  %v516 = vsub.s32 2, %v515
  %v517 = vrot.slane %v135, %v516
  %v518 = vadd.f32 %v498, %v517
  %v519 = vadd.f32 %v499, %v517
  %v520 = vadd.f32 %v500, %v517
  %v521 = vadd.f32 %v501, %v517
  %v522 = vadd.f32 %v502, %v517
  %v523 = vadd.f32 %v503, %v517
  %v524 = vadd.f32 %v504, %v517
  %v525 = vadd.f32 %v505, %v517
  %v526 = vadd.f32 %v506, %v517
  %v527 = vadd.f32 %v507, %v517
  %v528 = vadd.f32 %v508, %v517
  %v529 = vadd.f32 %v509, %v517
  %v530 = vadd.f32 %v510, %v517
  %v531 = vadd.f32 %v511, %v517
  %v532 = vadd.f32 %v512, %v517
  %v533 = vadd.f32 %v513, %v517
  %534 = vst [vmem:[%s3] sm:$0xff] %v518
  %535 = vst [vmem:[%s3 + $0x8] sm:$0xff] %v519
  %536 = vst [vmem:[%s3 + $0x10] sm:$0xff] %v520
  %537 = vst [vmem:[%s3 + $0x18] sm:$0xff] %v521
  %538 = vst [vmem:[%s3 + $0x20] sm:$0xff] %v522
  %539 = vst [vmem:[%s3 + $0x28] sm:$0xff] %v523
  %540 = vst [vmem:[%s3 + $0x30] sm:$0xff] %v524
  %541 = vst [vmem:[%s3 + $0x38] sm:$0xff] %v525
  %542 = vst [vmem:[%s3 + $0x40] sm:$0xff] %v526
  %543 = vst [vmem:[%s3 + $0x48] sm:$0xff] %v527
  %544 = vst [vmem:[%s3 + $0x50] sm:$0xff] %v528
  %545 = vst [vmem:[%s3 + $0x58] sm:$0xff] %v529
  %546 = vst [vmem:[%s3 + $0x60] sm:$0xff] %v530
  %547 = vst [vmem:[%s3 + $0x68] sm:$0xff] %v531
  %548 = vst [vmem:[%s3 + $0x70] sm:$0xff] %v532
  %549 = vst [vmem:[%s3 + $0x78] sm:$0xff] %v533
  // Predicated region
  $region14: #{fashioncnn4_forward.7} parent=0 // pred_check
    _
  $region15: #{fashioncnn4_forward.7} parent=0 // pred_check_branch
    %551 = sbr.rel (0) target = $region17
  $region16: #{fashioncnn4_forward.7} parent=0 // pred_region
    _
  $region17: #{fashioncnn4_forward.7} parent=0 // pred_fallthru
    _
  // Predicated region
  $region18: #{fashioncnn4_forward.7} parent=0 // pred_check
    _
  $region19: #{fashioncnn4_forward.7} parent=0 // pred_check_branch
    %553 = sbr.rel (0) target = $region21
  $region20: #{fashioncnn4_forward.7} parent=0 // pred_region
    _
  $region21: #{fashioncnn4_forward.7} parent=0 // pred_fallthru
    _

// kernel: fashioncnn4_forward.6
$region0: #{fashioncnn4_forward.6}
  #allocation0 [shape = 'u32[]', space=smem, size = 0x4, offset = 0x4, fixed_abs, tag = 'smem constant byte address 0x4 - core index']
  #allocation1 [shape = 'u32[144,128]{1,0:T(1,128)}', space=vmem, size = 0x12000, scoped, tag = 'internal scratch']
  %s0 = inlined_call_operand.vmem [shape: f32[800,896], index: 0, kind: input, shape index: {}]
  %s1 = inlined_call_operand.vmem [shape: bf16[896,128], index: 1, kind: input, shape index: {}]
  %s2 = inlined_call_operand.vmem [shape: f32[3,128], index: 2, kind: input, shape index: {}]
  %s3 = inlined_call_operand.vmem [shape: f32[800,128], index: 3, kind: output, shape index: {}]
  %s4 = sld [smem:[#allocation0]]
  $region22: #{fashioncnn4_forward.6} parent=0
    _
  %s6 = ssub.s32 1, %s4
  %s7 = scalar_select 0, %s6, %s4
  // Predicated region
  $region2: #{fashioncnn4_forward.6} parent=0 // pred_check
    _
  $region3: #{fashioncnn4_forward.6} parent=0 // pred_check_branch
    %9 = sbr.rel (0) target = $region5
  $region4: #{fashioncnn4_forward.6} parent=0 // pred_region
    _
  $region5: #{fashioncnn4_forward.6} parent=0 // pred_fallthru
    _
  // Predicated region
  $region6: #{fashioncnn4_forward.6} parent=0 // pred_check
    _
  $region7: #{fashioncnn4_forward.6} parent=0 // pred_check_branch
    %11 = sbr.rel (0) target = $region9
  $region8: #{fashioncnn4_forward.6} parent=0 // pred_region
    _
  $region9: #{fashioncnn4_forward.6} parent=0 // pred_fallthru
    _
  // Predicated region
  $region10: #{fashioncnn4_forward.6} parent=0 // pred_check
    _
  $region11: #{fashioncnn4_forward.6} parent=0 // pred_check_branch
    %13 = sbr.rel (0) target = $region13
  $region12: #{fashioncnn4_forward.6} parent=0 // pred_region
    _
  $region13: #{fashioncnn4_forward.6} parent=0 // pred_fallthru
    _
  %v15 = vld [vmem:[%s0] sm:$0xff]
  %v16 = vld [vmem:[%s0 + $0x8] sm:$0xff]
  %v17 = vld [vmem:[%s0 + $0x10] sm:$0xff]
  %v18 = vld [vmem:[%s0 + $0x18] sm:$0xff]
  %v19 = vld [vmem:[%s0 + $0x20] sm:$0xff]
  %v20 = vld [vmem:[%s0 + $0x28] sm:$0xff]
  %v21 = vld [vmem:[%s0 + $0x30] sm:$0xff]
  %v22 = vld [vmem:[%s0 + $0x38] sm:$0xff]
  %v23 = vld [vmem:[%s0 + $0x40] sm:$0xff]
  %v24 = vld [vmem:[%s0 + $0x48] sm:$0xff]
  %v25 = vld [vmem:[%s0 + $0x50] sm:$0xff]
  %v26 = vld [vmem:[%s0 + $0x58] sm:$0xff]
  %v27 = vld [vmem:[%s0 + $0x60] sm:$0xff]
  %v28 = vld [vmem:[%s0 + $0x68] sm:$0xff]
  %v29 = vld [vmem:[%s0 + $0x70] sm:$0xff]
  %v30 = vld [vmem:[%s0 + $0x78] sm:$0xff]
  %v31 = vld [vmem:[%s0 + $0x80] sm:$0xff]
  %v32 = vld [vmem:[%s0 + $0x88] sm:$0xff]
  %v33 = vld [vmem:[%s0 + $0x90] sm:$0xff]
  %v34 = vld [vmem:[%s0 + $0x98] sm:$0xff]
  %v35 = vld [vmem:[%s0 + $0xa0] sm:$0xff]
  %v36 = vld [vmem:[%s0 + $0xa8] sm:$0xff]
  %v37 = vld [vmem:[%s0 + $0xb0] sm:$0xff]
  %v38 = vld [vmem:[%s0 + $0xb8] sm:$0xff]
  %v39 = vld [vmem:[%s0 + $0xc0] sm:$0xff]
  %v40 = vld [vmem:[%s0 + $0xc8] sm:$0xff]
  %v41 = vld [vmem:[%s0 + $0xd0] sm:$0xff]
  %v42 = vld [vmem:[%s0 + $0xd8] sm:$0xff]
  %v43 = vld [vmem:[%s0 + $0xe0] sm:$0xff]
  %v44 = vld [vmem:[%s0 + $0xe8] sm:$0xff]
  %v45 = vld [vmem:[%s0 + $0xf0] sm:$0xff]
  %v46 = vld [vmem:[%s0 + $0xf8] sm:$0xff]
  %v47 = vld [vmem:[%s0 + $0x100] sm:$0xff]
  %v48 = vld [vmem:[%s0 + $0x108] sm:$0xff]
  %v49 = vld [vmem:[%s0 + $0x110] sm:$0xff]
  %v50 = vld [vmem:[%s0 + $0x118] sm:$0xff]
  %v51 = vld [vmem:[%s0 + $0x120] sm:$0xff]
  %v52 = vld [vmem:[%s0 + $0x128] sm:$0xff]
  %v53 = vld [vmem:[%s0 + $0x130] sm:$0xff]
  %v54 = vld [vmem:[%s0 + $0x138] sm:$0xff]
  %v55 = vld [vmem:[%s0 + $0x140] sm:$0xff]
  %v56 = vld [vmem:[%s0 + $0x148] sm:$0xff]
  %v57 = vld [vmem:[%s0 + $0x150] sm:$0xff]
  %v58 = vld [vmem:[%s0 + $0x158] sm:$0xff]
  %v59 = vld [vmem:[%s0 + $0x160] sm:$0xff]
  %v60 = vld [vmem:[%s0 + $0x168] sm:$0xff]
  %v61 = vld [vmem:[%s0 + $0x170] sm:$0xff]
  %v62 = vld [vmem:[%s0 + $0x178] sm:$0xff]
  %v63 = vld [vmem:[%s0 + $0x180] sm:$0xff]
  %v64 = vld [vmem:[%s0 + $0x188] sm:$0xff]
  %v65 = vld [vmem:[%s0 + $0x190] sm:$0xff]
  %v66 = vld [vmem:[%s0 + $0x198] sm:$0xff]
  %v67 = vld [vmem:[%s0 + $0x1a0] sm:$0xff]
  %v68 = vld [vmem:[%s0 + $0x1a8] sm:$0xff]
  %v69 = vld [vmem:[%s0 + $0x1b0] sm:$0xff]
  %v70 = vld [vmem:[%s0 + $0x1b8] sm:$0xff]
  %v71 = vld [vmem:[%s0 + $0x1c0] sm:$0xff]
  %v72 = vld [vmem:[%s0 + $0x1c8] sm:$0xff]
  %v73 = vld [vmem:[%s0 + $0x1d0] sm:$0xff]
  %v74 = vld [vmem:[%s0 + $0x1d8] sm:$0xff]
  %v75 = vld [vmem:[%s0 + $0x1e0] sm:$0xff]
  %v76 = vld [vmem:[%s0 + $0x1e8] sm:$0xff]
  %v77 = vld [vmem:[%s0 + $0x1f0] sm:$0xff]
  %v78 = vld [vmem:[%s0 + $0x1f8] sm:$0xff]
  %v79 = vld [vmem:[%s0 + $0x200] sm:$0xff]
  %v80 = vld [vmem:[%s0 + $0x208] sm:$0xff]
  %v81 = vld [vmem:[%s0 + $0x210] sm:$0xff]
  %v82 = vld [vmem:[%s0 + $0x218] sm:$0xff]
  %v83 = vld [vmem:[%s0 + $0x220] sm:$0xff]
  %v84 = vld [vmem:[%s0 + $0x228] sm:$0xff]
  %v85 = vld [vmem:[%s0 + $0x230] sm:$0xff]
  %v86 = vld [vmem:[%s0 + $0x238] sm:$0xff]
  %v87 = vld [vmem:[%s0 + $0x240] sm:$0xff]
  %v88 = vld [vmem:[%s0 + $0x248] sm:$0xff]
  %v89 = vld [vmem:[%s0 + $0x250] sm:$0xff]
  %v90 = vld [vmem:[%s0 + $0x258] sm:$0xff]
  %v91 = vld [vmem:[%s0 + $0x260] sm:$0xff]
  %v92 = vld [vmem:[%s0 + $0x268] sm:$0xff]
  %v93 = vld [vmem:[%s0 + $0x270] sm:$0xff]
  %v94 = vld [vmem:[%s0 + $0x278] sm:$0xff]
  %v95 = vld [vmem:[%s0 + $0x280] sm:$0xff]
  %v96 = vld [vmem:[%s0 + $0x288] sm:$0xff]
  %v97 = vld [vmem:[%s0 + $0x290] sm:$0xff]
  %v98 = vld [vmem:[%s0 + $0x298] sm:$0xff]
  %v99 = vld [vmem:[%s0 + $0x2a0] sm:$0xff]
  %v100 = vld [vmem:[%s0 + $0x2a8] sm:$0xff]
  %v101 = vld [vmem:[%s0 + $0x2b0] sm:$0xff]
  %v102 = vld [vmem:[%s0 + $0x2b8] sm:$0xff]
  %v103 = vld [vmem:[%s0 + $0x2c0] sm:$0xff]
  %v104 = vld [vmem:[%s0 + $0x2c8] sm:$0xff]
  %v105 = vld [vmem:[%s0 + $0x2d0] sm:$0xff]
  %v106 = vld [vmem:[%s0 + $0x2d8] sm:$0xff]
  %v107 = vld [vmem:[%s0 + $0x2e0] sm:$0xff]
  %v108 = vld [vmem:[%s0 + $0x2e8] sm:$0xff]
  %v109 = vld [vmem:[%s0 + $0x2f0] sm:$0xff]
  %v110 = vld [vmem:[%s0 + $0x2f8] sm:$0xff]
  %v111 = vld [vmem:[%s0 + $0x300] sm:$0xff]
  %v112 = vld [vmem:[%s0 + $0x308] sm:$0xff]
  %v113 = vld [vmem:[%s0 + $0x310] sm:$0xff]
  %v114 = vld [vmem:[%s0 + $0x318] sm:$0xff]
  %v115 = vld [vmem:[%s0 + $0x320] sm:$0xff]
  %v116 = vld [vmem:[%s0 + $0x328] sm:$0xff]
  %v117 = vld [vmem:[%s0 + $0x330] sm:$0xff]
  %v118 = vld [vmem:[%s0 + $0x338] sm:$0xff]
  %v119 = vld [vmem:[%s0 + $0x340] sm:$0xff]
  %v120 = vld [vmem:[%s0 + $0x348] sm:$0xff]
  %v121 = vld [vmem:[%s0 + $0x350] sm:$0xff]
  %v122 = vld [vmem:[%s0 + $0x358] sm:$0xff]
  %v123 = vld [vmem:[%s0 + $0x360] sm:$0xff]
  %v124 = vld [vmem:[%s0 + $0x368] sm:$0xff]
  %v125 = vld [vmem:[%s0 + $0x370] sm:$0xff]
  %v126 = vld [vmem:[%s0 + $0x378] sm:$0xff]
  %v127 = vld [vmem:[%s0 + $0x380] sm:$0xff]
  %v128 = vld [vmem:[%s0 + $0x388] sm:$0xff]
  %v129 = vld [vmem:[%s0 + $0x390] sm:$0xff]
  %v130 = vld [vmem:[%s0 + $0x398] sm:$0xff]
  %v131 = vld [vmem:[%s0 + $0x3a0] sm:$0xff]
  %v132 = vld [vmem:[%s0 + $0x3a8] sm:$0xff]
  %v133 = vld [vmem:[%s0 + $0x3b0] sm:$0xff]
  %v134 = vld [vmem:[%s0 + $0x3b8] sm:$0xff]
  %v135 = vld [vmem:[%s0 + $0x3c0] sm:$0xff]
  %v136 = vld [vmem:[%s0 + $0x3c8] sm:$0xff]
  %v137 = vld [vmem:[%s0 + $0x3d0] sm:$0xff]
  %v138 = vld [vmem:[%s0 + $0x3d8] sm:$0xff]
  %v139 = vld [vmem:[%s0 + $0x3e0] sm:$0xff]
  %v140 = vld [vmem:[%s0 + $0x3e8] sm:$0xff]
  %v141 = vld [vmem:[%s0 + $0x3f0] sm:$0xff]
  %v142 = vld [vmem:[%s0 + $0x3f8] sm:$0xff]
  %v143 = vld [vmem:[%s0 + $0x400] sm:$0xff]
  %v144 = vld [vmem:[%s0 + $0x408] sm:$0xff]
  %v145 = vld [vmem:[%s0 + $0x410] sm:$0xff]
  %v146 = vld [vmem:[%s0 + $0x418] sm:$0xff]
  %v147 = vld [vmem:[%s0 + $0x420] sm:$0xff]
  %v148 = vld [vmem:[%s0 + $0x428] sm:$0xff]
  %v149 = vld [vmem:[%s0 + $0x430] sm:$0xff]
  %v150 = vld [vmem:[%s0 + $0x438] sm:$0xff]
  %v151 = vld [vmem:[%s0 + $0x440] sm:$0xff]
  %v152 = vld [vmem:[%s0 + $0x448] sm:$0xff]
  %v153 = vld [vmem:[%s0 + $0x450] sm:$0xff]
  %v154 = vld [vmem:[%s0 + $0x458] sm:$0xff]
  %v155 = vld [vmem:[%s0 + $0x460] sm:$0xff]
  %v156 = vld [vmem:[%s0 + $0x468] sm:$0xff]
  %v157 = vld [vmem:[%s0 + $0x470] sm:$0xff]
  %v158 = vld [vmem:[%s0 + $0x478] sm:$0xff]
  %v159 = vld [vmem:[%s0 + $0x480] sm:$0xff]
  %v160 = vld [vmem:[%s0 + $0x488] sm:$0xff]
  %v161 = vld [vmem:[%s0 + $0x490] sm:$0xff]
  %v162 = vld [vmem:[%s0 + $0x498] sm:$0xff]
  %v163 = vld [vmem:[%s0 + $0x4a0] sm:$0xff]
  %v164 = vld [vmem:[%s0 + $0x4a8] sm:$0xff]
  %v165 = vld [vmem:[%s0 + $0x4b0] sm:$0xff]
  %v166 = vld [vmem:[%s0 + $0x4b8] sm:$0xff]
  %v167 = vld [vmem:[%s0 + $0x4c0] sm:$0xff]
  %v168 = vld [vmem:[%s0 + $0x4c8] sm:$0xff]
  %v169 = vld [vmem:[%s0 + $0x4d0] sm:$0xff]
  %v170 = vld [vmem:[%s0 + $0x4d8] sm:$0xff]
  %v171 = vld [vmem:[%s0 + $0x4e0] sm:$0xff]
  %v172 = vld [vmem:[%s0 + $0x4e8] sm:$0xff]
  %v173 = vld [vmem:[%s0 + $0x4f0] sm:$0xff]
  %v174 = vld [vmem:[%s0 + $0x4f8] sm:$0xff]
  %v175 = vld [vmem:[%s0 + $0x500] sm:$0xff]
  %v176 = vld [vmem:[%s0 + $0x508] sm:$0xff]
  %v177 = vld [vmem:[%s0 + $0x510] sm:$0xff]
  %v178 = vld [vmem:[%s0 + $0x518] sm:$0xff]
  %v179 = vld [vmem:[%s0 + $0x520] sm:$0xff]
  %v180 = vld [vmem:[%s0 + $0x528] sm:$0xff]
  %v181 = vld [vmem:[%s0 + $0x530] sm:$0xff]
  %v182 = vld [vmem:[%s0 + $0x538] sm:$0xff]
  %v183 = vld [vmem:[%s0 + $0x540] sm:$0xff]
  %v184 = vld [vmem:[%s0 + $0x548] sm:$0xff]
  %v185 = vld [vmem:[%s0 + $0x550] sm:$0xff]
  %v186 = vld [vmem:[%s0 + $0x558] sm:$0xff]
  %v187 = vld [vmem:[%s0 + $0x560] sm:$0xff]
  %v188 = vld [vmem:[%s0 + $0x568] sm:$0xff]
  %v189 = vld [vmem:[%s0 + $0x570] sm:$0xff]
  %v190 = vld [vmem:[%s0 + $0x578] sm:$0xff]
  %v191 = vld [vmem:[%s0 + $0x580] sm:$0xff]
  %v192 = vld [vmem:[%s0 + $0x588] sm:$0xff]
  %v193 = vld [vmem:[%s0 + $0x590] sm:$0xff]
  %v194 = vld [vmem:[%s0 + $0x598] sm:$0xff]
  %v195 = vld [vmem:[%s0 + $0x5a0] sm:$0xff]
  %v196 = vld [vmem:[%s0 + $0x5a8] sm:$0xff]
  %v197 = vld [vmem:[%s0 + $0x5b0] sm:$0xff]
  %v198 = vld [vmem:[%s0 + $0x5b8] sm:$0xff]
  %v199 = vld [vmem:[%s0 + $0x5c0] sm:$0xff]
  %v200 = vld [vmem:[%s0 + $0x5c8] sm:$0xff]
  %v201 = vld [vmem:[%s0 + $0x5d0] sm:$0xff]
  %v202 = vld [vmem:[%s0 + $0x5d8] sm:$0xff]
  %v203 = vld [vmem:[%s0 + $0x5e0] sm:$0xff]
  %v204 = vld [vmem:[%s0 + $0x5e8] sm:$0xff]
  %v205 = vld [vmem:[%s0 + $0x5f0] sm:$0xff]
  %v206 = vld [vmem:[%s0 + $0x5f8] sm:$0xff]
  %v207 = vld [vmem:[%s0 + $0x600] sm:$0xff]
  %v208 = vld [vmem:[%s0 + $0x608] sm:$0xff]
  %v209 = vld [vmem:[%s0 + $0x610] sm:$0xff]
  %v210 = vld [vmem:[%s0 + $0x618] sm:$0xff]
  %v211 = vld [vmem:[%s0 + $0x620] sm:$0xff]
  %v212 = vld [vmem:[%s0 + $0x628] sm:$0xff]
  %v213 = vld [vmem:[%s0 + $0x630] sm:$0xff]
  %v214 = vld [vmem:[%s0 + $0x638] sm:$0xff]
  %v215 = vld [vmem:[%s0 + $0x640] sm:$0xff]
  %v216 = vld [vmem:[%s0 + $0x648] sm:$0xff]
  %v217 = vld [vmem:[%s0 + $0x650] sm:$0xff]
  %v218 = vld [vmem:[%s0 + $0x658] sm:$0xff]
  %v219 = vld [vmem:[%s0 + $0x660] sm:$0xff]
  %v220 = vld [vmem:[%s0 + $0x668] sm:$0xff]
  %v221 = vld [vmem:[%s0 + $0x670] sm:$0xff]
  %v222 = vld [vmem:[%s0 + $0x678] sm:$0xff]
  %v223 = vld [vmem:[%s0 + $0x680] sm:$0xff]
  %v224 = vld [vmem:[%s0 + $0x688] sm:$0xff]
  %v225 = vld [vmem:[%s0 + $0x690] sm:$0xff]
  %v226 = vld [vmem:[%s0 + $0x698] sm:$0xff]
  %v227 = vld [vmem:[%s0 + $0x6a0] sm:$0xff]
  %v228 = vld [vmem:[%s0 + $0x6a8] sm:$0xff]
  %v229 = vld [vmem:[%s0 + $0x6b0] sm:$0xff]
  %v230 = vld [vmem:[%s0 + $0x6b8] sm:$0xff]
  %v231 = vld [vmem:[%s0 + $0x6c0] sm:$0xff]
  %v232 = vld [vmem:[%s0 + $0x6c8] sm:$0xff]
  %v233 = vld [vmem:[%s0 + $0x6d0] sm:$0xff]
  %v234 = vld [vmem:[%s0 + $0x6d8] sm:$0xff]
  %v235 = vld [vmem:[%s0 + $0x6e0] sm:$0xff]
  %v236 = vld [vmem:[%s0 + $0x6e8] sm:$0xff]
  %v237 = vld [vmem:[%s0 + $0x6f0] sm:$0xff]
  %v238 = vld [vmem:[%s0 + $0x6f8] sm:$0xff]
  %v239 = vld [vmem:[%s0 + $0x700] sm:$0xff]
  %v240 = vld [vmem:[%s0 + $0x708] sm:$0xff]
  %v241 = vld [vmem:[%s0 + $0x710] sm:$0xff]
  %v242 = vld [vmem:[%s0 + $0x718] sm:$0xff]
  %v243 = vld [vmem:[%s0 + $0x720] sm:$0xff]
  %v244 = vld [vmem:[%s0 + $0x728] sm:$0xff]
  %v245 = vld [vmem:[%s0 + $0x730] sm:$0xff]
  %v246 = vld [vmem:[%s0 + $0x738] sm:$0xff]
  %v247 = vld [vmem:[%s0 + $0x740] sm:$0xff]
  %v248 = vld [vmem:[%s0 + $0x748] sm:$0xff]
  %v249 = vld [vmem:[%s0 + $0x750] sm:$0xff]
  %v250 = vld [vmem:[%s0 + $0x758] sm:$0xff]
  %v251 = vld [vmem:[%s0 + $0x760] sm:$0xff]
  %v252 = vld [vmem:[%s0 + $0x768] sm:$0xff]
  %v253 = vld [vmem:[%s0 + $0x770] sm:$0xff]
  %v254 = vld [vmem:[%s0 + $0x778] sm:$0xff]
  %v255 = vld [vmem:[%s0 + $0x780] sm:$0xff]
  %v256 = vld [vmem:[%s0 + $0x788] sm:$0xff]
  %v257 = vld [vmem:[%s0 + $0x790] sm:$0xff]
  %v258 = vld [vmem:[%s0 + $0x798] sm:$0xff]
  %v259 = vld [vmem:[%s0 + $0x7a0] sm:$0xff]
  %v260 = vld [vmem:[%s0 + $0x7a8] sm:$0xff]
  %v261 = vld [vmem:[%s0 + $0x7b0] sm:$0xff]
  %v262 = vld [vmem:[%s0 + $0x7b8] sm:$0xff]
  %v263 = vld [vmem:[%s0 + $0x7c0] sm:$0xff]
  %v264 = vld [vmem:[%s0 + $0x7c8] sm:$0xff]
  %v265 = vld [vmem:[%s0 + $0x7d0] sm:$0xff]
  %v266 = vld [vmem:[%s0 + $0x7d8] sm:$0xff]
  %v267 = vld [vmem:[%s0 + $0x7e0] sm:$0xff]
  %v268 = vld [vmem:[%s0 + $0x7e8] sm:$0xff]
  %v269 = vld [vmem:[%s0 + $0x7f0] sm:$0xff]
  %v270 = vld [vmem:[%s0 + $0x7f8] sm:$0xff]
  %v271 = vld [vmem:[%s0 + $0x800] sm:$0xff]
  %v272 = vld [vmem:[%s0 + $0x808] sm:$0xff]
  %v273 = vld [vmem:[%s0 + $0x810] sm:$0xff]
  %v274 = vld [vmem:[%s0 + $0x818] sm:$0xff]
  %v275 = vld [vmem:[%s0 + $0x820] sm:$0xff]
  %v276 = vld [vmem:[%s0 + $0x828] sm:$0xff]
  %v277 = vld [vmem:[%s0 + $0x830] sm:$0xff]
  %v278 = vld [vmem:[%s0 + $0x838] sm:$0xff]
  %v279 = vld [vmem:[%s0 + $0x840] sm:$0xff]
  %v280 = vld [vmem:[%s0 + $0x848] sm:$0xff]
  %v281 = vld [vmem:[%s0 + $0x850] sm:$0xff]
  %v282 = vld [vmem:[%s0 + $0x858] sm:$0xff]
  %v283 = vld [vmem:[%s0 + $0x860] sm:$0xff]
  %v284 = vld [vmem:[%s0 + $0x868] sm:$0xff]
  %v285 = vld [vmem:[%s0 + $0x870] sm:$0xff]
  %v286 = vld [vmem:[%s0 + $0x878] sm:$0xff]
  %v287 = vld [vmem:[%s0 + $0x880] sm:$0xff]
  %v288 = vld [vmem:[%s0 + $0x888] sm:$0xff]
  %v289 = vld [vmem:[%s0 + $0x890] sm:$0xff]
  %v290 = vld [vmem:[%s0 + $0x898] sm:$0xff]
  %v291 = vld [vmem:[%s0 + $0x8a0] sm:$0xff]
  %v292 = vld [vmem:[%s0 + $0x8a8] sm:$0xff]
  %v293 = vld [vmem:[%s0 + $0x8b0] sm:$0xff]
  %v294 = vld [vmem:[%s0 + $0x8b8] sm:$0xff]
  %v295 = vld [vmem:[%s0 + $0x8c0] sm:$0xff]
  %v296 = vld [vmem:[%s0 + $0x8c8] sm:$0xff]
  %v297 = vld [vmem:[%s0 + $0x8d0] sm:$0xff]
  %v298 = vld [vmem:[%s0 + $0x8d8] sm:$0xff]
  %v299 = vld [vmem:[%s0 + $0x8e0] sm:$0xff]
  %v300 = vld [vmem:[%s0 + $0x8e8] sm:$0xff]
  %v301 = vld [vmem:[%s0 + $0x8f0] sm:$0xff]
  %v302 = vld [vmem:[%s0 + $0x8f8] sm:$0xff]
  %v303 = vld [vmem:[%s0 + $0x900] sm:$0xff]
  %v304 = vld [vmem:[%s0 + $0x908] sm:$0xff]
  %v305 = vld [vmem:[%s0 + $0x910] sm:$0xff]
  %v306 = vld [vmem:[%s0 + $0x918] sm:$0xff]
  %v307 = vld [vmem:[%s0 + $0x920] sm:$0xff]
  %v308 = vld [vmem:[%s0 + $0x928] sm:$0xff]
  %v309 = vld [vmem:[%s0 + $0x930] sm:$0xff]
  %v310 = vld [vmem:[%s0 + $0x938] sm:$0xff]
  %v311 = vld [vmem:[%s0 + $0x940] sm:$0xff]
  %v312 = vld [vmem:[%s0 + $0x948] sm:$0xff]
  %v313 = vld [vmem:[%s0 + $0x950] sm:$0xff]
  %v314 = vld [vmem:[%s0 + $0x958] sm:$0xff]
  %v315 = vld [vmem:[%s0 + $0x960] sm:$0xff]
  %v316 = vld [vmem:[%s0 + $0x968] sm:$0xff]
  %v317 = vld [vmem:[%s0 + $0x970] sm:$0xff]
  %v318 = vld [vmem:[%s0 + $0x978] sm:$0xff]
  %v319 = vld [vmem:[%s0 + $0x980] sm:$0xff]
  %v320 = vld [vmem:[%s0 + $0x988] sm:$0xff]
  %v321 = vld [vmem:[%s0 + $0x990] sm:$0xff]
  %v322 = vld [vmem:[%s0 + $0x998] sm:$0xff]
  %v323 = vld [vmem:[%s0 + $0x9a0] sm:$0xff]
  %v324 = vld [vmem:[%s0 + $0x9a8] sm:$0xff]
  %v325 = vld [vmem:[%s0 + $0x9b0] sm:$0xff]
  %v326 = vld [vmem:[%s0 + $0x9b8] sm:$0xff]
  %v327 = vld [vmem:[%s0 + $0x9c0] sm:$0xff]
  %v328 = vld [vmem:[%s0 + $0x9c8] sm:$0xff]
  %v329 = vld [vmem:[%s0 + $0x9d0] sm:$0xff]
  %v330 = vld [vmem:[%s0 + $0x9d8] sm:$0xff]
  %v331 = vld [vmem:[%s0 + $0x9e0] sm:$0xff]
  %v332 = vld [vmem:[%s0 + $0x9e8] sm:$0xff]
  %v333 = vld [vmem:[%s0 + $0x9f0] sm:$0xff]
  %v334 = vld [vmem:[%s0 + $0x9f8] sm:$0xff]
  %v335 = vld [vmem:[%s0 + $0xa00] sm:$0xff]
  %v336 = vld [vmem:[%s0 + $0xa08] sm:$0xff]
  %v337 = vld [vmem:[%s0 + $0xa10] sm:$0xff]
  %v338 = vld [vmem:[%s0 + $0xa18] sm:$0xff]
  %v339 = vld [vmem:[%s0 + $0xa20] sm:$0xff]
  %v340 = vld [vmem:[%s0 + $0xa28] sm:$0xff]
  %v341 = vld [vmem:[%s0 + $0xa30] sm:$0xff]
  %v342 = vld [vmem:[%s0 + $0xa38] sm:$0xff]
  %v343 = vld [vmem:[%s0 + $0xa40] sm:$0xff]
  %v344 = vld [vmem:[%s0 + $0xa48] sm:$0xff]
  %v345 = vld [vmem:[%s0 + $0xa50] sm:$0xff]
  %v346 = vld [vmem:[%s0 + $0xa58] sm:$0xff]
  %v347 = vld [vmem:[%s0 + $0xa60] sm:$0xff]
  %v348 = vld [vmem:[%s0 + $0xa68] sm:$0xff]
  %v349 = vld [vmem:[%s0 + $0xa70] sm:$0xff]
  %v350 = vld [vmem:[%s0 + $0xa78] sm:$0xff]
  %v351 = vld [vmem:[%s0 + $0xa80] sm:$0xff]
  %v352 = vld [vmem:[%s0 + $0xa88] sm:$0xff]
  %v353 = vld [vmem:[%s0 + $0xa90] sm:$0xff]
  %v354 = vld [vmem:[%s0 + $0xa98] sm:$0xff]
  %v355 = vld [vmem:[%s0 + $0xaa0] sm:$0xff]
  %v356 = vld [vmem:[%s0 + $0xaa8] sm:$0xff]
  %v357 = vld [vmem:[%s0 + $0xab0] sm:$0xff]
  %v358 = vld [vmem:[%s0 + $0xab8] sm:$0xff]
  %v359 = vld [vmem:[%s0 + $0xac0] sm:$0xff]
  %v360 = vld [vmem:[%s0 + $0xac8] sm:$0xff]
  %v361 = vld [vmem:[%s0 + $0xad0] sm:$0xff]
  %v362 = vld [vmem:[%s0 + $0xad8] sm:$0xff]
  %v363 = vld [vmem:[%s0 + $0xae0] sm:$0xff]
  %v364 = vld [vmem:[%s0 + $0xae8] sm:$0xff]
  %v365 = vld [vmem:[%s0 + $0xaf0] sm:$0xff]
  %v366 = vld [vmem:[%s0 + $0xaf8] sm:$0xff]
  %v367 = vld [vmem:[%s0 + $0xb00] sm:$0xff]
  %v368 = vld [vmem:[%s0 + $0xb08] sm:$0xff]
  %v369 = vld [vmem:[%s0 + $0xb10] sm:$0xff]
  %v370 = vld [vmem:[%s0 + $0xb18] sm:$0xff]
  %v371 = vld [vmem:[%s0 + $0xb20] sm:$0xff]
  %v372 = vld [vmem:[%s0 + $0xb28] sm:$0xff]
  %v373 = vld [vmem:[%s0 + $0xb30] sm:$0xff]
  %v374 = vld [vmem:[%s0 + $0xb38] sm:$0xff]
  %v375 = vld [vmem:[%s0 + $0xb40] sm:$0xff]
  %v376 = vld [vmem:[%s0 + $0xb48] sm:$0xff]
  %v377 = vld [vmem:[%s0 + $0xb50] sm:$0xff]
  %v378 = vld [vmem:[%s0 + $0xb58] sm:$0xff]
  %v379 = vld [vmem:[%s0 + $0xb60] sm:$0xff]
  %v380 = vld [vmem:[%s0 + $0xb68] sm:$0xff]
  %v381 = vld [vmem:[%s0 + $0xb70] sm:$0xff]
  %v382 = vld [vmem:[%s0 + $0xb78] sm:$0xff]
  %v383 = vld [vmem:[%s0 + $0xb80] sm:$0xff]
  %v384 = vld [vmem:[%s0 + $0xb88] sm:$0xff]
  %v385 = vld [vmem:[%s0 + $0xb90] sm:$0xff]
  %v386 = vld [vmem:[%s0 + $0xb98] sm:$0xff]
  %v387 = vld [vmem:[%s0 + $0xba0] sm:$0xff]
  %v388 = vld [vmem:[%s0 + $0xba8] sm:$0xff]
  %v389 = vld [vmem:[%s0 + $0xbb0] sm:$0xff]
  %v390 = vld [vmem:[%s0 + $0xbb8] sm:$0xff]
  %v391 = vld [vmem:[%s0 + $0xbc0] sm:$0xff]
  %v392 = vld [vmem:[%s0 + $0xbc8] sm:$0xff]
  %v393 = vld [vmem:[%s0 + $0xbd0] sm:$0xff]
  %v394 = vld [vmem:[%s0 + $0xbd8] sm:$0xff]
  %v395 = vld [vmem:[%s0 + $0xbe0] sm:$0xff]
  %v396 = vld [vmem:[%s0 + $0xbe8] sm:$0xff]
  %v397 = vld [vmem:[%s0 + $0xbf0] sm:$0xff]
  %v398 = vld [vmem:[%s0 + $0xbf8] sm:$0xff]
  %v399 = vld [vmem:[%s0 + $0xc00] sm:$0xff]
  %v400 = vld [vmem:[%s0 + $0xc08] sm:$0xff]
  %v401 = vld [vmem:[%s0 + $0xc10] sm:$0xff]
  %v402 = vld [vmem:[%s0 + $0xc18] sm:$0xff]
  %v403 = vld [vmem:[%s0 + $0xc20] sm:$0xff]
  %v404 = vld [vmem:[%s0 + $0xc28] sm:$0xff]
  %v405 = vld [vmem:[%s0 + $0xc30] sm:$0xff]
  %v406 = vld [vmem:[%s0 + $0xc38] sm:$0xff]
  %v407 = vld [vmem:[%s0 + $0xc40] sm:$0xff]
  %v408 = vld [vmem:[%s0 + $0xc48] sm:$0xff]
  %v409 = vld [vmem:[%s0 + $0xc50] sm:$0xff]
  %v410 = vld [vmem:[%s0 + $0xc58] sm:$0xff]
  %v411 = vld [vmem:[%s0 + $0xc60] sm:$0xff]
  %v412 = vld [vmem:[%s0 + $0xc68] sm:$0xff]
  %v413 = vld [vmem:[%s0 + $0xc70] sm:$0xff]
  %v414 = vld [vmem:[%s0 + $0xc78] sm:$0xff]
  %v415 = vld [vmem:[%s0 + $0xc80] sm:$0xff]
  %v416 = vld [vmem:[%s0 + $0xc88] sm:$0xff]
  %v417 = vld [vmem:[%s0 + $0xc90] sm:$0xff]
  %v418 = vld [vmem:[%s0 + $0xc98] sm:$0xff]
  %v419 = vld [vmem:[%s0 + $0xca0] sm:$0xff]
  %v420 = vld [vmem:[%s0 + $0xca8] sm:$0xff]
  %v421 = vld [vmem:[%s0 + $0xcb0] sm:$0xff]
  %v422 = vld [vmem:[%s0 + $0xcb8] sm:$0xff]
  %v423 = vld [vmem:[%s0 + $0xcc0] sm:$0xff]
  %v424 = vld [vmem:[%s0 + $0xcc8] sm:$0xff]
  %v425 = vld [vmem:[%s0 + $0xcd0] sm:$0xff]
  %v426 = vld [vmem:[%s0 + $0xcd8] sm:$0xff]
  %v427 = vld [vmem:[%s0 + $0xce0] sm:$0xff]
  %v428 = vld [vmem:[%s0 + $0xce8] sm:$0xff]
  %v429 = vld [vmem:[%s0 + $0xcf0] sm:$0xff]
  %v430 = vld [vmem:[%s0 + $0xcf8] sm:$0xff]
  %v431 = vld [vmem:[%s0 + $0xd00] sm:$0xff]
  %v432 = vld [vmem:[%s0 + $0xd08] sm:$0xff]
  %v433 = vld [vmem:[%s0 + $0xd10] sm:$0xff]
  %v434 = vld [vmem:[%s0 + $0xd18] sm:$0xff]
  %v435 = vld [vmem:[%s0 + $0xd20] sm:$0xff]
  %v436 = vld [vmem:[%s0 + $0xd28] sm:$0xff]
  %v437 = vld [vmem:[%s0 + $0xd30] sm:$0xff]
  %v438 = vld [vmem:[%s0 + $0xd38] sm:$0xff]
  %v439 = vld [vmem:[%s0 + $0xd40] sm:$0xff]
  %v440 = vld [vmem:[%s0 + $0xd48] sm:$0xff]
  %v441 = vld [vmem:[%s0 + $0xd50] sm:$0xff]
  %v442 = vld [vmem:[%s0 + $0xd58] sm:$0xff]
  %v443 = vld [vmem:[%s0 + $0xd60] sm:$0xff]
  %v444 = vld [vmem:[%s0 + $0xd68] sm:$0xff]
  %v445 = vld [vmem:[%s0 + $0xd70] sm:$0xff]
  %v446 = vld [vmem:[%s0 + $0xd78] sm:$0xff]
  %v447 = vld [vmem:[%s0 + $0xd80] sm:$0xff]
  %v448 = vld [vmem:[%s0 + $0xd88] sm:$0xff]
  %v449 = vld [vmem:[%s0 + $0xd90] sm:$0xff]
  %v450 = vld [vmem:[%s0 + $0xd98] sm:$0xff]
  %v451 = vld [vmem:[%s0 + $0xda0] sm:$0xff]
  %v452 = vld [vmem:[%s0 + $0xda8] sm:$0xff]
  %v453 = vld [vmem:[%s0 + $0xdb0] sm:$0xff]
  %v454 = vld [vmem:[%s0 + $0xdb8] sm:$0xff]
  %v455 = vld [vmem:[%s0 + $0xdc0] sm:$0xff]
  %v456 = vld [vmem:[%s0 + $0xdc8] sm:$0xff]
  %v457 = vld [vmem:[%s0 + $0xdd0] sm:$0xff]
  %v458 = vld [vmem:[%s0 + $0xdd8] sm:$0xff]
  %v459 = vld [vmem:[%s0 + $0xde0] sm:$0xff]
  %v460 = vld [vmem:[%s0 + $0xde8] sm:$0xff]
  %v461 = vld [vmem:[%s0 + $0xdf0] sm:$0xff]
  %v462 = vld [vmem:[%s0 + $0xdf8] sm:$0xff]
  %v463 = vld [vmem:[%s0 + $0xe00] sm:$0xff]
  %v464 = vld [vmem:[%s0 + $0xe08] sm:$0xff]
  %v465 = vld [vmem:[%s0 + $0xe10] sm:$0xff]
  %v466 = vld [vmem:[%s0 + $0xe18] sm:$0xff]
  %v467 = vld [vmem:[%s0 + $0xe20] sm:$0xff]
  %v468 = vld [vmem:[%s0 + $0xe28] sm:$0xff]
  %v469 = vld [vmem:[%s0 + $0xe30] sm:$0xff]
  %v470 = vld [vmem:[%s0 + $0xe38] sm:$0xff]
  %v471 = vld [vmem:[%s0 + $0xe40] sm:$0xff]
  %v472 = vld [vmem:[%s0 + $0xe48] sm:$0xff]
  %v473 = vld [vmem:[%s0 + $0xe50] sm:$0xff]
  %v474 = vld [vmem:[%s0 + $0xe58] sm:$0xff]
  %v475 = vld [vmem:[%s0 + $0xe60] sm:$0xff]
  %v476 = vld [vmem:[%s0 + $0xe68] sm:$0xff]
  %v477 = vld [vmem:[%s0 + $0xe70] sm:$0xff]
  %v478 = vld [vmem:[%s0 + $0xe78] sm:$0xff]
  %v479 = vld [vmem:[%s0 + $0xe80] sm:$0xff]
  %v480 = vld [vmem:[%s0 + $0xe88] sm:$0xff]
  %v481 = vld [vmem:[%s0 + $0xe90] sm:$0xff]
  %v482 = vld [vmem:[%s0 + $0xe98] sm:$0xff]
  %v483 = vld [vmem:[%s0 + $0xea0] sm:$0xff]
  %v484 = vld [vmem:[%s0 + $0xea8] sm:$0xff]
  %v485 = vld [vmem:[%s0 + $0xeb0] sm:$0xff]
  %v486 = vld [vmem:[%s0 + $0xeb8] sm:$0xff]
  %v487 = vld [vmem:[%s0 + $0xec0] sm:$0xff]
  %v488 = vld [vmem:[%s0 + $0xec8] sm:$0xff]
  %v489 = vld [vmem:[%s0 + $0xed0] sm:$0xff]
  %v490 = vld [vmem:[%s0 + $0xed8] sm:$0xff]
  %v491 = vld [vmem:[%s0 + $0xee0] sm:$0xff]
  %v492 = vld [vmem:[%s0 + $0xee8] sm:$0xff]
  %v493 = vld [vmem:[%s0 + $0xef0] sm:$0xff]
  %v494 = vld [vmem:[%s0 + $0xef8] sm:$0xff]
  %v495 = vld [vmem:[%s0 + $0xf00] sm:$0xff]
  %v496 = vld [vmem:[%s0 + $0xf08] sm:$0xff]
  %v497 = vld [vmem:[%s0 + $0xf10] sm:$0xff]
  %v498 = vld [vmem:[%s0 + $0xf18] sm:$0xff]
  %v499 = vld [vmem:[%s0 + $0xf20] sm:$0xff]
  %v500 = vld [vmem:[%s0 + $0xf28] sm:$0xff]
  %v501 = vld [vmem:[%s0 + $0xf30] sm:$0xff]
  %v502 = vld [vmem:[%s0 + $0xf38] sm:$0xff]
  %v503 = vld [vmem:[%s0 + $0xf40] sm:$0xff]
  %v504 = vld [vmem:[%s0 + $0xf48] sm:$0xff]
  %v505 = vld [vmem:[%s0 + $0xf50] sm:$0xff]
  %v506 = vld [vmem:[%s0 + $0xf58] sm:$0xff]
  %v507 = vld [vmem:[%s0 + $0xf60] sm:$0xff]
  %v508 = vld [vmem:[%s0 + $0xf68] sm:$0xff]
  %v509 = vld [vmem:[%s0 + $0xf70] sm:$0xff]
  %v510 = vld [vmem:[%s0 + $0xf78] sm:$0xff]
  %v511 = vld [vmem:[%s0 + $0xf80] sm:$0xff]
  %v512 = vld [vmem:[%s0 + $0xf88] sm:$0xff]
  %v513 = vld [vmem:[%s0 + $0xf90] sm:$0xff]
  %v514 = vld [vmem:[%s0 + $0xf98] sm:$0xff]
  %v515 = vld [vmem:[%s0 + $0xfa0] sm:$0xff]
  %v516 = vld [vmem:[%s0 + $0xfa8] sm:$0xff]
  %v517 = vld [vmem:[%s0 + $0xfb0] sm:$0xff]
  %v518 = vld [vmem:[%s0 + $0xfb8] sm:$0xff]
  %v519 = vld [vmem:[%s0 + $0xfc0] sm:$0xff]
  %v520 = vld [vmem:[%s0 + $0xfc8] sm:$0xff]
  %v521 = vld [vmem:[%s0 + $0xfd0] sm:$0xff]
  %v522 = vld [vmem:[%s0 + $0xfd8] sm:$0xff]
  %v523 = vld [vmem:[%s0 + $0xfe0] sm:$0xff]
  %v524 = vld [vmem:[%s0 + $0xfe8] sm:$0xff]
  %v525 = vld [vmem:[%s0 + $0xff0] sm:$0xff]
  %v526 = vld [vmem:[%s0 + $0xff8] sm:$0xff]
  %v527 = vld [vmem:[%s0 + $0x1000] sm:$0xff]
  %v528 = vld [vmem:[%s0 + $0x1008] sm:$0xff]
  %v529 = vld [vmem:[%s0 + $0x1010] sm:$0xff]
  %v530 = vld [vmem:[%s0 + $0x1018] sm:$0xff]
  %v531 = vld [vmem:[%s0 + $0x1020] sm:$0xff]
  %v532 = vld [vmem:[%s0 + $0x1028] sm:$0xff]
  %v533 = vld [vmem:[%s0 + $0x1030] sm:$0xff]
  %v534 = vld [vmem:[%s0 + $0x1038] sm:$0xff]
  %v535 = vld [vmem:[%s0 + $0x1040] sm:$0xff]
  %v536 = vld [vmem:[%s0 + $0x1048] sm:$0xff]
  %v537 = vld [vmem:[%s0 + $0x1050] sm:$0xff]
  %v538 = vld [vmem:[%s0 + $0x1058] sm:$0xff]
  %v539 = vld [vmem:[%s0 + $0x1060] sm:$0xff]
  %v540 = vld [vmem:[%s0 + $0x1068] sm:$0xff]
  %v541 = vld [vmem:[%s0 + $0x1070] sm:$0xff]
  %v542 = vld [vmem:[%s0 + $0x1078] sm:$0xff]
  %v543 = vld [vmem:[%s0 + $0x1080] sm:$0xff]
  %v544 = vld [vmem:[%s0 + $0x1088] sm:$0xff]
  %v545 = vld [vmem:[%s0 + $0x1090] sm:$0xff]
  %v546 = vld [vmem:[%s0 + $0x1098] sm:$0xff]
  %v547 = vld [vmem:[%s0 + $0x10a0] sm:$0xff]
  %v548 = vld [vmem:[%s0 + $0x10a8] sm:$0xff]
  %v549 = vld [vmem:[%s0 + $0x10b0] sm:$0xff]
  %v550 = vld [vmem:[%s0 + $0x10b8] sm:$0xff]
  %v551 = vld [vmem:[%s0 + $0x10c0] sm:$0xff]
  %v552 = vld [vmem:[%s0 + $0x10c8] sm:$0xff]
  %v553 = vld [vmem:[%s0 + $0x10d0] sm:$0xff]
  %v554 = vld [vmem:[%s0 + $0x10d8] sm:$0xff]
  %v555 = vld [vmem:[%s0 + $0x10e0] sm:$0xff]
  %v556 = vld [vmem:[%s0 + $0x10e8] sm:$0xff]
  %v557 = vld [vmem:[%s0 + $0x10f0] sm:$0xff]
  %v558 = vld [vmem:[%s0 + $0x10f8] sm:$0xff]
  %v559 = vld [vmem:[%s0 + $0x1100] sm:$0xff]
  %v560 = vld [vmem:[%s0 + $0x1108] sm:$0xff]
  %v561 = vld [vmem:[%s0 + $0x1110] sm:$0xff]
  %v562 = vld [vmem:[%s0 + $0x1118] sm:$0xff]
  %v563 = vld [vmem:[%s0 + $0x1120] sm:$0xff]
  %v564 = vld [vmem:[%s0 + $0x1128] sm:$0xff]
  %v565 = vld [vmem:[%s0 + $0x1130] sm:$0xff]
  %v566 = vld [vmem:[%s0 + $0x1138] sm:$0xff]
  %v567 = vld [vmem:[%s0 + $0x1140] sm:$0xff]
  %v568 = vld [vmem:[%s0 + $0x1148] sm:$0xff]
  %v569 = vld [vmem:[%s0 + $0x1150] sm:$0xff]
  %v570 = vld [vmem:[%s0 + $0x1158] sm:$0xff]
  %v571 = vld [vmem:[%s0 + $0x1160] sm:$0xff]
  %v572 = vld [vmem:[%s0 + $0x1168] sm:$0xff]
  %v573 = vld [vmem:[%s0 + $0x1170] sm:$0xff]
  %v574 = vld [vmem:[%s0 + $0x1178] sm:$0xff]
  %v575 = vld [vmem:[%s0 + $0x1180] sm:$0xff]
  %v576 = vld [vmem:[%s0 + $0x1188] sm:$0xff]
  %v577 = vld [vmem:[%s0 + $0x1190] sm:$0xff]
  %v578 = vld [vmem:[%s0 + $0x1198] sm:$0xff]
  %v579 = vld [vmem:[%s0 + $0x11a0] sm:$0xff]
  %v580 = vld [vmem:[%s0 + $0x11a8] sm:$0xff]
  %v581 = vld [vmem:[%s0 + $0x11b0] sm:$0xff]
  %v582 = vld [vmem:[%s0 + $0x11b8] sm:$0xff]
  %v583 = vld [vmem:[%s0 + $0x11c0] sm:$0xff]
  %v584 = vld [vmem:[%s0 + $0x11c8] sm:$0xff]
  %v585 = vld [vmem:[%s0 + $0x11d0] sm:$0xff]
  %v586 = vld [vmem:[%s0 + $0x11d8] sm:$0xff]
  %v587 = vld [vmem:[%s0 + $0x11e0] sm:$0xff]
  %v588 = vld [vmem:[%s0 + $0x11e8] sm:$0xff]
  %v589 = vld [vmem:[%s0 + $0x11f0] sm:$0xff]
  %v590 = vld [vmem:[%s0 + $0x11f8] sm:$0xff]
  %v591 = vld [vmem:[%s0 + $0x1200] sm:$0xff]
  %v592 = vld [vmem:[%s0 + $0x1208] sm:$0xff]
  %v593 = vld [vmem:[%s0 + $0x1210] sm:$0xff]
  %v594 = vld [vmem:[%s0 + $0x1218] sm:$0xff]
  %v595 = vld [vmem:[%s0 + $0x1220] sm:$0xff]
  %v596 = vld [vmem:[%s0 + $0x1228] sm:$0xff]
  %v597 = vld [vmem:[%s0 + $0x1230] sm:$0xff]
  %v598 = vld [vmem:[%s0 + $0x1238] sm:$0xff]
  %v599 = vld [vmem:[%s0 + $0x1240] sm:$0xff]
  %v600 = vld [vmem:[%s0 + $0x1248] sm:$0xff]
  %v601 = vld [vmem:[%s0 + $0x1250] sm:$0xff]
  %v602 = vld [vmem:[%s0 + $0x1258] sm:$0xff]
  %v603 = vld [vmem:[%s0 + $0x1260] sm:$0xff]
  %v604 = vld [vmem:[%s0 + $0x1268] sm:$0xff]
  %v605 = vld [vmem:[%s0 + $0x1270] sm:$0xff]
  %v606 = vld [vmem:[%s0 + $0x1278] sm:$0xff]
  %v607 = vld [vmem:[%s0 + $0x1280] sm:$0xff]
  %v608 = vld [vmem:[%s0 + $0x1288] sm:$0xff]
  %v609 = vld [vmem:[%s0 + $0x1290] sm:$0xff]
  %v610 = vld [vmem:[%s0 + $0x1298] sm:$0xff]
  %v611 = vld [vmem:[%s0 + $0x12a0] sm:$0xff]
  %v612 = vld [vmem:[%s0 + $0x12a8] sm:$0xff]
  %v613 = vld [vmem:[%s0 + $0x12b0] sm:$0xff]
  %v614 = vld [vmem:[%s0 + $0x12b8] sm:$0xff]
  %v615 = vld [vmem:[%s0 + $0x12c0] sm:$0xff]
  %v616 = vld [vmem:[%s0 + $0x12c8] sm:$0xff]
  %v617 = vld [vmem:[%s0 + $0x12d0] sm:$0xff]
  %v618 = vld [vmem:[%s0 + $0x12d8] sm:$0xff]
  %v619 = vld [vmem:[%s0 + $0x12e0] sm:$0xff]
  %v620 = vld [vmem:[%s0 + $0x12e8] sm:$0xff]
  %v621 = vld [vmem:[%s0 + $0x12f0] sm:$0xff]
  %v622 = vld [vmem:[%s0 + $0x12f8] sm:$0xff]
  %v623 = vld [vmem:[%s0 + $0x1300] sm:$0xff]
  %v624 = vld [vmem:[%s0 + $0x1308] sm:$0xff]
  %v625 = vld [vmem:[%s0 + $0x1310] sm:$0xff]
  %v626 = vld [vmem:[%s0 + $0x1318] sm:$0xff]
  %v627 = vld [vmem:[%s0 + $0x1320] sm:$0xff]
  %v628 = vld [vmem:[%s0 + $0x1328] sm:$0xff]
  %v629 = vld [vmem:[%s0 + $0x1330] sm:$0xff]
  %v630 = vld [vmem:[%s0 + $0x1338] sm:$0xff]
  %v631 = vld [vmem:[%s0 + $0x1340] sm:$0xff]
  %v632 = vld [vmem:[%s0 + $0x1348] sm:$0xff]
  %v633 = vld [vmem:[%s0 + $0x1350] sm:$0xff]
  %v634 = vld [vmem:[%s0 + $0x1358] sm:$0xff]
  %v635 = vld [vmem:[%s0 + $0x1360] sm:$0xff]
  %v636 = vld [vmem:[%s0 + $0x1368] sm:$0xff]
  %v637 = vld [vmem:[%s0 + $0x1370] sm:$0xff]
  %v638 = vld [vmem:[%s0 + $0x1378] sm:$0xff]
  %v639 = vld [vmem:[%s0 + $0x1380] sm:$0xff]
  %v640 = vld [vmem:[%s0 + $0x1388] sm:$0xff]
  %v641 = vld [vmem:[%s0 + $0x1390] sm:$0xff]
  %v642 = vld [vmem:[%s0 + $0x1398] sm:$0xff]
  %v643 = vld [vmem:[%s0 + $0x13a0] sm:$0xff]
  %v644 = vld [vmem:[%s0 + $0x13a8] sm:$0xff]
  %v645 = vld [vmem:[%s0 + $0x13b0] sm:$0xff]
  %v646 = vld [vmem:[%s0 + $0x13b8] sm:$0xff]
  %v647 = vld [vmem:[%s0 + $0x13c0] sm:$0xff]
  %v648 = vld [vmem:[%s0 + $0x13c8] sm:$0xff]
  %v649 = vld [vmem:[%s0 + $0x13d0] sm:$0xff]
  %v650 = vld [vmem:[%s0 + $0x13d8] sm:$0xff]
  %v651 = vld [vmem:[%s0 + $0x13e0] sm:$0xff]
  %v652 = vld [vmem:[%s0 + $0x13e8] sm:$0xff]
  %v653 = vld [vmem:[%s0 + $0x13f0] sm:$0xff]
  %v654 = vld [vmem:[%s0 + $0x13f8] sm:$0xff]
  %v655 = vld [vmem:[%s0 + $0x1400] sm:$0xff]
  %v656 = vld [vmem:[%s0 + $0x1408] sm:$0xff]
  %v657 = vld [vmem:[%s0 + $0x1410] sm:$0xff]
  %v658 = vld [vmem:[%s0 + $0x1418] sm:$0xff]
  %v659 = vld [vmem:[%s0 + $0x1420] sm:$0xff]
  %v660 = vld [vmem:[%s0 + $0x1428] sm:$0xff]
  %v661 = vld [vmem:[%s0 + $0x1430] sm:$0xff]
  %v662 = vld [vmem:[%s0 + $0x1438] sm:$0xff]
  %v663 = vld [vmem:[%s0 + $0x1440] sm:$0xff]
  %v664 = vld [vmem:[%s0 + $0x1448] sm:$0xff]
  %v665 = vld [vmem:[%s0 + $0x1450] sm:$0xff]
  %v666 = vld [vmem:[%s0 + $0x1458] sm:$0xff]
  %v667 = vld [vmem:[%s0 + $0x1460] sm:$0xff]
  %v668 = vld [vmem:[%s0 + $0x1468] sm:$0xff]
  %v669 = vld [vmem:[%s0 + $0x1470] sm:$0xff]
  %v670 = vld [vmem:[%s0 + $0x1478] sm:$0xff]
  %v671 = vld [vmem:[%s0 + $0x1480] sm:$0xff]
  %v672 = vld [vmem:[%s0 + $0x1488] sm:$0xff]
  %v673 = vld [vmem:[%s0 + $0x1490] sm:$0xff]
  %v674 = vld [vmem:[%s0 + $0x1498] sm:$0xff]
  %v675 = vld [vmem:[%s0 + $0x14a0] sm:$0xff]
  %v676 = vld [vmem:[%s0 + $0x14a8] sm:$0xff]
  %v677 = vld [vmem:[%s0 + $0x14b0] sm:$0xff]
  %v678 = vld [vmem:[%s0 + $0x14b8] sm:$0xff]
  %v679 = vld [vmem:[%s0 + $0x14c0] sm:$0xff]
  %v680 = vld [vmem:[%s0 + $0x14c8] sm:$0xff]
  %v681 = vld [vmem:[%s0 + $0x14d0] sm:$0xff]
  %v682 = vld [vmem:[%s0 + $0x14d8] sm:$0xff]
  %v683 = vld [vmem:[%s0 + $0x14e0] sm:$0xff]
  %v684 = vld [vmem:[%s0 + $0x14e8] sm:$0xff]
  %v685 = vld [vmem:[%s0 + $0x14f0] sm:$0xff]
  %v686 = vld [vmem:[%s0 + $0x14f8] sm:$0xff]
  %v687 = vld [vmem:[%s0 + $0x1500] sm:$0xff]
  %v688 = vld [vmem:[%s0 + $0x1508] sm:$0xff]
  %v689 = vld [vmem:[%s0 + $0x1510] sm:$0xff]
  %v690 = vld [vmem:[%s0 + $0x1518] sm:$0xff]
  %v691 = vld [vmem:[%s0 + $0x1520] sm:$0xff]
  %v692 = vld [vmem:[%s0 + $0x1528] sm:$0xff]
  %v693 = vld [vmem:[%s0 + $0x1530] sm:$0xff]
  %v694 = vld [vmem:[%s0 + $0x1538] sm:$0xff]
  %v695 = vld [vmem:[%s0 + $0x1540] sm:$0xff]
  %v696 = vld [vmem:[%s0 + $0x1548] sm:$0xff]
  %v697 = vld [vmem:[%s0 + $0x1550] sm:$0xff]
  %v698 = vld [vmem:[%s0 + $0x1558] sm:$0xff]
  %v699 = vld [vmem:[%s0 + $0x1560] sm:$0xff]
  %v700 = vld [vmem:[%s0 + $0x1568] sm:$0xff]
  %v701 = vld [vmem:[%s0 + $0x1570] sm:$0xff]
  %v702 = vld [vmem:[%s0 + $0x1578] sm:$0xff]
  %v703 = vld [vmem:[%s0 + $0x1580] sm:$0xff]
  %v704 = vld [vmem:[%s0 + $0x1588] sm:$0xff]
  %v705 = vld [vmem:[%s0 + $0x1590] sm:$0xff]
  %v706 = vld [vmem:[%s0 + $0x1598] sm:$0xff]
  %v707 = vld [vmem:[%s0 + $0x15a0] sm:$0xff]
  %v708 = vld [vmem:[%s0 + $0x15a8] sm:$0xff]
  %v709 = vld [vmem:[%s0 + $0x15b0] sm:$0xff]
  %v710 = vld [vmem:[%s0 + $0x15b8] sm:$0xff]
  %v711 = vld [vmem:[%s0 + $0x15c0] sm:$0xff]
  %v712 = vld [vmem:[%s0 + $0x15c8] sm:$0xff]
  %v713 = vld [vmem:[%s0 + $0x15d0] sm:$0xff]
  %v714 = vld [vmem:[%s0 + $0x15d8] sm:$0xff]
  %v715 = vpack.c.bf16 %v22, %v15
  %v716 = vpack.c.bf16 %v23, %v16
  %v717 = vpack.c.bf16 %v24, %v17
  %v718 = vpack.c.bf16 %v25, %v18
  %v719 = vpack.c.bf16 %v26, %v19
  %v720 = vpack.c.bf16 %v27, %v20
  %v721 = vpack.c.bf16 %v28, %v21
  %v722 = vpack.c.bf16 %v36, %v29
  %v723 = vpack.c.bf16 %v37, %v30
  %v724 = vpack.c.bf16 %v38, %v31
  %v725 = vpack.c.bf16 %v39, %v32
  %v726 = vpack.c.bf16 %v40, %v33
  %v727 = vpack.c.bf16 %v41, %v34
  %v728 = vpack.c.bf16 %v42, %v35
  %v729 = vpack.c.bf16 %v50, %v43
  %v730 = vpack.c.bf16 %v51, %v44
  %v731 = vpack.c.bf16 %v52, %v45
  %v732 = vpack.c.bf16 %v53, %v46
  %v733 = vpack.c.bf16 %v54, %v47
  %v734 = vpack.c.bf16 %v55, %v48
  %v735 = vpack.c.bf16 %v56, %v49
  %v736 = vpack.c.bf16 %v64, %v57
  %v737 = vpack.c.bf16 %v65, %v58
  %v738 = vpack.c.bf16 %v66, %v59
  %v739 = vpack.c.bf16 %v67, %v60
  %v740 = vpack.c.bf16 %v68, %v61
  %v741 = vpack.c.bf16 %v69, %v62
  %v742 = vpack.c.bf16 %v70, %v63
  %v743 = vpack.c.bf16 %v78, %v71
  %v744 = vpack.c.bf16 %v79, %v72
  %v745 = vpack.c.bf16 %v80, %v73
  %v746 = vpack.c.bf16 %v81, %v74
  %v747 = vpack.c.bf16 %v82, %v75
  %v748 = vpack.c.bf16 %v83, %v76
  %v749 = vpack.c.bf16 %v84, %v77
  %v750 = vpack.c.bf16 %v92, %v85
  %v751 = vpack.c.bf16 %v93, %v86
  %v752 = vpack.c.bf16 %v94, %v87
  %v753 = vpack.c.bf16 %v95, %v88
  %v754 = vpack.c.bf16 %v96, %v89
  %v755 = vpack.c.bf16 %v97, %v90
  %v756 = vpack.c.bf16 %v98, %v91
  %v757 = vpack.c.bf16 %v106, %v99
  %v758 = vpack.c.bf16 %v107, %v100
  %v759 = vpack.c.bf16 %v108, %v101
  %v760 = vpack.c.bf16 %v109, %v102
  %v761 = vpack.c.bf16 %v110, %v103
  %v762 = vpack.c.bf16 %v111, %v104
  %v763 = vpack.c.bf16 %v112, %v105
  %v764 = vpack.c.bf16 %v120, %v113
  %v765 = vpack.c.bf16 %v121, %v114
  %v766 = vpack.c.bf16 %v122, %v115
  %v767 = vpack.c.bf16 %v123, %v116
  %v768 = vpack.c.bf16 %v124, %v117
  %v769 = vpack.c.bf16 %v125, %v118
  %v770 = vpack.c.bf16 %v126, %v119
  %v771 = vpack.c.bf16 %v134, %v127
  %v772 = vpack.c.bf16 %v135, %v128
  %v773 = vpack.c.bf16 %v136, %v129
  %v774 = vpack.c.bf16 %v137, %v130
  %v775 = vpack.c.bf16 %v138, %v131
  %v776 = vpack.c.bf16 %v139, %v132
  %v777 = vpack.c.bf16 %v140, %v133
  %v778 = vpack.c.bf16 %v148, %v141
  %v779 = vpack.c.bf16 %v149, %v142
  %v780 = vpack.c.bf16 %v150, %v143
  %v781 = vpack.c.bf16 %v151, %v144
  %v782 = vpack.c.bf16 %v152, %v145
  %v783 = vpack.c.bf16 %v153, %v146
  %v784 = vpack.c.bf16 %v154, %v147
  %v785 = vpack.c.bf16 %v162, %v155
  %v786 = vpack.c.bf16 %v163, %v156
  %v787 = vpack.c.bf16 %v164, %v157
  %v788 = vpack.c.bf16 %v165, %v158
  %v789 = vpack.c.bf16 %v166, %v159
  %v790 = vpack.c.bf16 %v167, %v160
  %v791 = vpack.c.bf16 %v168, %v161
  %v792 = vpack.c.bf16 %v176, %v169
  %v793 = vpack.c.bf16 %v177, %v170
  %v794 = vpack.c.bf16 %v178, %v171
  %v795 = vpack.c.bf16 %v179, %v172
  %v796 = vpack.c.bf16 %v180, %v173
  %v797 = vpack.c.bf16 %v181, %v174
  %v798 = vpack.c.bf16 %v182, %v175
  %v799 = vpack.c.bf16 %v190, %v183
  %v800 = vpack.c.bf16 %v191, %v184
  %v801 = vpack.c.bf16 %v192, %v185
  %v802 = vpack.c.bf16 %v193, %v186
  %v803 = vpack.c.bf16 %v194, %v187
  %v804 = vpack.c.bf16 %v195, %v188
  %v805 = vpack.c.bf16 %v196, %v189
  %v806 = vpack.c.bf16 %v204, %v197
  %v807 = vpack.c.bf16 %v205, %v198
  %v808 = vpack.c.bf16 %v206, %v199
  %v809 = vpack.c.bf16 %v207, %v200
  %v810 = vpack.c.bf16 %v208, %v201
  %v811 = vpack.c.bf16 %v209, %v202
  %v812 = vpack.c.bf16 %v210, %v203
  %v813 = vpack.c.bf16 %v218, %v211
  %v814 = vpack.c.bf16 %v219, %v212
  %v815 = vpack.c.bf16 %v220, %v213
  %v816 = vpack.c.bf16 %v221, %v214
  %v817 = vpack.c.bf16 %v222, %v215
  %v818 = vpack.c.bf16 %v223, %v216
  %v819 = vpack.c.bf16 %v224, %v217
  %v820 = vpack.c.bf16 %v232, %v225
  %v821 = vpack.c.bf16 %v233, %v226
  %v822 = vpack.c.bf16 %v234, %v227
  %v823 = vpack.c.bf16 %v235, %v228
  %v824 = vpack.c.bf16 %v236, %v229
  %v825 = vpack.c.bf16 %v237, %v230
  %v826 = vpack.c.bf16 %v238, %v231
  %v827 = vpack.c.bf16 %v246, %v239
  %v828 = vpack.c.bf16 %v247, %v240
  %v829 = vpack.c.bf16 %v248, %v241
  %v830 = vpack.c.bf16 %v249, %v242
  %v831 = vpack.c.bf16 %v250, %v243
  %v832 = vpack.c.bf16 %v251, %v244
  %v833 = vpack.c.bf16 %v252, %v245
  %v834 = vpack.c.bf16 %v260, %v253
  %v835 = vpack.c.bf16 %v261, %v254
  %v836 = vpack.c.bf16 %v262, %v255
  %v837 = vpack.c.bf16 %v263, %v256
  %v838 = vpack.c.bf16 %v264, %v257
  %v839 = vpack.c.bf16 %v265, %v258
  %v840 = vpack.c.bf16 %v266, %v259
  %v841 = vpack.c.bf16 %v274, %v267
  %v842 = vpack.c.bf16 %v275, %v268
  %v843 = vpack.c.bf16 %v276, %v269
  %v844 = vpack.c.bf16 %v277, %v270
  %v845 = vpack.c.bf16 %v278, %v271
  %v846 = vpack.c.bf16 %v279, %v272
  %v847 = vpack.c.bf16 %v280, %v273
  %v848 = vpack.c.bf16 %v288, %v281
  %v849 = vpack.c.bf16 %v289, %v282
  %v850 = vpack.c.bf16 %v290, %v283
  %v851 = vpack.c.bf16 %v291, %v284
  %v852 = vpack.c.bf16 %v292, %v285
  %v853 = vpack.c.bf16 %v293, %v286
  %v854 = vpack.c.bf16 %v294, %v287
  %v855 = vpack.c.bf16 %v302, %v295
  %v856 = vpack.c.bf16 %v303, %v296
  %v857 = vpack.c.bf16 %v304, %v297
  %v858 = vpack.c.bf16 %v305, %v298
  %v859 = vpack.c.bf16 %v306, %v299
  %v860 = vpack.c.bf16 %v307, %v300
  %v861 = vpack.c.bf16 %v308, %v301
  %v862 = vpack.c.bf16 %v316, %v309
  %v863 = vpack.c.bf16 %v317, %v310
  %v864 = vpack.c.bf16 %v318, %v311
  %v865 = vpack.c.bf16 %v319, %v312
  %v866 = vpack.c.bf16 %v320, %v313
  %v867 = vpack.c.bf16 %v321, %v314
  %v868 = vpack.c.bf16 %v322, %v315
  %v869 = vpack.c.bf16 %v330, %v323
  %v870 = vpack.c.bf16 %v331, %v324
  %v871 = vpack.c.bf16 %v332, %v325
  %v872 = vpack.c.bf16 %v333, %v326
  %v873 = vpack.c.bf16 %v334, %v327
  %v874 = vpack.c.bf16 %v335, %v328
  %v875 = vpack.c.bf16 %v336, %v329
  %v876 = vpack.c.bf16 %v344, %v337
  %v877 = vpack.c.bf16 %v345, %v338
  %v878 = vpack.c.bf16 %v346, %v339
  %v879 = vpack.c.bf16 %v347, %v340
  %v880 = vpack.c.bf16 %v348, %v341
  %v881 = vpack.c.bf16 %v349, %v342
  %v882 = vpack.c.bf16 %v350, %v343
  %v883 = vpack.c.bf16 %v358, %v351
  %v884 = vpack.c.bf16 %v359, %v352
  %v885 = vpack.c.bf16 %v360, %v353
  %v886 = vpack.c.bf16 %v361, %v354
  %v887 = vpack.c.bf16 %v362, %v355
  %v888 = vpack.c.bf16 %v363, %v356
  %v889 = vpack.c.bf16 %v364, %v357
  %v890 = vpack.c.bf16 %v372, %v365
  %v891 = vpack.c.bf16 %v373, %v366
  %v892 = vpack.c.bf16 %v374, %v367
  %v893 = vpack.c.bf16 %v375, %v368
  %v894 = vpack.c.bf16 %v376, %v369
  %v895 = vpack.c.bf16 %v377, %v370
  %v896 = vpack.c.bf16 %v378, %v371
  %v897 = vpack.c.bf16 %v386, %v379
  %v898 = vpack.c.bf16 %v387, %v380
  %v899 = vpack.c.bf16 %v388, %v381
  %v900 = vpack.c.bf16 %v389, %v382
  %v901 = vpack.c.bf16 %v390, %v383
  %v902 = vpack.c.bf16 %v391, %v384
  %v903 = vpack.c.bf16 %v392, %v385
  %v904 = vpack.c.bf16 %v400, %v393
  %v905 = vpack.c.bf16 %v401, %v394
  %v906 = vpack.c.bf16 %v402, %v395
  %v907 = vpack.c.bf16 %v403, %v396
  %v908 = vpack.c.bf16 %v404, %v397
  %v909 = vpack.c.bf16 %v405, %v398
  %v910 = vpack.c.bf16 %v406, %v399
  %v911 = vpack.c.bf16 %v414, %v407
  %v912 = vpack.c.bf16 %v415, %v408
  %v913 = vpack.c.bf16 %v416, %v409
  %v914 = vpack.c.bf16 %v417, %v410
  %v915 = vpack.c.bf16 %v418, %v411
  %v916 = vpack.c.bf16 %v419, %v412
  %v917 = vpack.c.bf16 %v420, %v413
  %v918 = vpack.c.bf16 %v428, %v421
  %v919 = vpack.c.bf16 %v429, %v422
  %v920 = vpack.c.bf16 %v430, %v423
  %v921 = vpack.c.bf16 %v431, %v424
  %v922 = vpack.c.bf16 %v432, %v425
  %v923 = vpack.c.bf16 %v433, %v426
  %v924 = vpack.c.bf16 %v434, %v427
  %v925 = vpack.c.bf16 %v442, %v435
  %v926 = vpack.c.bf16 %v443, %v436
  %v927 = vpack.c.bf16 %v444, %v437
  %v928 = vpack.c.bf16 %v445, %v438
  %v929 = vpack.c.bf16 %v446, %v439
  %v930 = vpack.c.bf16 %v447, %v440
  %v931 = vpack.c.bf16 %v448, %v441
  %v932 = vpack.c.bf16 %v456, %v449
  %v933 = vpack.c.bf16 %v457, %v450
  %v934 = vpack.c.bf16 %v458, %v451
  %v935 = vpack.c.bf16 %v459, %v452
  %v936 = vpack.c.bf16 %v460, %v453
  %v937 = vpack.c.bf16 %v461, %v454
  %v938 = vpack.c.bf16 %v462, %v455
  %v939 = vpack.c.bf16 %v470, %v463
  %v940 = vpack.c.bf16 %v471, %v464
  %v941 = vpack.c.bf16 %v472, %v465
  %v942 = vpack.c.bf16 %v473, %v466
  %v943 = vpack.c.bf16 %v474, %v467
  %v944 = vpack.c.bf16 %v475, %v468
  %v945 = vpack.c.bf16 %v476, %v469
  %v946 = vpack.c.bf16 %v484, %v477
  %v947 = vpack.c.bf16 %v485, %v478
  %v948 = vpack.c.bf16 %v486, %v479
  %v949 = vpack.c.bf16 %v487, %v480
  %v950 = vpack.c.bf16 %v488, %v481
  %v951 = vpack.c.bf16 %v489, %v482
  %v952 = vpack.c.bf16 %v490, %v483
  %v953 = vpack.c.bf16 %v498, %v491
  %v954 = vpack.c.bf16 %v499, %v492
  %v955 = vpack.c.bf16 %v500, %v493
  %v956 = vpack.c.bf16 %v501, %v494
  %v957 = vpack.c.bf16 %v502, %v495
  %v958 = vpack.c.bf16 %v503, %v496
  %v959 = vpack.c.bf16 %v504, %v497
  %v960 = vpack.c.bf16 %v512, %v505
  %v961 = vpack.c.bf16 %v513, %v506
  %v962 = vpack.c.bf16 %v514, %v507
  %v963 = vpack.c.bf16 %v515, %v508
  %v964 = vpack.c.bf16 %v516, %v509
  %v965 = vpack.c.bf16 %v517, %v510
  %v966 = vpack.c.bf16 %v518, %v511
  %v967 = vpack.c.bf16 %v526, %v519
  %v968 = vpack.c.bf16 %v527, %v520
  %v969 = vpack.c.bf16 %v528, %v521
  %v970 = vpack.c.bf16 %v529, %v522
  %v971 = vpack.c.bf16 %v530, %v523
  %v972 = vpack.c.bf16 %v531, %v524
  %v973 = vpack.c.bf16 %v532, %v525
  %v974 = vpack.c.bf16 %v540, %v533
  %v975 = vpack.c.bf16 %v541, %v534
  %v976 = vpack.c.bf16 %v542, %v535
  %v977 = vpack.c.bf16 %v543, %v536
  %v978 = vpack.c.bf16 %v544, %v537
  %v979 = vpack.c.bf16 %v545, %v538
  %v980 = vpack.c.bf16 %v546, %v539
  %v981 = vpack.c.bf16 %v554, %v547
  %v982 = vpack.c.bf16 %v555, %v548
  %v983 = vpack.c.bf16 %v556, %v549
  %v984 = vpack.c.bf16 %v557, %v550
  %v985 = vpack.c.bf16 %v558, %v551
  %v986 = vpack.c.bf16 %v559, %v552
  %v987 = vpack.c.bf16 %v560, %v553
  %v988 = vpack.c.bf16 %v568, %v561
  %v989 = vpack.c.bf16 %v569, %v562
  %v990 = vpack.c.bf16 %v570, %v563
  %v991 = vpack.c.bf16 %v571, %v564
  %v992 = vpack.c.bf16 %v572, %v565
  %v993 = vpack.c.bf16 %v573, %v566
  %v994 = vpack.c.bf16 %v574, %v567
  %v995 = vpack.c.bf16 %v582, %v575
  %v996 = vpack.c.bf16 %v583, %v576
  %v997 = vpack.c.bf16 %v584, %v577
  %v998 = vpack.c.bf16 %v585, %v578
  %v999 = vpack.c.bf16 %v586, %v579
  %v1000 = vpack.c.bf16 %v587, %v580
  %v1001 = vpack.c.bf16 %v588, %v581
  %v1002 = vpack.c.bf16 %v596, %v589
  %v1003 = vpack.c.bf16 %v597, %v590
  %v1004 = vpack.c.bf16 %v598, %v591
  %v1005 = vpack.c.bf16 %v599, %v592
  %v1006 = vpack.c.bf16 %v600, %v593
  %v1007 = vpack.c.bf16 %v601, %v594
  %v1008 = vpack.c.bf16 %v602, %v595
  %v1009 = vpack.c.bf16 %v610, %v603
  %v1010 = vpack.c.bf16 %v611, %v604
  %v1011 = vpack.c.bf16 %v612, %v605
  %v1012 = vpack.c.bf16 %v613, %v606
  %v1013 = vpack.c.bf16 %v614, %v607
  %v1014 = vpack.c.bf16 %v615, %v608
  %v1015 = vpack.c.bf16 %v616, %v609
  %v1016 = vpack.c.bf16 %v624, %v617
  %v1017 = vpack.c.bf16 %v625, %v618
  %v1018 = vpack.c.bf16 %v626, %v619
  %v1019 = vpack.c.bf16 %v627, %v620
  %v1020 = vpack.c.bf16 %v628, %v621
  %v1021 = vpack.c.bf16 %v629, %v622
  %v1022 = vpack.c.bf16 %v630, %v623
  %v1023 = vpack.c.bf16 %v638, %v631
  %v1024 = vpack.c.bf16 %v639, %v632
  %v1025 = vpack.c.bf16 %v640, %v633
  %v1026 = vpack.c.bf16 %v641, %v634
  %v1027 = vpack.c.bf16 %v642, %v635
  %v1028 = vpack.c.bf16 %v643, %v636
  %v1029 = vpack.c.bf16 %v644, %v637
  %v1030 = vpack.c.bf16 %v652, %v645
  %v1031 = vpack.c.bf16 %v653, %v646
  %v1032 = vpack.c.bf16 %v654, %v647
  %v1033 = vpack.c.bf16 %v655, %v648
  %v1034 = vpack.c.bf16 %v656, %v649
  %v1035 = vpack.c.bf16 %v657, %v650
  %v1036 = vpack.c.bf16 %v658, %v651
  %v1037 = vpack.c.bf16 %v666, %v659
  %v1038 = vpack.c.bf16 %v667, %v660
  %v1039 = vpack.c.bf16 %v668, %v661
  %v1040 = vpack.c.bf16 %v669, %v662
  %v1041 = vpack.c.bf16 %v670, %v663
  %v1042 = vpack.c.bf16 %v671, %v664
  %v1043 = vpack.c.bf16 %v672, %v665
  %v1044 = vpack.c.bf16 %v680, %v673
  %v1045 = vpack.c.bf16 %v681, %v674
  %v1046 = vpack.c.bf16 %v682, %v675
  %v1047 = vpack.c.bf16 %v683, %v676
  %v1048 = vpack.c.bf16 %v684, %v677
  %v1049 = vpack.c.bf16 %v685, %v678
  %v1050 = vpack.c.bf16 %v686, %v679
  %v1051 = vpack.c.bf16 %v694, %v687
  %v1052 = vpack.c.bf16 %v695, %v688
  %v1053 = vpack.c.bf16 %v696, %v689
  %v1054 = vpack.c.bf16 %v697, %v690
  %v1055 = vpack.c.bf16 %v698, %v691
  %v1056 = vpack.c.bf16 %v699, %v692
  %v1057 = vpack.c.bf16 %v700, %v693
  %v1058 = vpack.c.bf16 %v708, %v701
  %v1059 = vpack.c.bf16 %v709, %v702
  %v1060 = vpack.c.bf16 %v710, %v703
  %v1061 = vpack.c.bf16 %v711, %v704
  %v1062 = vpack.c.bf16 %v712, %v705
  %v1063 = vpack.c.bf16 %v713, %v706
  %v1064 = vpack.c.bf16 %v714, %v707
  %v1065 = vld [vmem:[%s1] sm:$0xf]
  %v1066 = vld [vmem:[%s1 + $0x4] sm:$0xf]
  %v1067 = vld [vmem:[%s1 + $0x8] sm:$0xf]
  %v1068 = vld [vmem:[%s1 + $0xc] sm:$0xf]
  %v1069 = vld [vmem:[%s1 + $0x10] sm:$0xf]
  %v1070 = vld [vmem:[%s1 + $0x14] sm:$0xf]
  %v1071 = vld [vmem:[%s1 + $0x18] sm:$0xf]
  %v1072 = vld [vmem:[%s1 + $0x1c] sm:$0xf]
  %v1073 = vld [vmem:[%s1 + $0x20] sm:$0xf]
  %v1074 = vld [vmem:[%s1 + $0x24] sm:$0xf]
  %v1075 = vld [vmem:[%s1 + $0x28] sm:$0xf]
  %v1076 = vld [vmem:[%s1 + $0x2c] sm:$0xf]
  %v1077 = vld [vmem:[%s1 + $0x30] sm:$0xf]
  %v1078 = vld [vmem:[%s1 + $0x34] sm:$0xf]
  %v1079 = vld [vmem:[%s1 + $0x38] sm:$0xf]
  %v1080 = vld [vmem:[%s1 + $0x3c] sm:$0xf]
  %v1081 = vld [vmem:[%s1 + $0x40] sm:$0xf]
  %v1082 = vld [vmem:[%s1 + $0x44] sm:$0xf]
  %v1083 = vld [vmem:[%s1 + $0x48] sm:$0xf]
  %v1084 = vld [vmem:[%s1 + $0x4c] sm:$0xf]
  %v1085 = vld [vmem:[%s1 + $0x50] sm:$0xf]
  %v1086 = vld [vmem:[%s1 + $0x54] sm:$0xf]
  %v1087 = vld [vmem:[%s1 + $0x58] sm:$0xf]
  %v1088 = vld [vmem:[%s1 + $0x5c] sm:$0xf]
  %v1089 = vld [vmem:[%s1 + $0x60] sm:$0xf]
  %v1090 = vld [vmem:[%s1 + $0x64] sm:$0xf]
  %v1091 = vld [vmem:[%s1 + $0x68] sm:$0xf]
  %v1092 = vld [vmem:[%s1 + $0x6c] sm:$0xf]
  %v1093 = vld [vmem:[%s1 + $0x70] sm:$0xf]
  %v1094 = vld [vmem:[%s1 + $0x74] sm:$0xf]
  %v1095 = vld [vmem:[%s1 + $0x78] sm:$0xf]
  %v1096 = vld [vmem:[%s1 + $0x7c] sm:$0xf]
  %v1097 = vld [vmem:[%s1 + $0x80] sm:$0xf]
  %v1098 = vld [vmem:[%s1 + $0x84] sm:$0xf]
  %v1099 = vld [vmem:[%s1 + $0x88] sm:$0xf]
  %v1100 = vld [vmem:[%s1 + $0x8c] sm:$0xf]
  %v1101 = vld [vmem:[%s1 + $0x90] sm:$0xf]
  %v1102 = vld [vmem:[%s1 + $0x94] sm:$0xf]
  %v1103 = vld [vmem:[%s1 + $0x98] sm:$0xf]
  %v1104 = vld [vmem:[%s1 + $0x9c] sm:$0xf]
  %v1105 = vld [vmem:[%s1 + $0xa0] sm:$0xf]
  %v1106 = vld [vmem:[%s1 + $0xa4] sm:$0xf]
  %v1107 = vld [vmem:[%s1 + $0xa8] sm:$0xf]
  %v1108 = vld [vmem:[%s1 + $0xac] sm:$0xf]
  %v1109 = vld [vmem:[%s1 + $0xb0] sm:$0xf]
  %v1110 = vld [vmem:[%s1 + $0xb4] sm:$0xf]
  %v1111 = vld [vmem:[%s1 + $0xb8] sm:$0xf]
  %v1112 = vld [vmem:[%s1 + $0xbc] sm:$0xf]
  %v1113 = vld [vmem:[%s1 + $0xc0] sm:$0xf]
  %v1114 = vld [vmem:[%s1 + $0xc4] sm:$0xf]
  %v1115 = vld [vmem:[%s1 + $0xc8] sm:$0xf]
  %v1116 = vld [vmem:[%s1 + $0xcc] sm:$0xf]
  %v1117 = vld [vmem:[%s1 + $0xd0] sm:$0xf]
  %v1118 = vld [vmem:[%s1 + $0xd4] sm:$0xf]
  %v1119 = vld [vmem:[%s1 + $0xd8] sm:$0xf]
  %v1120 = vld [vmem:[%s1 + $0xdc] sm:$0xf]
  %v1121 = vld [vmem:[%s1 + $0xe0] sm:$0xf]
  %v1122 = vld [vmem:[%s1 + $0xe4] sm:$0xf]
  %v1123 = vld [vmem:[%s1 + $0xe8] sm:$0xf]
  %v1124 = vld [vmem:[%s1 + $0xec] sm:$0xf]
  %v1125 = vld [vmem:[%s1 + $0xf0] sm:$0xf]
  %v1126 = vld [vmem:[%s1 + $0xf4] sm:$0xf]
  %v1127 = vld [vmem:[%s1 + $0xf8] sm:$0xf]
  %v1128 = vld [vmem:[%s1 + $0xfc] sm:$0xf]
  %v1129 = vld [vmem:[%s1 + $0x100] sm:$0xf]
  %v1130 = vld [vmem:[%s1 + $0x104] sm:$0xf]
  %v1131 = vld [vmem:[%s1 + $0x108] sm:$0xf]
  %v1132 = vld [vmem:[%s1 + $0x10c] sm:$0xf]
  %v1133 = vld [vmem:[%s1 + $0x110] sm:$0xf]
  %v1134 = vld [vmem:[%s1 + $0x114] sm:$0xf]
  %v1135 = vld [vmem:[%s1 + $0x118] sm:$0xf]
  %v1136 = vld [vmem:[%s1 + $0x11c] sm:$0xf]
  %v1137 = vld [vmem:[%s1 + $0x120] sm:$0xf]
  %v1138 = vld [vmem:[%s1 + $0x124] sm:$0xf]
  %v1139 = vld [vmem:[%s1 + $0x128] sm:$0xf]
  %v1140 = vld [vmem:[%s1 + $0x12c] sm:$0xf]
  %v1141 = vld [vmem:[%s1 + $0x130] sm:$0xf]
  %v1142 = vld [vmem:[%s1 + $0x134] sm:$0xf]
  %v1143 = vld [vmem:[%s1 + $0x138] sm:$0xf]
  %v1144 = vld [vmem:[%s1 + $0x13c] sm:$0xf]
  %v1145 = vld [vmem:[%s1 + $0x140] sm:$0xf]
  %v1146 = vld [vmem:[%s1 + $0x144] sm:$0xf]
  %v1147 = vld [vmem:[%s1 + $0x148] sm:$0xf]
  %v1148 = vld [vmem:[%s1 + $0x14c] sm:$0xf]
  %v1149 = vld [vmem:[%s1 + $0x150] sm:$0xf]
  %v1150 = vld [vmem:[%s1 + $0x154] sm:$0xf]
  %v1151 = vld [vmem:[%s1 + $0x158] sm:$0xf]
  %v1152 = vld [vmem:[%s1 + $0x15c] sm:$0xf]
  %v1153 = vld [vmem:[%s1 + $0x160] sm:$0xf]
  %v1154 = vld [vmem:[%s1 + $0x164] sm:$0xf]
  %v1155 = vld [vmem:[%s1 + $0x168] sm:$0xf]
  %v1156 = vld [vmem:[%s1 + $0x16c] sm:$0xf]
  %v1157 = vld [vmem:[%s1 + $0x170] sm:$0xf]
  %v1158 = vld [vmem:[%s1 + $0x174] sm:$0xf]
  %v1159 = vld [vmem:[%s1 + $0x178] sm:$0xf]
  %v1160 = vld [vmem:[%s1 + $0x17c] sm:$0xf]
  %v1161 = vld [vmem:[%s1 + $0x180] sm:$0xf]
  %v1162 = vld [vmem:[%s1 + $0x184] sm:$0xf]
  %v1163 = vld [vmem:[%s1 + $0x188] sm:$0xf]
  %v1164 = vld [vmem:[%s1 + $0x18c] sm:$0xf]
  %v1165 = vld [vmem:[%s1 + $0x190] sm:$0xf]
  %v1166 = vld [vmem:[%s1 + $0x194] sm:$0xf]
  %v1167 = vld [vmem:[%s1 + $0x198] sm:$0xf]
  %v1168 = vld [vmem:[%s1 + $0x19c] sm:$0xf]
  %v1169 = vld [vmem:[%s1 + $0x1a0] sm:$0xf]
  %v1170 = vld [vmem:[%s1 + $0x1a4] sm:$0xf]
  %v1171 = vld [vmem:[%s1 + $0x1a8] sm:$0xf]
  %v1172 = vld [vmem:[%s1 + $0x1ac] sm:$0xf]
  %v1173 = vld [vmem:[%s1 + $0x1b0] sm:$0xf]
  %v1174 = vld [vmem:[%s1 + $0x1b4] sm:$0xf]
  %v1175 = vld [vmem:[%s1 + $0x1b8] sm:$0xf]
  %v1176 = vld [vmem:[%s1 + $0x1bc] sm:$0xf]
  %v1177 = vld [vmem:[%s2] sm:$0x7]
  %v1178 = vlaneseq
  %v1179 = vshrl.u32 %v1178, 7
  %v1180 = vsub.s32 0, %v1179
  %v1181 = vrot.slane %v1177, %v1180
  %v1294 = vunpack.c.l.b16 %v1065
  %v1295 = vunpack.c.l.b16 %v1066
  %v1296 = vunpack.c.l.b16 %v1067
  %v1297 = vunpack.c.l.b16 %v1068
  %v1298 = vunpack.c.l.b16 %v1069
  %v1299 = vunpack.c.l.b16 %v1070
  %v1300 = vunpack.c.l.b16 %v1071
  %v1301 = vunpack.c.l.b16 %v1072
  %v1302 = vunpack.c.l.b16 %v1073
  %v1303 = vunpack.c.l.b16 %v1074
  %v1304 = vunpack.c.l.b16 %v1075
  %v1305 = vunpack.c.l.b16 %v1076
  %v1306 = vunpack.c.l.b16 %v1077
  %v1307 = vunpack.c.l.b16 %v1078
  %v1308 = vunpack.c.l.b16 %v1079
  %v1309 = vunpack.c.l.b16 %v1080
  %v1310 = vunpack.c.l.b16 %v1081
  %v1311 = vunpack.c.l.b16 %v1082
  %v1312 = vunpack.c.l.b16 %v1083
  %v1313 = vunpack.c.l.b16 %v1084
  %v1314 = vunpack.c.l.b16 %v1085
  %v1315 = vunpack.c.l.b16 %v1086
  %v1316 = vunpack.c.l.b16 %v1087
  %v1317 = vunpack.c.l.b16 %v1088
  %v1318 = vunpack.c.l.b16 %v1089
  %v1319 = vunpack.c.l.b16 %v1090
  %v1320 = vunpack.c.l.b16 %v1091
  %v1321 = vunpack.c.l.b16 %v1092
  %v1322 = vunpack.c.l.b16 %v1093
  %v1323 = vunpack.c.l.b16 %v1094
  %v1324 = vunpack.c.l.b16 %v1095
  %v1325 = vunpack.c.l.b16 %v1096
  %v1326 = vunpack.c.l.b16 %v1097
  %v1327 = vunpack.c.l.b16 %v1098
  %v1328 = vunpack.c.l.b16 %v1099
  %v1329 = vunpack.c.l.b16 %v1100
  %v1330 = vunpack.c.l.b16 %v1101
  %v1331 = vunpack.c.l.b16 %v1102
  %v1332 = vunpack.c.l.b16 %v1103
  %v1333 = vunpack.c.l.b16 %v1104
  %v1334 = vunpack.c.l.b16 %v1105
  %v1335 = vunpack.c.l.b16 %v1106
  %v1336 = vunpack.c.l.b16 %v1107
  %v1337 = vunpack.c.l.b16 %v1108
  %v1338 = vunpack.c.l.b16 %v1109
  %v1339 = vunpack.c.l.b16 %v1110
  %v1340 = vunpack.c.l.b16 %v1111
  %v1341 = vunpack.c.l.b16 %v1112
  %v1342 = vunpack.c.l.b16 %v1113
  %v1343 = vunpack.c.l.b16 %v1114
  %v1344 = vunpack.c.l.b16 %v1115
  %v1345 = vunpack.c.l.b16 %v1116
  %v1346 = vunpack.c.l.b16 %v1117
  %v1347 = vunpack.c.l.b16 %v1118
  %v1348 = vunpack.c.l.b16 %v1119
  %v1349 = vunpack.c.l.b16 %v1120
  %v1350 = vunpack.c.l.b16 %v1121
  %v1351 = vunpack.c.l.b16 %v1122
  %v1352 = vunpack.c.l.b16 %v1123
  %v1353 = vunpack.c.l.b16 %v1124
  %v1354 = vunpack.c.l.b16 %v1125
  %v1355 = vunpack.c.l.b16 %v1126
  %v1356 = vunpack.c.l.b16 %v1127
  %v1357 = vunpack.c.l.b16 %v1128
  %v1358 = vunpack.c.l.b16 %v1129
  %v1359 = vunpack.c.l.b16 %v1130
  %v1360 = vunpack.c.l.b16 %v1131
  %v1361 = vunpack.c.l.b16 %v1132
  %v1362 = vunpack.c.l.b16 %v1133
  %v1363 = vunpack.c.l.b16 %v1134
  %v1364 = vunpack.c.l.b16 %v1135
  %v1365 = vunpack.c.l.b16 %v1136
  %v1366 = vunpack.c.l.b16 %v1137
  %v1367 = vunpack.c.l.b16 %v1138
  %v1368 = vunpack.c.l.b16 %v1139
  %v1369 = vunpack.c.l.b16 %v1140
  %v1370 = vunpack.c.l.b16 %v1141
  %v1371 = vunpack.c.l.b16 %v1142
  %v1372 = vunpack.c.l.b16 %v1143
  %v1373 = vunpack.c.l.b16 %v1144
  %v1374 = vunpack.c.l.b16 %v1145
  %v1375 = vunpack.c.l.b16 %v1146
  %v1376 = vunpack.c.l.b16 %v1147
  %v1377 = vunpack.c.l.b16 %v1148
  %v1378 = vunpack.c.l.b16 %v1149
  %v1379 = vunpack.c.l.b16 %v1150
  %v1380 = vunpack.c.l.b16 %v1151
  %v1381 = vunpack.c.l.b16 %v1152
  %v1382 = vunpack.c.l.b16 %v1153
  %v1383 = vunpack.c.l.b16 %v1154
  %v1384 = vunpack.c.l.b16 %v1155
  %v1385 = vunpack.c.l.b16 %v1156
  %v1386 = vunpack.c.l.b16 %v1157
  %v1387 = vunpack.c.l.b16 %v1158
  %v1388 = vunpack.c.l.b16 %v1159
  %v1389 = vunpack.c.l.b16 %v1160
  %v1390 = vunpack.c.l.b16 %v1161
  %v1391 = vunpack.c.l.b16 %v1162
  %v1392 = vunpack.c.l.b16 %v1163
  %v1393 = vunpack.c.l.b16 %v1164
  %v1394 = vunpack.c.l.b16 %v1165
  %v1395 = vunpack.c.l.b16 %v1166
  %v1396 = vunpack.c.l.b16 %v1167
  %v1397 = vunpack.c.l.b16 %v1168
  %v1398 = vunpack.c.l.b16 %v1169
  %v1399 = vunpack.c.l.b16 %v1170
  %v1400 = vunpack.c.l.b16 %v1171
  %v1401 = vunpack.c.l.b16 %v1172
  %v1402 = vunpack.c.l.b16 %v1173
  %v1403 = vunpack.c.l.b16 %v1174
  %v1404 = vunpack.c.l.b16 %v1175
  %v1405 = vunpack.c.l.b16 %v1176
  %v1406 = vpack.c.b16 %v1295, %v1294
  %v1407 = vpack.c.b16 %v1297, %v1296
  %v1408 = vpack.c.b16 %v1299, %v1298
  %v1409 = vpack.c.b16 %v1301, %v1300
  %v1410 = vpack.c.b16 %v1303, %v1302
  %v1411 = vpack.c.b16 %v1305, %v1304
  %v1412 = vpack.c.b16 %v1307, %v1306
  %v1413 = vpack.c.b16 %v1309, %v1308
  %v1414 = vpack.c.b16 %v1311, %v1310
  %v1415 = vpack.c.b16 %v1313, %v1312
  %v1416 = vpack.c.b16 %v1315, %v1314
  %v1417 = vpack.c.b16 %v1317, %v1316
  %v1418 = vpack.c.b16 %v1319, %v1318
  %v1419 = vpack.c.b16 %v1321, %v1320
  %v1420 = vpack.c.b16 %v1323, %v1322
  %v1421 = vpack.c.b16 %v1325, %v1324
  %v1422 = vpack.c.b16 %v1327, %v1326
  %v1423 = vpack.c.b16 %v1329, %v1328
  %v1424 = vpack.c.b16 %v1331, %v1330
  %v1425 = vpack.c.b16 %v1333, %v1332
  %v1426 = vpack.c.b16 %v1335, %v1334
  %v1427 = vpack.c.b16 %v1337, %v1336
  %v1428 = vpack.c.b16 %v1339, %v1338
  %v1429 = vpack.c.b16 %v1341, %v1340
  %v1430 = vpack.c.b16 %v1343, %v1342
  %v1431 = vpack.c.b16 %v1345, %v1344
  %v1432 = vpack.c.b16 %v1347, %v1346
  %v1433 = vpack.c.b16 %v1349, %v1348
  %v1434 = vpack.c.b16 %v1351, %v1350
  %v1435 = vpack.c.b16 %v1353, %v1352
  %v1436 = vpack.c.b16 %v1355, %v1354
  %v1437 = vpack.c.b16 %v1357, %v1356
  %v1438 = vpack.c.b16 %v1359, %v1358
  %v1439 = vpack.c.b16 %v1361, %v1360
  %v1440 = vpack.c.b16 %v1363, %v1362
  %v1441 = vpack.c.b16 %v1365, %v1364
  %v1442 = vpack.c.b16 %v1367, %v1366
  %v1443 = vpack.c.b16 %v1369, %v1368
  %v1444 = vpack.c.b16 %v1371, %v1370
  %v1445 = vpack.c.b16 %v1373, %v1372
  %v1446 = vpack.c.b16 %v1375, %v1374
  %v1447 = vpack.c.b16 %v1377, %v1376
  %v1448 = vpack.c.b16 %v1379, %v1378
  %v1449 = vpack.c.b16 %v1381, %v1380
  %v1450 = vpack.c.b16 %v1383, %v1382
  %v1451 = vpack.c.b16 %v1385, %v1384
  %v1452 = vpack.c.b16 %v1387, %v1386
  %v1453 = vpack.c.b16 %v1389, %v1388
  %v1454 = vpack.c.b16 %v1391, %v1390
  %v1455 = vpack.c.b16 %v1393, %v1392
  %v1456 = vpack.c.b16 %v1395, %v1394
  %v1457 = vpack.c.b16 %v1397, %v1396
  %v1458 = vpack.c.b16 %v1399, %v1398
  %v1459 = vpack.c.b16 %v1401, %v1400
  %v1460 = vpack.c.b16 %v1403, %v1402
  %v1461 = vpack.c.b16 %v1405, %v1404
  %1518 = vmatprep.subr.bf16.mxu0 0
  %1519 = vmatpush1.bf16.msra.mxu0 %v1413
  %1520 = vmatprep.subr.bf16.mxu0 0
  %1521 = vmatpush1.bf16.msra.mxu0 %v1412
  %1522 = vmatprep.subr.bf16.mxu0 0
  %1523 = vmatpush1.bf16.msra.mxu0 %v1411
  %1524 = vmatprep.subr.bf16.mxu0 0
  %1525 = vmatpush1.bf16.msra.mxu0 %v1410
  %1526 = vmatprep.subr.bf16.mxu0 0
  %1527 = vmatpush1.bf16.msra.mxu0 %v1409
  %1528 = vmatprep.subr.bf16.mxu0 0
  %1529 = vmatpush1.bf16.msra.mxu0 %v1408
  %1530 = vmatprep.subr.bf16.mxu0 0
  %1531 = vmatpush1.bf16.msra.mxu0 %v1407
  %1532 = vmatprep.subr.bf16.mxu0 0
  %1533 = vmatpush1.bf16.msra.mxu0 %v1406
  %1534 = vmatprep.subr.bf16.mxu0 0
  %1535 = vmatpush2.bf16.msra.mxu0 %v1421
  %1536 = vmatprep.subr.bf16.mxu0 0
  %1537 = vmatpush2.bf16.msra.mxu0 %v1420
  %1538 = vmatprep.subr.bf16.mxu0 0
  %1539 = vmatpush2.bf16.msra.mxu0 %v1419
  %1540 = vmatprep.subr.bf16.mxu0 0
  %1541 = vmatpush2.bf16.msra.mxu0 %v1418
  %1542 = vmatprep.subr.bf16.mxu0 0
  %1543 = vmatpush2.bf16.msra.mxu0 %v1417
  %1544 = vmatprep.subr.bf16.mxu0 0
  %1545 = vmatpush2.bf16.msra.mxu0 %v1416
  %1546 = vmatprep.subr.bf16.mxu0 0
  %1547 = vmatpush2.bf16.msra.mxu0 %v1415
  %1548 = vmatprep.subr.bf16.mxu0 0
  %1549 = vmatpush2.bf16.msra.mxu0 %v1414
  %1550 = vmatprep.mubr.bf16.mxu0 %v716
  %1551 = vmatmul.mubr.bf16.gmra.mxu0 %v715
  %v1552 = vpop.f32.mrf.mxu0
  %v1553 = vadd.f32 %v1181, %v1552
  %v1554 = vpop.f32.mrf.mxu0
  %v1555 = vpop.f32.mrf.mxu0
  %v1556 = vadd.f32 %v1181, %v1555
  %v1557 = vpop.f32.mrf.mxu0
  %1558 = vmatprep.mubr.bf16.mxu0 %v723
  %1559 = vmatmul.mubr.bf16.gmra.mxu0 %v722
  %v1560 = vpop.f32.mrf.mxu0
  %v1561 = vadd.f32 %v1181, %v1560
  %v1562 = vpop.f32.mrf.mxu0
  %v1563 = vpop.f32.mrf.mxu0
  %v1564 = vadd.f32 %v1181, %v1563
  %v1565 = vpop.f32.mrf.mxu0
  %1566 = vmatprep.mubr.bf16.mxu0 %v730
  %1567 = vmatmul.mubr.bf16.gmra.mxu0 %v729
  %v1568 = vpop.f32.mrf.mxu0
  %v1569 = vadd.f32 %v1181, %v1568
  %v1570 = vpop.f32.mrf.mxu0
  %v1571 = vpop.f32.mrf.mxu0
  %v1572 = vadd.f32 %v1181, %v1571
  %v1573 = vpop.f32.mrf.mxu0
  %1574 = vmatprep.mubr.bf16.mxu0 %v737
  %1575 = vmatmul.mubr.bf16.gmra.mxu0 %v736
  %v1576 = vpop.f32.mrf.mxu0
  %v1577 = vadd.f32 %v1181, %v1576
  %v1578 = vpop.f32.mrf.mxu0
  %v1579 = vpop.f32.mrf.mxu0
  %v1580 = vadd.f32 %v1181, %v1579
  %v1581 = vpop.f32.mrf.mxu0
  %1582 = vmatprep.mubr.bf16.mxu0 %v744
  %1583 = vmatmul.mubr.bf16.gmra.mxu0 %v743
  %v1584 = vpop.f32.mrf.mxu0
  %v1585 = vadd.f32 %v1181, %v1584
  %v1586 = vpop.f32.mrf.mxu0
  %v1587 = vpop.f32.mrf.mxu0
  %v1588 = vadd.f32 %v1181, %v1587
  %v1589 = vpop.f32.mrf.mxu0
  %1590 = vmatprep.mubr.bf16.mxu0 %v751
  %1591 = vmatmul.mubr.bf16.gmra.mxu0 %v750
  %v1592 = vpop.f32.mrf.mxu0
  %v1593 = vadd.f32 %v1181, %v1592
  %v1594 = vpop.f32.mrf.mxu0
  %v1595 = vpop.f32.mrf.mxu0
  %v1596 = vadd.f32 %v1181, %v1595
  %v1597 = vpop.f32.mrf.mxu0
  %1598 = vmatprep.mubr.bf16.mxu0 %v758
  %1599 = vmatmul.mubr.bf16.gmra.mxu0 %v757
  %v1600 = vpop.f32.mrf.mxu0
  %v1601 = vadd.f32 %v1181, %v1600
  %v1602 = vpop.f32.mrf.mxu0
  %v1603 = vpop.f32.mrf.mxu0
  %v1604 = vadd.f32 %v1181, %v1603
  %v1605 = vpop.f32.mrf.mxu0
  %1606 = vmatprep.mubr.bf16.mxu0 %v765
  %1607 = vmatmul.mubr.bf16.gmra.mxu0 %v764
  %v1608 = vpop.f32.mrf.mxu0
  %v1609 = vadd.f32 %v1181, %v1608
  %v1610 = vpop.f32.mrf.mxu0
  %v1611 = vpop.f32.mrf.mxu0
  %v1612 = vadd.f32 %v1181, %v1611
  %v1613 = vpop.f32.mrf.mxu0
  %1614 = vmatprep.mubr.bf16.mxu0 %v772
  %1615 = vmatmul.mubr.bf16.gmra.mxu0 %v771
  %v1616 = vpop.f32.mrf.mxu0
  %v1617 = vadd.f32 %v1181, %v1616
  %v1618 = vpop.f32.mrf.mxu0
  %v1619 = vpop.f32.mrf.mxu0
  %v1620 = vadd.f32 %v1181, %v1619
  %v1621 = vpop.f32.mrf.mxu0
  %1622 = vmatprep.mubr.bf16.mxu0 %v779
  %1623 = vmatmul.mubr.bf16.gmra.mxu0 %v778
  %v1624 = vpop.f32.mrf.mxu0
  %v1625 = vadd.f32 %v1181, %v1624
  %v1626 = vpop.f32.mrf.mxu0
  %v1627 = vpop.f32.mrf.mxu0
  %v1628 = vadd.f32 %v1181, %v1627
  %v1629 = vpop.f32.mrf.mxu0
  %1630 = vmatprep.mubr.bf16.mxu0 %v786
  %1631 = vmatmul.mubr.bf16.gmra.mxu0 %v785
  %v1632 = vpop.f32.mrf.mxu0
  %v1633 = vadd.f32 %v1181, %v1632
  %v1634 = vpop.f32.mrf.mxu0
  %v1635 = vpop.f32.mrf.mxu0
  %v1636 = vadd.f32 %v1181, %v1635
  %v1637 = vpop.f32.mrf.mxu0
  %1638 = vmatprep.mubr.bf16.mxu0 %v793
  %1639 = vmatmul.mubr.bf16.gmra.mxu0 %v792
  %v1640 = vpop.f32.mrf.mxu0
  %v1641 = vadd.f32 %v1181, %v1640
  %v1642 = vpop.f32.mrf.mxu0
  %v1643 = vpop.f32.mrf.mxu0
  %v1644 = vadd.f32 %v1181, %v1643
  %v1645 = vpop.f32.mrf.mxu0
  %1646 = vmatprep.mubr.bf16.mxu0 %v800
  %1647 = vmatmul.mubr.bf16.gmra.mxu0 %v799
  %v1648 = vpop.f32.mrf.mxu0
  %v1649 = vadd.f32 %v1181, %v1648
  %v1650 = vpop.f32.mrf.mxu0
  %v1651 = vpop.f32.mrf.mxu0
  %v1652 = vadd.f32 %v1181, %v1651
  %v1653 = vpop.f32.mrf.mxu0
  %1654 = vmatprep.mubr.bf16.mxu0 %v807
  %1655 = vmatmul.mubr.bf16.gmra.mxu0 %v806
  %v1656 = vpop.f32.mrf.mxu0
  %v1657 = vadd.f32 %v1181, %v1656
  %v1658 = vpop.f32.mrf.mxu0
  %v1659 = vpop.f32.mrf.mxu0
  %v1660 = vadd.f32 %v1181, %v1659
  %v1661 = vpop.f32.mrf.mxu0
  %1662 = vmatprep.mubr.bf16.mxu0 %v814
  %1663 = vmatmul.mubr.bf16.gmra.mxu0 %v813
  %v1664 = vpop.f32.mrf.mxu0
  %v1665 = vadd.f32 %v1181, %v1664
  %v1666 = vpop.f32.mrf.mxu0
  %v1667 = vpop.f32.mrf.mxu0
  %v1668 = vadd.f32 %v1181, %v1667
  %v1669 = vpop.f32.mrf.mxu0
  %1670 = vmatprep.mubr.bf16.mxu0 %v821
  %1671 = vmatmul.mubr.bf16.gmra.mxu0 %v820
  %v1672 = vpop.f32.mrf.mxu0
  %v1673 = vadd.f32 %v1181, %v1672
  %v1674 = vpop.f32.mrf.mxu0
  %v1675 = vpop.f32.mrf.mxu0
  %v1676 = vadd.f32 %v1181, %v1675
  %v1677 = vpop.f32.mrf.mxu0
  %1678 = vmatprep.mubr.bf16.mxu0 %v828
  %1679 = vmatmul.mubr.bf16.gmra.mxu0 %v827
  %v1680 = vpop.f32.mrf.mxu0
  %v1681 = vadd.f32 %v1181, %v1680
  %v1682 = vpop.f32.mrf.mxu0
  %v1683 = vpop.f32.mrf.mxu0
  %v1684 = vadd.f32 %v1181, %v1683
  %v1685 = vpop.f32.mrf.mxu0
  %1686 = vmatprep.mubr.bf16.mxu0 %v835
  %1687 = vmatmul.mubr.bf16.gmra.mxu0 %v834
  %v1688 = vpop.f32.mrf.mxu0
  %v1689 = vadd.f32 %v1181, %v1688
  %v1690 = vpop.f32.mrf.mxu0
  %v1691 = vpop.f32.mrf.mxu0
  %v1692 = vadd.f32 %v1181, %v1691
  %v1693 = vpop.f32.mrf.mxu0
  %1694 = vmatprep.mubr.bf16.mxu0 %v842
  %1695 = vmatmul.mubr.bf16.gmra.mxu0 %v841
  %v1696 = vpop.f32.mrf.mxu0
  %v1697 = vadd.f32 %v1181, %v1696
  %v1698 = vpop.f32.mrf.mxu0
  %v1699 = vpop.f32.mrf.mxu0
  %v1700 = vadd.f32 %v1181, %v1699
  %v1701 = vpop.f32.mrf.mxu0
  %1702 = vmatprep.mubr.bf16.mxu0 %v849
  %1703 = vmatmul.mubr.bf16.gmra.mxu0 %v848
  %v1704 = vpop.f32.mrf.mxu0
  %v1705 = vadd.f32 %v1181, %v1704
  %v1706 = vpop.f32.mrf.mxu0
  %v1707 = vpop.f32.mrf.mxu0
  %v1708 = vadd.f32 %v1181, %v1707
  %v1709 = vpop.f32.mrf.mxu0
  %1710 = vmatprep.mubr.bf16.mxu0 %v856
  %1711 = vmatmul.mubr.bf16.gmra.mxu0 %v855
  %v1712 = vpop.f32.mrf.mxu0
  %v1713 = vadd.f32 %v1181, %v1712
  %v1714 = vpop.f32.mrf.mxu0
  %v1715 = vpop.f32.mrf.mxu0
  %v1716 = vadd.f32 %v1181, %v1715
  %v1717 = vpop.f32.mrf.mxu0
  %1718 = vmatprep.mubr.bf16.mxu0 %v863
  %1719 = vmatmul.mubr.bf16.gmra.mxu0 %v862
  %v1720 = vpop.f32.mrf.mxu0
  %v1721 = vadd.f32 %v1181, %v1720
  %v1722 = vpop.f32.mrf.mxu0
  %v1723 = vpop.f32.mrf.mxu0
  %v1724 = vadd.f32 %v1181, %v1723
  %v1725 = vpop.f32.mrf.mxu0
  %1726 = vmatprep.mubr.bf16.mxu0 %v870
  %1727 = vmatmul.mubr.bf16.gmra.mxu0 %v869
  %v1728 = vpop.f32.mrf.mxu0
  %v1729 = vadd.f32 %v1181, %v1728
  %v1730 = vpop.f32.mrf.mxu0
  %v1731 = vpop.f32.mrf.mxu0
  %v1732 = vadd.f32 %v1181, %v1731
  %v1733 = vpop.f32.mrf.mxu0
  %1734 = vmatprep.mubr.bf16.mxu0 %v877
  %1735 = vmatmul.mubr.bf16.gmra.mxu0 %v876
  %v1736 = vpop.f32.mrf.mxu0
  %v1737 = vadd.f32 %v1181, %v1736
  %v1738 = vpop.f32.mrf.mxu0
  %v1739 = vpop.f32.mrf.mxu0
  %v1740 = vadd.f32 %v1181, %v1739
  %v1741 = vpop.f32.mrf.mxu0
  %1742 = vmatprep.mubr.bf16.mxu0 %v884
  %1743 = vmatmul.mubr.bf16.gmra.mxu0 %v883
  %v1744 = vpop.f32.mrf.mxu0
  %v1745 = vadd.f32 %v1181, %v1744
  %v1746 = vpop.f32.mrf.mxu0
  %v1747 = vpop.f32.mrf.mxu0
  %v1748 = vadd.f32 %v1181, %v1747
  %v1749 = vpop.f32.mrf.mxu0
  %1750 = vmatprep.mubr.bf16.mxu0 %v891
  %1751 = vmatmul.mubr.bf16.gmra.mxu0 %v890
  %v1752 = vpop.f32.mrf.mxu0
  %v1753 = vadd.f32 %v1181, %v1752
  %v1754 = vpop.f32.mrf.mxu0
  %v1755 = vpop.f32.mrf.mxu0
  %v1756 = vadd.f32 %v1181, %v1755
  %v1757 = vpop.f32.mrf.mxu0
  %1758 = vmatprep.mubr.bf16.mxu0 %v898
  %1759 = vmatmul.mubr.bf16.gmra.mxu0 %v897
  %v1760 = vpop.f32.mrf.mxu0
  %v1761 = vadd.f32 %v1181, %v1760
  %v1762 = vpop.f32.mrf.mxu0
  %v1763 = vpop.f32.mrf.mxu0
  %v1764 = vadd.f32 %v1181, %v1763
  %v1765 = vpop.f32.mrf.mxu0
  %1766 = vmatprep.mubr.bf16.mxu0 %v905
  %1767 = vmatmul.mubr.bf16.gmra.mxu0 %v904
  %v1768 = vpop.f32.mrf.mxu0
  %v1769 = vadd.f32 %v1181, %v1768
  %v1770 = vpop.f32.mrf.mxu0
  %v1771 = vpop.f32.mrf.mxu0
  %v1772 = vadd.f32 %v1181, %v1771
  %v1773 = vpop.f32.mrf.mxu0
  %1774 = vmatprep.mubr.bf16.mxu0 %v912
  %1775 = vmatmul.mubr.bf16.gmra.mxu0 %v911
  %v1776 = vpop.f32.mrf.mxu0
  %v1777 = vadd.f32 %v1181, %v1776
  %v1778 = vpop.f32.mrf.mxu0
  %v1779 = vpop.f32.mrf.mxu0
  %v1780 = vadd.f32 %v1181, %v1779
  %v1781 = vpop.f32.mrf.mxu0
  %1782 = vmatprep.mubr.bf16.mxu0 %v919
  %1783 = vmatmul.mubr.bf16.gmra.mxu0 %v918
  %v1784 = vpop.f32.mrf.mxu0
  %v1785 = vadd.f32 %v1181, %v1784
  %v1786 = vpop.f32.mrf.mxu0
  %v1787 = vpop.f32.mrf.mxu0
  %v1788 = vadd.f32 %v1181, %v1787
  %v1789 = vpop.f32.mrf.mxu0
  %1790 = vmatprep.mubr.bf16.mxu0 %v926
  %1791 = vmatmul.mubr.bf16.gmra.mxu0 %v925
  %v1792 = vpop.f32.mrf.mxu0
  %v1793 = vadd.f32 %v1181, %v1792
  %v1794 = vpop.f32.mrf.mxu0
  %v1795 = vpop.f32.mrf.mxu0
  %v1796 = vadd.f32 %v1181, %v1795
  %v1797 = vpop.f32.mrf.mxu0
  %1798 = vmatprep.mubr.bf16.mxu0 %v933
  %1799 = vmatmul.mubr.bf16.gmra.mxu0 %v932
  %v1800 = vpop.f32.mrf.mxu0
  %v1801 = vadd.f32 %v1181, %v1800
  %v1802 = vpop.f32.mrf.mxu0
  %v1803 = vpop.f32.mrf.mxu0
  %v1804 = vadd.f32 %v1181, %v1803
  %v1805 = vpop.f32.mrf.mxu0
  %1806 = vmatprep.mubr.bf16.mxu0 %v940
  %1807 = vmatmul.mubr.bf16.gmra.mxu0 %v939
  %v1808 = vpop.f32.mrf.mxu0
  %v1809 = vadd.f32 %v1181, %v1808
  %v1810 = vpop.f32.mrf.mxu0
  %v1811 = vpop.f32.mrf.mxu0
  %v1812 = vadd.f32 %v1181, %v1811
  %v1813 = vpop.f32.mrf.mxu0
  %1814 = vmatprep.mubr.bf16.mxu0 %v947
  %1815 = vmatmul.mubr.bf16.gmra.mxu0 %v946
  %v1816 = vpop.f32.mrf.mxu0
  %v1817 = vadd.f32 %v1181, %v1816
  %v1818 = vpop.f32.mrf.mxu0
  %v1819 = vpop.f32.mrf.mxu0
  %v1820 = vadd.f32 %v1181, %v1819
  %v1821 = vpop.f32.mrf.mxu0
  %1822 = vmatprep.mubr.bf16.mxu0 %v954
  %1823 = vmatmul.mubr.bf16.gmra.mxu0 %v953
  %v1824 = vpop.f32.mrf.mxu0
  %v1825 = vadd.f32 %v1181, %v1824
  %v1826 = vpop.f32.mrf.mxu0
  %v1827 = vpop.f32.mrf.mxu0
  %v1828 = vadd.f32 %v1181, %v1827
  %v1829 = vpop.f32.mrf.mxu0
  %1830 = vmatprep.mubr.bf16.mxu0 %v961
  %1831 = vmatmul.mubr.bf16.gmra.mxu0 %v960
  %v1832 = vpop.f32.mrf.mxu0
  %v1833 = vadd.f32 %v1181, %v1832
  %v1834 = vpop.f32.mrf.mxu0
  %v1835 = vpop.f32.mrf.mxu0
  %v1836 = vadd.f32 %v1181, %v1835
  %v1837 = vpop.f32.mrf.mxu0
  %1838 = vmatprep.mubr.bf16.mxu0 %v968
  %1839 = vmatmul.mubr.bf16.gmra.mxu0 %v967
  %v1840 = vpop.f32.mrf.mxu0
  %v1841 = vadd.f32 %v1181, %v1840
  %v1842 = vpop.f32.mrf.mxu0
  %v1843 = vpop.f32.mrf.mxu0
  %v1844 = vadd.f32 %v1181, %v1843
  %v1845 = vpop.f32.mrf.mxu0
  %1846 = vmatprep.mubr.bf16.mxu0 %v975
  %1847 = vmatmul.mubr.bf16.gmra.mxu0 %v974
  %v1848 = vpop.f32.mrf.mxu0
  %v1849 = vadd.f32 %v1181, %v1848
  %v1850 = vpop.f32.mrf.mxu0
  %v1851 = vpop.f32.mrf.mxu0
  %v1852 = vadd.f32 %v1181, %v1851
  %v1853 = vpop.f32.mrf.mxu0
  %1854 = vmatprep.mubr.bf16.mxu0 %v982
  %1855 = vmatmul.mubr.bf16.gmra.mxu0 %v981
  %v1856 = vpop.f32.mrf.mxu0
  %v1857 = vadd.f32 %v1181, %v1856
  %v1858 = vpop.f32.mrf.mxu0
  %v1859 = vpop.f32.mrf.mxu0
  %v1860 = vadd.f32 %v1181, %v1859
  %v1861 = vpop.f32.mrf.mxu0
  %1862 = vmatprep.mubr.bf16.mxu0 %v989
  %1863 = vmatmul.mubr.bf16.gmra.mxu0 %v988
  %v1864 = vpop.f32.mrf.mxu0
  %v1865 = vadd.f32 %v1181, %v1864
  %v1866 = vpop.f32.mrf.mxu0
  %v1867 = vpop.f32.mrf.mxu0
  %v1868 = vadd.f32 %v1181, %v1867
  %v1869 = vpop.f32.mrf.mxu0
  %1870 = vmatprep.mubr.bf16.mxu0 %v996
  %1871 = vmatmul.mubr.bf16.gmra.mxu0 %v995
  %v1872 = vpop.f32.mrf.mxu0
  %v1873 = vadd.f32 %v1181, %v1872
  %v1874 = vpop.f32.mrf.mxu0
  %v1875 = vpop.f32.mrf.mxu0
  %v1876 = vadd.f32 %v1181, %v1875
  %v1877 = vpop.f32.mrf.mxu0
  %1878 = vmatprep.mubr.bf16.mxu0 %v1003
  %1879 = vmatmul.mubr.bf16.gmra.mxu0 %v1002
  %v1880 = vpop.f32.mrf.mxu0
  %v1881 = vadd.f32 %v1181, %v1880
  %v1882 = vpop.f32.mrf.mxu0
  %v1883 = vpop.f32.mrf.mxu0
  %v1884 = vadd.f32 %v1181, %v1883
  %v1885 = vpop.f32.mrf.mxu0
  %1886 = vmatprep.mubr.bf16.mxu0 %v1010
  %1887 = vmatmul.mubr.bf16.gmra.mxu0 %v1009
  %v1888 = vpop.f32.mrf.mxu0
  %v1889 = vadd.f32 %v1181, %v1888
  %v1890 = vpop.f32.mrf.mxu0
  %v1891 = vpop.f32.mrf.mxu0
  %v1892 = vadd.f32 %v1181, %v1891
  %v1893 = vpop.f32.mrf.mxu0
  %1894 = vmatprep.mubr.bf16.mxu0 %v1017
  %1895 = vmatmul.mubr.bf16.gmra.mxu0 %v1016
  %v1896 = vpop.f32.mrf.mxu0
  %v1897 = vadd.f32 %v1181, %v1896
  %v1898 = vpop.f32.mrf.mxu0
  %v1899 = vpop.f32.mrf.mxu0
  %v1900 = vadd.f32 %v1181, %v1899
  %v1901 = vpop.f32.mrf.mxu0
  %1902 = vmatprep.mubr.bf16.mxu0 %v1024
  %1903 = vmatmul.mubr.bf16.gmra.mxu0 %v1023
  %v1904 = vpop.f32.mrf.mxu0
  %v1905 = vadd.f32 %v1181, %v1904
  %v1906 = vpop.f32.mrf.mxu0
  %v1907 = vpop.f32.mrf.mxu0
  %v1908 = vadd.f32 %v1181, %v1907
  %v1909 = vpop.f32.mrf.mxu0
  %1910 = vmatprep.mubr.bf16.mxu0 %v1031
  %1911 = vmatmul.mubr.bf16.gmra.mxu0 %v1030
  %v1912 = vpop.f32.mrf.mxu0
  %v1913 = vadd.f32 %v1181, %v1912
  %v1914 = vpop.f32.mrf.mxu0
  %v1915 = vpop.f32.mrf.mxu0
  %v1916 = vadd.f32 %v1181, %v1915
  %v1917 = vpop.f32.mrf.mxu0
  %1918 = vmatprep.mubr.bf16.mxu0 %v1038
  %1919 = vmatmul.mubr.bf16.gmra.mxu0 %v1037
  %v1920 = vpop.f32.mrf.mxu0
  %v1921 = vadd.f32 %v1181, %v1920
  %v1922 = vpop.f32.mrf.mxu0
  %v1923 = vpop.f32.mrf.mxu0
  %v1924 = vadd.f32 %v1181, %v1923
  %v1925 = vpop.f32.mrf.mxu0
  %1926 = vmatprep.mubr.bf16.mxu0 %v1045
  %1927 = vmatmul.mubr.bf16.gmra.mxu0 %v1044
  %v1928 = vpop.f32.mrf.mxu0
  %v1929 = vadd.f32 %v1181, %v1928
  %v1930 = vpop.f32.mrf.mxu0
  %v1931 = vpop.f32.mrf.mxu0
  %v1932 = vadd.f32 %v1181, %v1931
  %v1933 = vpop.f32.mrf.mxu0
  %1934 = vmatprep.mubr.bf16.mxu0 %v1052
  %1935 = vmatmul.mubr.bf16.gmra.mxu0 %v1051
  %v1936 = vpop.f32.mrf.mxu0
  %v1937 = vadd.f32 %v1181, %v1936
  %v1938 = vpop.f32.mrf.mxu0
  %v1939 = vpop.f32.mrf.mxu0
  %v1940 = vadd.f32 %v1181, %v1939
  %v1941 = vpop.f32.mrf.mxu0
  %1942 = vmatprep.mubr.bf16.mxu0 %v1059
  %1943 = vmatmul.mubr.bf16.gmra.mxu0 %v1058
  %v1944 = vpop.f32.mrf.mxu0
  %v1945 = vadd.f32 %v1181, %v1944
  %v1946 = vpop.f32.mrf.mxu0
  %v1947 = vpop.f32.mrf.mxu0
  %v1948 = vadd.f32 %v1181, %v1947
  %v1949 = vpop.f32.mrf.mxu0
  %1950 = vdwg.mxu0
  %1951 = vmatprep.subr.bf16.mxu0 0
  %1952 = vmatpush1.bf16.msra.mxu0 %v1429
  %1953 = vmatprep.subr.bf16.mxu0 0
  %1954 = vmatpush1.bf16.msra.mxu0 %v1428
  %1955 = vmatprep.subr.bf16.mxu0 0
  %1956 = vmatpush1.bf16.msra.mxu0 %v1427
  %1957 = vmatprep.subr.bf16.mxu0 0
  %1958 = vmatpush1.bf16.msra.mxu0 %v1426
  %1959 = vmatprep.subr.bf16.mxu0 0
  %1960 = vmatpush1.bf16.msra.mxu0 %v1425
  %1961 = vmatprep.subr.bf16.mxu0 0
  %1962 = vmatpush1.bf16.msra.mxu0 %v1424
  %1963 = vmatprep.subr.bf16.mxu0 0
  %1964 = vmatpush1.bf16.msra.mxu0 %v1423
  %1965 = vmatprep.subr.bf16.mxu0 0
  %1966 = vmatpush1.bf16.msra.mxu0 %v1422
  %1967 = vmatprep.subr.bf16.mxu0 0
  %1968 = vmatpush2.bf16.msra.mxu0 %v1437
  %1969 = vmatprep.subr.bf16.mxu0 0
  %1970 = vmatpush2.bf16.msra.mxu0 %v1436
  %1971 = vmatprep.subr.bf16.mxu0 0
  %1972 = vmatpush2.bf16.msra.mxu0 %v1435
  %1973 = vmatprep.subr.bf16.mxu0 0
  %1974 = vmatpush2.bf16.msra.mxu0 %v1434
  %1975 = vmatprep.subr.bf16.mxu0 0
  %1976 = vmatpush2.bf16.msra.mxu0 %v1433
  %1977 = vmatprep.subr.bf16.mxu0 0
  %1978 = vmatpush2.bf16.msra.mxu0 %v1432
  %1979 = vmatprep.subr.bf16.mxu0 0
  %1980 = vmatpush2.bf16.msra.mxu0 %v1431
  %1981 = vmatprep.subr.bf16.mxu0 0
  %1982 = vmatpush2.bf16.msra.mxu0 %v1430
  %1983 = vmatprep.mubr.bf16.mxu0 %v718
  %1984 = vmatmul.mubr.bf16.gmra.mxu0 %v717
  %v1985 = vpop.f32.mrf.mxu0
  %v1986 = vadd.f32 %v1553, %v1985
  %v1987 = vpop.f32.mrf.mxu0
  %v1988 = vpop.f32.mrf.mxu0
  %v1989 = vadd.f32 %v1556, %v1988
  %v1990 = vpop.f32.mrf.mxu0
  %1991 = vmatprep.mubr.bf16.mxu0 %v725
  %1992 = vmatmul.mubr.bf16.gmra.mxu0 %v724
  %v1993 = vpop.f32.mrf.mxu0
  %v1994 = vadd.f32 %v1561, %v1993
  %v1995 = vpop.f32.mrf.mxu0
  %v1996 = vpop.f32.mrf.mxu0
  %v1997 = vadd.f32 %v1564, %v1996
  %v1998 = vpop.f32.mrf.mxu0
  %1999 = vmatprep.mubr.bf16.mxu0 %v732
  %2000 = vmatmul.mubr.bf16.gmra.mxu0 %v731
  %v2001 = vpop.f32.mrf.mxu0
  %v2002 = vadd.f32 %v1569, %v2001
  %v2003 = vpop.f32.mrf.mxu0
  %v2004 = vpop.f32.mrf.mxu0
  %v2005 = vadd.f32 %v1572, %v2004
  %v2006 = vpop.f32.mrf.mxu0
  %2007 = vmatprep.mubr.bf16.mxu0 %v739
  %2008 = vmatmul.mubr.bf16.gmra.mxu0 %v738
  %v2009 = vpop.f32.mrf.mxu0
  %v2010 = vadd.f32 %v1577, %v2009
  %v2011 = vpop.f32.mrf.mxu0
  %v2012 = vpop.f32.mrf.mxu0
  %v2013 = vadd.f32 %v1580, %v2012
  %v2014 = vpop.f32.mrf.mxu0
  %2015 = vmatprep.mubr.bf16.mxu0 %v746
  %2016 = vmatmul.mubr.bf16.gmra.mxu0 %v745
  %v2017 = vpop.f32.mrf.mxu0
  %v2018 = vadd.f32 %v1585, %v2017
  %v2019 = vpop.f32.mrf.mxu0
  %v2020 = vpop.f32.mrf.mxu0
  %v2021 = vadd.f32 %v1588, %v2020
  %v2022 = vpop.f32.mrf.mxu0
  %2023 = vmatprep.mubr.bf16.mxu0 %v753
  %2024 = vmatmul.mubr.bf16.gmra.mxu0 %v752
  %v2025 = vpop.f32.mrf.mxu0
  %v2026 = vadd.f32 %v1593, %v2025
  %v2027 = vpop.f32.mrf.mxu0
  %v2028 = vpop.f32.mrf.mxu0
  %v2029 = vadd.f32 %v1596, %v2028
  %v2030 = vpop.f32.mrf.mxu0
  %2031 = vmatprep.mubr.bf16.mxu0 %v760
  %2032 = vmatmul.mubr.bf16.gmra.mxu0 %v759
  %v2033 = vpop.f32.mrf.mxu0
  %v2034 = vadd.f32 %v1601, %v2033
  %v2035 = vpop.f32.mrf.mxu0
  %v2036 = vpop.f32.mrf.mxu0
  %v2037 = vadd.f32 %v1604, %v2036
  %v2038 = vpop.f32.mrf.mxu0
  %2039 = vmatprep.mubr.bf16.mxu0 %v767
  %2040 = vmatmul.mubr.bf16.gmra.mxu0 %v766
  %v2041 = vpop.f32.mrf.mxu0
  %v2042 = vadd.f32 %v1609, %v2041
  %v2043 = vpop.f32.mrf.mxu0
  %v2044 = vpop.f32.mrf.mxu0
  %v2045 = vadd.f32 %v1612, %v2044
  %v2046 = vpop.f32.mrf.mxu0
  %2047 = vmatprep.mubr.bf16.mxu0 %v774
  %2048 = vmatmul.mubr.bf16.gmra.mxu0 %v773
  %v2049 = vpop.f32.mrf.mxu0
  %v2050 = vadd.f32 %v1617, %v2049
  %v2051 = vpop.f32.mrf.mxu0
  %v2052 = vpop.f32.mrf.mxu0
  %v2053 = vadd.f32 %v1620, %v2052
  %v2054 = vpop.f32.mrf.mxu0
  %2055 = vmatprep.mubr.bf16.mxu0 %v781
  %2056 = vmatmul.mubr.bf16.gmra.mxu0 %v780
  %v2057 = vpop.f32.mrf.mxu0
  %v2058 = vadd.f32 %v1625, %v2057
  %v2059 = vpop.f32.mrf.mxu0
  %v2060 = vpop.f32.mrf.mxu0
  %v2061 = vadd.f32 %v1628, %v2060
  %v2062 = vpop.f32.mrf.mxu0
  %2063 = vmatprep.mubr.bf16.mxu0 %v788
  %2064 = vmatmul.mubr.bf16.gmra.mxu0 %v787
  %v2065 = vpop.f32.mrf.mxu0
  %v2066 = vadd.f32 %v1633, %v2065
  %v2067 = vpop.f32.mrf.mxu0
  %v2068 = vpop.f32.mrf.mxu0
  %v2069 = vadd.f32 %v1636, %v2068
  %v2070 = vpop.f32.mrf.mxu0
  %2071 = vmatprep.mubr.bf16.mxu0 %v795
  %2072 = vmatmul.mubr.bf16.gmra.mxu0 %v794
  %v2073 = vpop.f32.mrf.mxu0
  %v2074 = vadd.f32 %v1641, %v2073
  %v2075 = vpop.f32.mrf.mxu0
  %v2076 = vpop.f32.mrf.mxu0
  %v2077 = vadd.f32 %v1644, %v2076
  %v2078 = vpop.f32.mrf.mxu0
  %2079 = vmatprep.mubr.bf16.mxu0 %v802
  %2080 = vmatmul.mubr.bf16.gmra.mxu0 %v801
  %v2081 = vpop.f32.mrf.mxu0
  %v2082 = vadd.f32 %v1649, %v2081
  %v2083 = vpop.f32.mrf.mxu0
  %v2084 = vpop.f32.mrf.mxu0
  %v2085 = vadd.f32 %v1652, %v2084
  %v2086 = vpop.f32.mrf.mxu0
  %2087 = vmatprep.mubr.bf16.mxu0 %v809
  %2088 = vmatmul.mubr.bf16.gmra.mxu0 %v808
  %v2089 = vpop.f32.mrf.mxu0
  %v2090 = vadd.f32 %v1657, %v2089
  %v2091 = vpop.f32.mrf.mxu0
  %v2092 = vpop.f32.mrf.mxu0
  %v2093 = vadd.f32 %v1660, %v2092
  %v2094 = vpop.f32.mrf.mxu0
  %2095 = vmatprep.mubr.bf16.mxu0 %v816
  %2096 = vmatmul.mubr.bf16.gmra.mxu0 %v815
  %v2097 = vpop.f32.mrf.mxu0
  %v2098 = vadd.f32 %v1665, %v2097
  %v2099 = vpop.f32.mrf.mxu0
  %v2100 = vpop.f32.mrf.mxu0
  %v2101 = vadd.f32 %v1668, %v2100
  %v2102 = vpop.f32.mrf.mxu0
  %2103 = vmatprep.mubr.bf16.mxu0 %v823
  %2104 = vmatmul.mubr.bf16.gmra.mxu0 %v822
  %v2105 = vpop.f32.mrf.mxu0
  %v2106 = vadd.f32 %v1673, %v2105
  %v2107 = vpop.f32.mrf.mxu0
  %v2108 = vpop.f32.mrf.mxu0
  %v2109 = vadd.f32 %v1676, %v2108
  %v2110 = vpop.f32.mrf.mxu0
  %2111 = vmatprep.mubr.bf16.mxu0 %v830
  %2112 = vmatmul.mubr.bf16.gmra.mxu0 %v829
  %v2113 = vpop.f32.mrf.mxu0
  %v2114 = vadd.f32 %v1681, %v2113
  %v2115 = vpop.f32.mrf.mxu0
  %v2116 = vpop.f32.mrf.mxu0
  %v2117 = vadd.f32 %v1684, %v2116
  %v2118 = vpop.f32.mrf.mxu0
  %2119 = vmatprep.mubr.bf16.mxu0 %v837
  %2120 = vmatmul.mubr.bf16.gmra.mxu0 %v836
  %v2121 = vpop.f32.mrf.mxu0
  %v2122 = vadd.f32 %v1689, %v2121
  %v2123 = vpop.f32.mrf.mxu0
  %v2124 = vpop.f32.mrf.mxu0
  %v2125 = vadd.f32 %v1692, %v2124
  %v2126 = vpop.f32.mrf.mxu0
  %2127 = vmatprep.mubr.bf16.mxu0 %v844
  %2128 = vmatmul.mubr.bf16.gmra.mxu0 %v843
  %v2129 = vpop.f32.mrf.mxu0
  %v2130 = vadd.f32 %v1697, %v2129
  %v2131 = vpop.f32.mrf.mxu0
  %v2132 = vpop.f32.mrf.mxu0
  %v2133 = vadd.f32 %v1700, %v2132
  %v2134 = vpop.f32.mrf.mxu0
  %2135 = vmatprep.mubr.bf16.mxu0 %v851
  %2136 = vmatmul.mubr.bf16.gmra.mxu0 %v850
  %v2137 = vpop.f32.mrf.mxu0
  %v2138 = vadd.f32 %v1705, %v2137
  %v2139 = vpop.f32.mrf.mxu0
  %v2140 = vpop.f32.mrf.mxu0
  %v2141 = vadd.f32 %v1708, %v2140
  %v2142 = vpop.f32.mrf.mxu0
  %2143 = vmatprep.mubr.bf16.mxu0 %v858
  %2144 = vmatmul.mubr.bf16.gmra.mxu0 %v857
  %v2145 = vpop.f32.mrf.mxu0
  %v2146 = vadd.f32 %v1713, %v2145
  %v2147 = vpop.f32.mrf.mxu0
  %v2148 = vpop.f32.mrf.mxu0
  %v2149 = vadd.f32 %v1716, %v2148
  %v2150 = vpop.f32.mrf.mxu0
  %2151 = vmatprep.mubr.bf16.mxu0 %v865
  %2152 = vmatmul.mubr.bf16.gmra.mxu0 %v864
  %v2153 = vpop.f32.mrf.mxu0
  %v2154 = vadd.f32 %v1721, %v2153
  %v2155 = vpop.f32.mrf.mxu0
  %v2156 = vpop.f32.mrf.mxu0
  %v2157 = vadd.f32 %v1724, %v2156
  %v2158 = vpop.f32.mrf.mxu0
  %2159 = vmatprep.mubr.bf16.mxu0 %v872
  %2160 = vmatmul.mubr.bf16.gmra.mxu0 %v871
  %v2161 = vpop.f32.mrf.mxu0
  %v2162 = vadd.f32 %v1729, %v2161
  %v2163 = vpop.f32.mrf.mxu0
  %v2164 = vpop.f32.mrf.mxu0
  %v2165 = vadd.f32 %v1732, %v2164
  %v2166 = vpop.f32.mrf.mxu0
  %2167 = vmatprep.mubr.bf16.mxu0 %v879
  %2168 = vmatmul.mubr.bf16.gmra.mxu0 %v878
  %v2169 = vpop.f32.mrf.mxu0
  %v2170 = vadd.f32 %v1737, %v2169
  %v2171 = vpop.f32.mrf.mxu0
  %v2172 = vpop.f32.mrf.mxu0
  %v2173 = vadd.f32 %v1740, %v2172
  %v2174 = vpop.f32.mrf.mxu0
  %2175 = vmatprep.mubr.bf16.mxu0 %v886
  %2176 = vmatmul.mubr.bf16.gmra.mxu0 %v885
  %v2177 = vpop.f32.mrf.mxu0
  %v2178 = vadd.f32 %v1745, %v2177
  %v2179 = vpop.f32.mrf.mxu0
  %v2180 = vpop.f32.mrf.mxu0
  %v2181 = vadd.f32 %v1748, %v2180
  %v2182 = vpop.f32.mrf.mxu0
  %2183 = vmatprep.mubr.bf16.mxu0 %v893
  %2184 = vmatmul.mubr.bf16.gmra.mxu0 %v892
  %v2185 = vpop.f32.mrf.mxu0
  %v2186 = vadd.f32 %v1753, %v2185
  %v2187 = vpop.f32.mrf.mxu0
  %v2188 = vpop.f32.mrf.mxu0
  %v2189 = vadd.f32 %v1756, %v2188
  %v2190 = vpop.f32.mrf.mxu0
  %2191 = vmatprep.mubr.bf16.mxu0 %v900
  %2192 = vmatmul.mubr.bf16.gmra.mxu0 %v899
  %v2193 = vpop.f32.mrf.mxu0
  %v2194 = vadd.f32 %v1761, %v2193
  %v2195 = vpop.f32.mrf.mxu0
  %v2196 = vpop.f32.mrf.mxu0
  %v2197 = vadd.f32 %v1764, %v2196
  %v2198 = vpop.f32.mrf.mxu0
  %2199 = vmatprep.mubr.bf16.mxu0 %v907
  %2200 = vmatmul.mubr.bf16.gmra.mxu0 %v906
  %v2201 = vpop.f32.mrf.mxu0
  %v2202 = vadd.f32 %v1769, %v2201
  %v2203 = vpop.f32.mrf.mxu0
  %v2204 = vpop.f32.mrf.mxu0
  %v2205 = vadd.f32 %v1772, %v2204
  %v2206 = vpop.f32.mrf.mxu0
  %2207 = vmatprep.mubr.bf16.mxu0 %v914
  %2208 = vmatmul.mubr.bf16.gmra.mxu0 %v913
  %v2209 = vpop.f32.mrf.mxu0
  %v2210 = vadd.f32 %v1777, %v2209
  %v2211 = vpop.f32.mrf.mxu0
  %v2212 = vpop.f32.mrf.mxu0
  %v2213 = vadd.f32 %v1780, %v2212
  %v2214 = vpop.f32.mrf.mxu0
  %2215 = vmatprep.mubr.bf16.mxu0 %v921
  %2216 = vmatmul.mubr.bf16.gmra.mxu0 %v920
  %v2217 = vpop.f32.mrf.mxu0
  %v2218 = vadd.f32 %v1785, %v2217
  %v2219 = vpop.f32.mrf.mxu0
  %v2220 = vpop.f32.mrf.mxu0
  %v2221 = vadd.f32 %v1788, %v2220
  %v2222 = vpop.f32.mrf.mxu0
  %2223 = vmatprep.mubr.bf16.mxu0 %v928
  %2224 = vmatmul.mubr.bf16.gmra.mxu0 %v927
  %v2225 = vpop.f32.mrf.mxu0
  %v2226 = vadd.f32 %v1793, %v2225
  %v2227 = vpop.f32.mrf.mxu0
  %v2228 = vpop.f32.mrf.mxu0
  %v2229 = vadd.f32 %v1796, %v2228
  %v2230 = vpop.f32.mrf.mxu0
  %2231 = vmatprep.mubr.bf16.mxu0 %v935
  %2232 = vmatmul.mubr.bf16.gmra.mxu0 %v934
  %v2233 = vpop.f32.mrf.mxu0
  %v2234 = vadd.f32 %v1801, %v2233
  %v2235 = vpop.f32.mrf.mxu0
  %v2236 = vpop.f32.mrf.mxu0
  %v2237 = vadd.f32 %v1804, %v2236
  %v2238 = vpop.f32.mrf.mxu0
  %2239 = vmatprep.mubr.bf16.mxu0 %v942
  %2240 = vmatmul.mubr.bf16.gmra.mxu0 %v941
  %v2241 = vpop.f32.mrf.mxu0
  %v2242 = vadd.f32 %v1809, %v2241
  %v2243 = vpop.f32.mrf.mxu0
  %v2244 = vpop.f32.mrf.mxu0
  %v2245 = vadd.f32 %v1812, %v2244
  %v2246 = vpop.f32.mrf.mxu0
  %2247 = vmatprep.mubr.bf16.mxu0 %v949
  %2248 = vmatmul.mubr.bf16.gmra.mxu0 %v948
  %v2249 = vpop.f32.mrf.mxu0
  %v2250 = vadd.f32 %v1817, %v2249
  %v2251 = vpop.f32.mrf.mxu0
  %v2252 = vpop.f32.mrf.mxu0
  %v2253 = vadd.f32 %v1820, %v2252
  %v2254 = vpop.f32.mrf.mxu0
  %2255 = vmatprep.mubr.bf16.mxu0 %v956
  %2256 = vmatmul.mubr.bf16.gmra.mxu0 %v955
  %v2257 = vpop.f32.mrf.mxu0
  %v2258 = vadd.f32 %v1825, %v2257
  %v2259 = vpop.f32.mrf.mxu0
  %v2260 = vpop.f32.mrf.mxu0
  %v2261 = vadd.f32 %v1828, %v2260
  %v2262 = vpop.f32.mrf.mxu0
  %2263 = vmatprep.mubr.bf16.mxu0 %v963
  %2264 = vmatmul.mubr.bf16.gmra.mxu0 %v962
  %v2265 = vpop.f32.mrf.mxu0
  %v2266 = vadd.f32 %v1833, %v2265
  %v2267 = vpop.f32.mrf.mxu0
  %v2268 = vpop.f32.mrf.mxu0
  %v2269 = vadd.f32 %v1836, %v2268
  %v2270 = vpop.f32.mrf.mxu0
  %2271 = vmatprep.mubr.bf16.mxu0 %v970
  %2272 = vmatmul.mubr.bf16.gmra.mxu0 %v969
  %v2273 = vpop.f32.mrf.mxu0
  %v2274 = vadd.f32 %v1841, %v2273
  %v2275 = vpop.f32.mrf.mxu0
  %v2276 = vpop.f32.mrf.mxu0
  %v2277 = vadd.f32 %v1844, %v2276
  %v2278 = vpop.f32.mrf.mxu0
  %2279 = vmatprep.mubr.bf16.mxu0 %v977
  %2280 = vmatmul.mubr.bf16.gmra.mxu0 %v976
  %v2281 = vpop.f32.mrf.mxu0
  %v2282 = vadd.f32 %v1849, %v2281
  %v2283 = vpop.f32.mrf.mxu0
  %v2284 = vpop.f32.mrf.mxu0
  %v2285 = vadd.f32 %v1852, %v2284
  %v2286 = vpop.f32.mrf.mxu0
  %2287 = vmatprep.mubr.bf16.mxu0 %v984
  %2288 = vmatmul.mubr.bf16.gmra.mxu0 %v983
  %v2289 = vpop.f32.mrf.mxu0
  %v2290 = vadd.f32 %v1857, %v2289
  %v2291 = vpop.f32.mrf.mxu0
  %v2292 = vpop.f32.mrf.mxu0
  %v2293 = vadd.f32 %v1860, %v2292
  %v2294 = vpop.f32.mrf.mxu0
  %2295 = vmatprep.mubr.bf16.mxu0 %v991
  %2296 = vmatmul.mubr.bf16.gmra.mxu0 %v990
  %v2297 = vpop.f32.mrf.mxu0
  %v2298 = vadd.f32 %v1865, %v2297
  %v2299 = vpop.f32.mrf.mxu0
  %v2300 = vpop.f32.mrf.mxu0
  %v2301 = vadd.f32 %v1868, %v2300
  %v2302 = vpop.f32.mrf.mxu0
  %2303 = vmatprep.mubr.bf16.mxu0 %v998
  %2304 = vmatmul.mubr.bf16.gmra.mxu0 %v997
  %v2305 = vpop.f32.mrf.mxu0
  %v2306 = vadd.f32 %v1873, %v2305
  %v2307 = vpop.f32.mrf.mxu0
  %v2308 = vpop.f32.mrf.mxu0
  %v2309 = vadd.f32 %v1876, %v2308
  %v2310 = vpop.f32.mrf.mxu0
  %2311 = vmatprep.mubr.bf16.mxu0 %v1005
  %2312 = vmatmul.mubr.bf16.gmra.mxu0 %v1004
  %v2313 = vpop.f32.mrf.mxu0
  %v2314 = vadd.f32 %v1881, %v2313
  %v2315 = vpop.f32.mrf.mxu0
  %v2316 = vpop.f32.mrf.mxu0
  %v2317 = vadd.f32 %v1884, %v2316
  %v2318 = vpop.f32.mrf.mxu0
  %2319 = vmatprep.mubr.bf16.mxu0 %v1012
  %2320 = vmatmul.mubr.bf16.gmra.mxu0 %v1011
  %v2321 = vpop.f32.mrf.mxu0
  %v2322 = vadd.f32 %v1889, %v2321
  %v2323 = vpop.f32.mrf.mxu0
  %v2324 = vpop.f32.mrf.mxu0
  %v2325 = vadd.f32 %v1892, %v2324
  %v2326 = vpop.f32.mrf.mxu0
  %2327 = vmatprep.mubr.bf16.mxu0 %v1019
  %2328 = vmatmul.mubr.bf16.gmra.mxu0 %v1018
  %v2329 = vpop.f32.mrf.mxu0
  %v2330 = vadd.f32 %v1897, %v2329
  %v2331 = vpop.f32.mrf.mxu0
  %v2332 = vpop.f32.mrf.mxu0
  %v2333 = vadd.f32 %v1900, %v2332
  %v2334 = vpop.f32.mrf.mxu0
  %2335 = vmatprep.mubr.bf16.mxu0 %v1026
  %2336 = vmatmul.mubr.bf16.gmra.mxu0 %v1025
  %v2337 = vpop.f32.mrf.mxu0
  %v2338 = vadd.f32 %v1905, %v2337
  %v2339 = vpop.f32.mrf.mxu0
  %v2340 = vpop.f32.mrf.mxu0
  %v2341 = vadd.f32 %v1908, %v2340
  %v2342 = vpop.f32.mrf.mxu0
  %2343 = vmatprep.mubr.bf16.mxu0 %v1033
  %2344 = vmatmul.mubr.bf16.gmra.mxu0 %v1032
  %v2345 = vpop.f32.mrf.mxu0
  %v2346 = vadd.f32 %v1913, %v2345
  %v2347 = vpop.f32.mrf.mxu0
  %v2348 = vpop.f32.mrf.mxu0
  %v2349 = vadd.f32 %v1916, %v2348
  %v2350 = vpop.f32.mrf.mxu0
  %2351 = vmatprep.mubr.bf16.mxu0 %v1040
  %2352 = vmatmul.mubr.bf16.gmra.mxu0 %v1039
  %v2353 = vpop.f32.mrf.mxu0
  %v2354 = vadd.f32 %v1921, %v2353
  %v2355 = vpop.f32.mrf.mxu0
  %v2356 = vpop.f32.mrf.mxu0
  %v2357 = vadd.f32 %v1924, %v2356
  %v2358 = vpop.f32.mrf.mxu0
  %2359 = vmatprep.mubr.bf16.mxu0 %v1047
  %2360 = vmatmul.mubr.bf16.gmra.mxu0 %v1046
  %v2361 = vpop.f32.mrf.mxu0
  %v2362 = vadd.f32 %v1929, %v2361
  %v2363 = vpop.f32.mrf.mxu0
  %v2364 = vpop.f32.mrf.mxu0
  %v2365 = vadd.f32 %v1932, %v2364
  %v2366 = vpop.f32.mrf.mxu0
  %2367 = vmatprep.mubr.bf16.mxu0 %v1054
  %2368 = vmatmul.mubr.bf16.gmra.mxu0 %v1053
  %v2369 = vpop.f32.mrf.mxu0
  %v2370 = vadd.f32 %v1937, %v2369
  %v2371 = vpop.f32.mrf.mxu0
  %v2372 = vpop.f32.mrf.mxu0
  %v2373 = vadd.f32 %v1940, %v2372
  %v2374 = vpop.f32.mrf.mxu0
  %2375 = vmatprep.mubr.bf16.mxu0 %v1061
  %2376 = vmatmul.mubr.bf16.gmra.mxu0 %v1060
  %v2377 = vpop.f32.mrf.mxu0
  %v2378 = vadd.f32 %v1945, %v2377
  %v2379 = vpop.f32.mrf.mxu0
  %v2380 = vpop.f32.mrf.mxu0
  %v2381 = vadd.f32 %v1948, %v2380
  %v2382 = vpop.f32.mrf.mxu0
  %2383 = vdwg.mxu0
  %2384 = vmatprep.subr.bf16.mxu0 0
  %2385 = vmatpush1.bf16.msra.mxu0 %v1445
  %2386 = vmatprep.subr.bf16.mxu0 0
  %2387 = vmatpush1.bf16.msra.mxu0 %v1444
  %2388 = vmatprep.subr.bf16.mxu0 0
  %2389 = vmatpush1.bf16.msra.mxu0 %v1443
  %2390 = vmatprep.subr.bf16.mxu0 0
  %2391 = vmatpush1.bf16.msra.mxu0 %v1442
  %2392 = vmatprep.subr.bf16.mxu0 0
  %2393 = vmatpush1.bf16.msra.mxu0 %v1441
  %2394 = vmatprep.subr.bf16.mxu0 0
  %2395 = vmatpush1.bf16.msra.mxu0 %v1440
  %2396 = vmatprep.subr.bf16.mxu0 0
  %2397 = vmatpush1.bf16.msra.mxu0 %v1439
  %2398 = vmatprep.subr.bf16.mxu0 0
  %2399 = vmatpush1.bf16.msra.mxu0 %v1438
  %2400 = vmatprep.subr.bf16.mxu0 0
  %2401 = vmatpush2.bf16.msra.mxu0 %v1453
  %2402 = vmatprep.subr.bf16.mxu0 0
  %2403 = vmatpush2.bf16.msra.mxu0 %v1452
  %2404 = vmatprep.subr.bf16.mxu0 0
  %2405 = vmatpush2.bf16.msra.mxu0 %v1451
  %2406 = vmatprep.subr.bf16.mxu0 0
  %2407 = vmatpush2.bf16.msra.mxu0 %v1450
  %2408 = vmatprep.subr.bf16.mxu0 0
  %2409 = vmatpush2.bf16.msra.mxu0 %v1449
  %2410 = vmatprep.subr.bf16.mxu0 0
  %2411 = vmatpush2.bf16.msra.mxu0 %v1448
  %2412 = vmatprep.subr.bf16.mxu0 0
  %2413 = vmatpush2.bf16.msra.mxu0 %v1447
  %2414 = vmatprep.subr.bf16.mxu0 0
  %2415 = vmatpush2.bf16.msra.mxu0 %v1446
  %2416 = vmatprep.mubr.bf16.mxu0 %v720
  %2417 = vmatmul.mubr.bf16.gmra.mxu0 %v719
  %v2418 = vpop.f32.mrf.mxu0
  %v2419 = vadd.f32 %v1986, %v2418
  %v2420 = vpop.f32.mrf.mxu0
  %v2421 = vpop.f32.mrf.mxu0
  %v2422 = vadd.f32 %v1989, %v2421
  %v2423 = vpop.f32.mrf.mxu0
  %2424 = vmatprep.mubr.bf16.mxu0 %v727
  %2425 = vmatmul.mubr.bf16.gmra.mxu0 %v726
  %v2426 = vpop.f32.mrf.mxu0
  %v2427 = vadd.f32 %v1994, %v2426
  %v2428 = vpop.f32.mrf.mxu0
  %v2429 = vpop.f32.mrf.mxu0
  %v2430 = vadd.f32 %v1997, %v2429
  %v2431 = vpop.f32.mrf.mxu0
  %2432 = vmatprep.mubr.bf16.mxu0 %v734
  %2433 = vmatmul.mubr.bf16.gmra.mxu0 %v733
  %v2434 = vpop.f32.mrf.mxu0
  %v2435 = vadd.f32 %v2002, %v2434
  %v2436 = vpop.f32.mrf.mxu0
  %v2437 = vpop.f32.mrf.mxu0
  %v2438 = vadd.f32 %v2005, %v2437
  %v2439 = vpop.f32.mrf.mxu0
  %2440 = vmatprep.mubr.bf16.mxu0 %v741
  %2441 = vmatmul.mubr.bf16.gmra.mxu0 %v740
  %v2442 = vpop.f32.mrf.mxu0
  %v2443 = vadd.f32 %v2010, %v2442
  %v2444 = vpop.f32.mrf.mxu0
  %v2445 = vpop.f32.mrf.mxu0
  %v2446 = vadd.f32 %v2013, %v2445
  %v2447 = vpop.f32.mrf.mxu0
  %2448 = vmatprep.mubr.bf16.mxu0 %v748
  %2449 = vmatmul.mubr.bf16.gmra.mxu0 %v747
  %v2450 = vpop.f32.mrf.mxu0
  %v2451 = vadd.f32 %v2018, %v2450
  %v2452 = vpop.f32.mrf.mxu0
  %v2453 = vpop.f32.mrf.mxu0
  %v2454 = vadd.f32 %v2021, %v2453
  %v2455 = vpop.f32.mrf.mxu0
  %2456 = vmatprep.mubr.bf16.mxu0 %v755
  %2457 = vmatmul.mubr.bf16.gmra.mxu0 %v754
  %v2458 = vpop.f32.mrf.mxu0
  %v2459 = vadd.f32 %v2026, %v2458
  %v2460 = vpop.f32.mrf.mxu0
  %v2461 = vpop.f32.mrf.mxu0
  %v2462 = vadd.f32 %v2029, %v2461
  %v2463 = vpop.f32.mrf.mxu0
  %2464 = vmatprep.mubr.bf16.mxu0 %v762
  %2465 = vmatmul.mubr.bf16.gmra.mxu0 %v761
  %v2466 = vpop.f32.mrf.mxu0
  %v2467 = vadd.f32 %v2034, %v2466
  %v2468 = vpop.f32.mrf.mxu0
  %v2469 = vpop.f32.mrf.mxu0
  %v2470 = vadd.f32 %v2037, %v2469
  %v2471 = vpop.f32.mrf.mxu0
  %2472 = vmatprep.mubr.bf16.mxu0 %v769
  %2473 = vmatmul.mubr.bf16.gmra.mxu0 %v768
  %v2474 = vpop.f32.mrf.mxu0
  %v2475 = vadd.f32 %v2042, %v2474
  %v2476 = vpop.f32.mrf.mxu0
  %v2477 = vpop.f32.mrf.mxu0
  %v2478 = vadd.f32 %v2045, %v2477
  %v2479 = vpop.f32.mrf.mxu0
  %2480 = vmatprep.mubr.bf16.mxu0 %v776
  %2481 = vmatmul.mubr.bf16.gmra.mxu0 %v775
  %v2482 = vpop.f32.mrf.mxu0
  %v2483 = vadd.f32 %v2050, %v2482
  %v2484 = vpop.f32.mrf.mxu0
  %v2485 = vpop.f32.mrf.mxu0
  %v2486 = vadd.f32 %v2053, %v2485
  %v2487 = vpop.f32.mrf.mxu0
  %2488 = vmatprep.mubr.bf16.mxu0 %v783
  %2489 = vmatmul.mubr.bf16.gmra.mxu0 %v782
  %v2490 = vpop.f32.mrf.mxu0
  %v2491 = vadd.f32 %v2058, %v2490
  %v2492 = vpop.f32.mrf.mxu0
  %v2493 = vpop.f32.mrf.mxu0
  %v2494 = vadd.f32 %v2061, %v2493
  %v2495 = vpop.f32.mrf.mxu0
  %2496 = vmatprep.mubr.bf16.mxu0 %v790
  %2497 = vmatmul.mubr.bf16.gmra.mxu0 %v789
  %v2498 = vpop.f32.mrf.mxu0
  %v2499 = vadd.f32 %v2066, %v2498
  %v2500 = vpop.f32.mrf.mxu0
  %v2501 = vpop.f32.mrf.mxu0
  %v2502 = vadd.f32 %v2069, %v2501
  %v2503 = vpop.f32.mrf.mxu0
  %2504 = vmatprep.mubr.bf16.mxu0 %v797
  %2505 = vmatmul.mubr.bf16.gmra.mxu0 %v796
  %v2506 = vpop.f32.mrf.mxu0
  %v2507 = vadd.f32 %v2074, %v2506
  %v2508 = vpop.f32.mrf.mxu0
  %v2509 = vpop.f32.mrf.mxu0
  %v2510 = vadd.f32 %v2077, %v2509
  %v2511 = vpop.f32.mrf.mxu0
  %2512 = vmatprep.mubr.bf16.mxu0 %v804
  %2513 = vmatmul.mubr.bf16.gmra.mxu0 %v803
  %v2514 = vpop.f32.mrf.mxu0
  %v2515 = vadd.f32 %v2082, %v2514
  %v2516 = vpop.f32.mrf.mxu0
  %v2517 = vpop.f32.mrf.mxu0
  %v2518 = vadd.f32 %v2085, %v2517
  %v2519 = vpop.f32.mrf.mxu0
  %2520 = vmatprep.mubr.bf16.mxu0 %v811
  %2521 = vmatmul.mubr.bf16.gmra.mxu0 %v810
  %v2522 = vpop.f32.mrf.mxu0
  %v2523 = vadd.f32 %v2090, %v2522
  %v2524 = vpop.f32.mrf.mxu0
  %v2525 = vpop.f32.mrf.mxu0
  %v2526 = vadd.f32 %v2093, %v2525
  %v2527 = vpop.f32.mrf.mxu0
  %2528 = vmatprep.mubr.bf16.mxu0 %v818
  %2529 = vmatmul.mubr.bf16.gmra.mxu0 %v817
  %v2530 = vpop.f32.mrf.mxu0
  %v2531 = vadd.f32 %v2098, %v2530
  %v2532 = vpop.f32.mrf.mxu0
  %v2533 = vpop.f32.mrf.mxu0
  %v2534 = vadd.f32 %v2101, %v2533
  %v2535 = vpop.f32.mrf.mxu0
  %2536 = vmatprep.mubr.bf16.mxu0 %v825
  %2537 = vmatmul.mubr.bf16.gmra.mxu0 %v824
  %v2538 = vpop.f32.mrf.mxu0
  %v2539 = vadd.f32 %v2106, %v2538
  %v2540 = vpop.f32.mrf.mxu0
  %v2541 = vpop.f32.mrf.mxu0
  %v2542 = vadd.f32 %v2109, %v2541
  %v2543 = vpop.f32.mrf.mxu0
  %2544 = vmatprep.mubr.bf16.mxu0 %v832
  %2545 = vmatmul.mubr.bf16.gmra.mxu0 %v831
  %v2546 = vpop.f32.mrf.mxu0
  %v2547 = vadd.f32 %v2114, %v2546
  %v2548 = vpop.f32.mrf.mxu0
  %v2549 = vpop.f32.mrf.mxu0
  %v2550 = vadd.f32 %v2117, %v2549
  %v2551 = vpop.f32.mrf.mxu0
  %2552 = vmatprep.mubr.bf16.mxu0 %v839
  %2553 = vmatmul.mubr.bf16.gmra.mxu0 %v838
  %v2554 = vpop.f32.mrf.mxu0
  %v2555 = vadd.f32 %v2122, %v2554
  %v2556 = vpop.f32.mrf.mxu0
  %v2557 = vpop.f32.mrf.mxu0
  %v2558 = vadd.f32 %v2125, %v2557
  %v2559 = vpop.f32.mrf.mxu0
  %2560 = vmatprep.mubr.bf16.mxu0 %v846
  %2561 = vmatmul.mubr.bf16.gmra.mxu0 %v845
  %v2562 = vpop.f32.mrf.mxu0
  %v2563 = vadd.f32 %v2130, %v2562
  %v2564 = vpop.f32.mrf.mxu0
  %v2565 = vpop.f32.mrf.mxu0
  %v2566 = vadd.f32 %v2133, %v2565
  %v2567 = vpop.f32.mrf.mxu0
  %2568 = vmatprep.mubr.bf16.mxu0 %v853
  %2569 = vmatmul.mubr.bf16.gmra.mxu0 %v852
  %v2570 = vpop.f32.mrf.mxu0
  %v2571 = vadd.f32 %v2138, %v2570
  %v2572 = vpop.f32.mrf.mxu0
  %v2573 = vpop.f32.mrf.mxu0
  %v2574 = vadd.f32 %v2141, %v2573
  %v2575 = vpop.f32.mrf.mxu0
  %2576 = vmatprep.mubr.bf16.mxu0 %v860
  %2577 = vmatmul.mubr.bf16.gmra.mxu0 %v859
  %v2578 = vpop.f32.mrf.mxu0
  %v2579 = vadd.f32 %v2146, %v2578
  %v2580 = vpop.f32.mrf.mxu0
  %v2581 = vpop.f32.mrf.mxu0
  %v2582 = vadd.f32 %v2149, %v2581
  %v2583 = vpop.f32.mrf.mxu0
  %2584 = vmatprep.mubr.bf16.mxu0 %v867
  %2585 = vmatmul.mubr.bf16.gmra.mxu0 %v866
  %v2586 = vpop.f32.mrf.mxu0
  %v2587 = vadd.f32 %v2154, %v2586
  %v2588 = vpop.f32.mrf.mxu0
  %v2589 = vpop.f32.mrf.mxu0
  %v2590 = vadd.f32 %v2157, %v2589
  %v2591 = vpop.f32.mrf.mxu0
  %2592 = vmatprep.mubr.bf16.mxu0 %v874
  %2593 = vmatmul.mubr.bf16.gmra.mxu0 %v873
  %v2594 = vpop.f32.mrf.mxu0
  %v2595 = vadd.f32 %v2162, %v2594
  %v2596 = vpop.f32.mrf.mxu0
  %v2597 = vpop.f32.mrf.mxu0
  %v2598 = vadd.f32 %v2165, %v2597
  %v2599 = vpop.f32.mrf.mxu0
  %2600 = vmatprep.mubr.bf16.mxu0 %v881
  %2601 = vmatmul.mubr.bf16.gmra.mxu0 %v880
  %v2602 = vpop.f32.mrf.mxu0
  %v2603 = vadd.f32 %v2170, %v2602
  %v2604 = vpop.f32.mrf.mxu0
  %v2605 = vpop.f32.mrf.mxu0
  %v2606 = vadd.f32 %v2173, %v2605
  %v2607 = vpop.f32.mrf.mxu0
  %2608 = vmatprep.mubr.bf16.mxu0 %v888
  %2609 = vmatmul.mubr.bf16.gmra.mxu0 %v887
  %v2610 = vpop.f32.mrf.mxu0
  %v2611 = vadd.f32 %v2178, %v2610
  %v2612 = vpop.f32.mrf.mxu0
  %v2613 = vpop.f32.mrf.mxu0
  %v2614 = vadd.f32 %v2181, %v2613
  %v2615 = vpop.f32.mrf.mxu0
  %2616 = vmatprep.mubr.bf16.mxu0 %v895
  %2617 = vmatmul.mubr.bf16.gmra.mxu0 %v894
  %v2618 = vpop.f32.mrf.mxu0
  %v2619 = vadd.f32 %v2186, %v2618
  %v2620 = vpop.f32.mrf.mxu0
  %v2621 = vpop.f32.mrf.mxu0
  %v2622 = vadd.f32 %v2189, %v2621
  %v2623 = vpop.f32.mrf.mxu0
  %2624 = vmatprep.mubr.bf16.mxu0 %v902
  %2625 = vmatmul.mubr.bf16.gmra.mxu0 %v901
  %v2626 = vpop.f32.mrf.mxu0
  %v2627 = vadd.f32 %v2194, %v2626
  %v2628 = vpop.f32.mrf.mxu0
  %v2629 = vpop.f32.mrf.mxu0
  %v2630 = vadd.f32 %v2197, %v2629
  %v2631 = vpop.f32.mrf.mxu0
  %2632 = vmatprep.mubr.bf16.mxu0 %v909
  %2633 = vmatmul.mubr.bf16.gmra.mxu0 %v908
  %v2634 = vpop.f32.mrf.mxu0
  %v2635 = vadd.f32 %v2202, %v2634
  %v2636 = vpop.f32.mrf.mxu0
  %v2637 = vpop.f32.mrf.mxu0
  %v2638 = vadd.f32 %v2205, %v2637
  %v2639 = vpop.f32.mrf.mxu0
  %2640 = vmatprep.mubr.bf16.mxu0 %v916
  %2641 = vmatmul.mubr.bf16.gmra.mxu0 %v915
  %v2642 = vpop.f32.mrf.mxu0
  %v2643 = vadd.f32 %v2210, %v2642
  %v2644 = vpop.f32.mrf.mxu0
  %v2645 = vpop.f32.mrf.mxu0
  %v2646 = vadd.f32 %v2213, %v2645
  %v2647 = vpop.f32.mrf.mxu0
  %2648 = vmatprep.mubr.bf16.mxu0 %v923
  %2649 = vmatmul.mubr.bf16.gmra.mxu0 %v922
  %v2650 = vpop.f32.mrf.mxu0
  %v2651 = vadd.f32 %v2218, %v2650
  %v2652 = vpop.f32.mrf.mxu0
  %v2653 = vpop.f32.mrf.mxu0
  %v2654 = vadd.f32 %v2221, %v2653
  %v2655 = vpop.f32.mrf.mxu0
  %2656 = vmatprep.mubr.bf16.mxu0 %v930
  %2657 = vmatmul.mubr.bf16.gmra.mxu0 %v929
  %v2658 = vpop.f32.mrf.mxu0
  %v2659 = vadd.f32 %v2226, %v2658
  %v2660 = vpop.f32.mrf.mxu0
  %v2661 = vpop.f32.mrf.mxu0
  %v2662 = vadd.f32 %v2229, %v2661
  %v2663 = vpop.f32.mrf.mxu0
  %2664 = vmatprep.mubr.bf16.mxu0 %v937
  %2665 = vmatmul.mubr.bf16.gmra.mxu0 %v936
  %v2666 = vpop.f32.mrf.mxu0
  %v2667 = vadd.f32 %v2234, %v2666
  %v2668 = vpop.f32.mrf.mxu0
  %v2669 = vpop.f32.mrf.mxu0
  %v2670 = vadd.f32 %v2237, %v2669
  %v2671 = vpop.f32.mrf.mxu0
  %2672 = vmatprep.mubr.bf16.mxu0 %v944
  %2673 = vmatmul.mubr.bf16.gmra.mxu0 %v943
  %v2674 = vpop.f32.mrf.mxu0
  %v2675 = vadd.f32 %v2242, %v2674
  %v2676 = vpop.f32.mrf.mxu0
  %v2677 = vpop.f32.mrf.mxu0
  %v2678 = vadd.f32 %v2245, %v2677
  %v2679 = vpop.f32.mrf.mxu0
  %2680 = vmatprep.mubr.bf16.mxu0 %v951
  %2681 = vmatmul.mubr.bf16.gmra.mxu0 %v950
  %v2682 = vpop.f32.mrf.mxu0
  %v2683 = vadd.f32 %v2250, %v2682
  %v2684 = vpop.f32.mrf.mxu0
  %v2685 = vpop.f32.mrf.mxu0
  %v2686 = vadd.f32 %v2253, %v2685
  %v2687 = vpop.f32.mrf.mxu0
  %2688 = vmatprep.mubr.bf16.mxu0 %v958
  %2689 = vmatmul.mubr.bf16.gmra.mxu0 %v957
  %v2690 = vpop.f32.mrf.mxu0
  %v2691 = vadd.f32 %v2258, %v2690
  %v2692 = vpop.f32.mrf.mxu0
  %v2693 = vpop.f32.mrf.mxu0
  %v2694 = vadd.f32 %v2261, %v2693
  %v2695 = vpop.f32.mrf.mxu0
  %2696 = vmatprep.mubr.bf16.mxu0 %v965
  %2697 = vmatmul.mubr.bf16.gmra.mxu0 %v964
  %v2698 = vpop.f32.mrf.mxu0
  %v2699 = vadd.f32 %v2266, %v2698
  %v2700 = vpop.f32.mrf.mxu0
  %v2701 = vpop.f32.mrf.mxu0
  %v2702 = vadd.f32 %v2269, %v2701
  %v2703 = vpop.f32.mrf.mxu0
  %2704 = vmatprep.mubr.bf16.mxu0 %v972
  %2705 = vmatmul.mubr.bf16.gmra.mxu0 %v971
  %v2706 = vpop.f32.mrf.mxu0
  %v2707 = vadd.f32 %v2274, %v2706
  %v2708 = vpop.f32.mrf.mxu0
  %v2709 = vpop.f32.mrf.mxu0
  %v2710 = vadd.f32 %v2277, %v2709
  %v2711 = vpop.f32.mrf.mxu0
  %2712 = vmatprep.mubr.bf16.mxu0 %v979
  %2713 = vmatmul.mubr.bf16.gmra.mxu0 %v978
  %v2714 = vpop.f32.mrf.mxu0
  %v2715 = vadd.f32 %v2282, %v2714
  %v2716 = vpop.f32.mrf.mxu0
  %v2717 = vpop.f32.mrf.mxu0
  %v2718 = vadd.f32 %v2285, %v2717
  %v2719 = vpop.f32.mrf.mxu0
  %2720 = vmatprep.mubr.bf16.mxu0 %v986
  %2721 = vmatmul.mubr.bf16.gmra.mxu0 %v985
  %v2722 = vpop.f32.mrf.mxu0
  %v2723 = vadd.f32 %v2290, %v2722
  %v2724 = vpop.f32.mrf.mxu0
  %v2725 = vpop.f32.mrf.mxu0
  %v2726 = vadd.f32 %v2293, %v2725
  %v2727 = vpop.f32.mrf.mxu0
  %2728 = vmatprep.mubr.bf16.mxu0 %v993
  %2729 = vmatmul.mubr.bf16.gmra.mxu0 %v992
  %v2730 = vpop.f32.mrf.mxu0
  %v2731 = vadd.f32 %v2298, %v2730
  %v2732 = vpop.f32.mrf.mxu0
  %v2733 = vpop.f32.mrf.mxu0
  %v2734 = vadd.f32 %v2301, %v2733
  %v2735 = vpop.f32.mrf.mxu0
  %2736 = vmatprep.mubr.bf16.mxu0 %v1000
  %2737 = vmatmul.mubr.bf16.gmra.mxu0 %v999
  %v2738 = vpop.f32.mrf.mxu0
  %v2739 = vadd.f32 %v2306, %v2738
  %v2740 = vpop.f32.mrf.mxu0
  %v2741 = vpop.f32.mrf.mxu0
  %v2742 = vadd.f32 %v2309, %v2741
  %v2743 = vpop.f32.mrf.mxu0
  %2744 = vmatprep.mubr.bf16.mxu0 %v1007
  %2745 = vmatmul.mubr.bf16.gmra.mxu0 %v1006
  %v2746 = vpop.f32.mrf.mxu0
  %v2747 = vadd.f32 %v2314, %v2746
  %v2748 = vpop.f32.mrf.mxu0
  %v2749 = vpop.f32.mrf.mxu0
  %v2750 = vadd.f32 %v2317, %v2749
  %v2751 = vpop.f32.mrf.mxu0
  %2752 = vmatprep.mubr.bf16.mxu0 %v1014
  %2753 = vmatmul.mubr.bf16.gmra.mxu0 %v1013
  %v2754 = vpop.f32.mrf.mxu0
  %v2755 = vadd.f32 %v2322, %v2754
  %v2756 = vpop.f32.mrf.mxu0
  %v2757 = vpop.f32.mrf.mxu0
  %v2758 = vadd.f32 %v2325, %v2757
  %v2759 = vpop.f32.mrf.mxu0
  %2760 = vmatprep.mubr.bf16.mxu0 %v1021
  %2761 = vmatmul.mubr.bf16.gmra.mxu0 %v1020
  %v2762 = vpop.f32.mrf.mxu0
  %v2763 = vadd.f32 %v2330, %v2762
  %v2764 = vpop.f32.mrf.mxu0
  %v2765 = vpop.f32.mrf.mxu0
  %v2766 = vadd.f32 %v2333, %v2765
  %v2767 = vpop.f32.mrf.mxu0
  %2768 = vmatprep.mubr.bf16.mxu0 %v1028
  %2769 = vmatmul.mubr.bf16.gmra.mxu0 %v1027
  %v2770 = vpop.f32.mrf.mxu0
  %v2771 = vadd.f32 %v2338, %v2770
  %v2772 = vpop.f32.mrf.mxu0
  %v2773 = vpop.f32.mrf.mxu0
  %v2774 = vadd.f32 %v2341, %v2773
  %v2775 = vpop.f32.mrf.mxu0
  %2776 = vmatprep.mubr.bf16.mxu0 %v1035
  %2777 = vmatmul.mubr.bf16.gmra.mxu0 %v1034
  %v2778 = vpop.f32.mrf.mxu0
  %v2779 = vadd.f32 %v2346, %v2778
  %v2780 = vpop.f32.mrf.mxu0
  %v2781 = vpop.f32.mrf.mxu0
  %v2782 = vadd.f32 %v2349, %v2781
  %v2783 = vpop.f32.mrf.mxu0
  %2784 = vmatprep.mubr.bf16.mxu0 %v1042
  %2785 = vmatmul.mubr.bf16.gmra.mxu0 %v1041
  %v2786 = vpop.f32.mrf.mxu0
  %v2787 = vadd.f32 %v2354, %v2786
  %v2788 = vpop.f32.mrf.mxu0
  %v2789 = vpop.f32.mrf.mxu0
  %v2790 = vadd.f32 %v2357, %v2789
  %v2791 = vpop.f32.mrf.mxu0
  %2792 = vmatprep.mubr.bf16.mxu0 %v1049
  %2793 = vmatmul.mubr.bf16.gmra.mxu0 %v1048
  %v2794 = vpop.f32.mrf.mxu0
  %v2795 = vadd.f32 %v2362, %v2794
  %v2796 = vpop.f32.mrf.mxu0
  %v2797 = vpop.f32.mrf.mxu0
  %v2798 = vadd.f32 %v2365, %v2797
  %v2799 = vpop.f32.mrf.mxu0
  %2800 = vmatprep.mubr.bf16.mxu0 %v1056
  %2801 = vmatmul.mubr.bf16.gmra.mxu0 %v1055
  %v2802 = vpop.f32.mrf.mxu0
  %v2803 = vadd.f32 %v2370, %v2802
  %v2804 = vpop.f32.mrf.mxu0
  %v2805 = vpop.f32.mrf.mxu0
  %v2806 = vadd.f32 %v2373, %v2805
  %v2807 = vpop.f32.mrf.mxu0
  %2808 = vmatprep.mubr.bf16.mxu0 %v1063
  %2809 = vmatmul.mubr.bf16.gmra.mxu0 %v1062
  %v2810 = vpop.f32.mrf.mxu0
  %v2811 = vadd.f32 %v2378, %v2810
  %v2812 = vpop.f32.mrf.mxu0
  %v2813 = vpop.f32.mrf.mxu0
  %v2814 = vadd.f32 %v2381, %v2813
  %v2815 = vpop.f32.mrf.mxu0
  %2816 = vdwg.mxu0
  %2817 = vmatprep.subr.bf16.mxu0 0
  %2818 = vmatpush1.bf16.msra.mxu0 %v1461
  %2819 = vmatprep.subr.bf16.mxu0 0
  %2820 = vmatpush1.bf16.msra.mxu0 %v1460
  %2821 = vmatprep.subr.bf16.mxu0 0
  %2822 = vmatpush1.bf16.msra.mxu0 %v1459
  %2823 = vmatprep.subr.bf16.mxu0 0
  %2824 = vmatpush1.bf16.msra.mxu0 %v1458
  %2825 = vmatprep.subr.bf16.mxu0 0
  %2826 = vmatpush1.bf16.msra.mxu0 %v1457
  %2827 = vmatprep.subr.bf16.mxu0 0
  %2828 = vmatpush1.bf16.msra.mxu0 %v1456
  %2829 = vmatprep.subr.bf16.mxu0 0
  %2830 = vmatpush1.bf16.msra.mxu0 %v1455
  %2831 = vmatprep.subr.bf16.mxu0 0
  %2832 = vmatpush1.bf16.msra.mxu0 %v1454
  %2833 = vmatprep.subr.bf16.mxu0 0
  %2834 = vmatpush2.bf16.msra.mxu0 0
  %2835 = vmatprep.subr.bf16.mxu0 0
  %2836 = vmatpush2.bf16.msra.mxu0 0
  %2837 = vmatprep.subr.bf16.mxu0 0
  %2838 = vmatpush2.bf16.msra.mxu0 0
  %2839 = vmatprep.subr.bf16.mxu0 0
  %2840 = vmatpush2.bf16.msra.mxu0 0
  %2841 = vmatprep.subr.bf16.mxu0 0
  %2842 = vmatpush2.bf16.msra.mxu0 0
  %2843 = vmatprep.subr.bf16.mxu0 0
  %2844 = vmatpush2.bf16.msra.mxu0 0
  %2845 = vmatprep.subr.bf16.mxu0 0
  %2846 = vmatpush2.bf16.msra.mxu0 0
  %2847 = vmatprep.subr.bf16.mxu0 0
  %2848 = vmatpush2.bf16.msra.mxu0 0
  %2849 = vmatprep.mubr.bf16.mxu0 0
  %2850 = vmatmul.mubr.bf16.gmra.mxu0 %v721
  %v2851 = vpop.f32.mrf.mxu0
  %v2852 = vadd.f32 %v2419, %v2851
  %v2853 = vpop.f32.mrf.mxu0
  %v2854 = vpop.f32.mrf.mxu0
  %v2855 = vadd.f32 %v2422, %v2854
  %v2856 = vpop.f32.mrf.mxu0
  %2857 = vmatprep.mubr.bf16.mxu0 0
  %2858 = vmatmul.mubr.bf16.gmra.mxu0 %v728
  %v2859 = vpop.f32.mrf.mxu0
  %v2860 = vadd.f32 %v2427, %v2859
  %v2861 = vpop.f32.mrf.mxu0
  %v2862 = vpop.f32.mrf.mxu0
  %v2863 = vadd.f32 %v2430, %v2862
  %v2864 = vpop.f32.mrf.mxu0
  %2865 = vmatprep.mubr.bf16.mxu0 0
  %2866 = vmatmul.mubr.bf16.gmra.mxu0 %v735
  %v2867 = vpop.f32.mrf.mxu0
  %v2868 = vadd.f32 %v2435, %v2867
  %v2869 = vpop.f32.mrf.mxu0
  %v2870 = vpop.f32.mrf.mxu0
  %v2871 = vadd.f32 %v2438, %v2870
  %v2872 = vpop.f32.mrf.mxu0
  %2873 = vmatprep.mubr.bf16.mxu0 0
  %2874 = vmatmul.mubr.bf16.gmra.mxu0 %v742
  %v2875 = vpop.f32.mrf.mxu0
  %v2876 = vadd.f32 %v2443, %v2875
  %v2877 = vpop.f32.mrf.mxu0
  %v2878 = vpop.f32.mrf.mxu0
  %v2879 = vadd.f32 %v2446, %v2878
  %v2880 = vpop.f32.mrf.mxu0
  %2881 = vmatprep.mubr.bf16.mxu0 0
  %2882 = vmatmul.mubr.bf16.gmra.mxu0 %v749
  %v2883 = vpop.f32.mrf.mxu0
  %v2884 = vadd.f32 %v2451, %v2883
  %v2885 = vpop.f32.mrf.mxu0
  %v2886 = vpop.f32.mrf.mxu0
  %v2887 = vadd.f32 %v2454, %v2886
  %v2888 = vpop.f32.mrf.mxu0
  %2889 = vmatprep.mubr.bf16.mxu0 0
  %2890 = vmatmul.mubr.bf16.gmra.mxu0 %v756
  %v2891 = vpop.f32.mrf.mxu0
  %v2892 = vadd.f32 %v2459, %v2891
  %v2893 = vpop.f32.mrf.mxu0
  %v2894 = vpop.f32.mrf.mxu0
  %v2895 = vadd.f32 %v2462, %v2894
  %v2896 = vpop.f32.mrf.mxu0
  %2897 = vmatprep.mubr.bf16.mxu0 0
  %2898 = vmatmul.mubr.bf16.gmra.mxu0 %v763
  %v2899 = vpop.f32.mrf.mxu0
  %v2900 = vadd.f32 %v2467, %v2899
  %v2901 = vpop.f32.mrf.mxu0
  %v2902 = vpop.f32.mrf.mxu0
  %v2903 = vadd.f32 %v2470, %v2902
  %v2904 = vpop.f32.mrf.mxu0
  %2905 = vmatprep.mubr.bf16.mxu0 0
  %2906 = vmatmul.mubr.bf16.gmra.mxu0 %v770
  %v2907 = vpop.f32.mrf.mxu0
  %v2908 = vadd.f32 %v2475, %v2907
  %v2909 = vpop.f32.mrf.mxu0
  %v2910 = vpop.f32.mrf.mxu0
  %v2911 = vadd.f32 %v2478, %v2910
  %v2912 = vpop.f32.mrf.mxu0
  %2913 = vmatprep.mubr.bf16.mxu0 0
  %2914 = vmatmul.mubr.bf16.gmra.mxu0 %v777
  %v2915 = vpop.f32.mrf.mxu0
  %v2916 = vadd.f32 %v2483, %v2915
  %v2917 = vpop.f32.mrf.mxu0
  %v2918 = vpop.f32.mrf.mxu0
  %v2919 = vadd.f32 %v2486, %v2918
  %v2920 = vpop.f32.mrf.mxu0
  %2921 = vmatprep.mubr.bf16.mxu0 0
  %2922 = vmatmul.mubr.bf16.gmra.mxu0 %v784
  %v2923 = vpop.f32.mrf.mxu0
  %v2924 = vadd.f32 %v2491, %v2923
  %v2925 = vpop.f32.mrf.mxu0
  %v2926 = vpop.f32.mrf.mxu0
  %v2927 = vadd.f32 %v2494, %v2926
  %v2928 = vpop.f32.mrf.mxu0
  %2929 = vmatprep.mubr.bf16.mxu0 0
  %2930 = vmatmul.mubr.bf16.gmra.mxu0 %v791
  %v2931 = vpop.f32.mrf.mxu0
  %v2932 = vadd.f32 %v2499, %v2931
  %v2933 = vpop.f32.mrf.mxu0
  %v2934 = vpop.f32.mrf.mxu0
  %v2935 = vadd.f32 %v2502, %v2934
  %v2936 = vpop.f32.mrf.mxu0
  %2937 = vmatprep.mubr.bf16.mxu0 0
  %2938 = vmatmul.mubr.bf16.gmra.mxu0 %v798
  %v2939 = vpop.f32.mrf.mxu0
  %v2940 = vadd.f32 %v2507, %v2939
  %v2941 = vpop.f32.mrf.mxu0
  %v2942 = vpop.f32.mrf.mxu0
  %v2943 = vadd.f32 %v2510, %v2942
  %v2944 = vpop.f32.mrf.mxu0
  %2945 = vmatprep.mubr.bf16.mxu0 0
  %2946 = vmatmul.mubr.bf16.gmra.mxu0 %v805
  %v2947 = vpop.f32.mrf.mxu0
  %v2948 = vadd.f32 %v2515, %v2947
  %v2949 = vpop.f32.mrf.mxu0
  %v2950 = vpop.f32.mrf.mxu0
  %v2951 = vadd.f32 %v2518, %v2950
  %v2952 = vpop.f32.mrf.mxu0
  %2953 = vmatprep.mubr.bf16.mxu0 0
  %2954 = vmatmul.mubr.bf16.gmra.mxu0 %v812
  %v2955 = vpop.f32.mrf.mxu0
  %v2956 = vadd.f32 %v2523, %v2955
  %v2957 = vpop.f32.mrf.mxu0
  %v2958 = vpop.f32.mrf.mxu0
  %v2959 = vadd.f32 %v2526, %v2958
  %v2960 = vpop.f32.mrf.mxu0
  %2961 = vmatprep.mubr.bf16.mxu0 0
  %2962 = vmatmul.mubr.bf16.gmra.mxu0 %v819
  %v2963 = vpop.f32.mrf.mxu0
  %v2964 = vadd.f32 %v2531, %v2963
  %v2965 = vpop.f32.mrf.mxu0
  %v2966 = vpop.f32.mrf.mxu0
  %v2967 = vadd.f32 %v2534, %v2966
  %v2968 = vpop.f32.mrf.mxu0
  %2969 = vmatprep.mubr.bf16.mxu0 0
  %2970 = vmatmul.mubr.bf16.gmra.mxu0 %v826
  %v2971 = vpop.f32.mrf.mxu0
  %v2972 = vadd.f32 %v2539, %v2971
  %v2973 = vpop.f32.mrf.mxu0
  %v2974 = vpop.f32.mrf.mxu0
  %v2975 = vadd.f32 %v2542, %v2974
  %v2976 = vpop.f32.mrf.mxu0
  %2977 = vmatprep.mubr.bf16.mxu0 0
  %2978 = vmatmul.mubr.bf16.gmra.mxu0 %v833
  %v2979 = vpop.f32.mrf.mxu0
  %v2980 = vadd.f32 %v2547, %v2979
  %v2981 = vpop.f32.mrf.mxu0
  %v2982 = vpop.f32.mrf.mxu0
  %v2983 = vadd.f32 %v2550, %v2982
  %v2984 = vpop.f32.mrf.mxu0
  %2985 = vmatprep.mubr.bf16.mxu0 0
  %2986 = vmatmul.mubr.bf16.gmra.mxu0 %v840
  %v2987 = vpop.f32.mrf.mxu0
  %v2988 = vadd.f32 %v2555, %v2987
  %v2989 = vpop.f32.mrf.mxu0
  %v2990 = vpop.f32.mrf.mxu0
  %v2991 = vadd.f32 %v2558, %v2990
  %v2992 = vpop.f32.mrf.mxu0
  %2993 = vmatprep.mubr.bf16.mxu0 0
  %2994 = vmatmul.mubr.bf16.gmra.mxu0 %v847
  %v2995 = vpop.f32.mrf.mxu0
  %v2996 = vadd.f32 %v2563, %v2995
  %v2997 = vpop.f32.mrf.mxu0
  %v2998 = vpop.f32.mrf.mxu0
  %v2999 = vadd.f32 %v2566, %v2998
  %v3000 = vpop.f32.mrf.mxu0
  %3001 = vmatprep.mubr.bf16.mxu0 0
  %3002 = vmatmul.mubr.bf16.gmra.mxu0 %v854
  %v3003 = vpop.f32.mrf.mxu0
  %v3004 = vadd.f32 %v2571, %v3003
  %v3005 = vpop.f32.mrf.mxu0
  %v3006 = vpop.f32.mrf.mxu0
  %v3007 = vadd.f32 %v2574, %v3006
  %v3008 = vpop.f32.mrf.mxu0
  %3009 = vmatprep.mubr.bf16.mxu0 0
  %3010 = vmatmul.mubr.bf16.gmra.mxu0 %v861
  %v3011 = vpop.f32.mrf.mxu0
  %v3012 = vadd.f32 %v2579, %v3011
  %v3013 = vpop.f32.mrf.mxu0
  %v3014 = vpop.f32.mrf.mxu0
  %v3015 = vadd.f32 %v2582, %v3014
  %v3016 = vpop.f32.mrf.mxu0
  %3017 = vmatprep.mubr.bf16.mxu0 0
  %3018 = vmatmul.mubr.bf16.gmra.mxu0 %v868
  %v3019 = vpop.f32.mrf.mxu0
  %v3020 = vadd.f32 %v2587, %v3019
  %v3021 = vpop.f32.mrf.mxu0
  %v3022 = vpop.f32.mrf.mxu0
  %v3023 = vadd.f32 %v2590, %v3022
  %v3024 = vpop.f32.mrf.mxu0
  %3025 = vmatprep.mubr.bf16.mxu0 0
  %3026 = vmatmul.mubr.bf16.gmra.mxu0 %v875
  %v3027 = vpop.f32.mrf.mxu0
  %v3028 = vadd.f32 %v2595, %v3027
  %v3029 = vpop.f32.mrf.mxu0
  %v3030 = vpop.f32.mrf.mxu0
  %v3031 = vadd.f32 %v2598, %v3030
  %v3032 = vpop.f32.mrf.mxu0
  %3033 = vmatprep.mubr.bf16.mxu0 0
  %3034 = vmatmul.mubr.bf16.gmra.mxu0 %v882
  %v3035 = vpop.f32.mrf.mxu0
  %v3036 = vadd.f32 %v2603, %v3035
  %v3037 = vpop.f32.mrf.mxu0
  %v3038 = vpop.f32.mrf.mxu0
  %v3039 = vadd.f32 %v2606, %v3038
  %v3040 = vpop.f32.mrf.mxu0
  %3041 = vmatprep.mubr.bf16.mxu0 0
  %3042 = vmatmul.mubr.bf16.gmra.mxu0 %v889
  %v3043 = vpop.f32.mrf.mxu0
  %v3044 = vadd.f32 %v2611, %v3043
  %v3045 = vpop.f32.mrf.mxu0
  %v3046 = vpop.f32.mrf.mxu0
  %v3047 = vadd.f32 %v2614, %v3046
  %v3048 = vpop.f32.mrf.mxu0
  %3049 = vmatprep.mubr.bf16.mxu0 0
  %3050 = vmatmul.mubr.bf16.gmra.mxu0 %v896
  %v3051 = vpop.f32.mrf.mxu0
  %v3052 = vadd.f32 %v2619, %v3051
  %v3053 = vpop.f32.mrf.mxu0
  %v3054 = vpop.f32.mrf.mxu0
  %v3055 = vadd.f32 %v2622, %v3054
  %v3056 = vpop.f32.mrf.mxu0
  %3057 = vmatprep.mubr.bf16.mxu0 0
  %3058 = vmatmul.mubr.bf16.gmra.mxu0 %v903
  %v3059 = vpop.f32.mrf.mxu0
  %v3060 = vadd.f32 %v2627, %v3059
  %v3061 = vpop.f32.mrf.mxu0
  %v3062 = vpop.f32.mrf.mxu0
  %v3063 = vadd.f32 %v2630, %v3062
  %v3064 = vpop.f32.mrf.mxu0
  %3065 = vmatprep.mubr.bf16.mxu0 0
  %3066 = vmatmul.mubr.bf16.gmra.mxu0 %v910
  %v3067 = vpop.f32.mrf.mxu0
  %v3068 = vadd.f32 %v2635, %v3067
  %v3069 = vpop.f32.mrf.mxu0
  %v3070 = vpop.f32.mrf.mxu0
  %v3071 = vadd.f32 %v2638, %v3070
  %v3072 = vpop.f32.mrf.mxu0
  %3073 = vmatprep.mubr.bf16.mxu0 0
  %3074 = vmatmul.mubr.bf16.gmra.mxu0 %v917
  %v3075 = vpop.f32.mrf.mxu0
  %v3076 = vadd.f32 %v2643, %v3075
  %v3077 = vpop.f32.mrf.mxu0
  %v3078 = vpop.f32.mrf.mxu0
  %v3079 = vadd.f32 %v2646, %v3078
  %v3080 = vpop.f32.mrf.mxu0
  %3081 = vmatprep.mubr.bf16.mxu0 0
  %3082 = vmatmul.mubr.bf16.gmra.mxu0 %v924
  %v3083 = vpop.f32.mrf.mxu0
  %v3084 = vadd.f32 %v2651, %v3083
  %v3085 = vpop.f32.mrf.mxu0
  %v3086 = vpop.f32.mrf.mxu0
  %v3087 = vadd.f32 %v2654, %v3086
  %v3088 = vpop.f32.mrf.mxu0
  %3089 = vmatprep.mubr.bf16.mxu0 0
  %3090 = vmatmul.mubr.bf16.gmra.mxu0 %v931
  %v3091 = vpop.f32.mrf.mxu0
  %v3092 = vadd.f32 %v2659, %v3091
  %v3093 = vpop.f32.mrf.mxu0
  %v3094 = vpop.f32.mrf.mxu0
  %v3095 = vadd.f32 %v2662, %v3094
  %v3096 = vpop.f32.mrf.mxu0
  %3097 = vmatprep.mubr.bf16.mxu0 0
  %3098 = vmatmul.mubr.bf16.gmra.mxu0 %v938
  %v3099 = vpop.f32.mrf.mxu0
  %v3100 = vadd.f32 %v2667, %v3099
  %v3101 = vpop.f32.mrf.mxu0
  %v3102 = vpop.f32.mrf.mxu0
  %v3103 = vadd.f32 %v2670, %v3102
  %v3104 = vpop.f32.mrf.mxu0
  %3105 = vmatprep.mubr.bf16.mxu0 0
  %3106 = vmatmul.mubr.bf16.gmra.mxu0 %v945
  %v3107 = vpop.f32.mrf.mxu0
  %v3108 = vadd.f32 %v2675, %v3107
  %v3109 = vpop.f32.mrf.mxu0
  %v3110 = vpop.f32.mrf.mxu0
  %v3111 = vadd.f32 %v2678, %v3110
  %v3112 = vpop.f32.mrf.mxu0
  %3113 = vmatprep.mubr.bf16.mxu0 0
  %3114 = vmatmul.mubr.bf16.gmra.mxu0 %v952
  %v3115 = vpop.f32.mrf.mxu0
  %v3116 = vadd.f32 %v2683, %v3115
  %v3117 = vpop.f32.mrf.mxu0
  %v3118 = vpop.f32.mrf.mxu0
  %v3119 = vadd.f32 %v2686, %v3118
  %v3120 = vpop.f32.mrf.mxu0
  %3121 = vmatprep.mubr.bf16.mxu0 0
  %3122 = vmatmul.mubr.bf16.gmra.mxu0 %v959
  %v3123 = vpop.f32.mrf.mxu0
  %v3124 = vadd.f32 %v2691, %v3123
  %v3125 = vpop.f32.mrf.mxu0
  %v3126 = vpop.f32.mrf.mxu0
  %v3127 = vadd.f32 %v2694, %v3126
  %v3128 = vpop.f32.mrf.mxu0
  %3129 = vmatprep.mubr.bf16.mxu0 0
  %3130 = vmatmul.mubr.bf16.gmra.mxu0 %v966
  %v3131 = vpop.f32.mrf.mxu0
  %v3132 = vadd.f32 %v2699, %v3131
  %v3133 = vpop.f32.mrf.mxu0
  %v3134 = vpop.f32.mrf.mxu0
  %v3135 = vadd.f32 %v2702, %v3134
  %v3136 = vpop.f32.mrf.mxu0
  %3137 = vmatprep.mubr.bf16.mxu0 0
  %3138 = vmatmul.mubr.bf16.gmra.mxu0 %v973
  %v3139 = vpop.f32.mrf.mxu0
  %v3140 = vadd.f32 %v2707, %v3139
  %v3141 = vpop.f32.mrf.mxu0
  %v3142 = vpop.f32.mrf.mxu0
  %v3143 = vadd.f32 %v2710, %v3142
  %v3144 = vpop.f32.mrf.mxu0
  %3145 = vmatprep.mubr.bf16.mxu0 0
  %3146 = vmatmul.mubr.bf16.gmra.mxu0 %v980
  %v3147 = vpop.f32.mrf.mxu0
  %v3148 = vadd.f32 %v2715, %v3147
  %v3149 = vpop.f32.mrf.mxu0
  %v3150 = vpop.f32.mrf.mxu0
  %v3151 = vadd.f32 %v2718, %v3150
  %v3152 = vpop.f32.mrf.mxu0
  %3153 = vmatprep.mubr.bf16.mxu0 0
  %3154 = vmatmul.mubr.bf16.gmra.mxu0 %v987
  %v3155 = vpop.f32.mrf.mxu0
  %v3156 = vadd.f32 %v2723, %v3155
  %v3157 = vpop.f32.mrf.mxu0
  %v3158 = vpop.f32.mrf.mxu0
  %v3159 = vadd.f32 %v2726, %v3158
  %v3160 = vpop.f32.mrf.mxu0
  %3161 = vmatprep.mubr.bf16.mxu0 0
  %3162 = vmatmul.mubr.bf16.gmra.mxu0 %v994
  %v3163 = vpop.f32.mrf.mxu0
  %v3164 = vadd.f32 %v2731, %v3163
  %v3165 = vpop.f32.mrf.mxu0
  %v3166 = vpop.f32.mrf.mxu0
  %v3167 = vadd.f32 %v2734, %v3166
  %v3168 = vpop.f32.mrf.mxu0
  %3169 = vmatprep.mubr.bf16.mxu0 0
  %3170 = vmatmul.mubr.bf16.gmra.mxu0 %v1001
  %v3171 = vpop.f32.mrf.mxu0
  %v3172 = vadd.f32 %v2739, %v3171
  %v3173 = vpop.f32.mrf.mxu0
  %v3174 = vpop.f32.mrf.mxu0
  %v3175 = vadd.f32 %v2742, %v3174
  %v3176 = vpop.f32.mrf.mxu0
  %3177 = vmatprep.mubr.bf16.mxu0 0
  %3178 = vmatmul.mubr.bf16.gmra.mxu0 %v1008
  %v3179 = vpop.f32.mrf.mxu0
  %v3180 = vadd.f32 %v2747, %v3179
  %v3181 = vpop.f32.mrf.mxu0
  %v3182 = vpop.f32.mrf.mxu0
  %v3183 = vadd.f32 %v2750, %v3182
  %v3184 = vpop.f32.mrf.mxu0
  %3185 = vmatprep.mubr.bf16.mxu0 0
  %3186 = vmatmul.mubr.bf16.gmra.mxu0 %v1015
  %v3187 = vpop.f32.mrf.mxu0
  %v3188 = vadd.f32 %v2755, %v3187
  %v3189 = vpop.f32.mrf.mxu0
  %v3190 = vpop.f32.mrf.mxu0
  %v3191 = vadd.f32 %v2758, %v3190
  %v3192 = vpop.f32.mrf.mxu0
  %3193 = vmatprep.mubr.bf16.mxu0 0
  %3194 = vmatmul.mubr.bf16.gmra.mxu0 %v1022
  %v3195 = vpop.f32.mrf.mxu0
  %v3196 = vadd.f32 %v2763, %v3195
  %v3197 = vpop.f32.mrf.mxu0
  %v3198 = vpop.f32.mrf.mxu0
  %v3199 = vadd.f32 %v2766, %v3198
  %v3200 = vpop.f32.mrf.mxu0
  %3201 = vmatprep.mubr.bf16.mxu0 0
  %3202 = vmatmul.mubr.bf16.gmra.mxu0 %v1029
  %v3203 = vpop.f32.mrf.mxu0
  %v3204 = vadd.f32 %v2771, %v3203
  %v3205 = vpop.f32.mrf.mxu0
  %v3206 = vpop.f32.mrf.mxu0
  %v3207 = vadd.f32 %v2774, %v3206
  %v3208 = vpop.f32.mrf.mxu0
  %3209 = vmatprep.mubr.bf16.mxu0 0
  %3210 = vmatmul.mubr.bf16.gmra.mxu0 %v1036
  %v3211 = vpop.f32.mrf.mxu0
  %v3212 = vadd.f32 %v2779, %v3211
  %v3213 = vpop.f32.mrf.mxu0
  %v3214 = vpop.f32.mrf.mxu0
  %v3215 = vadd.f32 %v2782, %v3214
  %v3216 = vpop.f32.mrf.mxu0
  %3217 = vmatprep.mubr.bf16.mxu0 0
  %3218 = vmatmul.mubr.bf16.gmra.mxu0 %v1043
  %v3219 = vpop.f32.mrf.mxu0
  %v3220 = vadd.f32 %v2787, %v3219
  %v3221 = vpop.f32.mrf.mxu0
  %v3222 = vpop.f32.mrf.mxu0
  %v3223 = vadd.f32 %v2790, %v3222
  %v3224 = vpop.f32.mrf.mxu0
  %3225 = vmatprep.mubr.bf16.mxu0 0
  %3226 = vmatmul.mubr.bf16.gmra.mxu0 %v1050
  %v3227 = vpop.f32.mrf.mxu0
  %v3228 = vadd.f32 %v2795, %v3227
  %v3229 = vpop.f32.mrf.mxu0
  %v3230 = vpop.f32.mrf.mxu0
  %v3231 = vadd.f32 %v2798, %v3230
  %v3232 = vpop.f32.mrf.mxu0
  %3233 = vmatprep.mubr.bf16.mxu0 0
  %3234 = vmatmul.mubr.bf16.gmra.mxu0 %v1057
  %v3235 = vpop.f32.mrf.mxu0
  %v3236 = vadd.f32 %v2803, %v3235
  %v3237 = vpop.f32.mrf.mxu0
  %v3238 = vpop.f32.mrf.mxu0
  %v3239 = vadd.f32 %v2806, %v3238
  %v3240 = vpop.f32.mrf.mxu0
  %3241 = vmatprep.mubr.bf16.mxu0 0
  %3242 = vmatmul.mubr.bf16.gmra.mxu0 %v1064
  %v3243 = vpop.f32.mrf.mxu0
  %v3244 = vadd.f32 %v2811, %v3243
  %v3245 = vpop.f32.mrf.mxu0
  %v3246 = vpop.f32.mrf.mxu0
  %v3247 = vadd.f32 %v2814, %v3246
  %v3248 = vpop.f32.mrf.mxu0
  %3249 = vdwg.mxu0
  %v3250 = vmax.f32 %v2852, 0.0
  %v3251 = vmax.f32 %v2855, 0.0
  %v3252 = vmax.f32 %v2860, 0.0
  %v3253 = vmax.f32 %v2863, 0.0
  %v3254 = vmax.f32 %v2868, 0.0
  %v3255 = vmax.f32 %v2871, 0.0
  %v3256 = vmax.f32 %v2876, 0.0
  %v3257 = vmax.f32 %v2879, 0.0
  %v3258 = vmax.f32 %v2884, 0.0
  %v3259 = vmax.f32 %v2887, 0.0
  %v3260 = vmax.f32 %v2892, 0.0
  %v3261 = vmax.f32 %v2895, 0.0
  %v3262 = vmax.f32 %v2900, 0.0
  %v3263 = vmax.f32 %v2903, 0.0
  %v3264 = vmax.f32 %v2908, 0.0
  %v3265 = vmax.f32 %v2911, 0.0
  %v3266 = vmax.f32 %v2916, 0.0
  %v3267 = vmax.f32 %v2919, 0.0
  %v3268 = vmax.f32 %v2924, 0.0
  %v3269 = vmax.f32 %v2927, 0.0
  %v3270 = vmax.f32 %v2932, 0.0
  %v3271 = vmax.f32 %v2935, 0.0
  %v3272 = vmax.f32 %v2940, 0.0
  %v3273 = vmax.f32 %v2943, 0.0
  %v3274 = vmax.f32 %v2948, 0.0
  %v3275 = vmax.f32 %v2951, 0.0
  %v3276 = vmax.f32 %v2956, 0.0
  %v3277 = vmax.f32 %v2959, 0.0
  %v3278 = vmax.f32 %v2964, 0.0
  %v3279 = vmax.f32 %v2967, 0.0
  %v3280 = vmax.f32 %v2972, 0.0
  %v3281 = vmax.f32 %v2975, 0.0
  %v3282 = vmax.f32 %v2980, 0.0
  %v3283 = vmax.f32 %v2983, 0.0
  %v3284 = vmax.f32 %v2988, 0.0
  %v3285 = vmax.f32 %v2991, 0.0
  %v3286 = vmax.f32 %v2996, 0.0
  %v3287 = vmax.f32 %v2999, 0.0
  %v3288 = vmax.f32 %v3004, 0.0
  %v3289 = vmax.f32 %v3007, 0.0
  %v3290 = vmax.f32 %v3012, 0.0
  %v3291 = vmax.f32 %v3015, 0.0
  %v3292 = vmax.f32 %v3020, 0.0
  %v3293 = vmax.f32 %v3023, 0.0
  %v3294 = vmax.f32 %v3028, 0.0
  %v3295 = vmax.f32 %v3031, 0.0
  %v3296 = vmax.f32 %v3036, 0.0
  %v3297 = vmax.f32 %v3039, 0.0
  %v3298 = vmax.f32 %v3044, 0.0
  %v3299 = vmax.f32 %v3047, 0.0
  %v3300 = vmax.f32 %v3052, 0.0
  %v3301 = vmax.f32 %v3055, 0.0
  %v3302 = vmax.f32 %v3060, 0.0
  %v3303 = vmax.f32 %v3063, 0.0
  %v3304 = vmax.f32 %v3068, 0.0
  %v3305 = vmax.f32 %v3071, 0.0
  %v3306 = vmax.f32 %v3076, 0.0
  %v3307 = vmax.f32 %v3079, 0.0
  %v3308 = vmax.f32 %v3084, 0.0
  %v3309 = vmax.f32 %v3087, 0.0
  %v3310 = vmax.f32 %v3092, 0.0
  %v3311 = vmax.f32 %v3095, 0.0
  %v3312 = vmax.f32 %v3100, 0.0
  %v3313 = vmax.f32 %v3103, 0.0
  %v3314 = vmax.f32 %v3108, 0.0
  %v3315 = vmax.f32 %v3111, 0.0
  %v3316 = vmax.f32 %v3116, 0.0
  %v3317 = vmax.f32 %v3119, 0.0
  %v3318 = vmax.f32 %v3124, 0.0
  %v3319 = vmax.f32 %v3127, 0.0
  %v3320 = vmax.f32 %v3132, 0.0
  %v3321 = vmax.f32 %v3135, 0.0
  %v3322 = vmax.f32 %v3140, 0.0
  %v3323 = vmax.f32 %v3143, 0.0
  %v3324 = vmax.f32 %v3148, 0.0
  %v3325 = vmax.f32 %v3151, 0.0
  %v3326 = vmax.f32 %v3156, 0.0
  %v3327 = vmax.f32 %v3159, 0.0
  %v3328 = vmax.f32 %v3164, 0.0
  %v3329 = vmax.f32 %v3167, 0.0
  %v3330 = vmax.f32 %v3172, 0.0
  %v3331 = vmax.f32 %v3175, 0.0
  %v3332 = vmax.f32 %v3180, 0.0
  %v3333 = vmax.f32 %v3183, 0.0
  %v3334 = vmax.f32 %v3188, 0.0
  %v3335 = vmax.f32 %v3191, 0.0
  %v3336 = vmax.f32 %v3196, 0.0
  %v3337 = vmax.f32 %v3199, 0.0
  %v3338 = vmax.f32 %v3204, 0.0
  %v3339 = vmax.f32 %v3207, 0.0
  %v3340 = vmax.f32 %v3212, 0.0
  %v3341 = vmax.f32 %v3215, 0.0
  %v3342 = vmax.f32 %v3220, 0.0
  %v3343 = vmax.f32 %v3223, 0.0
  %v3344 = vmax.f32 %v3228, 0.0
  %v3345 = vmax.f32 %v3231, 0.0
  %v3346 = vmax.f32 %v3236, 0.0
  %v3347 = vmax.f32 %v3239, 0.0
  %v3348 = vmax.f32 %v3244, 0.0
  %v3349 = vmax.f32 %v3247, 0.0
  %v3350 = vlaneseq
  %v3351 = vshrl.u32 %v3350, 7
  %v3352 = vsub.s32 1, %v3351
  %v3353 = vrot.slane %v1177, %v3352
  %v3354 = vmul.f32 %v3250, %v3353
  %v3355 = vmul.f32 %v3251, %v3353
  %v3356 = vmul.f32 %v3252, %v3353
  %v3357 = vmul.f32 %v3253, %v3353
  %v3358 = vmul.f32 %v3254, %v3353
  %v3359 = vmul.f32 %v3255, %v3353
  %v3360 = vmul.f32 %v3256, %v3353
  %v3361 = vmul.f32 %v3257, %v3353
  %v3362 = vmul.f32 %v3258, %v3353
  %v3363 = vmul.f32 %v3259, %v3353
  %v3364 = vmul.f32 %v3260, %v3353
  %v3365 = vmul.f32 %v3261, %v3353
  %v3366 = vmul.f32 %v3262, %v3353
  %v3367 = vmul.f32 %v3263, %v3353
  %v3368 = vmul.f32 %v3264, %v3353
  %v3369 = vmul.f32 %v3265, %v3353
  %v3370 = vmul.f32 %v3266, %v3353
  %v3371 = vmul.f32 %v3267, %v3353
  %v3372 = vmul.f32 %v3268, %v3353
  %v3373 = vmul.f32 %v3269, %v3353
  %v3374 = vmul.f32 %v3270, %v3353
  %v3375 = vmul.f32 %v3271, %v3353
  %v3376 = vmul.f32 %v3272, %v3353
  %v3377 = vmul.f32 %v3273, %v3353
  %v3378 = vmul.f32 %v3274, %v3353
  %v3379 = vmul.f32 %v3275, %v3353
  %v3380 = vmul.f32 %v3276, %v3353
  %v3381 = vmul.f32 %v3277, %v3353
  %v3382 = vmul.f32 %v3278, %v3353
  %v3383 = vmul.f32 %v3279, %v3353
  %v3384 = vmul.f32 %v3280, %v3353
  %v3385 = vmul.f32 %v3281, %v3353
  %v3386 = vmul.f32 %v3282, %v3353
  %v3387 = vmul.f32 %v3283, %v3353
  %v3388 = vmul.f32 %v3284, %v3353
  %v3389 = vmul.f32 %v3285, %v3353
  %v3390 = vmul.f32 %v3286, %v3353
  %v3391 = vmul.f32 %v3287, %v3353
  %v3392 = vmul.f32 %v3288, %v3353
  %v3393 = vmul.f32 %v3289, %v3353
  %v3394 = vmul.f32 %v3290, %v3353
  %v3395 = vmul.f32 %v3291, %v3353
  %v3396 = vmul.f32 %v3292, %v3353
  %v3397 = vmul.f32 %v3293, %v3353
  %v3398 = vmul.f32 %v3294, %v3353
  %v3399 = vmul.f32 %v3295, %v3353
  %v3400 = vmul.f32 %v3296, %v3353
  %v3401 = vmul.f32 %v3297, %v3353
  %v3402 = vmul.f32 %v3298, %v3353
  %v3403 = vmul.f32 %v3299, %v3353
  %v3404 = vmul.f32 %v3300, %v3353
  %v3405 = vmul.f32 %v3301, %v3353
  %v3406 = vmul.f32 %v3302, %v3353
  %v3407 = vmul.f32 %v3303, %v3353
  %v3408 = vmul.f32 %v3304, %v3353
  %v3409 = vmul.f32 %v3305, %v3353
  %v3410 = vmul.f32 %v3306, %v3353
  %v3411 = vmul.f32 %v3307, %v3353
  %v3412 = vmul.f32 %v3308, %v3353
  %v3413 = vmul.f32 %v3309, %v3353
  %v3414 = vmul.f32 %v3310, %v3353
  %v3415 = vmul.f32 %v3311, %v3353
  %v3416 = vmul.f32 %v3312, %v3353
  %v3417 = vmul.f32 %v3313, %v3353
  %v3418 = vmul.f32 %v3314, %v3353
  %v3419 = vmul.f32 %v3315, %v3353
  %v3420 = vmul.f32 %v3316, %v3353
  %v3421 = vmul.f32 %v3317, %v3353
  %v3422 = vmul.f32 %v3318, %v3353
  %v3423 = vmul.f32 %v3319, %v3353
  %v3424 = vmul.f32 %v3320, %v3353
  %v3425 = vmul.f32 %v3321, %v3353
  %v3426 = vmul.f32 %v3322, %v3353
  %v3427 = vmul.f32 %v3323, %v3353
  %v3428 = vmul.f32 %v3324, %v3353
  %v3429 = vmul.f32 %v3325, %v3353
  %v3430 = vmul.f32 %v3326, %v3353
  %v3431 = vmul.f32 %v3327, %v3353
  %v3432 = vmul.f32 %v3328, %v3353
  %v3433 = vmul.f32 %v3329, %v3353
  %v3434 = vmul.f32 %v3330, %v3353
  %v3435 = vmul.f32 %v3331, %v3353
  %v3436 = vmul.f32 %v3332, %v3353
  %v3437 = vmul.f32 %v3333, %v3353
  %v3438 = vmul.f32 %v3334, %v3353
  %v3439 = vmul.f32 %v3335, %v3353
  %v3440 = vmul.f32 %v3336, %v3353
  %v3441 = vmul.f32 %v3337, %v3353
  %v3442 = vmul.f32 %v3338, %v3353
  %v3443 = vmul.f32 %v3339, %v3353
  %v3444 = vmul.f32 %v3340, %v3353
  %v3445 = vmul.f32 %v3341, %v3353
  %v3446 = vmul.f32 %v3342, %v3353
  %v3447 = vmul.f32 %v3343, %v3353
  %v3448 = vmul.f32 %v3344, %v3353
  %v3449 = vmul.f32 %v3345, %v3353
  %v3450 = vmul.f32 %v3346, %v3353
  %v3451 = vmul.f32 %v3347, %v3353
  %v3452 = vmul.f32 %v3348, %v3353
  %v3453 = vmul.f32 %v3349, %v3353
  %v3454 = vlaneseq
  %v3455 = vshrl.u32 %v3454, 7
  %v3456 = vsub.s32 2, %v3455
  %v3457 = vrot.slane %v1177, %v3456
  %v3458 = vadd.f32 %v3354, %v3457
  %v3459 = vadd.f32 %v3355, %v3457
  %v3460 = vadd.f32 %v3356, %v3457
  %v3461 = vadd.f32 %v3357, %v3457
  %v3462 = vadd.f32 %v3358, %v3457
  %v3463 = vadd.f32 %v3359, %v3457
  %v3464 = vadd.f32 %v3360, %v3457
  %v3465 = vadd.f32 %v3361, %v3457
  %v3466 = vadd.f32 %v3362, %v3457
  %v3467 = vadd.f32 %v3363, %v3457
  %v3468 = vadd.f32 %v3364, %v3457
  %v3469 = vadd.f32 %v3365, %v3457
  %v3470 = vadd.f32 %v3366, %v3457
  %v3471 = vadd.f32 %v3367, %v3457
  %v3472 = vadd.f32 %v3368, %v3457
  %v3473 = vadd.f32 %v3369, %v3457
  %v3474 = vadd.f32 %v3370, %v3457
  %v3475 = vadd.f32 %v3371, %v3457
  %v3476 = vadd.f32 %v3372, %v3457
  %v3477 = vadd.f32 %v3373, %v3457
  %v3478 = vadd.f32 %v3374, %v3457
  %v3479 = vadd.f32 %v3375, %v3457
  %v3480 = vadd.f32 %v3376, %v3457
  %v3481 = vadd.f32 %v3377, %v3457
  %v3482 = vadd.f32 %v3378, %v3457
  %v3483 = vadd.f32 %v3379, %v3457
  %v3484 = vadd.f32 %v3380, %v3457
  %v3485 = vadd.f32 %v3381, %v3457
  %v3486 = vadd.f32 %v3382, %v3457
  %v3487 = vadd.f32 %v3383, %v3457
  %v3488 = vadd.f32 %v3384, %v3457
  %v3489 = vadd.f32 %v3385, %v3457
  %v3490 = vadd.f32 %v3386, %v3457
  %v3491 = vadd.f32 %v3387, %v3457
  %v3492 = vadd.f32 %v3388, %v3457
  %v3493 = vadd.f32 %v3389, %v3457
  %v3494 = vadd.f32 %v3390, %v3457
  %v3495 = vadd.f32 %v3391, %v3457
  %v3496 = vadd.f32 %v3392, %v3457
  %v3497 = vadd.f32 %v3393, %v3457
  %v3498 = vadd.f32 %v3394, %v3457
  %v3499 = vadd.f32 %v3395, %v3457
  %v3500 = vadd.f32 %v3396, %v3457
  %v3501 = vadd.f32 %v3397, %v3457
  %v3502 = vadd.f32 %v3398, %v3457
  %v3503 = vadd.f32 %v3399, %v3457
  %v3504 = vadd.f32 %v3400, %v3457
  %v3505 = vadd.f32 %v3401, %v3457
  %v3506 = vadd.f32 %v3402, %v3457
  %v3507 = vadd.f32 %v3403, %v3457
  %v3508 = vadd.f32 %v3404, %v3457
  %v3509 = vadd.f32 %v3405, %v3457
  %v3510 = vadd.f32 %v3406, %v3457
  %v3511 = vadd.f32 %v3407, %v3457
  %v3512 = vadd.f32 %v3408, %v3457
  %v3513 = vadd.f32 %v3409, %v3457
  %v3514 = vadd.f32 %v3410, %v3457
  %v3515 = vadd.f32 %v3411, %v3457
  %v3516 = vadd.f32 %v3412, %v3457
  %v3517 = vadd.f32 %v3413, %v3457
  %v3518 = vadd.f32 %v3414, %v3457
  %v3519 = vadd.f32 %v3415, %v3457
  %v3520 = vadd.f32 %v3416, %v3457
  %v3521 = vadd.f32 %v3417, %v3457
  %v3522 = vadd.f32 %v3418, %v3457
  %v3523 = vadd.f32 %v3419, %v3457
  %v3524 = vadd.f32 %v3420, %v3457
  %v3525 = vadd.f32 %v3421, %v3457
  %v3526 = vadd.f32 %v3422, %v3457
  %v3527 = vadd.f32 %v3423, %v3457
  %v3528 = vadd.f32 %v3424, %v3457
  %v3529 = vadd.f32 %v3425, %v3457
  %v3530 = vadd.f32 %v3426, %v3457
  %v3531 = vadd.f32 %v3427, %v3457
  %v3532 = vadd.f32 %v3428, %v3457
  %v3533 = vadd.f32 %v3429, %v3457
  %v3534 = vadd.f32 %v3430, %v3457
  %v3535 = vadd.f32 %v3431, %v3457
  %v3536 = vadd.f32 %v3432, %v3457
  %v3537 = vadd.f32 %v3433, %v3457
  %v3538 = vadd.f32 %v3434, %v3457
  %v3539 = vadd.f32 %v3435, %v3457
  %v3540 = vadd.f32 %v3436, %v3457
  %v3541 = vadd.f32 %v3437, %v3457
  %v3542 = vadd.f32 %v3438, %v3457
  %v3543 = vadd.f32 %v3439, %v3457
  %v3544 = vadd.f32 %v3440, %v3457
  %v3545 = vadd.f32 %v3441, %v3457
  %v3546 = vadd.f32 %v3442, %v3457
  %v3547 = vadd.f32 %v3443, %v3457
  %v3548 = vadd.f32 %v3444, %v3457
  %v3549 = vadd.f32 %v3445, %v3457
  %v3550 = vadd.f32 %v3446, %v3457
  %v3551 = vadd.f32 %v3447, %v3457
  %v3552 = vadd.f32 %v3448, %v3457
  %v3553 = vadd.f32 %v3449, %v3457
  %v3554 = vadd.f32 %v3450, %v3457
  %v3555 = vadd.f32 %v3451, %v3457
  %v3556 = vadd.f32 %v3452, %v3457
  %v3557 = vadd.f32 %v3453, %v3457
  %3558 = vst [vmem:[%s3] sm:$0xff] %v3458
  %3559 = vst [vmem:[%s3 + $0x8] sm:$0xff] %v3459
  %3560 = vst [vmem:[%s3 + $0x10] sm:$0xff] %v3460
  %3561 = vst [vmem:[%s3 + $0x18] sm:$0xff] %v3461
  %3562 = vst [vmem:[%s3 + $0x20] sm:$0xff] %v3462
  %3563 = vst [vmem:[%s3 + $0x28] sm:$0xff] %v3463
  %3564 = vst [vmem:[%s3 + $0x30] sm:$0xff] %v3464
  %3565 = vst [vmem:[%s3 + $0x38] sm:$0xff] %v3465
  %3566 = vst [vmem:[%s3 + $0x40] sm:$0xff] %v3466
  %3567 = vst [vmem:[%s3 + $0x48] sm:$0xff] %v3467
  %3568 = vst [vmem:[%s3 + $0x50] sm:$0xff] %v3468
  %3569 = vst [vmem:[%s3 + $0x58] sm:$0xff] %v3469
  %3570 = vst [vmem:[%s3 + $0x60] sm:$0xff] %v3470
  %3571 = vst [vmem:[%s3 + $0x68] sm:$0xff] %v3471
  %3572 = vst [vmem:[%s3 + $0x70] sm:$0xff] %v3472
  %3573 = vst [vmem:[%s3 + $0x78] sm:$0xff] %v3473
  %3574 = vst [vmem:[%s3 + $0x80] sm:$0xff] %v3474
  %3575 = vst [vmem:[%s3 + $0x88] sm:$0xff] %v3475
  %3576 = vst [vmem:[%s3 + $0x90] sm:$0xff] %v3476
  %3577 = vst [vmem:[%s3 + $0x98] sm:$0xff] %v3477
  %3578 = vst [vmem:[%s3 + $0xa0] sm:$0xff] %v3478
  %3579 = vst [vmem:[%s3 + $0xa8] sm:$0xff] %v3479
  %3580 = vst [vmem:[%s3 + $0xb0] sm:$0xff] %v3480
  %3581 = vst [vmem:[%s3 + $0xb8] sm:$0xff] %v3481
  %3582 = vst [vmem:[%s3 + $0xc0] sm:$0xff] %v3482
  %3583 = vst [vmem:[%s3 + $0xc8] sm:$0xff] %v3483
  %3584 = vst [vmem:[%s3 + $0xd0] sm:$0xff] %v3484
  %3585 = vst [vmem:[%s3 + $0xd8] sm:$0xff] %v3485
  %3586 = vst [vmem:[%s3 + $0xe0] sm:$0xff] %v3486
  %3587 = vst [vmem:[%s3 + $0xe8] sm:$0xff] %v3487
  %3588 = vst [vmem:[%s3 + $0xf0] sm:$0xff] %v3488
  %3589 = vst [vmem:[%s3 + $0xf8] sm:$0xff] %v3489
  %3590 = vst [vmem:[%s3 + $0x100] sm:$0xff] %v3490
  %3591 = vst [vmem:[%s3 + $0x108] sm:$0xff] %v3491
  %3592 = vst [vmem:[%s3 + $0x110] sm:$0xff] %v3492
  %3593 = vst [vmem:[%s3 + $0x118] sm:$0xff] %v3493
  %3594 = vst [vmem:[%s3 + $0x120] sm:$0xff] %v3494
  %3595 = vst [vmem:[%s3 + $0x128] sm:$0xff] %v3495
  %3596 = vst [vmem:[%s3 + $0x130] sm:$0xff] %v3496
  %3597 = vst [vmem:[%s3 + $0x138] sm:$0xff] %v3497
  %3598 = vst [vmem:[%s3 + $0x140] sm:$0xff] %v3498
  %3599 = vst [vmem:[%s3 + $0x148] sm:$0xff] %v3499
  %3600 = vst [vmem:[%s3 + $0x150] sm:$0xff] %v3500
  %3601 = vst [vmem:[%s3 + $0x158] sm:$0xff] %v3501
  %3602 = vst [vmem:[%s3 + $0x160] sm:$0xff] %v3502
  %3603 = vst [vmem:[%s3 + $0x168] sm:$0xff] %v3503
  %3604 = vst [vmem:[%s3 + $0x170] sm:$0xff] %v3504
  %3605 = vst [vmem:[%s3 + $0x178] sm:$0xff] %v3505
  %3606 = vst [vmem:[%s3 + $0x180] sm:$0xff] %v3506
  %3607 = vst [vmem:[%s3 + $0x188] sm:$0xff] %v3507
  %3608 = vst [vmem:[%s3 + $0x190] sm:$0xff] %v3508
  %3609 = vst [vmem:[%s3 + $0x198] sm:$0xff] %v3509
  %3610 = vst [vmem:[%s3 + $0x1a0] sm:$0xff] %v3510
  %3611 = vst [vmem:[%s3 + $0x1a8] sm:$0xff] %v3511
  %3612 = vst [vmem:[%s3 + $0x1b0] sm:$0xff] %v3512
  %3613 = vst [vmem:[%s3 + $0x1b8] sm:$0xff] %v3513
  %3614 = vst [vmem:[%s3 + $0x1c0] sm:$0xff] %v3514
  %3615 = vst [vmem:[%s3 + $0x1c8] sm:$0xff] %v3515
  %3616 = vst [vmem:[%s3 + $0x1d0] sm:$0xff] %v3516
  %3617 = vst [vmem:[%s3 + $0x1d8] sm:$0xff] %v3517
  %3618 = vst [vmem:[%s3 + $0x1e0] sm:$0xff] %v3518
  %3619 = vst [vmem:[%s3 + $0x1e8] sm:$0xff] %v3519
  %3620 = vst [vmem:[%s3 + $0x1f0] sm:$0xff] %v3520
  %3621 = vst [vmem:[%s3 + $0x1f8] sm:$0xff] %v3521
  %3622 = vst [vmem:[%s3 + $0x200] sm:$0xff] %v3522
  %3623 = vst [vmem:[%s3 + $0x208] sm:$0xff] %v3523
  %3624 = vst [vmem:[%s3 + $0x210] sm:$0xff] %v3524
  %3625 = vst [vmem:[%s3 + $0x218] sm:$0xff] %v3525
  %3626 = vst [vmem:[%s3 + $0x220] sm:$0xff] %v3526
  %3627 = vst [vmem:[%s3 + $0x228] sm:$0xff] %v3527
  %3628 = vst [vmem:[%s3 + $0x230] sm:$0xff] %v3528
  %3629 = vst [vmem:[%s3 + $0x238] sm:$0xff] %v3529
  %3630 = vst [vmem:[%s3 + $0x240] sm:$0xff] %v3530
  %3631 = vst [vmem:[%s3 + $0x248] sm:$0xff] %v3531
  %3632 = vst [vmem:[%s3 + $0x250] sm:$0xff] %v3532
  %3633 = vst [vmem:[%s3 + $0x258] sm:$0xff] %v3533
  %3634 = vst [vmem:[%s3 + $0x260] sm:$0xff] %v3534
  %3635 = vst [vmem:[%s3 + $0x268] sm:$0xff] %v3535
  %3636 = vst [vmem:[%s3 + $0x270] sm:$0xff] %v3536
  %3637 = vst [vmem:[%s3 + $0x278] sm:$0xff] %v3537
  %3638 = vst [vmem:[%s3 + $0x280] sm:$0xff] %v3538
  %3639 = vst [vmem:[%s3 + $0x288] sm:$0xff] %v3539
  %3640 = vst [vmem:[%s3 + $0x290] sm:$0xff] %v3540
  %3641 = vst [vmem:[%s3 + $0x298] sm:$0xff] %v3541
  %3642 = vst [vmem:[%s3 + $0x2a0] sm:$0xff] %v3542
  %3643 = vst [vmem:[%s3 + $0x2a8] sm:$0xff] %v3543
  %3644 = vst [vmem:[%s3 + $0x2b0] sm:$0xff] %v3544
  %3645 = vst [vmem:[%s3 + $0x2b8] sm:$0xff] %v3545
  %3646 = vst [vmem:[%s3 + $0x2c0] sm:$0xff] %v3546
  %3647 = vst [vmem:[%s3 + $0x2c8] sm:$0xff] %v3547
  %3648 = vst [vmem:[%s3 + $0x2d0] sm:$0xff] %v3548
  %3649 = vst [vmem:[%s3 + $0x2d8] sm:$0xff] %v3549
  %3650 = vst [vmem:[%s3 + $0x2e0] sm:$0xff] %v3550
  %3651 = vst [vmem:[%s3 + $0x2e8] sm:$0xff] %v3551
  %3652 = vst [vmem:[%s3 + $0x2f0] sm:$0xff] %v3552
  %3653 = vst [vmem:[%s3 + $0x2f8] sm:$0xff] %v3553
  %3654 = vst [vmem:[%s3 + $0x300] sm:$0xff] %v3554
  %3655 = vst [vmem:[%s3 + $0x308] sm:$0xff] %v3555
  %3656 = vst [vmem:[%s3 + $0x310] sm:$0xff] %v3556
  %3657 = vst [vmem:[%s3 + $0x318] sm:$0xff] %v3557
  // Predicated region
  $region14: #{fashioncnn4_forward.6} parent=0 // pred_check
    _
  $region15: #{fashioncnn4_forward.6} parent=0 // pred_check_branch
    %3659 = sbr.rel (0) target = $region17
  $region16: #{fashioncnn4_forward.6} parent=0 // pred_region
    _
  $region17: #{fashioncnn4_forward.6} parent=0 // pred_fallthru
    _
  // Predicated region
  $region18: #{fashioncnn4_forward.6} parent=0 // pred_check
    _
  $region19: #{fashioncnn4_forward.6} parent=0 // pred_check_branch
    %3661 = sbr.rel (0) target = $region21
  $region20: #{fashioncnn4_forward.6} parent=0 // pred_region
    _
  $region21: #{fashioncnn4_forward.6} parent=0 // pred_fallthru
    _

// kernel: fashioncnn4_forward.8
$region0: #{fashioncnn4_forward.8}
  #allocation0 [shape = 'u32[]', space=smem, size = 0x4, offset = 0x4, fixed_abs, tag = 'smem constant byte address 0x4 - core index']
  #allocation1 [shape = 'u32[144,128]{1,0:T(1,128)}', space=vmem, size = 0x12000, scoped, tag = 'internal scratch']
  %s0 = inlined_call_operand.vmem [shape: f32[72,640], index: 0, kind: input, shape index: {}]
  %s1 = inlined_call_operand.vmem [shape: bf16[640,128], index: 1, kind: input, shape index: {}]
  %s2 = inlined_call_operand.vmem [shape: f32[3,128], index: 2, kind: input, shape index: {}]
  %s3 = inlined_call_operand.vmem [shape: f32[72,128], index: 3, kind: output, shape index: {}]
  %s4 = sld [smem:[#allocation0]]
  $region22: #{fashioncnn4_forward.8} parent=0
    _
  %s6 = ssub.s32 1, %s4
  %s7 = scalar_select 0, %s6, %s4
  // Predicated region
  $region2: #{fashioncnn4_forward.8} parent=0 // pred_check
    _
  $region3: #{fashioncnn4_forward.8} parent=0 // pred_check_branch
    %9 = sbr.rel (0) target = $region5
  $region4: #{fashioncnn4_forward.8} parent=0 // pred_region
    _
  $region5: #{fashioncnn4_forward.8} parent=0 // pred_fallthru
    _
  // Predicated region
  $region6: #{fashioncnn4_forward.8} parent=0 // pred_check
    _
  $region7: #{fashioncnn4_forward.8} parent=0 // pred_check_branch
    %11 = sbr.rel (0) target = $region9
  $region8: #{fashioncnn4_forward.8} parent=0 // pred_region
    _
  $region9: #{fashioncnn4_forward.8} parent=0 // pred_fallthru
    _
  // Predicated region
  $region10: #{fashioncnn4_forward.8} parent=0 // pred_check
    _
  $region11: #{fashioncnn4_forward.8} parent=0 // pred_check_branch
    %13 = sbr.rel (0) target = $region13
  $region12: #{fashioncnn4_forward.8} parent=0 // pred_region
    _
  $region13: #{fashioncnn4_forward.8} parent=0 // pred_fallthru
    _
  %v15 = vld [vmem:[%s0] sm:$0xff]
  %v16 = vld [vmem:[%s0 + $0x8] sm:$0xff]
  %v17 = vld [vmem:[%s0 + $0x10] sm:$0xff]
  %v18 = vld [vmem:[%s0 + $0x18] sm:$0xff]
  %v19 = vld [vmem:[%s0 + $0x20] sm:$0xff]
  %v20 = vld [vmem:[%s0 + $0x28] sm:$0xff]
  %v21 = vld [vmem:[%s0 + $0x30] sm:$0xff]
  %v22 = vld [vmem:[%s0 + $0x38] sm:$0xff]
  %v23 = vld [vmem:[%s0 + $0x40] sm:$0xff]
  %v24 = vld [vmem:[%s0 + $0x48] sm:$0xff]
  %v25 = vld [vmem:[%s0 + $0x50] sm:$0xff]
  %v26 = vld [vmem:[%s0 + $0x58] sm:$0xff]
  %v27 = vld [vmem:[%s0 + $0x60] sm:$0xff]
  %v28 = vld [vmem:[%s0 + $0x68] sm:$0xff]
  %v29 = vld [vmem:[%s0 + $0x70] sm:$0xff]
  %v30 = vld [vmem:[%s0 + $0x78] sm:$0xff]
  %v31 = vld [vmem:[%s0 + $0x80] sm:$0xff]
  %v32 = vld [vmem:[%s0 + $0x88] sm:$0xff]
  %v33 = vld [vmem:[%s0 + $0x90] sm:$0xff]
  %v34 = vld [vmem:[%s0 + $0x98] sm:$0xff]
  %v35 = vld [vmem:[%s0 + $0xa0] sm:$0xff]
  %v36 = vld [vmem:[%s0 + $0xa8] sm:$0xff]
  %v37 = vld [vmem:[%s0 + $0xb0] sm:$0xff]
  %v38 = vld [vmem:[%s0 + $0xb8] sm:$0xff]
  %v39 = vld [vmem:[%s0 + $0xc0] sm:$0xff]
  %v40 = vld [vmem:[%s0 + $0xc8] sm:$0xff]
  %v41 = vld [vmem:[%s0 + $0xd0] sm:$0xff]
  %v42 = vld [vmem:[%s0 + $0xd8] sm:$0xff]
  %v43 = vld [vmem:[%s0 + $0xe0] sm:$0xff]
  %v44 = vld [vmem:[%s0 + $0xe8] sm:$0xff]
  %v45 = vld [vmem:[%s0 + $0xf0] sm:$0xff]
  %v46 = vld [vmem:[%s0 + $0xf8] sm:$0xff]
  %v47 = vld [vmem:[%s0 + $0x100] sm:$0xff]
  %v48 = vld [vmem:[%s0 + $0x108] sm:$0xff]
  %v49 = vld [vmem:[%s0 + $0x110] sm:$0xff]
  %v50 = vld [vmem:[%s0 + $0x118] sm:$0xff]
  %v51 = vld [vmem:[%s0 + $0x120] sm:$0xff]
  %v52 = vld [vmem:[%s0 + $0x128] sm:$0xff]
  %v53 = vld [vmem:[%s0 + $0x130] sm:$0xff]
  %v54 = vld [vmem:[%s0 + $0x138] sm:$0xff]
  %v55 = vld [vmem:[%s0 + $0x140] sm:$0xff]
  %v56 = vld [vmem:[%s0 + $0x148] sm:$0xff]
  %v57 = vld [vmem:[%s0 + $0x150] sm:$0xff]
  %v58 = vld [vmem:[%s0 + $0x158] sm:$0xff]
  %v59 = vld [vmem:[%s0 + $0x160] sm:$0xff]
  %v60 = vpack.c.bf16 %v20, %v15
  %v61 = vpack.c.bf16 %v21, %v16
  %v62 = vpack.c.bf16 %v22, %v17
  %v63 = vpack.c.bf16 %v23, %v18
  %v64 = vpack.c.bf16 %v24, %v19
  %v65 = vpack.c.bf16 %v30, %v25
  %v66 = vpack.c.bf16 %v31, %v26
  %v67 = vpack.c.bf16 %v32, %v27
  %v68 = vpack.c.bf16 %v33, %v28
  %v69 = vpack.c.bf16 %v34, %v29
  %v70 = vpack.c.bf16 %v40, %v35
  %v71 = vpack.c.bf16 %v41, %v36
  %v72 = vpack.c.bf16 %v42, %v37
  %v73 = vpack.c.bf16 %v43, %v38
  %v74 = vpack.c.bf16 %v44, %v39
  %v75 = vpack.c.bf16 %v50, %v45
  %v76 = vpack.c.bf16 %v51, %v46
  %v77 = vpack.c.bf16 %v52, %v47
  %v78 = vpack.c.bf16 %v53, %v48
  %v79 = vpack.c.bf16 %v54, %v49
  %v80 = vpack.c.bf16 %v55, %v55
  %v81 = vpack.c.bf16 %v56, %v56
  %v82 = vpack.c.bf16 %v57, %v57
  %v83 = vpack.c.bf16 %v58, %v58
  %v84 = vpack.c.bf16 %v59, %v59
  %v85 = vld [vmem:[%s1] sm:$0xf]
  %v86 = vld [vmem:[%s1 + $0x4] sm:$0xf]
  %v87 = vld [vmem:[%s1 + $0x8] sm:$0xf]
  %v88 = vld [vmem:[%s1 + $0xc] sm:$0xf]
  %v89 = vld [vmem:[%s1 + $0x10] sm:$0xf]
  %v90 = vld [vmem:[%s1 + $0x14] sm:$0xf]
  %v91 = vld [vmem:[%s1 + $0x18] sm:$0xf]
  %v92 = vld [vmem:[%s1 + $0x1c] sm:$0xf]
  %v93 = vld [vmem:[%s1 + $0x20] sm:$0xf]
  %v94 = vld [vmem:[%s1 + $0x24] sm:$0xf]
  %v95 = vld [vmem:[%s1 + $0x28] sm:$0xf]
  %v96 = vld [vmem:[%s1 + $0x2c] sm:$0xf]
  %v97 = vld [vmem:[%s1 + $0x30] sm:$0xf]
  %v98 = vld [vmem:[%s1 + $0x34] sm:$0xf]
  %v99 = vld [vmem:[%s1 + $0x38] sm:$0xf]
  %v100 = vld [vmem:[%s1 + $0x3c] sm:$0xf]
  %v101 = vld [vmem:[%s1 + $0x40] sm:$0xf]
  %v102 = vld [vmem:[%s1 + $0x44] sm:$0xf]
  %v103 = vld [vmem:[%s1 + $0x48] sm:$0xf]
  %v104 = vld [vmem:[%s1 + $0x4c] sm:$0xf]
  %v105 = vld [vmem:[%s1 + $0x50] sm:$0xf]
  %v106 = vld [vmem:[%s1 + $0x54] sm:$0xf]
  %v107 = vld [vmem:[%s1 + $0x58] sm:$0xf]
  %v108 = vld [vmem:[%s1 + $0x5c] sm:$0xf]
  %v109 = vld [vmem:[%s1 + $0x60] sm:$0xf]
  %v110 = vld [vmem:[%s1 + $0x64] sm:$0xf]
  %v111 = vld [vmem:[%s1 + $0x68] sm:$0xf]
  %v112 = vld [vmem:[%s1 + $0x6c] sm:$0xf]
  %v113 = vld [vmem:[%s1 + $0x70] sm:$0xf]
  %v114 = vld [vmem:[%s1 + $0x74] sm:$0xf]
  %v115 = vld [vmem:[%s1 + $0x78] sm:$0xf]
  %v116 = vld [vmem:[%s1 + $0x7c] sm:$0xf]
  %v117 = vld [vmem:[%s1 + $0x80] sm:$0xf]
  %v118 = vld [vmem:[%s1 + $0x84] sm:$0xf]
  %v119 = vld [vmem:[%s1 + $0x88] sm:$0xf]
  %v120 = vld [vmem:[%s1 + $0x8c] sm:$0xf]
  %v121 = vld [vmem:[%s1 + $0x90] sm:$0xf]
  %v122 = vld [vmem:[%s1 + $0x94] sm:$0xf]
  %v123 = vld [vmem:[%s1 + $0x98] sm:$0xf]
  %v124 = vld [vmem:[%s1 + $0x9c] sm:$0xf]
  %v125 = vld [vmem:[%s1 + $0xa0] sm:$0xf]
  %v126 = vld [vmem:[%s1 + $0xa4] sm:$0xf]
  %v127 = vld [vmem:[%s1 + $0xa8] sm:$0xf]
  %v128 = vld [vmem:[%s1 + $0xac] sm:$0xf]
  %v129 = vld [vmem:[%s1 + $0xb0] sm:$0xf]
  %v130 = vld [vmem:[%s1 + $0xb4] sm:$0xf]
  %v131 = vld [vmem:[%s1 + $0xb8] sm:$0xf]
  %v132 = vld [vmem:[%s1 + $0xbc] sm:$0xf]
  %v133 = vld [vmem:[%s1 + $0xc0] sm:$0xf]
  %v134 = vld [vmem:[%s1 + $0xc4] sm:$0xf]
  %v135 = vld [vmem:[%s1 + $0xc8] sm:$0xf]
  %v136 = vld [vmem:[%s1 + $0xcc] sm:$0xf]
  %v137 = vld [vmem:[%s1 + $0xd0] sm:$0xf]
  %v138 = vld [vmem:[%s1 + $0xd4] sm:$0xf]
  %v139 = vld [vmem:[%s1 + $0xd8] sm:$0xf]
  %v140 = vld [vmem:[%s1 + $0xdc] sm:$0xf]
  %v141 = vld [vmem:[%s1 + $0xe0] sm:$0xf]
  %v142 = vld [vmem:[%s1 + $0xe4] sm:$0xf]
  %v143 = vld [vmem:[%s1 + $0xe8] sm:$0xf]
  %v144 = vld [vmem:[%s1 + $0xec] sm:$0xf]
  %v145 = vld [vmem:[%s1 + $0xf0] sm:$0xf]
  %v146 = vld [vmem:[%s1 + $0xf4] sm:$0xf]
  %v147 = vld [vmem:[%s1 + $0xf8] sm:$0xf]
  %v148 = vld [vmem:[%s1 + $0xfc] sm:$0xf]
  %v149 = vld [vmem:[%s1 + $0x100] sm:$0xf]
  %v150 = vld [vmem:[%s1 + $0x104] sm:$0xf]
  %v151 = vld [vmem:[%s1 + $0x108] sm:$0xf]
  %v152 = vld [vmem:[%s1 + $0x10c] sm:$0xf]
  %v153 = vld [vmem:[%s1 + $0x110] sm:$0xf]
  %v154 = vld [vmem:[%s1 + $0x114] sm:$0xf]
  %v155 = vld [vmem:[%s1 + $0x118] sm:$0xf]
  %v156 = vld [vmem:[%s1 + $0x11c] sm:$0xf]
  %v157 = vld [vmem:[%s1 + $0x120] sm:$0xf]
  %v158 = vld [vmem:[%s1 + $0x124] sm:$0xf]
  %v159 = vld [vmem:[%s1 + $0x128] sm:$0xf]
  %v160 = vld [vmem:[%s1 + $0x12c] sm:$0xf]
  %v161 = vld [vmem:[%s1 + $0x130] sm:$0xf]
  %v162 = vld [vmem:[%s1 + $0x134] sm:$0xf]
  %v163 = vld [vmem:[%s1 + $0x138] sm:$0xf]
  %v164 = vld [vmem:[%s1 + $0x13c] sm:$0xf]
  %v165 = vld [vmem:[%s2] sm:$0x7]
  %v166 = vlaneseq
  %v167 = vshrl.u32 %v166, 7
  %v168 = vsub.s32 0, %v167
  %v169 = vrot.slane %v165, %v168
  %v250 = vunpack.c.l.b16 %v85
  %v251 = vunpack.c.l.b16 %v86
  %v252 = vunpack.c.l.b16 %v87
  %v253 = vunpack.c.l.b16 %v88
  %v254 = vunpack.c.l.b16 %v89
  %v255 = vunpack.c.l.b16 %v90
  %v256 = vunpack.c.l.b16 %v91
  %v257 = vunpack.c.l.b16 %v92
  %v258 = vunpack.c.l.b16 %v93
  %v259 = vunpack.c.l.b16 %v94
  %v260 = vunpack.c.l.b16 %v95
  %v261 = vunpack.c.l.b16 %v96
  %v262 = vunpack.c.l.b16 %v97
  %v263 = vunpack.c.l.b16 %v98
  %v264 = vunpack.c.l.b16 %v99
  %v265 = vunpack.c.l.b16 %v100
  %v266 = vunpack.c.l.b16 %v101
  %v267 = vunpack.c.l.b16 %v102
  %v268 = vunpack.c.l.b16 %v103
  %v269 = vunpack.c.l.b16 %v104
  %v270 = vunpack.c.l.b16 %v105
  %v271 = vunpack.c.l.b16 %v106
  %v272 = vunpack.c.l.b16 %v107
  %v273 = vunpack.c.l.b16 %v108
  %v274 = vunpack.c.l.b16 %v109
  %v275 = vunpack.c.l.b16 %v110
  %v276 = vunpack.c.l.b16 %v111
  %v277 = vunpack.c.l.b16 %v112
  %v278 = vunpack.c.l.b16 %v113
  %v279 = vunpack.c.l.b16 %v114
  %v280 = vunpack.c.l.b16 %v115
  %v281 = vunpack.c.l.b16 %v116
  %v282 = vunpack.c.l.b16 %v117
  %v283 = vunpack.c.l.b16 %v118
  %v284 = vunpack.c.l.b16 %v119
  %v285 = vunpack.c.l.b16 %v120
  %v286 = vunpack.c.l.b16 %v121
  %v287 = vunpack.c.l.b16 %v122
  %v288 = vunpack.c.l.b16 %v123
  %v289 = vunpack.c.l.b16 %v124
  %v290 = vunpack.c.l.b16 %v125
  %v291 = vunpack.c.l.b16 %v126
  %v292 = vunpack.c.l.b16 %v127
  %v293 = vunpack.c.l.b16 %v128
  %v294 = vunpack.c.l.b16 %v129
  %v295 = vunpack.c.l.b16 %v130
  %v296 = vunpack.c.l.b16 %v131
  %v297 = vunpack.c.l.b16 %v132
  %v298 = vunpack.c.l.b16 %v133
  %v299 = vunpack.c.l.b16 %v134
  %v300 = vunpack.c.l.b16 %v135
  %v301 = vunpack.c.l.b16 %v136
  %v302 = vunpack.c.l.b16 %v137
  %v303 = vunpack.c.l.b16 %v138
  %v304 = vunpack.c.l.b16 %v139
  %v305 = vunpack.c.l.b16 %v140
  %v306 = vunpack.c.l.b16 %v141
  %v307 = vunpack.c.l.b16 %v142
  %v308 = vunpack.c.l.b16 %v143
  %v309 = vunpack.c.l.b16 %v144
  %v310 = vunpack.c.l.b16 %v145
  %v311 = vunpack.c.l.b16 %v146
  %v312 = vunpack.c.l.b16 %v147
  %v313 = vunpack.c.l.b16 %v148
  %v314 = vunpack.c.l.b16 %v149
  %v315 = vunpack.c.l.b16 %v150
  %v316 = vunpack.c.l.b16 %v151
  %v317 = vunpack.c.l.b16 %v152
  %v318 = vunpack.c.l.b16 %v153
  %v319 = vunpack.c.l.b16 %v154
  %v320 = vunpack.c.l.b16 %v155
  %v321 = vunpack.c.l.b16 %v156
  %v322 = vunpack.c.l.b16 %v157
  %v323 = vunpack.c.l.b16 %v158
  %v324 = vunpack.c.l.b16 %v159
  %v325 = vunpack.c.l.b16 %v160
  %v326 = vunpack.c.l.b16 %v161
  %v327 = vunpack.c.l.b16 %v162
  %v328 = vunpack.c.l.b16 %v163
  %v329 = vunpack.c.l.b16 %v164
  %v330 = vpack.c.b16 %v251, %v250
  %v331 = vpack.c.b16 %v253, %v252
  %v332 = vpack.c.b16 %v255, %v254
  %v333 = vpack.c.b16 %v257, %v256
  %v334 = vpack.c.b16 %v259, %v258
  %v335 = vpack.c.b16 %v261, %v260
  %v336 = vpack.c.b16 %v263, %v262
  %v337 = vpack.c.b16 %v265, %v264
  %v338 = vpack.c.b16 %v267, %v266
  %v339 = vpack.c.b16 %v269, %v268
  %v340 = vpack.c.b16 %v271, %v270
  %v341 = vpack.c.b16 %v273, %v272
  %v342 = vpack.c.b16 %v275, %v274
  %v343 = vpack.c.b16 %v277, %v276
  %v344 = vpack.c.b16 %v279, %v278
  %v345 = vpack.c.b16 %v281, %v280
  %v346 = vpack.c.b16 %v283, %v282
  %v347 = vpack.c.b16 %v285, %v284
  %v348 = vpack.c.b16 %v287, %v286
  %v349 = vpack.c.b16 %v289, %v288
  %v350 = vpack.c.b16 %v291, %v290
  %v351 = vpack.c.b16 %v293, %v292
  %v352 = vpack.c.b16 %v295, %v294
  %v353 = vpack.c.b16 %v297, %v296
  %v354 = vpack.c.b16 %v299, %v298
  %v355 = vpack.c.b16 %v301, %v300
  %v356 = vpack.c.b16 %v303, %v302
  %v357 = vpack.c.b16 %v305, %v304
  %v358 = vpack.c.b16 %v307, %v306
  %v359 = vpack.c.b16 %v309, %v308
  %v360 = vpack.c.b16 %v311, %v310
  %v361 = vpack.c.b16 %v313, %v312
  %v362 = vpack.c.b16 %v315, %v314
  %v363 = vpack.c.b16 %v317, %v316
  %v364 = vpack.c.b16 %v319, %v318
  %v365 = vpack.c.b16 %v321, %v320
  %v366 = vpack.c.b16 %v323, %v322
  %v367 = vpack.c.b16 %v325, %v324
  %v368 = vpack.c.b16 %v327, %v326
  %v369 = vpack.c.b16 %v329, %v328
  %410 = vmatprep.subr.bf16.mxu0 0
  %411 = vmatpush1.bf16.msra.mxu0 %v337
  %412 = vmatprep.subr.bf16.mxu0 0
  %413 = vmatpush1.bf16.msra.mxu0 %v336
  %414 = vmatprep.subr.bf16.mxu0 0
  %415 = vmatpush1.bf16.msra.mxu0 %v335
  %416 = vmatprep.subr.bf16.mxu0 0
  %417 = vmatpush1.bf16.msra.mxu0 %v334
  %418 = vmatprep.subr.bf16.mxu0 0
  %419 = vmatpush1.bf16.msra.mxu0 %v333
  %420 = vmatprep.subr.bf16.mxu0 0
  %421 = vmatpush1.bf16.msra.mxu0 %v332
  %422 = vmatprep.subr.bf16.mxu0 0
  %423 = vmatpush1.bf16.msra.mxu0 %v331
  %424 = vmatprep.subr.bf16.mxu0 0
  %425 = vmatpush1.bf16.msra.mxu0 %v330
  %426 = vmatprep.subr.bf16.mxu0 0
  %427 = vmatpush2.bf16.msra.mxu0 %v345
  %428 = vmatprep.subr.bf16.mxu0 0
  %429 = vmatpush2.bf16.msra.mxu0 %v344
  %430 = vmatprep.subr.bf16.mxu0 0
  %431 = vmatpush2.bf16.msra.mxu0 %v343
  %432 = vmatprep.subr.bf16.mxu0 0
  %433 = vmatpush2.bf16.msra.mxu0 %v342
  %434 = vmatprep.subr.bf16.mxu0 0
  %435 = vmatpush2.bf16.msra.mxu0 %v341
  %436 = vmatprep.subr.bf16.mxu0 0
  %437 = vmatpush2.bf16.msra.mxu0 %v340
  %438 = vmatprep.subr.bf16.mxu0 0
  %439 = vmatpush2.bf16.msra.mxu0 %v339
  %440 = vmatprep.subr.bf16.mxu0 0
  %441 = vmatpush2.bf16.msra.mxu0 %v338
  %442 = vmatprep.mubr.bf16.mxu0 %v61
  %443 = vmatmul.mubr.bf16.gmra.mxu0 %v60
  %v444 = vpop.f32.mrf.mxu0
  %v445 = vadd.f32 %v169, %v444
  %v446 = vpop.f32.mrf.mxu0
  %v447 = vpop.f32.mrf.mxu0
  %v448 = vadd.f32 %v169, %v447
  %v449 = vpop.f32.mrf.mxu0
  %450 = vmatprep.mubr.bf16.mxu0 %v66
  %451 = vmatmul.mubr.bf16.gmra.mxu0 %v65
  %v452 = vpop.f32.mrf.mxu0
  %v453 = vadd.f32 %v169, %v452
  %v454 = vpop.f32.mrf.mxu0
  %v455 = vpop.f32.mrf.mxu0
  %v456 = vadd.f32 %v169, %v455
  %v457 = vpop.f32.mrf.mxu0
  %458 = vmatprep.mubr.bf16.mxu0 %v71
  %459 = vmatmul.mubr.bf16.gmra.mxu0 %v70
  %v460 = vpop.f32.mrf.mxu0
  %v461 = vadd.f32 %v169, %v460
  %v462 = vpop.f32.mrf.mxu0
  %v463 = vpop.f32.mrf.mxu0
  %v464 = vadd.f32 %v169, %v463
  %v465 = vpop.f32.mrf.mxu0
  %466 = vmatprep.mubr.bf16.mxu0 %v76
  %467 = vmatmul.mubr.bf16.gmra.mxu0 %v75
  %v468 = vpop.f32.mrf.mxu0
  %v469 = vadd.f32 %v169, %v468
  %v470 = vpop.f32.mrf.mxu0
  %v471 = vpop.f32.mrf.mxu0
  %v472 = vadd.f32 %v169, %v471
  %v473 = vpop.f32.mrf.mxu0
  %474 = vmatprep.mubr.bf16.mxu0 %v81
  %475 = vmatmul.mubr.bf16.gmra.mxu0 %v80
  %v476 = vpop.f32.mrf.mxu0
  %v477 = vadd.f32 %v169, %v476
  %v478 = vpop.f32.mrf.mxu0
  %v479 = vpop.f32.mrf.mxu0
  %v480 = vpop.f32.mrf.mxu0
  %481 = vdwg.mxu0
  %482 = vmatprep.subr.bf16.mxu0 0
  %483 = vmatpush1.bf16.msra.mxu0 %v353
  %484 = vmatprep.subr.bf16.mxu0 0
  %485 = vmatpush1.bf16.msra.mxu0 %v352
  %486 = vmatprep.subr.bf16.mxu0 0
  %487 = vmatpush1.bf16.msra.mxu0 %v351
  %488 = vmatprep.subr.bf16.mxu0 0
  %489 = vmatpush1.bf16.msra.mxu0 %v350
  %490 = vmatprep.subr.bf16.mxu0 0
  %491 = vmatpush1.bf16.msra.mxu0 %v349
  %492 = vmatprep.subr.bf16.mxu0 0
  %493 = vmatpush1.bf16.msra.mxu0 %v348
  %494 = vmatprep.subr.bf16.mxu0 0
  %495 = vmatpush1.bf16.msra.mxu0 %v347
  %496 = vmatprep.subr.bf16.mxu0 0
  %497 = vmatpush1.bf16.msra.mxu0 %v346
  %498 = vmatprep.subr.bf16.mxu0 0
  %499 = vmatpush2.bf16.msra.mxu0 %v361
  %500 = vmatprep.subr.bf16.mxu0 0
  %501 = vmatpush2.bf16.msra.mxu0 %v360
  %502 = vmatprep.subr.bf16.mxu0 0
  %503 = vmatpush2.bf16.msra.mxu0 %v359
  %504 = vmatprep.subr.bf16.mxu0 0
  %505 = vmatpush2.bf16.msra.mxu0 %v358
  %506 = vmatprep.subr.bf16.mxu0 0
  %507 = vmatpush2.bf16.msra.mxu0 %v357
  %508 = vmatprep.subr.bf16.mxu0 0
  %509 = vmatpush2.bf16.msra.mxu0 %v356
  %510 = vmatprep.subr.bf16.mxu0 0
  %511 = vmatpush2.bf16.msra.mxu0 %v355
  %512 = vmatprep.subr.bf16.mxu0 0
  %513 = vmatpush2.bf16.msra.mxu0 %v354
  %514 = vmatprep.mubr.bf16.mxu0 %v63
  %515 = vmatmul.mubr.bf16.gmra.mxu0 %v62
  %v516 = vpop.f32.mrf.mxu0
  %v517 = vadd.f32 %v445, %v516
  %v518 = vpop.f32.mrf.mxu0
  %v519 = vpop.f32.mrf.mxu0
  %v520 = vadd.f32 %v448, %v519
  %v521 = vpop.f32.mrf.mxu0
  %522 = vmatprep.mubr.bf16.mxu0 %v68
  %523 = vmatmul.mubr.bf16.gmra.mxu0 %v67
  %v524 = vpop.f32.mrf.mxu0
  %v525 = vadd.f32 %v453, %v524
  %v526 = vpop.f32.mrf.mxu0
  %v527 = vpop.f32.mrf.mxu0
  %v528 = vadd.f32 %v456, %v527
  %v529 = vpop.f32.mrf.mxu0
  %530 = vmatprep.mubr.bf16.mxu0 %v73
  %531 = vmatmul.mubr.bf16.gmra.mxu0 %v72
  %v532 = vpop.f32.mrf.mxu0
  %v533 = vadd.f32 %v461, %v532
  %v534 = vpop.f32.mrf.mxu0
  %v535 = vpop.f32.mrf.mxu0
  %v536 = vadd.f32 %v464, %v535
  %v537 = vpop.f32.mrf.mxu0
  %538 = vmatprep.mubr.bf16.mxu0 %v78
  %539 = vmatmul.mubr.bf16.gmra.mxu0 %v77
  %v540 = vpop.f32.mrf.mxu0
  %v541 = vadd.f32 %v469, %v540
  %v542 = vpop.f32.mrf.mxu0
  %v543 = vpop.f32.mrf.mxu0
  %v544 = vadd.f32 %v472, %v543
  %v545 = vpop.f32.mrf.mxu0
  %546 = vmatprep.mubr.bf16.mxu0 %v83
  %547 = vmatmul.mubr.bf16.gmra.mxu0 %v82
  %v548 = vpop.f32.mrf.mxu0
  %v549 = vadd.f32 %v477, %v548
  %v550 = vpop.f32.mrf.mxu0
  %v551 = vpop.f32.mrf.mxu0
  %v552 = vpop.f32.mrf.mxu0
  %553 = vdwg.mxu0
  %554 = vmatprep.subr.bf16.mxu0 0
  %555 = vmatpush1.bf16.msra.mxu0 %v369
  %556 = vmatprep.subr.bf16.mxu0 0
  %557 = vmatpush1.bf16.msra.mxu0 %v368
  %558 = vmatprep.subr.bf16.mxu0 0
  %559 = vmatpush1.bf16.msra.mxu0 %v367
  %560 = vmatprep.subr.bf16.mxu0 0
  %561 = vmatpush1.bf16.msra.mxu0 %v366
  %562 = vmatprep.subr.bf16.mxu0 0
  %563 = vmatpush1.bf16.msra.mxu0 %v365
  %564 = vmatprep.subr.bf16.mxu0 0
  %565 = vmatpush1.bf16.msra.mxu0 %v364
  %566 = vmatprep.subr.bf16.mxu0 0
  %567 = vmatpush1.bf16.msra.mxu0 %v363
  %568 = vmatprep.subr.bf16.mxu0 0
  %569 = vmatpush1.bf16.msra.mxu0 %v362
  %570 = vmatprep.subr.bf16.mxu0 0
  %571 = vmatpush2.bf16.msra.mxu0 0
  %572 = vmatprep.subr.bf16.mxu0 0
  %573 = vmatpush2.bf16.msra.mxu0 0
  %574 = vmatprep.subr.bf16.mxu0 0
  %575 = vmatpush2.bf16.msra.mxu0 0
  %576 = vmatprep.subr.bf16.mxu0 0
  %577 = vmatpush2.bf16.msra.mxu0 0
  %578 = vmatprep.subr.bf16.mxu0 0
  %579 = vmatpush2.bf16.msra.mxu0 0
  %580 = vmatprep.subr.bf16.mxu0 0
  %581 = vmatpush2.bf16.msra.mxu0 0
  %582 = vmatprep.subr.bf16.mxu0 0
  %583 = vmatpush2.bf16.msra.mxu0 0
  %584 = vmatprep.subr.bf16.mxu0 0
  %585 = vmatpush2.bf16.msra.mxu0 0
  %586 = vmatprep.mubr.bf16.mxu0 0
  %587 = vmatmul.mubr.bf16.gmra.mxu0 %v64
  %v588 = vpop.f32.mrf.mxu0
  %v589 = vadd.f32 %v517, %v588
  %v590 = vpop.f32.mrf.mxu0
  %v591 = vpop.f32.mrf.mxu0
  %v592 = vadd.f32 %v520, %v591
  %v593 = vpop.f32.mrf.mxu0
  %594 = vmatprep.mubr.bf16.mxu0 0
  %595 = vmatmul.mubr.bf16.gmra.mxu0 %v69
  %v596 = vpop.f32.mrf.mxu0
  %v597 = vadd.f32 %v525, %v596
  %v598 = vpop.f32.mrf.mxu0
  %v599 = vpop.f32.mrf.mxu0
  %v600 = vadd.f32 %v528, %v599
  %v601 = vpop.f32.mrf.mxu0
  %602 = vmatprep.mubr.bf16.mxu0 0
  %603 = vmatmul.mubr.bf16.gmra.mxu0 %v74
  %v604 = vpop.f32.mrf.mxu0
  %v605 = vadd.f32 %v533, %v604
  %v606 = vpop.f32.mrf.mxu0
  %v607 = vpop.f32.mrf.mxu0
  %v608 = vadd.f32 %v536, %v607
  %v609 = vpop.f32.mrf.mxu0
  %610 = vmatprep.mubr.bf16.mxu0 0
  %611 = vmatmul.mubr.bf16.gmra.mxu0 %v79
  %v612 = vpop.f32.mrf.mxu0
  %v613 = vadd.f32 %v541, %v612
  %v614 = vpop.f32.mrf.mxu0
  %v615 = vpop.f32.mrf.mxu0
  %v616 = vadd.f32 %v544, %v615
  %v617 = vpop.f32.mrf.mxu0
  %618 = vmatprep.mubr.bf16.mxu0 0
  %619 = vmatmul.mubr.bf16.gmra.mxu0 %v84
  %v620 = vpop.f32.mrf.mxu0
  %v621 = vadd.f32 %v549, %v620
  %v622 = vpop.f32.mrf.mxu0
  %v623 = vpop.f32.mrf.mxu0
  %v624 = vpop.f32.mrf.mxu0
  %625 = vdwg.mxu0
  %v626 = vmax.f32 %v589, 0.0
  %v627 = vmax.f32 %v592, 0.0
  %v628 = vmax.f32 %v597, 0.0
  %v629 = vmax.f32 %v600, 0.0
  %v630 = vmax.f32 %v605, 0.0
  %v631 = vmax.f32 %v608, 0.0
  %v632 = vmax.f32 %v613, 0.0
  %v633 = vmax.f32 %v616, 0.0
  %v634 = vmax.f32 %v621, 0.0
  %v635 = vlaneseq
  %v636 = vshrl.u32 %v635, 7
  %v637 = vsub.s32 1, %v636
  %v638 = vrot.slane %v165, %v637
  %v639 = vmul.f32 %v626, %v638
  %v640 = vmul.f32 %v627, %v638
  %v641 = vmul.f32 %v628, %v638
  %v642 = vmul.f32 %v629, %v638
  %v643 = vmul.f32 %v630, %v638
  %v644 = vmul.f32 %v631, %v638
  %v645 = vmul.f32 %v632, %v638
  %v646 = vmul.f32 %v633, %v638
  %v647 = vmul.f32 %v634, %v638
  %v648 = vlaneseq
  %v649 = vshrl.u32 %v648, 7
  %v650 = vsub.s32 2, %v649
  %v651 = vrot.slane %v165, %v650
  %v652 = vadd.f32 %v639, %v651
  %v653 = vadd.f32 %v640, %v651
  %v654 = vadd.f32 %v641, %v651
  %v655 = vadd.f32 %v642, %v651
  %v656 = vadd.f32 %v643, %v651
  %v657 = vadd.f32 %v644, %v651
  %v658 = vadd.f32 %v645, %v651
  %v659 = vadd.f32 %v646, %v651
  %v660 = vadd.f32 %v647, %v651
  %661 = vst [vmem:[%s3] sm:$0xff] %v652
  %662 = vst [vmem:[%s3 + $0x8] sm:$0xff] %v653
  %663 = vst [vmem:[%s3 + $0x10] sm:$0xff] %v654
  %664 = vst [vmem:[%s3 + $0x18] sm:$0xff] %v655
  %665 = vst [vmem:[%s3 + $0x20] sm:$0xff] %v656
  %666 = vst [vmem:[%s3 + $0x28] sm:$0xff] %v657
  %667 = vst [vmem:[%s3 + $0x30] sm:$0xff] %v658
  %668 = vst [vmem:[%s3 + $0x38] sm:$0xff] %v659
  %669 = vst [vmem:[%s3 + $0x40] sm:$0xff] %v660
  // Predicated region
  $region14: #{fashioncnn4_forward.8} parent=0 // pred_check
    _
  $region15: #{fashioncnn4_forward.8} parent=0 // pred_check_branch
    %671 = sbr.rel (0) target = $region17
  $region16: #{fashioncnn4_forward.8} parent=0 // pred_region
    _
  $region17: #{fashioncnn4_forward.8} parent=0 // pred_fallthru
    _
  // Predicated region
  $region18: #{fashioncnn4_forward.8} parent=0 // pred_check
    _
  $region19: #{fashioncnn4_forward.8} parent=0 // pred_check_branch
    %673 = sbr.rel (0) target = $region21
  $region20: #{fashioncnn4_forward.8} parent=0 // pred_region
    _
  $region21: #{fashioncnn4_forward.8} parent=0 // pred_fallthru
    _

// kernel: fashioncnn4_forward.9
$region0: #{fashioncnn4_forward.9}
  #allocation0 [shape = 'u32[]', space=smem, size = 0x4, offset = 0x4, fixed_abs, tag = 'smem constant byte address 0x4 - core index']
  #allocation1 [shape = 'u32[144,128]{1,0:T(1,128)}', space=vmem, size = 0x12000, scoped, tag = 'internal scratch']
  %s0 = inlined_call_operand.vmem [shape: f32[8,640], index: 0, kind: input, shape index: {}]
  %s1 = inlined_call_operand.vmem [shape: bf16[640,256], index: 1, kind: input, shape index: {}]
  %s2 = inlined_call_operand.vmem [shape: f32[1,256], index: 2, kind: input, shape index: {}]
  %s3 = inlined_call_operand.vmem [shape: bf16[256,128], index: 3, kind: input, shape index: {}]
  %s4 = inlined_call_operand.vmem [shape: f32[1,128], index: 4, kind: input, shape index: {}]
  %s5 = inlined_call_operand.vmem [shape: f32[8,128], index: 5, kind: output, shape index: {}]
  %s6 = sld [smem:[#allocation0]]
  $region30: #{fashioncnn4_forward.9} parent=0
    _
  %s8 = ssub.s32 1, %s6
  %s9 = scalar_select 0, %s8, %s6
  // Predicated region
  $region2: #{fashioncnn4_forward.9} parent=0 // pred_check
    _
  $region3: #{fashioncnn4_forward.9} parent=0 // pred_check_branch
    %11 = sbr.rel (0) target = $region5
  $region4: #{fashioncnn4_forward.9} parent=0 // pred_region
    _
  $region5: #{fashioncnn4_forward.9} parent=0 // pred_fallthru
    _
  // Predicated region
  $region6: #{fashioncnn4_forward.9} parent=0 // pred_check
    _
  $region7: #{fashioncnn4_forward.9} parent=0 // pred_check_branch
    %13 = sbr.rel (0) target = $region9
  $region8: #{fashioncnn4_forward.9} parent=0 // pred_region
    _
  $region9: #{fashioncnn4_forward.9} parent=0 // pred_fallthru
    _
  // Predicated region
  $region10: #{fashioncnn4_forward.9} parent=0 // pred_check
    _
  $region11: #{fashioncnn4_forward.9} parent=0 // pred_check_branch
    %15 = sbr.rel (0) target = $region13
  $region12: #{fashioncnn4_forward.9} parent=0 // pred_region
    _
  $region13: #{fashioncnn4_forward.9} parent=0 // pred_fallthru
    _
  // Predicated region
  $region14: #{fashioncnn4_forward.9} parent=0 // pred_check
    _
  $region15: #{fashioncnn4_forward.9} parent=0 // pred_check_branch
    %17 = sbr.rel (0) target = $region17
  $region16: #{fashioncnn4_forward.9} parent=0 // pred_region
    _
  $region17: #{fashioncnn4_forward.9} parent=0 // pred_fallthru
    _
  // Predicated region
  $region18: #{fashioncnn4_forward.9} parent=0 // pred_check
    _
  $region19: #{fashioncnn4_forward.9} parent=0 // pred_check_branch
    %19 = sbr.rel (0) target = $region21
  $region20: #{fashioncnn4_forward.9} parent=0 // pred_region
    _
  $region21: #{fashioncnn4_forward.9} parent=0 // pred_fallthru
    _
  %v21 = vld [vmem:[%s0] sm:$0xff]
  %v22 = vld [vmem:[%s0 + $0x8] sm:$0xff]
  %v23 = vld [vmem:[%s0 + $0x10] sm:$0xff]
  %v24 = vld [vmem:[%s0 + $0x18] sm:$0xff]
  %v25 = vld [vmem:[%s0 + $0x20] sm:$0xff]
  %v26 = vpack.c.bf16 %v21, %v21
  %v27 = vpack.c.bf16 %v22, %v22
  %v28 = vpack.c.bf16 %v23, %v23
  %v29 = vpack.c.bf16 %v24, %v24
  %v30 = vpack.c.bf16 %v25, %v25
  %v31 = vld [vmem:[%s1] sm:$0xff]
  %v32 = vld [vmem:[%s1 + $0x8] sm:$0xff]
  %v33 = vld [vmem:[%s1 + $0x10] sm:$0xff]
  %v34 = vld [vmem:[%s1 + $0x18] sm:$0xff]
  %v35 = vld [vmem:[%s1 + $0x20] sm:$0xff]
  %v36 = vld [vmem:[%s1 + $0x28] sm:$0xff]
  %v37 = vld [vmem:[%s1 + $0x30] sm:$0xff]
  %v38 = vld [vmem:[%s1 + $0x38] sm:$0xff]
  %v39 = vld [vmem:[%s1 + $0x40] sm:$0xff]
  %v40 = vld [vmem:[%s1 + $0x48] sm:$0xff]
  %v41 = vld [vmem:[%s1 + $0x50] sm:$0xff]
  %v42 = vld [vmem:[%s1 + $0x58] sm:$0xff]
  %v43 = vld [vmem:[%s1 + $0x60] sm:$0xff]
  %v44 = vld [vmem:[%s1 + $0x68] sm:$0xff]
  %v45 = vld [vmem:[%s1 + $0x70] sm:$0xff]
  %v46 = vld [vmem:[%s1 + $0x78] sm:$0xff]
  %v47 = vld [vmem:[%s1 + $0x80] sm:$0xff]
  %v48 = vld [vmem:[%s1 + $0x88] sm:$0xff]
  %v49 = vld [vmem:[%s1 + $0x90] sm:$0xff]
  %v50 = vld [vmem:[%s1 + $0x98] sm:$0xff]
  %v51 = vld [vmem:[%s1 + $0xa0] sm:$0xff]
  %v52 = vld [vmem:[%s1 + $0xa8] sm:$0xff]
  %v53 = vld [vmem:[%s1 + $0xb0] sm:$0xff]
  %v54 = vld [vmem:[%s1 + $0xb8] sm:$0xff]
  %v55 = vld [vmem:[%s1 + $0xc0] sm:$0xff]
  %v56 = vld [vmem:[%s1 + $0xc8] sm:$0xff]
  %v57 = vld [vmem:[%s1 + $0xd0] sm:$0xff]
  %v58 = vld [vmem:[%s1 + $0xd8] sm:$0xff]
  %v59 = vld [vmem:[%s1 + $0xe0] sm:$0xff]
  %v60 = vld [vmem:[%s1 + $0xe8] sm:$0xff]
  %v61 = vld [vmem:[%s1 + $0xf0] sm:$0xff]
  %v62 = vld [vmem:[%s1 + $0xf8] sm:$0xff]
  %v63 = vld [vmem:[%s1 + $0x100] sm:$0xff]
  %v64 = vld [vmem:[%s1 + $0x108] sm:$0xff]
  %v65 = vld [vmem:[%s1 + $0x110] sm:$0xff]
  %v66 = vld [vmem:[%s1 + $0x118] sm:$0xff]
  %v67 = vld [vmem:[%s1 + $0x120] sm:$0xff]
  %v68 = vld [vmem:[%s1 + $0x128] sm:$0xff]
  %v69 = vld [vmem:[%s1 + $0x130] sm:$0xff]
  %v70 = vld [vmem:[%s1 + $0x138] sm:$0xff]
  %v71 = vld [vmem:[%s1 + $0x140] sm:$0xff]
  %v72 = vld [vmem:[%s1 + $0x148] sm:$0xff]
  %v73 = vld [vmem:[%s1 + $0x150] sm:$0xff]
  %v74 = vld [vmem:[%s1 + $0x158] sm:$0xff]
  %v75 = vld [vmem:[%s1 + $0x160] sm:$0xff]
  %v76 = vld [vmem:[%s1 + $0x168] sm:$0xff]
  %v77 = vld [vmem:[%s1 + $0x170] sm:$0xff]
  %v78 = vld [vmem:[%s1 + $0x178] sm:$0xff]
  %v79 = vld [vmem:[%s1 + $0x180] sm:$0xff]
  %v80 = vld [vmem:[%s1 + $0x188] sm:$0xff]
  %v81 = vld [vmem:[%s1 + $0x190] sm:$0xff]
  %v82 = vld [vmem:[%s1 + $0x198] sm:$0xff]
  %v83 = vld [vmem:[%s1 + $0x1a0] sm:$0xff]
  %v84 = vld [vmem:[%s1 + $0x1a8] sm:$0xff]
  %v85 = vld [vmem:[%s1 + $0x1b0] sm:$0xff]
  %v86 = vld [vmem:[%s1 + $0x1b8] sm:$0xff]
  %v87 = vld [vmem:[%s1 + $0x1c0] sm:$0xff]
  %v88 = vld [vmem:[%s1 + $0x1c8] sm:$0xff]
  %v89 = vld [vmem:[%s1 + $0x1d0] sm:$0xff]
  %v90 = vld [vmem:[%s1 + $0x1d8] sm:$0xff]
  %v91 = vld [vmem:[%s1 + $0x1e0] sm:$0xff]
  %v92 = vld [vmem:[%s1 + $0x1e8] sm:$0xff]
  %v93 = vld [vmem:[%s1 + $0x1f0] sm:$0xff]
  %v94 = vld [vmem:[%s1 + $0x1f8] sm:$0xff]
  %v95 = vld [vmem:[%s1 + $0x200] sm:$0xff]
  %v96 = vld [vmem:[%s1 + $0x208] sm:$0xff]
  %v97 = vld [vmem:[%s1 + $0x210] sm:$0xff]
  %v98 = vld [vmem:[%s1 + $0x218] sm:$0xff]
  %v99 = vld [vmem:[%s1 + $0x220] sm:$0xff]
  %v100 = vld [vmem:[%s1 + $0x228] sm:$0xff]
  %v101 = vld [vmem:[%s1 + $0x230] sm:$0xff]
  %v102 = vld [vmem:[%s1 + $0x238] sm:$0xff]
  %v103 = vld [vmem:[%s1 + $0x240] sm:$0xff]
  %v104 = vld [vmem:[%s1 + $0x248] sm:$0xff]
  %v105 = vld [vmem:[%s1 + $0x250] sm:$0xff]
  %v106 = vld [vmem:[%s1 + $0x258] sm:$0xff]
  %v107 = vld [vmem:[%s1 + $0x260] sm:$0xff]
  %v108 = vld [vmem:[%s1 + $0x268] sm:$0xff]
  %v109 = vld [vmem:[%s1 + $0x270] sm:$0xff]
  %v110 = vld [vmem:[%s1 + $0x278] sm:$0xff]
  %v111 = vld [vmem:[%s2] sm:$0x3]
  %v113 = vlaneseq
  %v114 = vshrl.u32 %v113, 7
  %v115 = vsub.s32 0, %v114
  %v116 = vrot.slane %v111, %v115
  %v117 = vlaneseq
  %v118 = vshrl.u32 %v117, 7
  %v119 = vsub.s32 1, %v118
  %v120 = vrot.slane %v111, %v119
  %v203 = vunpack.c.l.b16 %v31
  %v204 = vunpack.c.h.b16 %v31
  %v205 = vunpack.c.l.b16 %v32
  %v206 = vunpack.c.h.b16 %v32
  %v207 = vunpack.c.l.b16 %v33
  %v208 = vunpack.c.h.b16 %v33
  %v209 = vunpack.c.l.b16 %v34
  %v210 = vunpack.c.h.b16 %v34
  %v211 = vunpack.c.l.b16 %v35
  %v212 = vunpack.c.h.b16 %v35
  %v213 = vunpack.c.l.b16 %v36
  %v214 = vunpack.c.h.b16 %v36
  %v215 = vunpack.c.l.b16 %v37
  %v216 = vunpack.c.h.b16 %v37
  %v217 = vunpack.c.l.b16 %v38
  %v218 = vunpack.c.h.b16 %v38
  %v219 = vunpack.c.l.b16 %v39
  %v220 = vunpack.c.h.b16 %v39
  %v221 = vunpack.c.l.b16 %v40
  %v222 = vunpack.c.h.b16 %v40
  %v223 = vunpack.c.l.b16 %v41
  %v224 = vunpack.c.h.b16 %v41
  %v225 = vunpack.c.l.b16 %v42
  %v226 = vunpack.c.h.b16 %v42
  %v227 = vunpack.c.l.b16 %v43
  %v228 = vunpack.c.h.b16 %v43
  %v229 = vunpack.c.l.b16 %v44
  %v230 = vunpack.c.h.b16 %v44
  %v231 = vunpack.c.l.b16 %v45
  %v232 = vunpack.c.h.b16 %v45
  %v233 = vunpack.c.l.b16 %v46
  %v234 = vunpack.c.h.b16 %v46
  %v235 = vunpack.c.l.b16 %v47
  %v236 = vunpack.c.h.b16 %v47
  %v237 = vunpack.c.l.b16 %v48
  %v238 = vunpack.c.h.b16 %v48
  %v239 = vunpack.c.l.b16 %v49
  %v240 = vunpack.c.h.b16 %v49
  %v241 = vunpack.c.l.b16 %v50
  %v242 = vunpack.c.h.b16 %v50
  %v243 = vunpack.c.l.b16 %v51
  %v244 = vunpack.c.h.b16 %v51
  %v245 = vunpack.c.l.b16 %v52
  %v246 = vunpack.c.h.b16 %v52
  %v247 = vunpack.c.l.b16 %v53
  %v248 = vunpack.c.h.b16 %v53
  %v249 = vunpack.c.l.b16 %v54
  %v250 = vunpack.c.h.b16 %v54
  %v251 = vunpack.c.l.b16 %v55
  %v252 = vunpack.c.h.b16 %v55
  %v253 = vunpack.c.l.b16 %v56
  %v254 = vunpack.c.h.b16 %v56
  %v255 = vunpack.c.l.b16 %v57
  %v256 = vunpack.c.h.b16 %v57
  %v257 = vunpack.c.l.b16 %v58
  %v258 = vunpack.c.h.b16 %v58
  %v259 = vunpack.c.l.b16 %v59
  %v260 = vunpack.c.h.b16 %v59
  %v261 = vunpack.c.l.b16 %v60
  %v262 = vunpack.c.h.b16 %v60
  %v263 = vunpack.c.l.b16 %v61
  %v264 = vunpack.c.h.b16 %v61
  %v265 = vunpack.c.l.b16 %v62
  %v266 = vunpack.c.h.b16 %v62
  %v267 = vunpack.c.l.b16 %v63
  %v268 = vunpack.c.h.b16 %v63
  %v269 = vunpack.c.l.b16 %v64
  %v270 = vunpack.c.h.b16 %v64
  %v271 = vunpack.c.l.b16 %v65
  %v272 = vunpack.c.h.b16 %v65
  %v273 = vunpack.c.l.b16 %v66
  %v274 = vunpack.c.h.b16 %v66
  %v275 = vunpack.c.l.b16 %v67
  %v276 = vunpack.c.h.b16 %v67
  %v277 = vunpack.c.l.b16 %v68
  %v278 = vunpack.c.h.b16 %v68
  %v279 = vunpack.c.l.b16 %v69
  %v280 = vunpack.c.h.b16 %v69
  %v281 = vunpack.c.l.b16 %v70
  %v282 = vunpack.c.h.b16 %v70
  %v283 = vunpack.c.l.b16 %v71
  %v284 = vunpack.c.h.b16 %v71
  %v285 = vunpack.c.l.b16 %v72
  %v286 = vunpack.c.h.b16 %v72
  %v287 = vunpack.c.l.b16 %v73
  %v288 = vunpack.c.h.b16 %v73
  %v289 = vunpack.c.l.b16 %v74
  %v290 = vunpack.c.h.b16 %v74
  %v291 = vunpack.c.l.b16 %v75
  %v292 = vunpack.c.h.b16 %v75
  %v293 = vunpack.c.l.b16 %v76
  %v294 = vunpack.c.h.b16 %v76
  %v295 = vunpack.c.l.b16 %v77
  %v296 = vunpack.c.h.b16 %v77
  %v297 = vunpack.c.l.b16 %v78
  %v298 = vunpack.c.h.b16 %v78
  %v299 = vunpack.c.l.b16 %v79
  %v300 = vunpack.c.h.b16 %v79
  %v301 = vunpack.c.l.b16 %v80
  %v302 = vunpack.c.h.b16 %v80
  %v303 = vunpack.c.l.b16 %v81
  %v304 = vunpack.c.h.b16 %v81
  %v305 = vunpack.c.l.b16 %v82
  %v306 = vunpack.c.h.b16 %v82
  %v307 = vunpack.c.l.b16 %v83
  %v308 = vunpack.c.h.b16 %v83
  %v309 = vunpack.c.l.b16 %v84
  %v310 = vunpack.c.h.b16 %v84
  %v311 = vunpack.c.l.b16 %v85
  %v312 = vunpack.c.h.b16 %v85
  %v313 = vunpack.c.l.b16 %v86
  %v314 = vunpack.c.h.b16 %v86
  %v315 = vunpack.c.l.b16 %v87
  %v316 = vunpack.c.h.b16 %v87
  %v317 = vunpack.c.l.b16 %v88
  %v318 = vunpack.c.h.b16 %v88
  %v319 = vunpack.c.l.b16 %v89
  %v320 = vunpack.c.h.b16 %v89
  %v321 = vunpack.c.l.b16 %v90
  %v322 = vunpack.c.h.b16 %v90
  %v323 = vunpack.c.l.b16 %v91
  %v324 = vunpack.c.h.b16 %v91
  %v325 = vunpack.c.l.b16 %v92
  %v326 = vunpack.c.h.b16 %v92
  %v327 = vunpack.c.l.b16 %v93
  %v328 = vunpack.c.h.b16 %v93
  %v329 = vunpack.c.l.b16 %v94
  %v330 = vunpack.c.h.b16 %v94
  %v331 = vunpack.c.l.b16 %v95
  %v332 = vunpack.c.h.b16 %v95
  %v333 = vunpack.c.l.b16 %v96
  %v334 = vunpack.c.h.b16 %v96
  %v335 = vunpack.c.l.b16 %v97
  %v336 = vunpack.c.h.b16 %v97
  %v337 = vunpack.c.l.b16 %v98
  %v338 = vunpack.c.h.b16 %v98
  %v339 = vunpack.c.l.b16 %v99
  %v340 = vunpack.c.h.b16 %v99
  %v341 = vunpack.c.l.b16 %v100
  %v342 = vunpack.c.h.b16 %v100
  %v343 = vunpack.c.l.b16 %v101
  %v344 = vunpack.c.h.b16 %v101
  %v345 = vunpack.c.l.b16 %v102
  %v346 = vunpack.c.h.b16 %v102
  %v347 = vunpack.c.l.b16 %v103
  %v348 = vunpack.c.h.b16 %v103
  %v349 = vunpack.c.l.b16 %v104
  %v350 = vunpack.c.h.b16 %v104
  %v351 = vunpack.c.l.b16 %v105
  %v352 = vunpack.c.h.b16 %v105
  %v353 = vunpack.c.l.b16 %v106
  %v354 = vunpack.c.h.b16 %v106
  %v355 = vunpack.c.l.b16 %v107
  %v356 = vunpack.c.h.b16 %v107
  %v357 = vunpack.c.l.b16 %v108
  %v358 = vunpack.c.h.b16 %v108
  %v359 = vunpack.c.l.b16 %v109
  %v360 = vunpack.c.h.b16 %v109
  %v361 = vunpack.c.l.b16 %v110
  %v362 = vunpack.c.h.b16 %v110
  %v363 = vpack.c.b16 %v205, %v203
  %v364 = vpack.c.b16 %v206, %v204
  %v365 = vpack.c.b16 %v209, %v207
  %v366 = vpack.c.b16 %v210, %v208
  %v367 = vpack.c.b16 %v213, %v211
  %v368 = vpack.c.b16 %v214, %v212
  %v369 = vpack.c.b16 %v217, %v215
  %v370 = vpack.c.b16 %v218, %v216
  %v371 = vpack.c.b16 %v221, %v219
  %v372 = vpack.c.b16 %v222, %v220
  %v373 = vpack.c.b16 %v225, %v223
  %v374 = vpack.c.b16 %v226, %v224
  %v375 = vpack.c.b16 %v229, %v227
  %v376 = vpack.c.b16 %v230, %v228
  %v377 = vpack.c.b16 %v233, %v231
  %v378 = vpack.c.b16 %v234, %v232
  %v379 = vpack.c.b16 %v237, %v235
  %v380 = vpack.c.b16 %v238, %v236
  %v381 = vpack.c.b16 %v241, %v239
  %v382 = vpack.c.b16 %v242, %v240
  %v383 = vpack.c.b16 %v245, %v243
  %v384 = vpack.c.b16 %v246, %v244
  %v385 = vpack.c.b16 %v249, %v247
  %v386 = vpack.c.b16 %v250, %v248
  %v387 = vpack.c.b16 %v253, %v251
  %v388 = vpack.c.b16 %v254, %v252
  %v389 = vpack.c.b16 %v257, %v255
  %v390 = vpack.c.b16 %v258, %v256
  %v391 = vpack.c.b16 %v261, %v259
  %v392 = vpack.c.b16 %v262, %v260
  %v393 = vpack.c.b16 %v265, %v263
  %v394 = vpack.c.b16 %v266, %v264
  %v395 = vpack.c.b16 %v269, %v267
  %v396 = vpack.c.b16 %v270, %v268
  %v397 = vpack.c.b16 %v273, %v271
  %v398 = vpack.c.b16 %v274, %v272
  %v399 = vpack.c.b16 %v277, %v275
  %v400 = vpack.c.b16 %v278, %v276
  %v401 = vpack.c.b16 %v281, %v279
  %v402 = vpack.c.b16 %v282, %v280
  %v403 = vpack.c.b16 %v285, %v283
  %v404 = vpack.c.b16 %v286, %v284
  %v405 = vpack.c.b16 %v289, %v287
  %v406 = vpack.c.b16 %v290, %v288
  %v407 = vpack.c.b16 %v293, %v291
  %v408 = vpack.c.b16 %v294, %v292
  %v409 = vpack.c.b16 %v297, %v295
  %v410 = vpack.c.b16 %v298, %v296
  %v411 = vpack.c.b16 %v301, %v299
  %v412 = vpack.c.b16 %v302, %v300
  %v413 = vpack.c.b16 %v305, %v303
  %v414 = vpack.c.b16 %v306, %v304
  %v415 = vpack.c.b16 %v309, %v307
  %v416 = vpack.c.b16 %v310, %v308
  %v417 = vpack.c.b16 %v313, %v311
  %v418 = vpack.c.b16 %v314, %v312
  %v419 = vpack.c.b16 %v317, %v315
  %v420 = vpack.c.b16 %v318, %v316
  %v421 = vpack.c.b16 %v321, %v319
  %v422 = vpack.c.b16 %v322, %v320
  %v423 = vpack.c.b16 %v325, %v323
  %v424 = vpack.c.b16 %v326, %v324
  %v425 = vpack.c.b16 %v329, %v327
  %v426 = vpack.c.b16 %v330, %v328
  %v427 = vpack.c.b16 %v333, %v331
  %v428 = vpack.c.b16 %v334, %v332
  %v429 = vpack.c.b16 %v337, %v335
  %v430 = vpack.c.b16 %v338, %v336
  %v431 = vpack.c.b16 %v341, %v339
  %v432 = vpack.c.b16 %v342, %v340
  %v433 = vpack.c.b16 %v345, %v343
  %v434 = vpack.c.b16 %v346, %v344
  %v435 = vpack.c.b16 %v349, %v347
  %v436 = vpack.c.b16 %v350, %v348
  %v437 = vpack.c.b16 %v353, %v351
  %v438 = vpack.c.b16 %v354, %v352
  %v439 = vpack.c.b16 %v357, %v355
  %v440 = vpack.c.b16 %v358, %v356
  %v441 = vpack.c.b16 %v361, %v359
  %v442 = vpack.c.b16 %v362, %v360
  %523 = vmatprep.subr.bf16.mxu0 %v378
  %524 = vmatpush1.bf16.msra.mxu0 %v377
  %525 = vmatprep.subr.bf16.mxu0 %v376
  %526 = vmatpush1.bf16.msra.mxu0 %v375
  %527 = vmatprep.subr.bf16.mxu0 %v374
  %528 = vmatpush1.bf16.msra.mxu0 %v373
  %529 = vmatprep.subr.bf16.mxu0 %v372
  %530 = vmatpush1.bf16.msra.mxu0 %v371
  %531 = vmatprep.subr.bf16.mxu0 %v370
  %532 = vmatpush1.bf16.msra.mxu0 %v369
  %533 = vmatprep.subr.bf16.mxu0 %v368
  %534 = vmatpush1.bf16.msra.mxu0 %v367
  %535 = vmatprep.subr.bf16.mxu0 %v366
  %536 = vmatpush1.bf16.msra.mxu0 %v365
  %537 = vmatprep.subr.bf16.mxu0 %v364
  %538 = vmatpush1.bf16.msra.mxu0 %v363
  %539 = vmatprep.subr.bf16.mxu0 %v394
  %540 = vmatpush2.bf16.msra.mxu0 %v393
  %541 = vmatprep.subr.bf16.mxu0 %v392
  %542 = vmatpush2.bf16.msra.mxu0 %v391
  %543 = vmatprep.subr.bf16.mxu0 %v390
  %544 = vmatpush2.bf16.msra.mxu0 %v389
  %545 = vmatprep.subr.bf16.mxu0 %v388
  %546 = vmatpush2.bf16.msra.mxu0 %v387
  %547 = vmatprep.subr.bf16.mxu0 %v386
  %548 = vmatpush2.bf16.msra.mxu0 %v385
  %549 = vmatprep.subr.bf16.mxu0 %v384
  %550 = vmatpush2.bf16.msra.mxu0 %v383
  %551 = vmatprep.subr.bf16.mxu0 %v382
  %552 = vmatpush2.bf16.msra.mxu0 %v381
  %553 = vmatprep.subr.bf16.mxu0 %v380
  %554 = vmatpush2.bf16.msra.mxu0 %v379
  %555 = vmatprep.mubr.bf16.mxu0 %v27
  %556 = vmatmul.mubr.bf16.gmra.mxu0 %v26
  %v557 = vpop.f32.mrf.mxu0
  %v558 = vadd.f32 %v116, %v557
  %v559 = vpop.f32.mrf.mxu0
  %v560 = vadd.f32 %v120, %v559
  %v561 = vpop.f32.mrf.mxu0
  %v562 = vpop.f32.mrf.mxu0
  %563 = vdwg.mxu0
  %564 = vmatprep.subr.bf16.mxu0 %v410
  %565 = vmatpush1.bf16.msra.mxu0 %v409
  %566 = vmatprep.subr.bf16.mxu0 %v408
  %567 = vmatpush1.bf16.msra.mxu0 %v407
  %568 = vmatprep.subr.bf16.mxu0 %v406
  %569 = vmatpush1.bf16.msra.mxu0 %v405
  %570 = vmatprep.subr.bf16.mxu0 %v404
  %571 = vmatpush1.bf16.msra.mxu0 %v403
  %572 = vmatprep.subr.bf16.mxu0 %v402
  %573 = vmatpush1.bf16.msra.mxu0 %v401
  %574 = vmatprep.subr.bf16.mxu0 %v400
  %575 = vmatpush1.bf16.msra.mxu0 %v399
  %576 = vmatprep.subr.bf16.mxu0 %v398
  %577 = vmatpush1.bf16.msra.mxu0 %v397
  %578 = vmatprep.subr.bf16.mxu0 %v396
  %579 = vmatpush1.bf16.msra.mxu0 %v395
  %580 = vmatprep.subr.bf16.mxu0 %v426
  %581 = vmatpush2.bf16.msra.mxu0 %v425
  %582 = vmatprep.subr.bf16.mxu0 %v424
  %583 = vmatpush2.bf16.msra.mxu0 %v423
  %584 = vmatprep.subr.bf16.mxu0 %v422
  %585 = vmatpush2.bf16.msra.mxu0 %v421
  %586 = vmatprep.subr.bf16.mxu0 %v420
  %587 = vmatpush2.bf16.msra.mxu0 %v419
  %588 = vmatprep.subr.bf16.mxu0 %v418
  %589 = vmatpush2.bf16.msra.mxu0 %v417
  %590 = vmatprep.subr.bf16.mxu0 %v416
  %591 = vmatpush2.bf16.msra.mxu0 %v415
  %592 = vmatprep.subr.bf16.mxu0 %v414
  %593 = vmatpush2.bf16.msra.mxu0 %v413
  %594 = vmatprep.subr.bf16.mxu0 %v412
  %595 = vmatpush2.bf16.msra.mxu0 %v411
  %596 = vmatprep.mubr.bf16.mxu0 %v29
  %597 = vmatmul.mubr.bf16.gmra.mxu0 %v28
  %v598 = vpop.f32.mrf.mxu0
  %v599 = vadd.f32 %v558, %v598
  %v600 = vpop.f32.mrf.mxu0
  %v601 = vadd.f32 %v560, %v600
  %v602 = vpop.f32.mrf.mxu0
  %v603 = vpop.f32.mrf.mxu0
  %604 = vdwg.mxu0
  %605 = vmatprep.subr.bf16.mxu0 %v442
  %606 = vmatpush1.bf16.msra.mxu0 %v441
  %607 = vmatprep.subr.bf16.mxu0 %v440
  %608 = vmatpush1.bf16.msra.mxu0 %v439
  %609 = vmatprep.subr.bf16.mxu0 %v438
  %610 = vmatpush1.bf16.msra.mxu0 %v437
  %611 = vmatprep.subr.bf16.mxu0 %v436
  %612 = vmatpush1.bf16.msra.mxu0 %v435
  %613 = vmatprep.subr.bf16.mxu0 %v434
  %614 = vmatpush1.bf16.msra.mxu0 %v433
  %615 = vmatprep.subr.bf16.mxu0 %v432
  %616 = vmatpush1.bf16.msra.mxu0 %v431
  %617 = vmatprep.subr.bf16.mxu0 %v430
  %618 = vmatpush1.bf16.msra.mxu0 %v429
  %619 = vmatprep.subr.bf16.mxu0 %v428
  %620 = vmatpush1.bf16.msra.mxu0 %v427
  %621 = vmatprep.subr.bf16.mxu0 0
  %622 = vmatpush2.bf16.msra.mxu0 0
  %623 = vmatprep.subr.bf16.mxu0 0
  %624 = vmatpush2.bf16.msra.mxu0 0
  %625 = vmatprep.subr.bf16.mxu0 0
  %626 = vmatpush2.bf16.msra.mxu0 0
  %627 = vmatprep.subr.bf16.mxu0 0
  %628 = vmatpush2.bf16.msra.mxu0 0
  %629 = vmatprep.subr.bf16.mxu0 0
  %630 = vmatpush2.bf16.msra.mxu0 0
  %631 = vmatprep.subr.bf16.mxu0 0
  %632 = vmatpush2.bf16.msra.mxu0 0
  %633 = vmatprep.subr.bf16.mxu0 0
  %634 = vmatpush2.bf16.msra.mxu0 0
  %635 = vmatprep.subr.bf16.mxu0 0
  %636 = vmatpush2.bf16.msra.mxu0 0
  %637 = vmatprep.mubr.bf16.mxu0 0
  %638 = vmatmul.mubr.bf16.gmra.mxu0 %v30
  %v639 = vpop.f32.mrf.mxu0
  %v640 = vadd.f32 %v599, %v639
  %v641 = vpop.f32.mrf.mxu0
  %v642 = vadd.f32 %v601, %v641
  %v643 = vpop.f32.mrf.mxu0
  %v644 = vpop.f32.mrf.mxu0
  %645 = vdwg.mxu0
  %v646 = vmax.f32 %v640, 0.0
  %v647 = vmax.f32 %v642, 0.0
  %v648 = vpack.c.bf16 %v646, %v646
  %v649 = vpack.c.bf16 %v647, %v647
  %v650 = vld [vmem:[%s3] sm:$0xf]
  %v651 = vld [vmem:[%s3 + $0x4] sm:$0xf]
  %v652 = vld [vmem:[%s3 + $0x8] sm:$0xf]
  %v653 = vld [vmem:[%s3 + $0xc] sm:$0xf]
  %v654 = vld [vmem:[%s3 + $0x10] sm:$0xf]
  %v655 = vld [vmem:[%s3 + $0x14] sm:$0xf]
  %v656 = vld [vmem:[%s3 + $0x18] sm:$0xf]
  %v657 = vld [vmem:[%s3 + $0x1c] sm:$0xf]
  %v658 = vld [vmem:[%s3 + $0x20] sm:$0xf]
  %v659 = vld [vmem:[%s3 + $0x24] sm:$0xf]
  %v660 = vld [vmem:[%s3 + $0x28] sm:$0xf]
  %v661 = vld [vmem:[%s3 + $0x2c] sm:$0xf]
  %v662 = vld [vmem:[%s3 + $0x30] sm:$0xf]
  %v663 = vld [vmem:[%s3 + $0x34] sm:$0xf]
  %v664 = vld [vmem:[%s3 + $0x38] sm:$0xf]
  %v665 = vld [vmem:[%s3 + $0x3c] sm:$0xf]
  %v666 = vld [vmem:[%s3 + $0x40] sm:$0xf]
  %v667 = vld [vmem:[%s3 + $0x44] sm:$0xf]
  %v668 = vld [vmem:[%s3 + $0x48] sm:$0xf]
  %v669 = vld [vmem:[%s3 + $0x4c] sm:$0xf]
  %v670 = vld [vmem:[%s3 + $0x50] sm:$0xf]
  %v671 = vld [vmem:[%s3 + $0x54] sm:$0xf]
  %v672 = vld [vmem:[%s3 + $0x58] sm:$0xf]
  %v673 = vld [vmem:[%s3 + $0x5c] sm:$0xf]
  %v674 = vld [vmem:[%s3 + $0x60] sm:$0xf]
  %v675 = vld [vmem:[%s3 + $0x64] sm:$0xf]
  %v676 = vld [vmem:[%s3 + $0x68] sm:$0xf]
  %v677 = vld [vmem:[%s3 + $0x6c] sm:$0xf]
  %v678 = vld [vmem:[%s3 + $0x70] sm:$0xf]
  %v679 = vld [vmem:[%s3 + $0x74] sm:$0xf]
  %v680 = vld [vmem:[%s3 + $0x78] sm:$0xf]
  %v681 = vld [vmem:[%s3 + $0x7c] sm:$0xf]
  %v682 = vld [vmem:[%s4] sm:$0x1]
  %v684 = vlaneseq
  %v685 = vshrl.u32 %v684, 7
  %v686 = vsub.s32 0, %v685
  %v687 = vrot.slane %v682, %v686
  %v721 = vunpack.c.l.b16 %v650
  %v722 = vunpack.c.l.b16 %v651
  %v723 = vunpack.c.l.b16 %v652
  %v724 = vunpack.c.l.b16 %v653
  %v725 = vunpack.c.l.b16 %v654
  %v726 = vunpack.c.l.b16 %v655
  %v727 = vunpack.c.l.b16 %v656
  %v728 = vunpack.c.l.b16 %v657
  %v729 = vunpack.c.l.b16 %v658
  %v730 = vunpack.c.l.b16 %v659
  %v731 = vunpack.c.l.b16 %v660
  %v732 = vunpack.c.l.b16 %v661
  %v733 = vunpack.c.l.b16 %v662
  %v734 = vunpack.c.l.b16 %v663
  %v735 = vunpack.c.l.b16 %v664
  %v736 = vunpack.c.l.b16 %v665
  %v737 = vunpack.c.l.b16 %v666
  %v738 = vunpack.c.l.b16 %v667
  %v739 = vunpack.c.l.b16 %v668
  %v740 = vunpack.c.l.b16 %v669
  %v741 = vunpack.c.l.b16 %v670
  %v742 = vunpack.c.l.b16 %v671
  %v743 = vunpack.c.l.b16 %v672
  %v744 = vunpack.c.l.b16 %v673
  %v745 = vunpack.c.l.b16 %v674
  %v746 = vunpack.c.l.b16 %v675
  %v747 = vunpack.c.l.b16 %v676
  %v748 = vunpack.c.l.b16 %v677
  %v749 = vunpack.c.l.b16 %v678
  %v750 = vunpack.c.l.b16 %v679
  %v751 = vunpack.c.l.b16 %v680
  %v752 = vunpack.c.l.b16 %v681
  %v753 = vpack.c.b16 %v722, %v721
  %v754 = vpack.c.b16 %v724, %v723
  %v755 = vpack.c.b16 %v726, %v725
  %v756 = vpack.c.b16 %v728, %v727
  %v757 = vpack.c.b16 %v730, %v729
  %v758 = vpack.c.b16 %v732, %v731
  %v759 = vpack.c.b16 %v734, %v733
  %v760 = vpack.c.b16 %v736, %v735
  %v761 = vpack.c.b16 %v738, %v737
  %v762 = vpack.c.b16 %v740, %v739
  %v763 = vpack.c.b16 %v742, %v741
  %v764 = vpack.c.b16 %v744, %v743
  %v765 = vpack.c.b16 %v746, %v745
  %v766 = vpack.c.b16 %v748, %v747
  %v767 = vpack.c.b16 %v750, %v749
  %v768 = vpack.c.b16 %v752, %v751
  %785 = vmatprep.subr.bf16.mxu0 0
  %786 = vmatpush1.bf16.msra.mxu0 %v760
  %787 = vmatprep.subr.bf16.mxu0 0
  %788 = vmatpush1.bf16.msra.mxu0 %v759
  %789 = vmatprep.subr.bf16.mxu0 0
  %790 = vmatpush1.bf16.msra.mxu0 %v758
  %791 = vmatprep.subr.bf16.mxu0 0
  %792 = vmatpush1.bf16.msra.mxu0 %v757
  %793 = vmatprep.subr.bf16.mxu0 0
  %794 = vmatpush1.bf16.msra.mxu0 %v756
  %795 = vmatprep.subr.bf16.mxu0 0
  %796 = vmatpush1.bf16.msra.mxu0 %v755
  %797 = vmatprep.subr.bf16.mxu0 0
  %798 = vmatpush1.bf16.msra.mxu0 %v754
  %799 = vmatprep.subr.bf16.mxu0 0
  %800 = vmatpush1.bf16.msra.mxu0 %v753
  %801 = vmatprep.subr.bf16.mxu0 0
  %802 = vmatpush2.bf16.msra.mxu0 %v768
  %803 = vmatprep.subr.bf16.mxu0 0
  %804 = vmatpush2.bf16.msra.mxu0 %v767
  %805 = vmatprep.subr.bf16.mxu0 0
  %806 = vmatpush2.bf16.msra.mxu0 %v766
  %807 = vmatprep.subr.bf16.mxu0 0
  %808 = vmatpush2.bf16.msra.mxu0 %v765
  %809 = vmatprep.subr.bf16.mxu0 0
  %810 = vmatpush2.bf16.msra.mxu0 %v764
  %811 = vmatprep.subr.bf16.mxu0 0
  %812 = vmatpush2.bf16.msra.mxu0 %v763
  %813 = vmatprep.subr.bf16.mxu0 0
  %814 = vmatpush2.bf16.msra.mxu0 %v762
  %815 = vmatprep.subr.bf16.mxu0 0
  %816 = vmatpush2.bf16.msra.mxu0 %v761
  %817 = vmatprep.mubr.bf16.mxu0 %v649
  %818 = vmatmul.mubr.bf16.gmra.mxu0 %v648
  %v819 = vpop.f32.mrf.mxu0
  %v820 = vadd.f32 %v687, %v819
  %v821 = vpop.f32.mrf.mxu0
  %v822 = vpop.f32.mrf.mxu0
  %v823 = vpop.f32.mrf.mxu0
  %824 = vdwg.mxu0
  %825 = vst [vmem:[%s5] sm:$0xff] %v820
  // Predicated region
  $region22: #{fashioncnn4_forward.9} parent=0 // pred_check
    _
  $region23: #{fashioncnn4_forward.9} parent=0 // pred_check_branch
    %827 = sbr.rel (0) target = $region25
  $region24: #{fashioncnn4_forward.9} parent=0 // pred_region
    _
  $region25: #{fashioncnn4_forward.9} parent=0 // pred_fallthru
    _
  // Predicated region
  $region26: #{fashioncnn4_forward.9} parent=0 // pred_check
    _
  $region27: #{fashioncnn4_forward.9} parent=0 // pred_check_branch
    %829 = sbr.rel (0) target = $region29
  $region28: #{fashioncnn4_forward.9} parent=0 // pred_region
    _
  $region29: #{fashioncnn4_forward.9} parent=0 // pred_fallthru
    _

</llo_original>
